<compile_context>
chip_gen: v5e
topology: v5e:2x2
jax: 0.10.0
libtpu: 0.0.40
codegen_flags: <defaults>
</compile_context>

<pallas_src>
import functools

import jax
import jax.numpy as jnp
from jax.experimental import pallas as pl
from jax.experimental.pallas import tpu as pltpu


def decoder_layer_kernel(x_ref, wqkv_ref, wo_ref, bo_ref,
                         w1_ref, b1_ref, w2_ref, b2_ref, out_ref,
                         *, head_num, qkv_dim, tb, n, bf16_softmax):
    HD = head_num * qkv_dim
    M = tb * n

    x_f32 = x_ref[...]                                   # (M, E) float32
    x_bf = x_f32.astype(jnp.bfloat16)

    # Fused QKV projection: one (M, E) @ (E, 3*HD) MXU pass (bf16 in, f32 acc).
    qkv = jnp.dot(x_bf, wqkv_ref[...], preferred_element_type=jnp.float32)
    qkv_bf = qkv.astype(jnp.bfloat16)                    # (M, 3*HD)
    # Layout-preserving split of the row dim into (TB, N): N == 8 matches the
    # sublane group, lanes untouched.
    qkv3 = qkv_bf.reshape(tb, n, 3 * HD)                 # (TB, N, 3*HD)

    scale = 1.0 / float(qkv_dim) ** 0.5
    mh = jnp.zeros_like(x_f32)                           # (M, E) f32 accumulator

    # Static per-head loop (head_num = 4).  Scores / softmax / PV are batched
    # over TB blocks, so no cross-batch masking is needed and the softmax only
    # touches (TB, N, N) useful entries instead of a dense (M, M) slab.
    for h in range(head_num):
        lo = h * qkv_dim
        qh = qkv3[:, :, lo:lo + qkv_dim]                 # (TB, N, D) bf16
        kh = qkv3[:, :, HD + lo:HD + lo + qkv_dim]       # (TB, N, D) bf16
        vh = qkv3[:, :, 2 * HD + lo:2 * HD + lo + qkv_dim]

        # Scores: batched (TB, N, D) x (TB, N, D)^T -> (TB, N, N), f32 acc.
        s = jax.lax.dot_general(
            qh, kh, (((2,), (2,)), ((0,), (0,))),
            preferred_element_type=jnp.float32) * scale

        m = jnp.max(s, axis=-1, keepdims=True)
        z = s - m
        if bf16_softmax:
            # v6e / v7x: bf16 VPU+EUP -> 2x packed elementwise throughput.
            e = jnp.exp(z.astype(jnp.bfloat16))
            denom = jnp.sum(e.astype(jnp.float32), axis=-1, keepdims=True)
            w = e * pl.reciprocal(denom, approx=True).astype(jnp.bfloat16)
        else:
            # v5e: no bf16 VPU/EUP -> keep elementwise math in f32.
            e = jnp.exp(z)
            denom = jnp.sum(e, axis=-1, keepdims=True)
            w = (e * pl.reciprocal(denom, approx=True)).astype(jnp.bfloat16)

        # PV: batched (TB, N, N) x (TB, N, D) -> (TB, N, D), f32 acc.
        oh = jax.lax.dot_general(
            w, vh, (((2,), (1,)), ((0,), (0,))),
            preferred_element_type=jnp.float32)

        # Per-head combine: accumulate head_out @ Wo[h*D:(h+1)*D, :] instead of
        # concatenating heads along lanes.  Reshape (TB, N, D) -> (M, D) is
        # layout-preserving; the Wo slice is a free sublane slice.
        mh = mh + jnp.dot(oh.reshape(M, qkv_dim).astype(jnp.bfloat16),
                          wo_ref[lo:lo + qkv_dim, :],
                          preferred_element_type=jnp.float32)

    out1 = x_f32 + mh + bo_ref[...]                      # residual 1 (M, E)

    # Feed-forward: W2(relu(W1(out1))) + residual.
    h1 = jnp.maximum(
        jnp.dot(out1.astype(jnp.bfloat16), w1_ref[...],
                preferred_element_type=jnp.float32) + b1_ref[...], 0.0)
    out2 = jnp.dot(h1.astype(jnp.bfloat16), w2_ref[...],
                   preferred_element_type=jnp.float32) + b2_ref[...]

    out_ref[...] = (out1 + out2).astype(out_ref.dtype)


def prepare_params(params):
    """One-time weight preprocessing (hoisted out of the per-call wrapper)."""
    return {
        "wqkv": jnp.concatenate(
            [params["wq"], params["wk"], params["wv"]], axis=1
        ).astype(jnp.bfloat16),
        "wo": params["wo"].astype(jnp.bfloat16),
        "bo": params["bo"].astype(jnp.float32),
        "w1": params["w1"].astype(jnp.bfloat16),
        "b1": params["b1"].astype(jnp.float32),
        "w2": params["w2"].astype(jnp.bfloat16),
        "b2": params["b2"].astype(jnp.float32),
    }


def _default_bf16_softmax():
    """bf16 elementwise softmax only on generations with a bf16 VPU/EUP."""
    try:
        kind = jax.devices()[0].device_kind.lower()
    except Exception:
        return False
    return ("v6" in kind) or ("v7" in kind)


def decoder_layer(x, params, *, head_num, qkv_dim, rows_per_step=256,
                  bf16_softmax=None):
    """Pallas forward for DecoderLayer.  x: (B, N, E) float32 -> (B, N, E)."""
    B, N, E = x.shape
    HD = head_num * qkv_dim

    if "wqkv" not in params:          # accept raw params for convenience
        params = prepare_params(params)
    F = params["w1"].shape[1]
    if bf16_softmax is None:
        bf16_softmax = _default_bf16_softmax()

    # Batch elements per grid step: large blocks amortize the ~0.35us per-step
    # pipeline overhead, but keep >= 2 grid steps when possible so both v7x
    # TensorCores get work (harmless on single-TC v5e/v6e).
    TB = max(1, rows_per_step // N)
    if B >= 2:
        TB = min(TB, -(-B // 2))
    while (TB * N) % 8 != 0:          # keep the block's sublane dim 8-aligned
        TB += 1
    Bp = ((B + TB - 1) // TB) * TB    # pad batch to a multiple of TB
    if Bp != B:
        x = jnp.concatenate([x, jnp.zeros((Bp - B, N, E), x.dtype)], axis=0)
    M = TB * N
    num_steps = Bp // TB

    # Flatten (B, N) wrapper-side so every grid block is a plain (M, E) slab.
    x2 = x.reshape(Bp * N, E)

    kernel = functools.partial(decoder_layer_kernel, head_num=head_num,
                               qkv_dim=qkv_dim, tb=TB, n=N,
                               bf16_softmax=bf16_softmax)

    # Constant-index blocks (weights / biases): fetched once, resident.
    const = lambda shape: pl.BlockSpec(shape, lambda b: (0, 0))

    out2 = pl.pallas_call(
        kernel,
        out_shape=jax.ShapeDtypeStruct((Bp * N, E), x.dtype),
        grid=(num_steps,),
        in_specs=[
            pl.BlockSpec((M, E), lambda b: (b, 0)),   # x rows for this step
            const((E, 3 * HD)),                       # fused Wqkv
            const((HD, E)),                           # Wo (multi_head_combine)
            const((1, E)),                            # bo
            const((E, F)),                            # W1
            const((1, F)),                            # b1
            const((F, E)),                            # W2
            const((1, E)),                            # b2
        ],
        out_specs=pl.BlockSpec((M, E), lambda b: (b, 0)),
        compiler_params=pltpu.CompilerParams(
            dimension_semantics=("parallel",)),
    )(x2, params["wqkv"], params["wo"], params["bo"],
      params["w1"], params["b1"], params["w2"], params["b2"])

    out = out2.reshape(Bp, N, E)
    return out[:B] if Bp != B else out


def reference_decoder_layer(x, params, *, head_num, qkv_dim):
    """Pure-JAX f32 reference replicating the PyTorch forward exactly."""
    B, N, E = x.shape
    q = x @ params["wq"]
    k = x @ params["wk"]
    v = x @ params["wv"]

    def by_heads(t):
        return t.reshape(B, N, head_num, qkv_dim).transpose(0, 2, 1, 3)

    qh, kh, vh = by_heads(q), by_heads(k), by_heads(v)       # (B, H, N, D)
    score = jnp.einsum("bhnd,bhmd->bhnm", qh, kh) / jnp.sqrt(
        jnp.float32(qkv_dim))
    w = jax.nn.softmax(score, axis=3)
    out = jnp.einsum("bhnm,bhmd->bhnd", w, vh)
    out_concat = out.transpose(0, 2, 1, 3).reshape(B, N, head_num * qkv_dim)
    mh = out_concat @ params["wo"] + params["bo"][0]
    out1 = x + mh
    out2 = jax.nn.relu(out1 @ params["w1"] + params["b1"][0]) @ params["w2"] \
        + params["b2"][0]
    return out1 + out2


def init_params(key, *, embedding_dim, head_num, qkv_dim, ff_hidden_dim):
    HD = head_num * qkv_dim
    ks = jax.random.split(key, 10)
    scale = 0.1
    return {
        "wq": scale * jax.random.normal(ks[0], (embedding_dim, HD), jnp.float32),
        "wk": scale * jax.random.normal(ks[1], (embedding_dim, HD), jnp.float32),
        "wv": scale * jax.random.normal(ks[2], (embedding_dim, HD), jnp.float32),
        "wo": scale * jax.random.normal(ks[3], (HD, embedding_dim), jnp.float32),
        "bo": scale * jax.random.normal(ks[4], (1, embedding_dim), jnp.float32),
        "w1": scale * jax.random.normal(ks[5], (embedding_dim, ff_hidden_dim), jnp.float32),
        "b1": scale * jax.random.normal(ks[6], (1, ff_hidden_dim), jnp.float32),
        "w2": scale * jax.random.normal(ks[7], (ff_hidden_dim, embedding_dim), jnp.float32),
        "b2": scale * jax.random.normal(ks[8], (1, embedding_dim), jnp.float32),
    }


if __name__ == "__main__":
    # Model hyperparameters (consistent with the module's __init__).
    embedding_dim = 32
    head_num = 4
    qkv_dim = 8           # head_num * qkv_dim == embedding_dim, as in POMO
    ff_hidden_dim = 64

    # batch=50 -> 2 grid steps of 25 batch elements (200 rows) each.
    batch = 50
    n = 8

    key = jax.random.PRNGKey(0)
    kx, kp = jax.random.split(key)
    x = jax.random.normal(kx, (batch, n, embedding_dim), jnp.float32)
    params = init_params(kp, embedding_dim=embedding_dim, head_num=head_num,
                         qkv_dim=qkv_dim, ff_hidden_dim=ff_hidden_dim)

    # One-time weight prep (fused QKV + bf16 casts), reused across calls.
    prepped = prepare_params(params)

    out = decoder_layer(x, prepped, head_num=head_num, qkv_dim=qkv_dim)
    out = jax.block_until_ready(out)

    ref = reference_decoder_layer(x, params, head_num=head_num, qkv_dim=qkv_dim)
    assert out.shape == (batch, n, embedding_dim)
    # bf16 matmul inputs with f32 accumulation -> compare at bf16-level tolerance.
    assert jnp.allclose(out, ref, atol=5e-2, rtol=5e-2), "mismatch vs reference"

    print("KERNEL_OK")
</pallas_src>

<mosaic_0001>
module attributes {stable_mosaic.version = 11 : i64} {
  func.func @decoder_layer_kernel(%arg0: i32, %arg1: memref<200x32xf32, #tpu.memory_space<vmem>>, %arg2: memref<32x96xbf16, #tpu.memory_space<vmem>>, %arg3: memref<32x32xbf16, #tpu.memory_space<vmem>>, %arg4: memref<1x32xf32, #tpu.memory_space<vmem>>, %arg5: memref<32x64xbf16, #tpu.memory_space<vmem>>, %arg6: memref<1x64xf32, #tpu.memory_space<vmem>>, %arg7: memref<64x32xbf16, #tpu.memory_space<vmem>>, %arg8: memref<1x32xf32, #tpu.memory_space<vmem>>, %arg9: memref<200x32xf32, #tpu.memory_space<vmem>>) attributes {dimension_semantics = [#tpu.dimension_semantics<parallel>], iteration_bounds = array<i64: 2>, scalar_prefetch = 0 : i64, scratch_operands = 0 : i64, tpu.core_type = #tpu.core_type<tc>, window_params = [{transform_indices = @transform_0, window_bounds = array<i64: 200, 32>}, {pipeline_mode = #tpu.pipeline_mode<synchronous>, transform_indices = @transform_1, window_bounds = array<i64: 32, 96>}, {pipeline_mode = #tpu.pipeline_mode<synchronous>, transform_indices = @transform_2, window_bounds = array<i64: 32, 32>}, {pipeline_mode = #tpu.pipeline_mode<synchronous>, transform_indices = @transform_3, window_bounds = array<i64: 1, 32>}, {pipeline_mode = #tpu.pipeline_mode<synchronous>, transform_indices = @transform_4, window_bounds = array<i64: 32, 64>}, {pipeline_mode = #tpu.pipeline_mode<synchronous>, transform_indices = @transform_5, window_bounds = array<i64: 1, 64>}, {pipeline_mode = #tpu.pipeline_mode<synchronous>, transform_indices = @transform_6, window_bounds = array<i64: 64, 32>}, {pipeline_mode = #tpu.pipeline_mode<synchronous>, transform_indices = @transform_7, window_bounds = array<i64: 1, 32>}, {transform_indices = @transform_8, window_bounds = array<i64: 200, 32>}]} {
    %c0 = arith.constant 0 : index
    %c0_0 = arith.constant 0 : index
    %0 = vector.load %arg1[%c0, %c0_0] : memref<200x32xf32, #tpu.memory_space<vmem>>, vector<200x32xf32>
    %1 = arith.truncf %0 : vector<200x32xf32> to vector<200x32xbf16>
    %c0_1 = arith.constant 0 : index
    %c0_2 = arith.constant 0 : index
    %2 = vector.load %arg2[%c0_1, %c0_2] : memref<32x96xbf16, #tpu.memory_space<vmem>>, vector<32x96xbf16>
    %cst = arith.constant dense<0.000000e+00> : vector<200x96xf32>
    %3 = tpu.matmul %1, %2, %cst {dimension_numbers = #tpu.dot_dimension_numbers<[1], [0], [0], [1], [0, 0, 1, 1], [], []>} : vector<200x32xbf16>, vector<32x96xbf16>, vector<200x96xf32> -> vector<200x96xf32>
    %4 = arith.truncf %3 : vector<200x96xf32> to vector<200x96xbf16>
    %5 = vector.shape_cast %4 : vector<200x96xbf16> to vector<25x8x96xbf16>
    %cst_3 = arith.constant 0.000000e+00 : f32
    %6 = vector.broadcast %cst_3 : f32 to vector<200x32xf32>
    %7 = vector.extract_strided_slice %5 {offsets = [0, 0, 0], sizes = [25, 8, 8], strides = [1, 1, 1]} : vector<25x8x96xbf16> to vector<25x8x8xbf16>
    %8 = vector.extract_strided_slice %5 {offsets = [0, 0, 32], sizes = [25, 8, 8], strides = [1, 1, 1]} : vector<25x8x96xbf16> to vector<25x8x8xbf16>
    %9 = vector.extract_strided_slice %5 {offsets = [0, 0, 64], sizes = [25, 8, 8], strides = [1, 1, 1]} : vector<25x8x96xbf16> to vector<25x8x8xbf16>
    %cst_4 = arith.constant dense<0.000000e+00> : vector<25x8x8xf32>
    %10 = tpu.matmul %7, %8, %cst_4 {dimension_numbers = #tpu.dot_dimension_numbers<[2], [2], [1], [1], [0, 0, 0, 1, 1, 1], [0], [0]>} : vector<25x8x8xbf16>, vector<25x8x8xbf16>, vector<25x8x8xf32> -> vector<25x8x8xf32>
    %cst_5 = arith.constant 0.353553385 : f32
    %11 = vector.broadcast %cst_5 : f32 to vector<25x8x8xf32>
    %12 = arith.mulf %10, %11 : vector<25x8x8xf32>
    %cst_6 = arith.constant dense<0xFF800000> : vector<25x8xf32>
    %13 = vector.multi_reduction <maximumf>, %12, %cst_6 [2] : vector<25x8x8xf32> to vector<25x8xf32>
    %14 = vector.shape_cast %13 : vector<25x8xf32> to vector<25x8x1xf32>
    %15 = vector.broadcast %14 : vector<25x8x1xf32> to vector<25x8x8xf32>
    %16 = arith.subf %12, %15 : vector<25x8x8xf32>
    %17 = math.exp %16 : vector<25x8x8xf32>
    %cst_7 = arith.constant dense<0.000000e+00> : vector<25x8xf32>
    %18 = vector.multi_reduction <add>, %17, %cst_7 [2] : vector<25x8x8xf32> to vector<25x8xf32>
    %19 = vector.shape_cast %18 : vector<25x8xf32> to vector<25x8x1xf32>
    %20 = tpu.reciprocal %19 {approx = true} : vector<25x8x1xf32> -> vector<25x8x1xf32>
    %21 = vector.broadcast %20 : vector<25x8x1xf32> to vector<25x8x8xf32>
    %22 = arith.mulf %17, %21 : vector<25x8x8xf32>
    %23 = arith.truncf %22 : vector<25x8x8xf32> to vector<25x8x8xbf16>
    %cst_8 = arith.constant dense<0.000000e+00> : vector<25x8x8xf32>
    %24 = tpu.matmul %23, %9, %cst_8 {dimension_numbers = #tpu.dot_dimension_numbers<[2], [1], [1], [2], [0, 0, 0, 1, 1, 2], [0], [0]>} : vector<25x8x8xbf16>, vector<25x8x8xbf16>, vector<25x8x8xf32> -> vector<25x8x8xf32>
    %25 = vector.shape_cast %24 : vector<25x8x8xf32> to vector<200x8xf32>
    %26 = arith.truncf %25 : vector<200x8xf32> to vector<200x8xbf16>
    %c0_9 = arith.constant 0 : index
    %c0_10 = arith.constant 0 : index
    %27 = vector.load %arg3[%c0_9, %c0_10] : memref<32x32xbf16, #tpu.memory_space<vmem>>, vector<8x32xbf16>
    %cst_11 = arith.constant dense<0.000000e+00> : vector<200x32xf32>
    %28 = tpu.matmul %26, %27, %cst_11 {dimension_numbers = #tpu.dot_dimension_numbers<[1], [0], [0], [1], [0, 0, 1, 1], [], []>} : vector<200x8xbf16>, vector<8x32xbf16>, vector<200x32xf32> -> vector<200x32xf32>
    %29 = arith.addf %6, %28 : vector<200x32xf32>
    %30 = vector.extract_strided_slice %5 {offsets = [0, 0, 8], sizes = [25, 8, 8], strides = [1, 1, 1]} : vector<25x8x96xbf16> to vector<25x8x8xbf16>
    %31 = vector.extract_strided_slice %5 {offsets = [0, 0, 40], sizes = [25, 8, 8], strides = [1, 1, 1]} : vector<25x8x96xbf16> to vector<25x8x8xbf16>
    %32 = vector.extract_strided_slice %5 {offsets = [0, 0, 72], sizes = [25, 8, 8], strides = [1, 1, 1]} : vector<25x8x96xbf16> to vector<25x8x8xbf16>
    %cst_12 = arith.constant dense<0.000000e+00> : vector<25x8x8xf32>
    %33 = tpu.matmul %30, %31, %cst_12 {dimension_numbers = #tpu.dot_dimension_numbers<[2], [2], [1], [1], [0, 0, 0, 1, 1, 1], [0], [0]>} : vector<25x8x8xbf16>, vector<25x8x8xbf16>, vector<25x8x8xf32> -> vector<25x8x8xf32>
    %cst_13 = arith.constant 0.353553385 : f32
    %34 = vector.broadcast %cst_13 : f32 to vector<25x8x8xf32>
    %35 = arith.mulf %33, %34 : vector<25x8x8xf32>
    %cst_14 = arith.constant dense<0xFF800000> : vector<25x8xf32>
    %36 = vector.multi_reduction <maximumf>, %35, %cst_14 [2] : vector<25x8x8xf32> to vector<25x8xf32>
    %37 = vector.shape_cast %36 : vector<25x8xf32> to vector<25x8x1xf32>
    %38 = vector.broadcast %37 : vector<25x8x1xf32> to vector<25x8x8xf32>
    %39 = arith.subf %35, %38 : vector<25x8x8xf32>
    %40 = math.exp %39 : vector<25x8x8xf32>
    %cst_15 = arith.constant dense<0.000000e+00> : vector<25x8xf32>
    %41 = vector.multi_reduction <add>, %40, %cst_15 [2] : vector<25x8x8xf32> to vector<25x8xf32>
    %42 = vector.shape_cast %41 : vector<25x8xf32> to vector<25x8x1xf32>
    %43 = tpu.reciprocal %42 {approx = true} : vector<25x8x1xf32> -> vector<25x8x1xf32>
    %44 = vector.broadcast %43 : vector<25x8x1xf32> to vector<25x8x8xf32>
    %45 = arith.mulf %40, %44 : vector<25x8x8xf32>
    %46 = arith.truncf %45 : vector<25x8x8xf32> to vector<25x8x8xbf16>
    %cst_16 = arith.constant dense<0.000000e+00> : vector<25x8x8xf32>
    %47 = tpu.matmul %46, %32, %cst_16 {dimension_numbers = #tpu.dot_dimension_numbers<[2], [1], [1], [2], [0, 0, 0, 1, 1, 2], [0], [0]>} : vector<25x8x8xbf16>, vector<25x8x8xbf16>, vector<25x8x8xf32> -> vector<25x8x8xf32>
    %48 = vector.shape_cast %47 : vector<25x8x8xf32> to vector<200x8xf32>
    %49 = arith.truncf %48 : vector<200x8xf32> to vector<200x8xbf16>
    %c8 = arith.constant 8 : index
    %c0_17 = arith.constant 0 : index
    %50 = vector.load %arg3[%c8, %c0_17] : memref<32x32xbf16, #tpu.memory_space<vmem>>, vector<8x32xbf16>
    %cst_18 = arith.constant dense<0.000000e+00> : vector<200x32xf32>
    %51 = tpu.matmul %49, %50, %cst_18 {dimension_numbers = #tpu.dot_dimension_numbers<[1], [0], [0], [1], [0, 0, 1, 1], [], []>} : vector<200x8xbf16>, vector<8x32xbf16>, vector<200x32xf32> -> vector<200x32xf32>
    %52 = arith.addf %29, %51 : vector<200x32xf32>
    %53 = vector.extract_strided_slice %5 {offsets = [0, 0, 16], sizes = [25, 8, 8], strides = [1, 1, 1]} : vector<25x8x96xbf16> to vector<25x8x8xbf16>
    %54 = vector.extract_strided_slice %5 {offsets = [0, 0, 48], sizes = [25, 8, 8], strides = [1, 1, 1]} : vector<25x8x96xbf16> to vector<25x8x8xbf16>
    %55 = vector.extract_strided_slice %5 {offsets = [0, 0, 80], sizes = [25, 8, 8], strides = [1, 1, 1]} : vector<25x8x96xbf16> to vector<25x8x8xbf16>
    %cst_19 = arith.constant dense<0.000000e+00> : vector<25x8x8xf32>
    %56 = tpu.matmul %53, %54, %cst_19 {dimension_numbers = #tpu.dot_dimension_numbers<[2], [2], [1], [1], [0, 0, 0, 1, 1, 1], [0], [0]>} : vector<25x8x8xbf16>, vector<25x8x8xbf16>, vector<25x8x8xf32> -> vector<25x8x8xf32>
    %cst_20 = arith.constant 0.353553385 : f32
    %57 = vector.broadcast %cst_20 : f32 to vector<25x8x8xf32>
    %58 = arith.mulf %56, %57 : vector<25x8x8xf32>
    %cst_21 = arith.constant dense<0xFF800000> : vector<25x8xf32>
    %59 = vector.multi_reduction <maximumf>, %58, %cst_21 [2] : vector<25x8x8xf32> to vector<25x8xf32>
    %60 = vector.shape_cast %59 : vector<25x8xf32> to vector<25x8x1xf32>
    %61 = vector.broadcast %60 : vector<25x8x1xf32> to vector<25x8x8xf32>
    %62 = arith.subf %58, %61 : vector<25x8x8xf32>
    %63 = math.exp %62 : vector<25x8x8xf32>
    %cst_22 = arith.constant dense<0.000000e+00> : vector<25x8xf32>
    %64 = vector.multi_reduction <add>, %63, %cst_22 [2] : vector<25x8x8xf32> to vector<25x8xf32>
    %65 = vector.shape_cast %64 : vector<25x8xf32> to vector<25x8x1xf32>
    %66 = tpu.reciprocal %65 {approx = true} : vector<25x8x1xf32> -> vector<25x8x1xf32>
    %67 = vector.broadcast %66 : vector<25x8x1xf32> to vector<25x8x8xf32>
    %68 = arith.mulf %63, %67 : vector<25x8x8xf32>
    %69 = arith.truncf %68 : vector<25x8x8xf32> to vector<25x8x8xbf16>
    %cst_23 = arith.constant dense<0.000000e+00> : vector<25x8x8xf32>
    %70 = tpu.matmul %69, %55, %cst_23 {dimension_numbers = #tpu.dot_dimension_numbers<[2], [1], [1], [2], [0, 0, 0, 1, 1, 2], [0], [0]>} : vector<25x8x8xbf16>, vector<25x8x8xbf16>, vector<25x8x8xf32> -> vector<25x8x8xf32>
    %71 = vector.shape_cast %70 : vector<25x8x8xf32> to vector<200x8xf32>
    %72 = arith.truncf %71 : vector<200x8xf32> to vector<200x8xbf16>
    %c16 = arith.constant 16 : index
    %c0_24 = arith.constant 0 : index
    %73 = vector.load %arg3[%c16, %c0_24] : memref<32x32xbf16, #tpu.memory_space<vmem>>, vector<8x32xbf16>
    %cst_25 = arith.constant dense<0.000000e+00> : vector<200x32xf32>
    %74 = tpu.matmul %72, %73, %cst_25 {dimension_numbers = #tpu.dot_dimension_numbers<[1], [0], [0], [1], [0, 0, 1, 1], [], []>} : vector<200x8xbf16>, vector<8x32xbf16>, vector<200x32xf32> -> vector<200x32xf32>
    %75 = arith.addf %52, %74 : vector<200x32xf32>
    %76 = vector.extract_strided_slice %5 {offsets = [0, 0, 24], sizes = [25, 8, 8], strides = [1, 1, 1]} : vector<25x8x96xbf16> to vector<25x8x8xbf16>
    %77 = vector.extract_strided_slice %5 {offsets = [0, 0, 56], sizes = [25, 8, 8], strides = [1, 1, 1]} : vector<25x8x96xbf16> to vector<25x8x8xbf16>
    %78 = vector.extract_strided_slice %5 {offsets = [0, 0, 88], sizes = [25, 8, 8], strides = [1, 1, 1]} : vector<25x8x96xbf16> to vector<25x8x8xbf16>
    %cst_26 = arith.constant dense<0.000000e+00> : vector<25x8x8xf32>
    %79 = tpu.matmul %76, %77, %cst_26 {dimension_numbers = #tpu.dot_dimension_numbers<[2], [2], [1], [1], [0, 0, 0, 1, 1, 1], [0], [0]>} : vector<25x8x8xbf16>, vector<25x8x8xbf16>, vector<25x8x8xf32> -> vector<25x8x8xf32>
    %cst_27 = arith.constant 0.353553385 : f32
    %80 = vector.broadcast %cst_27 : f32 to vector<25x8x8xf32>
    %81 = arith.mulf %79, %80 : vector<25x8x8xf32>
    %cst_28 = arith.constant dense<0xFF800000> : vector<25x8xf32>
    %82 = vector.multi_reduction <maximumf>, %81, %cst_28 [2] : vector<25x8x8xf32> to vector<25x8xf32>
    %83 = vector.shape_cast %82 : vector<25x8xf32> to vector<25x8x1xf32>
    %84 = vector.broadcast %83 : vector<25x8x1xf32> to vector<25x8x8xf32>
    %85 = arith.subf %81, %84 : vector<25x8x8xf32>
    %86 = math.exp %85 : vector<25x8x8xf32>
    %cst_29 = arith.constant dense<0.000000e+00> : vector<25x8xf32>
    %87 = vector.multi_reduction <add>, %86, %cst_29 [2] : vector<25x8x8xf32> to vector<25x8xf32>
    %88 = vector.shape_cast %87 : vector<25x8xf32> to vector<25x8x1xf32>
    %89 = tpu.reciprocal %88 {approx = true} : vector<25x8x1xf32> -> vector<25x8x1xf32>
    %90 = vector.broadcast %89 : vector<25x8x1xf32> to vector<25x8x8xf32>
    %91 = arith.mulf %86, %90 : vector<25x8x8xf32>
    %92 = arith.truncf %91 : vector<25x8x8xf32> to vector<25x8x8xbf16>
    %cst_30 = arith.constant dense<0.000000e+00> : vector<25x8x8xf32>
    %93 = tpu.matmul %92, %78, %cst_30 {dimension_numbers = #tpu.dot_dimension_numbers<[2], [1], [1], [2], [0, 0, 0, 1, 1, 2], [0], [0]>} : vector<25x8x8xbf16>, vector<25x8x8xbf16>, vector<25x8x8xf32> -> vector<25x8x8xf32>
    %94 = vector.shape_cast %93 : vector<25x8x8xf32> to vector<200x8xf32>
    %95 = arith.truncf %94 : vector<200x8xf32> to vector<200x8xbf16>
    %c24 = arith.constant 24 : index
    %c0_31 = arith.constant 0 : index
    %96 = vector.load %arg3[%c24, %c0_31] : memref<32x32xbf16, #tpu.memory_space<vmem>>, vector<8x32xbf16>
    %cst_32 = arith.constant dense<0.000000e+00> : vector<200x32xf32>
    %97 = tpu.matmul %95, %96, %cst_32 {dimension_numbers = #tpu.dot_dimension_numbers<[1], [0], [0], [1], [0, 0, 1, 1], [], []>} : vector<200x8xbf16>, vector<8x32xbf16>, vector<200x32xf32> -> vector<200x32xf32>
    %98 = arith.addf %75, %97 : vector<200x32xf32>
    %99 = arith.addf %0, %98 : vector<200x32xf32>
    %c0_33 = arith.constant 0 : index
    %c0_34 = arith.constant 0 : index
    %100 = vector.load %arg4[%c0_33, %c0_34] : memref<1x32xf32, #tpu.memory_space<vmem>>, vector<1x32xf32>
    %101 = vector.broadcast %100 : vector<1x32xf32> to vector<200x32xf32>
    %102 = arith.addf %99, %101 : vector<200x32xf32>
    %103 = arith.truncf %102 : vector<200x32xf32> to vector<200x32xbf16>
    %c0_35 = arith.constant 0 : index
    %c0_36 = arith.constant 0 : index
    %104 = vector.load %arg5[%c0_35, %c0_36] : memref<32x64xbf16, #tpu.memory_space<vmem>>, vector<32x64xbf16>
    %cst_37 = arith.constant dense<0.000000e+00> : vector<200x64xf32>
    %105 = tpu.matmul %103, %104, %cst_37 {dimension_numbers = #tpu.dot_dimension_numbers<[1], [0], [0], [1], [0, 0, 1, 1], [], []>} : vector<200x32xbf16>, vector<32x64xbf16>, vector<200x64xf32> -> vector<200x64xf32>
    %c0_38 = arith.constant 0 : index
    %c0_39 = arith.constant 0 : index
    %106 = vector.load %arg6[%c0_38, %c0_39] : memref<1x64xf32, #tpu.memory_space<vmem>>, vector<1x64xf32>
    %107 = vector.broadcast %106 : vector<1x64xf32> to vector<200x64xf32>
    %108 = arith.addf %105, %107 : vector<200x64xf32>
    %cst_40 = arith.constant 0.000000e+00 : f32
    %109 = vector.broadcast %cst_40 : f32 to vector<200x64xf32>
    %110 = arith.maximumf %108, %109 : vector<200x64xf32>
    %111 = arith.truncf %110 : vector<200x64xf32> to vector<200x64xbf16>
    %c0_41 = arith.constant 0 : index
    %c0_42 = arith.constant 0 : index
    %112 = vector.load %arg7[%c0_41, %c0_42] : memref<64x32xbf16, #tpu.memory_space<vmem>>, vector<64x32xbf16>
    %cst_43 = arith.constant dense<0.000000e+00> : vector<200x32xf32>
    %113 = tpu.matmul %111, %112, %cst_43 {dimension_numbers = #tpu.dot_dimension_numbers<[1], [0], [0], [1], [0, 0, 1, 1], [], []>} : vector<200x64xbf16>, vector<64x32xbf16>, vector<200x32xf32> -> vector<200x32xf32>
    %c0_44 = arith.constant 0 : index
    %c0_45 = arith.constant 0 : index
    %114 = vector.load %arg8[%c0_44, %c0_45] : memref<1x32xf32, #tpu.memory_space<vmem>>, vector<1x32xf32>
    %115 = vector.broadcast %114 : vector<1x32xf32> to vector<200x32xf32>
    %116 = arith.addf %113, %115 : vector<200x32xf32>
    %117 = arith.addf %102, %116 : vector<200x32xf32>
    %c0_46 = arith.constant 0 : index
    %c0_47 = arith.constant 0 : index
    %118 = vector.load %arg9[%c0_46, %c0_47] : memref<200x32xf32, #tpu.memory_space<vmem>>, vector<200x32xf32>
    tpu.vector_store %arg9[%c0_46, %c0_47], %117 {strides = array<i32>} : memref<200x32xf32, #tpu.memory_space<vmem>>, vector<200x32xf32>,
    return
  }
  func.func @transform_0(%arg0: i32) -> (i32, i32) {
    %c0_i32 = arith.constant 0 : i32
    %c0_i32_0 = arith.constant 0 : i32
    return %arg0, %c0_i32 : i32, i32
  }
  func.func @transform_1(%arg0: i32) -> (i32, i32) {
    %c0_i32 = arith.constant 0 : i32
    %c0_i32_0 = arith.constant 0 : i32
    %c0_i32_1 = arith.constant 0 : i32
    return %c0_i32, %c0_i32_0 : i32, i32
  }
  func.func @transform_2(%arg0: i32) -> (i32, i32) {
    %c0_i32 = arith.constant 0 : i32
    %c0_i32_0 = arith.constant 0 : i32
    %c0_i32_1 = arith.constant 0 : i32
    return %c0_i32, %c0_i32_0 : i32, i32
  }
  func.func @transform_3(%arg0: i32) -> (i32, i32) {
    %c0_i32 = arith.constant 0 : i32
    %c0_i32_0 = arith.constant 0 : i32
    %c0_i32_1 = arith.constant 0 : i32
    return %c0_i32, %c0_i32_0 : i32, i32
  }
  func.func @transform_4(%arg0: i32) -> (i32, i32) {
    %c0_i32 = arith.constant 0 : i32
    %c0_i32_0 = arith.constant 0 : i32
    %c0_i32_1 = arith.constant 0 : i32
    return %c0_i32, %c0_i32_0 : i32, i32
  }
  func.func @transform_5(%arg0: i32) -> (i32, i32) {
    %c0_i32 = arith.constant 0 : i32
    %c0_i32_0 = arith.constant 0 : i32
    %c0_i32_1 = arith.constant 0 : i32
    return %c0_i32, %c0_i32_0 : i32, i32
  }
  func.func @transform_6(%arg0: i32) -> (i32, i32) {
    %c0_i32 = arith.constant 0 : i32
    %c0_i32_0 = arith.constant 0 : i32
    %c0_i32_1 = arith.constant 0 : i32
    return %c0_i32, %c0_i32_0 : i32, i32
  }
  func.func @transform_7(%arg0: i32) -> (i32, i32) {
    %c0_i32 = arith.constant 0 : i32
    %c0_i32_0 = arith.constant 0 : i32
    %c0_i32_1 = arith.constant 0 : i32
    return %c0_i32, %c0_i32_0 : i32, i32
  }
  func.func @transform_8(%arg0: i32) -> (i32, i32) {
    %c0_i32 = arith.constant 0 : i32
    %c0_i32_0 = arith.constant 0 : i32
    return %arg0, %c0_i32 : i32, i32
  }
}

</mosaic_0001>

<llo_original>
// kernel: tpu_custom_call.1
$region0: #{tpu_custom_call.1}
  #allocation0 [shape = 'u32[]', space=smem, size = 0x4, offset = 0x4, fixed_abs, tag = 'smem constant byte address 0x4 - core index']
  #allocation1 [shape = 'u32[72,128]{1,0:T(1,128)}', space=vmem, size = 0x9000, scoped, tag = 'internal scratch']
  %s0 = inlined_call_operand.vmem [shape: f32[400,32], index: 0, kind: input, shape index: {}]
  %s1 = inlined_call_operand.vmem [shape: bf16[32,96], index: 1, kind: input, shape index: {}]
  %s2 = inlined_call_operand.vmem [shape: bf16[32,32], index: 2, kind: input, shape index: {}]
  %s3 = inlined_call_operand.vmem [shape: f32[1,32], index: 3, kind: input, shape index: {}]
  %s4 = inlined_call_operand.vmem [shape: bf16[32,64], index: 4, kind: input, shape index: {}]
  %s5 = inlined_call_operand.vmem [shape: f32[1,64], index: 5, kind: input, shape index: {}]
  %s6 = inlined_call_operand.vmem [shape: bf16[64,32], index: 6, kind: input, shape index: {}]
  %s7 = inlined_call_operand.vmem [shape: f32[1,32], index: 7, kind: input, shape index: {}]
  %s8 = inlined_call_operand.vmem [shape: f32[400,32], index: 8, kind: output, shape index: {}]
  %s9 = sld [smem:[#allocation0]]
  $region65: #{tpu_custom_call.1} parent=0
    _
  %s11 = ssub.s32 1, %s9
  %s12 = scalar_select 0, %s11, %s9
  loop: start=0, step=1, limit=4
  $region2: #{tpu_custom_call.1} parent=0 // loop_pre_header
    _
  $region3: #{tpu_custom_call.1} parent=0 // loop_header
    %s14 = sphi 0, %s18
    %p15 = scmp.ge.s32.totalorder %s14, 4
    %s24 = sphi 0, %s26
    %s27 = sphi 0, %s24
    %s28 = sphi 0, %s27
    %s44 = sphi 0, %s28
    %s48 = sphi 0, %s48
    %s50 = sphi 0, %s48
    %s51 = sphi 0, %s50
    %s65 = sphi 0, %s51
    %s69 = sphi 0, %s69
    %s71 = sphi 0, %s69
    %s72 = sphi 0, %s71
    %s86 = sphi 0, %s72
    %s90 = sphi 0, %s90
    %s92 = sphi 0, %s90
    %s93 = sphi 0, %s92
    %s107 = sphi 0, %s93
    %s111 = sphi 0, %s111
    %s113 = sphi 0, %s111
    %s114 = sphi 0, %s113
    %s128 = sphi 0, %s114
    %s132 = sphi 0, %s132
    %s134 = sphi 0, %s132
    %s135 = sphi 0, %s134
    %s149 = sphi 0, %s135
    %s153 = sphi 0, %s153
    %s155 = sphi 0, %s153
    %s156 = sphi 0, %s155
    %s170 = sphi 0, %s156
    %s174 = sphi 0, %s174
    %s176 = sphi 0, %s174
    %s177 = sphi 0, %s176
    %s191 = sphi 0, %s177
    %s197 = sphi 0, %s199
    %s200 = sphi 0, %s197
    %s201 = sphi 0, %s200
    %s217 = sphi 0, %s201
  $region4: #{tpu_custom_call.1} parent=0 // loop_header_branch
    %17 = sbr.rel (%p15) target = $region8
  $region5: #{tpu_custom_call.1} parent=0 // loop_body
    %s19 = ssub.s32 %s14, 1
    %s20 = ssub.s32 %s14, 2
    %s21 = sadd.s32 %s14, 1
    %s22 = ssub.s32 %s14, %s21
    %p23 = scmp.eq.s32.totalorder %s22, 0
    %s25 = sadd.s32 %s24, 1
    %s26 = scalar_select %p23, %s24, %s25
    %p29 = pneg %p23
    %p30 = scmp.eq.s32.totalorder %s14, 1
    %p31 = por %p29, %p30
    %p32 = scmp.ne.s32.totalorder %s24, %s27
    %p33 = scmp.eq.s32.totalorder %s14, 0
    %p34 = por %p32, %p33
    %p35 = scmp.ne.s32.totalorder %s24, %s27
    %p36 = scmp.eq.s32.totalorder %s19, 1
    %p37 = por %p35, %p36
    %p38 = scmp.ne.s32.totalorder %s27, %s28
    %p39 = scmp.eq.s32.totalorder %s19, 0
    %p40 = por %p38, %p39
    %p41 = scmp.ne.s32.totalorder %s27, %s28
    %p42 = scmp.eq.s32.totalorder %s20, 1
    %p43 = por %p41, %p42
    %p45 = scmp.ne.s32.totalorder %s28, %s44
    %p46 = scmp.eq.s32.totalorder %s20, 0
    %p47 = por %p45, %p46
    %s49 = sadd.s32 %s48, 1
    %p52 = scmp.eq.s32.totalorder %s14, 1
    %p53 = scmp.ne.s32.totalorder %s48, %s50
    %p54 = scmp.eq.s32.totalorder %s14, 0
    %p55 = por %p53, %p54
    %p56 = scmp.ne.s32.totalorder %s48, %s50
    %p57 = scmp.eq.s32.totalorder %s19, 1
    %p58 = por %p56, %p57
    %p59 = scmp.ne.s32.totalorder %s50, %s51
    %p60 = scmp.eq.s32.totalorder %s19, 0
    %p61 = por %p59, %p60
    %p62 = scmp.ne.s32.totalorder %s50, %s51
    %p63 = scmp.eq.s32.totalorder %s20, 1
    %p64 = por %p62, %p63
    %p66 = scmp.ne.s32.totalorder %s51, %s65
    %p67 = scmp.eq.s32.totalorder %s20, 0
    %p68 = por %p66, %p67
    %s70 = sadd.s32 %s69, 1
    %p73 = scmp.eq.s32.totalorder %s14, 1
    %p74 = scmp.ne.s32.totalorder %s69, %s71
    %p75 = scmp.eq.s32.totalorder %s14, 0
    %p76 = por %p74, %p75
    %p77 = scmp.ne.s32.totalorder %s69, %s71
    %p78 = scmp.eq.s32.totalorder %s19, 1
    %p79 = por %p77, %p78
    %p80 = scmp.ne.s32.totalorder %s71, %s72
    %p81 = scmp.eq.s32.totalorder %s19, 0
    %p82 = por %p80, %p81
    %p83 = scmp.ne.s32.totalorder %s71, %s72
    %p84 = scmp.eq.s32.totalorder %s20, 1
    %p85 = por %p83, %p84
    %p87 = scmp.ne.s32.totalorder %s72, %s86
    %p88 = scmp.eq.s32.totalorder %s20, 0
    %p89 = por %p87, %p88
    %s91 = sadd.s32 %s90, 1
    %p94 = scmp.eq.s32.totalorder %s14, 1
    %p95 = scmp.ne.s32.totalorder %s90, %s92
    %p96 = scmp.eq.s32.totalorder %s14, 0
    %p97 = por %p95, %p96
    %p98 = scmp.ne.s32.totalorder %s90, %s92
    %p99 = scmp.eq.s32.totalorder %s19, 1
    %p100 = por %p98, %p99
    %p101 = scmp.ne.s32.totalorder %s92, %s93
    %p102 = scmp.eq.s32.totalorder %s19, 0
    %p103 = por %p101, %p102
    %p104 = scmp.ne.s32.totalorder %s92, %s93
    %p105 = scmp.eq.s32.totalorder %s20, 1
    %p106 = por %p104, %p105
    %p108 = scmp.ne.s32.totalorder %s93, %s107
    %p109 = scmp.eq.s32.totalorder %s20, 0
    %p110 = por %p108, %p109
    %s112 = sadd.s32 %s111, 1
    %p115 = scmp.eq.s32.totalorder %s14, 1
    %p116 = scmp.ne.s32.totalorder %s111, %s113
    %p117 = scmp.eq.s32.totalorder %s14, 0
    %p118 = por %p116, %p117
    %p119 = scmp.ne.s32.totalorder %s111, %s113
    %p120 = scmp.eq.s32.totalorder %s19, 1
    %p121 = por %p119, %p120
    %p122 = scmp.ne.s32.totalorder %s113, %s114
    %p123 = scmp.eq.s32.totalorder %s19, 0
    %p124 = por %p122, %p123
    %p125 = scmp.ne.s32.totalorder %s113, %s114
    %p126 = scmp.eq.s32.totalorder %s20, 1
    %p127 = por %p125, %p126
    %p129 = scmp.ne.s32.totalorder %s114, %s128
    %p130 = scmp.eq.s32.totalorder %s20, 0
    %p131 = por %p129, %p130
    %s133 = sadd.s32 %s132, 1
    %p136 = scmp.eq.s32.totalorder %s14, 1
    %p137 = scmp.ne.s32.totalorder %s132, %s134
    %p138 = scmp.eq.s32.totalorder %s14, 0
    %p139 = por %p137, %p138
    %p140 = scmp.ne.s32.totalorder %s132, %s134
    %p141 = scmp.eq.s32.totalorder %s19, 1
    %p142 = por %p140, %p141
    %p143 = scmp.ne.s32.totalorder %s134, %s135
    %p144 = scmp.eq.s32.totalorder %s19, 0
    %p145 = por %p143, %p144
    %p146 = scmp.ne.s32.totalorder %s134, %s135
    %p147 = scmp.eq.s32.totalorder %s20, 1
    %p148 = por %p146, %p147
    %p150 = scmp.ne.s32.totalorder %s135, %s149
    %p151 = scmp.eq.s32.totalorder %s20, 0
    %p152 = por %p150, %p151
    %s154 = sadd.s32 %s153, 1
    %p157 = scmp.eq.s32.totalorder %s14, 1
    %p158 = scmp.ne.s32.totalorder %s153, %s155
    %p159 = scmp.eq.s32.totalorder %s14, 0
    %p160 = por %p158, %p159
    %p161 = scmp.ne.s32.totalorder %s153, %s155
    %p162 = scmp.eq.s32.totalorder %s19, 1
    %p163 = por %p161, %p162
    %p164 = scmp.ne.s32.totalorder %s155, %s156
    %p165 = scmp.eq.s32.totalorder %s19, 0
    %p166 = por %p164, %p165
    %p167 = scmp.ne.s32.totalorder %s155, %s156
    %p168 = scmp.eq.s32.totalorder %s20, 1
    %p169 = por %p167, %p168
    %p171 = scmp.ne.s32.totalorder %s156, %s170
    %p172 = scmp.eq.s32.totalorder %s20, 0
    %p173 = por %p171, %p172
    %s175 = sadd.s32 %s174, 1
    %p178 = scmp.eq.s32.totalorder %s14, 1
    %p179 = scmp.ne.s32.totalorder %s174, %s176
    %p180 = scmp.eq.s32.totalorder %s14, 0
    %p181 = por %p179, %p180
    %p182 = scmp.ne.s32.totalorder %s174, %s176
    %p183 = scmp.eq.s32.totalorder %s19, 1
    %p184 = por %p182, %p183
    %p185 = scmp.ne.s32.totalorder %s176, %s177
    %p186 = scmp.eq.s32.totalorder %s19, 0
    %p187 = por %p185, %p186
    %p188 = scmp.ne.s32.totalorder %s176, %s177
    %p189 = scmp.eq.s32.totalorder %s20, 1
    %p190 = por %p188, %p189
    %p192 = scmp.ne.s32.totalorder %s177, %s191
    %p193 = scmp.eq.s32.totalorder %s20, 0
    %p194 = por %p192, %p193
    %s195 = ssub.s32 %s14, %s21
    %p196 = scmp.eq.s32.totalorder %s195, 0
    %s198 = sadd.s32 %s197, 1
    %s199 = scalar_select %p196, %s197, %s198
    %p202 = pneg %p196
    %p203 = scmp.eq.s32.totalorder %s14, 1
    %p204 = por %p202, %p203
    %p205 = scmp.ne.s32.totalorder %s197, %s200
    %p206 = scmp.eq.s32.totalorder %s14, 0
    %p207 = por %p205, %p206
    %p208 = scmp.ne.s32.totalorder %s197, %s200
    %p209 = scmp.eq.s32.totalorder %s19, 1
    %p210 = por %p208, %p209
    %p211 = scmp.ne.s32.totalorder %s200, %s201
    %p212 = scmp.eq.s32.totalorder %s19, 0
    %p213 = por %p211, %p212
    %p214 = scmp.ne.s32.totalorder %s200, %s201
    %p215 = scmp.eq.s32.totalorder %s20, 1
    %p216 = por %p214, %p215
    %p218 = scmp.ne.s32.totalorder %s201, %s217
    %p219 = scmp.eq.s32.totalorder %s20, 0
    %p220 = por %p218, %p219
    %p221 = scmp.le.s32.totalorder 1, %s14
    %p222 = scmp.lt.s32.totalorder %s14, 3
    %p223 = pnand %p221, %p222
    %p224 = pneg %p223
    // Predicated region
    $region9: #{tpu_custom_call.1} parent=5 // pred_check
      _
    $region10: #{tpu_custom_call.1} parent=5 // pred_check_branch
      %226 = sbr.rel (%p223) target = $region12
    $region11: #{tpu_custom_call.1} parent=5 // pred_region
      %s227 = ssub.s32 %s14, 1
      // Predicated region
      $region13: #{tpu_custom_call.1} parent=11 // pred_check
        %p228 = pneg %p61
      $region14: #{tpu_custom_call.1} parent=11 // pred_check_branch
        %230 = sbr.rel (%p228) target = $region16
      $region15: #{tpu_custom_call.1} parent=11 // pred_region
        _
      $region16: #{tpu_custom_call.1} parent=11 // pred_fallthru
        _
      // Predicated region
      $region17: #{tpu_custom_call.1} parent=11 // pred_check
        %p231 = pneg %p82
      $region18: #{tpu_custom_call.1} parent=11 // pred_check_branch
        %233 = sbr.rel (%p231) target = $region20
      $region19: #{tpu_custom_call.1} parent=11 // pred_region
        _
      $region20: #{tpu_custom_call.1} parent=11 // pred_fallthru
        _
      // Predicated region
      $region21: #{tpu_custom_call.1} parent=11 // pred_check
        %p234 = pneg %p103
      $region22: #{tpu_custom_call.1} parent=11 // pred_check_branch
        %236 = sbr.rel (%p234) target = $region24
      $region23: #{tpu_custom_call.1} parent=11 // pred_region
        _
      $region24: #{tpu_custom_call.1} parent=11 // pred_fallthru
        _
      // Predicated region
      $region25: #{tpu_custom_call.1} parent=11 // pred_check
        %p237 = pneg %p124
      $region26: #{tpu_custom_call.1} parent=11 // pred_check_branch
        %239 = sbr.rel (%p237) target = $region28
      $region27: #{tpu_custom_call.1} parent=11 // pred_region
        _
      $region28: #{tpu_custom_call.1} parent=11 // pred_fallthru
        _
      // Predicated region
      $region29: #{tpu_custom_call.1} parent=11 // pred_check
        %p240 = pneg %p145
      $region30: #{tpu_custom_call.1} parent=11 // pred_check_branch
        %242 = sbr.rel (%p240) target = $region32
      $region31: #{tpu_custom_call.1} parent=11 // pred_region
        _
      $region32: #{tpu_custom_call.1} parent=11 // pred_fallthru
        _
      // Predicated region
      $region33: #{tpu_custom_call.1} parent=11 // pred_check
        %p243 = pneg %p166
      $region34: #{tpu_custom_call.1} parent=11 // pred_check_branch
        %245 = sbr.rel (%p243) target = $region36
      $region35: #{tpu_custom_call.1} parent=11 // pred_region
        _
      $region36: #{tpu_custom_call.1} parent=11 // pred_fallthru
        _
      // Predicated region
      $region37: #{tpu_custom_call.1} parent=11 // pred_check
        %p246 = pneg %p187
      $region38: #{tpu_custom_call.1} parent=11 // pred_check_branch
        %248 = sbr.rel (%p246) target = $region40
      $region39: #{tpu_custom_call.1} parent=11 // pred_region
        _
      $region40: #{tpu_custom_call.1} parent=11 // pred_fallthru
        _
    $region12: #{tpu_custom_call.1} parent=5 // pred_fallthru
      _
    %p249 = scmp.lt.s32.totalorder %s14, 2
    // Predicated region
    $region41: #{tpu_custom_call.1} parent=5 // pred_check
      %p250 = pneg %p249
    $region42: #{tpu_custom_call.1} parent=5 // pred_check_branch
      %252 = sbr.rel (%p250) target = $region44
    $region43: #{tpu_custom_call.1} parent=5 // pred_region
      // Predicated region
      $region45: #{tpu_custom_call.1} parent=43 // pred_check
        %p253 = pneg %p34
      $region46: #{tpu_custom_call.1} parent=43 // pred_check_branch
        %255 = sbr.rel (%p253) target = $region48
      $region47: #{tpu_custom_call.1} parent=43 // pred_region
        %s256 = smul.u32 25, %s14
        %p257 = scmp.lt.s32.totalorder %s256, 49
        %s258 = scalar_select %p257, %s256, 49
        %s259 = smul.addr %s258, 8
        %s260 = scalar_lea.vmem %s0, %s259
        %s261 = smul.u32 25, %s14
      $region48: #{tpu_custom_call.1} parent=43 // pred_fallthru
        _
    $region44: #{tpu_custom_call.1} parent=5 // pred_fallthru
      _
    %p262 = scmp.le.s32.totalorder 1, %s14
    %p263 = scmp.lt.s32.totalorder %s14, 3
    %p264 = pnand %p262, %p263
    %p265 = pneg %p264
    // Predicated region
    $region49: #{tpu_custom_call.1} parent=5 // pred_check
      _
    $region50: #{tpu_custom_call.1} parent=5 // pred_check_branch
      %267 = sbr.rel (%p264) target = $region52
    $region51: #{tpu_custom_call.1} parent=5 // pred_region
      %s268 = ssub.s32 %s14, 1
      %s269 = smul.u32 25, %s19
      %p270 = scmp.lt.s32.totalorder %s269, 49
      %s271 = scalar_select %p270, %s269, 49
      %s272 = smul.addr %s271, 8
      %s273 = scalar_lea.vmem %s0, %s272
      %p274 = pneg %p40
      %p275 = pneg %p37
      %p276 = pneg %p61
      %p277 = pneg %p58
      %p278 = pneg %p82
      %p279 = pneg %p79
      %p280 = pneg %p103
      %p281 = pneg %p100
      %p282 = pneg %p124
      %p283 = pneg %p121
      %p284 = pneg %p145
      %p285 = pneg %p142
      %p286 = pneg %p166
      %p287 = pneg %p163
      %p288 = pneg %p187
      %p289 = pneg %p184
      %p290 = pneg %p213
      %p291 = pneg %p210
      %s292 = smul.u32 25, %s19
      %p293 = scmp.lt.s32.totalorder %s292, 49
      %s294 = scalar_select %p293, %s292, 49
      %s295 = smul.addr %s294, 8
      %s296 = scalar_lea.vmem %s8, %s295
      %s297 = smul.u32 25, %s19
      %p298 = scmp.lt.s32.totalorder %s297, 49
      %s299 = scalar_select %p298, %s297, 49
      %s300 = smul.addr %s299, 8
      %s301 = scalar_lea.vmem %s0, %s300
      %s302 = smul.u32 25, %s19
      %s303 = smul.u32 25, %s19
      %p304 = scmp.lt.s32.totalorder %s303, 49
      %s305 = scalar_select %p304, %s303, 49
      %s306 = smul.addr %s305, 8
      %s307 = scalar_lea.vmem %s8, %s306
      %s308 = smul.u32 25, %s19
      %v310 = vld [vmem:[%s301] sm:$0xff]
      %v311 = vld [vmem:[%s301 + $0x8] sm:$0xff]
      %v312 = vld [vmem:[%s301 + $0x10] sm:$0xff]
      %v313 = vld [vmem:[%s301 + $0x18] sm:$0xff]
      %v314 = vld [vmem:[%s301 + $0x20] sm:$0xff]
      %v315 = vld [vmem:[%s301 + $0x28] sm:$0xff]
      %v316 = vld [vmem:[%s301 + $0x30] sm:$0xff]
      %v317 = vld [vmem:[%s301 + $0x38] sm:$0xff]
      %v318 = vld [vmem:[%s301 + $0x40] sm:$0xff]
      %v319 = vld [vmem:[%s301 + $0x48] sm:$0xff]
      %v320 = vld [vmem:[%s301 + $0x50] sm:$0xff]
      %v321 = vld [vmem:[%s301 + $0x58] sm:$0xff]
      %v322 = vld [vmem:[%s301 + $0x60] sm:$0xff]
      %v323 = vld [vmem:[%s301 + $0x68] sm:$0xff]
      %v324 = vld [vmem:[%s301 + $0x70] sm:$0xff]
      %v325 = vld [vmem:[%s301 + $0x78] sm:$0xff]
      %v326 = vld [vmem:[%s301 + $0x80] sm:$0xff]
      %v327 = vld [vmem:[%s301 + $0x88] sm:$0xff]
      %v328 = vld [vmem:[%s301 + $0x90] sm:$0xff]
      %v329 = vld [vmem:[%s301 + $0x98] sm:$0xff]
      %v330 = vld [vmem:[%s301 + $0xa0] sm:$0xff]
      %v331 = vld [vmem:[%s301 + $0xa8] sm:$0xff]
      %v332 = vld [vmem:[%s301 + $0xb0] sm:$0xff]
      %v333 = vld [vmem:[%s301 + $0xb8] sm:$0xff]
      %v334 = vld [vmem:[%s301 + $0xc0] sm:$0xff]
      %v335 = vpack.c.bf16 %v311, %v310
      %v336 = vpack.c.bf16 %v313, %v312
      %v337 = vpack.c.bf16 %v315, %v314
      %v338 = vpack.c.bf16 %v317, %v316
      %v339 = vpack.c.bf16 %v319, %v318
      %v340 = vpack.c.bf16 %v321, %v320
      %v341 = vpack.c.bf16 %v323, %v322
      %v342 = vpack.c.bf16 %v325, %v324
      %v343 = vpack.c.bf16 %v327, %v326
      %v344 = vpack.c.bf16 %v329, %v328
      %v345 = vpack.c.bf16 %v331, %v330
      %v346 = vpack.c.bf16 %v333, %v332
      %v347 = vpack.c.bf16 %v334, %v334
      %v348 = vld [vmem:[%s1] sm:$0xf]
      %v349 = vld [vmem:[%s1 + $0x4] sm:$0xf]
      %v350 = vld [vmem:[%s1 + $0x8] sm:$0xf]
      %v351 = vld [vmem:[%s1 + $0xc] sm:$0xf]
      %v356 = vunpack.c.l.b16 %v348
      %v357 = vunpack.c.l.b16 %v349
      %v358 = vunpack.c.l.b16 %v350
      %v359 = vunpack.c.l.b16 %v351
      %v360 = vpack.c.b16 %v357, %v356
      %v361 = vpack.c.b16 %v359, %v358
      %vm364 = vcmask 261120
      %v366 = vsel %vm364, %v335, 0
      %v369 = vsel %vm364, %v336, 0
      %v372 = vsel %vm364, %v337, 0
      %v375 = vsel %vm364, %v338, 0
      %v378 = vsel %vm364, %v339, 0
      %v381 = vsel %vm364, %v340, 0
      %v384 = vsel %vm364, %v341, 0
      %v387 = vsel %vm364, %v342, 0
      %v390 = vsel %vm364, %v343, 0
      %v393 = vsel %vm364, %v344, 0
      %v396 = vsel %vm364, %v345, 0
      %v399 = vsel %vm364, %v346, 0
      %v402 = vsel %vm364, %v347, 0
      %404 = vmatpush.bf16.msra.mxu0 0
      %405 = vmatpush.bf16.msra.mxu0 0
      %406 = vmatpush.bf16.msra.mxu0 0
      %407 = vmatpush.bf16.msra.mxu0 0
      %408 = vmatpush.bf16.msra.mxu0 0
      %409 = vmatpush.bf16.msra.mxu0 0
      %410 = vmatpush.bf16.msra.mxu0 %v361
      %411 = vmatpush.bf16.msra.mxu0 %v360
      %412 = vmatmul.bf16.gmra.mxu0 %v366
      %v413 = vpop.f32.mrf.mxu0
      %v414 = vadd.f32 0.0, %v413
      %v415 = vpop.f32.mrf.mxu0
      %v416 = vadd.f32 0.0, %v415
      %417 = vmatmul.bf16.gmra.mxu0 %v369
      %v418 = vpop.f32.mrf.mxu0
      %v419 = vadd.f32 0.0, %v418
      %v420 = vpop.f32.mrf.mxu0
      %v421 = vadd.f32 0.0, %v420
      %422 = vmatmul.bf16.gmra.mxu0 %v372
      %v423 = vpop.f32.mrf.mxu0
      %v424 = vadd.f32 0.0, %v423
      %v425 = vpop.f32.mrf.mxu0
      %v426 = vadd.f32 0.0, %v425
      %427 = vmatmul.bf16.gmra.mxu0 %v375
      %v428 = vpop.f32.mrf.mxu0
      %v429 = vadd.f32 0.0, %v428
      %v430 = vpop.f32.mrf.mxu0
      %v431 = vadd.f32 0.0, %v430
      %432 = vmatmul.bf16.gmra.mxu0 %v378
      %v433 = vpop.f32.mrf.mxu0
      %v434 = vadd.f32 0.0, %v433
      %v435 = vpop.f32.mrf.mxu0
      %v436 = vadd.f32 0.0, %v435
      %437 = vmatmul.bf16.gmra.mxu0 %v381
      %v438 = vpop.f32.mrf.mxu0
      %v439 = vadd.f32 0.0, %v438
      %v440 = vpop.f32.mrf.mxu0
      %v441 = vadd.f32 0.0, %v440
      %442 = vmatmul.bf16.gmra.mxu0 %v384
      %v443 = vpop.f32.mrf.mxu0
      %v444 = vadd.f32 0.0, %v443
      %v445 = vpop.f32.mrf.mxu0
      %v446 = vadd.f32 0.0, %v445
      %447 = vmatmul.bf16.gmra.mxu0 %v387
      %v448 = vpop.f32.mrf.mxu0
      %v449 = vadd.f32 0.0, %v448
      %v450 = vpop.f32.mrf.mxu0
      %v451 = vadd.f32 0.0, %v450
      %452 = vmatmul.bf16.gmra.mxu0 %v390
      %v453 = vpop.f32.mrf.mxu0
      %v454 = vadd.f32 0.0, %v453
      %v455 = vpop.f32.mrf.mxu0
      %v456 = vadd.f32 0.0, %v455
      %457 = vmatmul.bf16.gmra.mxu0 %v393
      %v458 = vpop.f32.mrf.mxu0
      %v459 = vadd.f32 0.0, %v458
      %v460 = vpop.f32.mrf.mxu0
      %v461 = vadd.f32 0.0, %v460
      %462 = vmatmul.bf16.gmra.mxu0 %v396
      %v463 = vpop.f32.mrf.mxu0
      %v464 = vadd.f32 0.0, %v463
      %v465 = vpop.f32.mrf.mxu0
      %v466 = vadd.f32 0.0, %v465
      %467 = vmatmul.bf16.gmra.mxu0 %v399
      %v468 = vpop.f32.mrf.mxu0
      %v469 = vadd.f32 0.0, %v468
      %v470 = vpop.f32.mrf.mxu0
      %v471 = vadd.f32 0.0, %v470
      %472 = vmatmul.bf16.gmra.mxu0 %v402
      %v473 = vpop.f32.mrf.mxu0
      %v474 = vadd.f32 0.0, %v473
      %v475 = vpop.f32.mrf.mxu0
      %476 = vdwg.mxu0
      %v477 = vpack.c.bf16 %v414, %v414
      %v478 = vpack.c.bf16 %v416, %v416
      %v479 = vpack.c.bf16 %v419, %v419
      %v480 = vpack.c.bf16 %v421, %v421
      %v481 = vpack.c.bf16 %v424, %v424
      %v482 = vpack.c.bf16 %v426, %v426
      %v483 = vpack.c.bf16 %v429, %v429
      %v484 = vpack.c.bf16 %v431, %v431
      %v485 = vpack.c.bf16 %v434, %v434
      %v486 = vpack.c.bf16 %v436, %v436
      %v487 = vpack.c.bf16 %v439, %v439
      %v488 = vpack.c.bf16 %v441, %v441
      %v489 = vpack.c.bf16 %v444, %v444
      %v490 = vpack.c.bf16 %v446, %v446
      %v491 = vpack.c.bf16 %v449, %v449
      %v492 = vpack.c.bf16 %v451, %v451
      %v493 = vpack.c.bf16 %v454, %v454
      %v494 = vpack.c.bf16 %v456, %v456
      %v495 = vpack.c.bf16 %v459, %v459
      %v496 = vpack.c.bf16 %v461, %v461
      %v497 = vpack.c.bf16 %v464, %v464
      %v498 = vpack.c.bf16 %v466, %v466
      %v499 = vpack.c.bf16 %v469, %v469
      %v500 = vpack.c.bf16 %v471, %v471
      %v501 = vpack.c.bf16 %v474, %v474
      %v503 = vunpack.c.l.b16 %v477
      %v504 = vpack.c.b16 %v503, %v503
      %505 = vrot.lane.b32.xlu0 %v504, 96
      %v506 = vpop.permute.xlu0 %505
      %vm507 = vcmask 64512
      %v509 = vsel %vm507, %v477, 0
      %v512 = vsel %vm507, %v506, 0
      %514 = vmatpush.bf16.xpose.msra.mxu0 0
      %515 = vmatpush.bf16.xpose.msra.mxu0 0
      %516 = vmatpush.bf16.xpose.msra.mxu0 0
      %517 = vmatpush.bf16.xpose.msra.mxu0 0
      %518 = vmatpush.bf16.xpose.msra.mxu0 0
      %519 = vmatpush.bf16.xpose.msra.mxu0 0
      %520 = vmatpush.bf16.xpose.msra.mxu0 0
      %521 = vmatpush.bf16.xpose.msra.mxu0 %v512
      %522 = vmatmul.bf16.gmra.mxu0 %v509
      %v523 = vpop.f32.mrf.mxu0
      %v524 = vadd.f32 0.0, %v523
      %v525 = vpop.f32.mrf.mxu0
      %526 = vdwg.mxu0
      %v528 = vunpack.c.l.b16 %v478
      %v529 = vpack.c.b16 %v528, %v528
      %530 = vrot.lane.b32.xlu0 %v529, 96
      %v531 = vpop.permute.xlu0 %530
      %v533 = vsel %vm507, %v478, 0
      %v536 = vsel %vm507, %v531, 0
      %538 = vmatpush.bf16.xpose.msra.mxu0 0
      %539 = vmatpush.bf16.xpose.msra.mxu0 0
      %540 = vmatpush.bf16.xpose.msra.mxu0 0
      %541 = vmatpush.bf16.xpose.msra.mxu0 0
      %542 = vmatpush.bf16.xpose.msra.mxu0 0
      %543 = vmatpush.bf16.xpose.msra.mxu0 0
      %544 = vmatpush.bf16.xpose.msra.mxu0 0
      %545 = vmatpush.bf16.xpose.msra.mxu0 %v536
      %546 = vmatmul.bf16.gmra.mxu0 %v533
      %v547 = vpop.f32.mrf.mxu0
      %v548 = vadd.f32 0.0, %v547
      %v549 = vpop.f32.mrf.mxu0
      %550 = vdwg.mxu0
      %v552 = vunpack.c.l.b16 %v479
      %v553 = vpack.c.b16 %v552, %v552
      %554 = vrot.lane.b32.xlu0 %v553, 96
      %v555 = vpop.permute.xlu0 %554
      %v557 = vsel %vm507, %v479, 0
      %v560 = vsel %vm507, %v555, 0
      %562 = vmatpush.bf16.xpose.msra.mxu0 0
      %563 = vmatpush.bf16.xpose.msra.mxu0 0
      %564 = vmatpush.bf16.xpose.msra.mxu0 0
      %565 = vmatpush.bf16.xpose.msra.mxu0 0
      %566 = vmatpush.bf16.xpose.msra.mxu0 0
      %567 = vmatpush.bf16.xpose.msra.mxu0 0
      %568 = vmatpush.bf16.xpose.msra.mxu0 0
      %569 = vmatpush.bf16.xpose.msra.mxu0 %v560
      %570 = vmatmul.bf16.gmra.mxu0 %v557
      %v571 = vpop.f32.mrf.mxu0
      %v572 = vadd.f32 0.0, %v571
      %v573 = vpop.f32.mrf.mxu0
      %574 = vdwg.mxu0
      %v576 = vunpack.c.l.b16 %v480
      %v577 = vpack.c.b16 %v576, %v576
      %578 = vrot.lane.b32.xlu0 %v577, 96
      %v579 = vpop.permute.xlu0 %578
      %v581 = vsel %vm507, %v480, 0
      %v584 = vsel %vm507, %v579, 0
      %586 = vmatpush.bf16.xpose.msra.mxu0 0
      %587 = vmatpush.bf16.xpose.msra.mxu0 0
      %588 = vmatpush.bf16.xpose.msra.mxu0 0
      %589 = vmatpush.bf16.xpose.msra.mxu0 0
      %590 = vmatpush.bf16.xpose.msra.mxu0 0
      %591 = vmatpush.bf16.xpose.msra.mxu0 0
      %592 = vmatpush.bf16.xpose.msra.mxu0 0
      %593 = vmatpush.bf16.xpose.msra.mxu0 %v584
      %594 = vmatmul.bf16.gmra.mxu0 %v581
      %v595 = vpop.f32.mrf.mxu0
      %v596 = vadd.f32 0.0, %v595
      %v597 = vpop.f32.mrf.mxu0
      %598 = vdwg.mxu0
      %v600 = vunpack.c.l.b16 %v481
      %v601 = vpack.c.b16 %v600, %v600
      %602 = vrot.lane.b32.xlu0 %v601, 96
      %v603 = vpop.permute.xlu0 %602
      %v605 = vsel %vm507, %v481, 0
      %v608 = vsel %vm507, %v603, 0
      %610 = vmatpush.bf16.xpose.msra.mxu0 0
      %611 = vmatpush.bf16.xpose.msra.mxu0 0
      %612 = vmatpush.bf16.xpose.msra.mxu0 0
      %613 = vmatpush.bf16.xpose.msra.mxu0 0
      %614 = vmatpush.bf16.xpose.msra.mxu0 0
      %615 = vmatpush.bf16.xpose.msra.mxu0 0
      %616 = vmatpush.bf16.xpose.msra.mxu0 0
      %617 = vmatpush.bf16.xpose.msra.mxu0 %v608
      %618 = vmatmul.bf16.gmra.mxu0 %v605
      %v619 = vpop.f32.mrf.mxu0
      %v620 = vadd.f32 0.0, %v619
      %v621 = vpop.f32.mrf.mxu0
      %622 = vdwg.mxu0
      %v624 = vunpack.c.l.b16 %v482
      %v625 = vpack.c.b16 %v624, %v624
      %626 = vrot.lane.b32.xlu0 %v625, 96
      %v627 = vpop.permute.xlu0 %626
      %v629 = vsel %vm507, %v482, 0
      %v632 = vsel %vm507, %v627, 0
      %634 = vmatpush.bf16.xpose.msra.mxu0 0
      %635 = vmatpush.bf16.xpose.msra.mxu0 0
      %636 = vmatpush.bf16.xpose.msra.mxu0 0
      %637 = vmatpush.bf16.xpose.msra.mxu0 0
      %638 = vmatpush.bf16.xpose.msra.mxu0 0
      %639 = vmatpush.bf16.xpose.msra.mxu0 0
      %640 = vmatpush.bf16.xpose.msra.mxu0 0
      %641 = vmatpush.bf16.xpose.msra.mxu0 %v632
      %642 = vmatmul.bf16.gmra.mxu0 %v629
      %v643 = vpop.f32.mrf.mxu0
      %v644 = vadd.f32 0.0, %v643
      %v645 = vpop.f32.mrf.mxu0
      %646 = vdwg.mxu0
      %v648 = vunpack.c.l.b16 %v483
      %v649 = vpack.c.b16 %v648, %v648
      %650 = vrot.lane.b32.xlu0 %v649, 96
      %v651 = vpop.permute.xlu0 %650
      %v653 = vsel %vm507, %v483, 0
      %v656 = vsel %vm507, %v651, 0
      %658 = vmatpush.bf16.xpose.msra.mxu0 0
      %659 = vmatpush.bf16.xpose.msra.mxu0 0
      %660 = vmatpush.bf16.xpose.msra.mxu0 0
      %661 = vmatpush.bf16.xpose.msra.mxu0 0
      %662 = vmatpush.bf16.xpose.msra.mxu0 0
      %663 = vmatpush.bf16.xpose.msra.mxu0 0
      %664 = vmatpush.bf16.xpose.msra.mxu0 0
      %665 = vmatpush.bf16.xpose.msra.mxu0 %v656
      %666 = vmatmul.bf16.gmra.mxu0 %v653
      %v667 = vpop.f32.mrf.mxu0
      %v668 = vadd.f32 0.0, %v667
      %v669 = vpop.f32.mrf.mxu0
      %670 = vdwg.mxu0
      %v672 = vunpack.c.l.b16 %v484
      %v673 = vpack.c.b16 %v672, %v672
      %674 = vrot.lane.b32.xlu0 %v673, 96
      %v675 = vpop.permute.xlu0 %674
      %v677 = vsel %vm507, %v484, 0
      %v680 = vsel %vm507, %v675, 0
      %682 = vmatpush.bf16.xpose.msra.mxu0 0
      %683 = vmatpush.bf16.xpose.msra.mxu0 0
      %684 = vmatpush.bf16.xpose.msra.mxu0 0
      %685 = vmatpush.bf16.xpose.msra.mxu0 0
      %686 = vmatpush.bf16.xpose.msra.mxu0 0
      %687 = vmatpush.bf16.xpose.msra.mxu0 0
      %688 = vmatpush.bf16.xpose.msra.mxu0 0
      %689 = vmatpush.bf16.xpose.msra.mxu0 %v680
      %690 = vmatmul.bf16.gmra.mxu0 %v677
      %v691 = vpop.f32.mrf.mxu0
      %v692 = vadd.f32 0.0, %v691
      %v693 = vpop.f32.mrf.mxu0
      %694 = vdwg.mxu0
      %v696 = vunpack.c.l.b16 %v485
      %v697 = vpack.c.b16 %v696, %v696
      %698 = vrot.lane.b32.xlu0 %v697, 96
      %v699 = vpop.permute.xlu0 %698
      %v701 = vsel %vm507, %v485, 0
      %v704 = vsel %vm507, %v699, 0
      %706 = vmatpush.bf16.xpose.msra.mxu0 0
      %707 = vmatpush.bf16.xpose.msra.mxu0 0
      %708 = vmatpush.bf16.xpose.msra.mxu0 0
      %709 = vmatpush.bf16.xpose.msra.mxu0 0
      %710 = vmatpush.bf16.xpose.msra.mxu0 0
      %711 = vmatpush.bf16.xpose.msra.mxu0 0
      %712 = vmatpush.bf16.xpose.msra.mxu0 0
      %713 = vmatpush.bf16.xpose.msra.mxu0 %v704
      %714 = vmatmul.bf16.gmra.mxu0 %v701
      %v715 = vpop.f32.mrf.mxu0
      %v716 = vadd.f32 0.0, %v715
      %v717 = vpop.f32.mrf.mxu0
      %718 = vdwg.mxu0
      %v720 = vunpack.c.l.b16 %v486
      %v721 = vpack.c.b16 %v720, %v720
      %722 = vrot.lane.b32.xlu0 %v721, 96
      %v723 = vpop.permute.xlu0 %722
      %v725 = vsel %vm507, %v486, 0
      %v728 = vsel %vm507, %v723, 0
      %730 = vmatpush.bf16.xpose.msra.mxu0 0
      %731 = vmatpush.bf16.xpose.msra.mxu0 0
      %732 = vmatpush.bf16.xpose.msra.mxu0 0
      %733 = vmatpush.bf16.xpose.msra.mxu0 0
      %734 = vmatpush.bf16.xpose.msra.mxu0 0
      %735 = vmatpush.bf16.xpose.msra.mxu0 0
      %736 = vmatpush.bf16.xpose.msra.mxu0 0
      %737 = vmatpush.bf16.xpose.msra.mxu0 %v728
      %738 = vmatmul.bf16.gmra.mxu0 %v725
      %v739 = vpop.f32.mrf.mxu0
      %v740 = vadd.f32 0.0, %v739
      %v741 = vpop.f32.mrf.mxu0
      %742 = vdwg.mxu0
      %v744 = vunpack.c.l.b16 %v487
      %v745 = vpack.c.b16 %v744, %v744
      %746 = vrot.lane.b32.xlu0 %v745, 96
      %v747 = vpop.permute.xlu0 %746
      %v749 = vsel %vm507, %v487, 0
      %v752 = vsel %vm507, %v747, 0
      %754 = vmatpush.bf16.xpose.msra.mxu0 0
      %755 = vmatpush.bf16.xpose.msra.mxu0 0
      %756 = vmatpush.bf16.xpose.msra.mxu0 0
      %757 = vmatpush.bf16.xpose.msra.mxu0 0
      %758 = vmatpush.bf16.xpose.msra.mxu0 0
      %759 = vmatpush.bf16.xpose.msra.mxu0 0
      %760 = vmatpush.bf16.xpose.msra.mxu0 0
      %761 = vmatpush.bf16.xpose.msra.mxu0 %v752
      %762 = vmatmul.bf16.gmra.mxu0 %v749
      %v763 = vpop.f32.mrf.mxu0
      %v764 = vadd.f32 0.0, %v763
      %v765 = vpop.f32.mrf.mxu0
      %766 = vdwg.mxu0
      %v768 = vunpack.c.l.b16 %v488
      %v769 = vpack.c.b16 %v768, %v768
      %770 = vrot.lane.b32.xlu0 %v769, 96
      %v771 = vpop.permute.xlu0 %770
      %v773 = vsel %vm507, %v488, 0
      %v776 = vsel %vm507, %v771, 0
      %778 = vmatpush.bf16.xpose.msra.mxu0 0
      %779 = vmatpush.bf16.xpose.msra.mxu0 0
      %780 = vmatpush.bf16.xpose.msra.mxu0 0
      %781 = vmatpush.bf16.xpose.msra.mxu0 0
      %782 = vmatpush.bf16.xpose.msra.mxu0 0
      %783 = vmatpush.bf16.xpose.msra.mxu0 0
      %784 = vmatpush.bf16.xpose.msra.mxu0 0
      %785 = vmatpush.bf16.xpose.msra.mxu0 %v776
      %786 = vmatmul.bf16.gmra.mxu0 %v773
      %v787 = vpop.f32.mrf.mxu0
      %v788 = vadd.f32 0.0, %v787
      %v789 = vpop.f32.mrf.mxu0
      %790 = vdwg.mxu0
      %v792 = vunpack.c.l.b16 %v489
      %v793 = vpack.c.b16 %v792, %v792
      %794 = vrot.lane.b32.xlu0 %v793, 96
      %v795 = vpop.permute.xlu0 %794
      %v797 = vsel %vm507, %v489, 0
      %v800 = vsel %vm507, %v795, 0
      %802 = vmatpush.bf16.xpose.msra.mxu0 0
      %803 = vmatpush.bf16.xpose.msra.mxu0 0
      %804 = vmatpush.bf16.xpose.msra.mxu0 0
      %805 = vmatpush.bf16.xpose.msra.mxu0 0
      %806 = vmatpush.bf16.xpose.msra.mxu0 0
      %807 = vmatpush.bf16.xpose.msra.mxu0 0
      %808 = vmatpush.bf16.xpose.msra.mxu0 0
      %809 = vmatpush.bf16.xpose.msra.mxu0 %v800
      %810 = vmatmul.bf16.gmra.mxu0 %v797
      %v811 = vpop.f32.mrf.mxu0
      %v812 = vadd.f32 0.0, %v811
      %v813 = vpop.f32.mrf.mxu0
      %814 = vdwg.mxu0
      %v816 = vunpack.c.l.b16 %v490
      %v817 = vpack.c.b16 %v816, %v816
      %818 = vrot.lane.b32.xlu0 %v817, 96
      %v819 = vpop.permute.xlu0 %818
      %v821 = vsel %vm507, %v490, 0
      %v824 = vsel %vm507, %v819, 0
      %826 = vmatpush.bf16.xpose.msra.mxu0 0
      %827 = vmatpush.bf16.xpose.msra.mxu0 0
      %828 = vmatpush.bf16.xpose.msra.mxu0 0
      %829 = vmatpush.bf16.xpose.msra.mxu0 0
      %830 = vmatpush.bf16.xpose.msra.mxu0 0
      %831 = vmatpush.bf16.xpose.msra.mxu0 0
      %832 = vmatpush.bf16.xpose.msra.mxu0 0
      %833 = vmatpush.bf16.xpose.msra.mxu0 %v824
      %834 = vmatmul.bf16.gmra.mxu0 %v821
      %v835 = vpop.f32.mrf.mxu0
      %v836 = vadd.f32 0.0, %v835
      %v837 = vpop.f32.mrf.mxu0
      %838 = vdwg.mxu0
      %v840 = vunpack.c.l.b16 %v491
      %v841 = vpack.c.b16 %v840, %v840
      %842 = vrot.lane.b32.xlu0 %v841, 96
      %v843 = vpop.permute.xlu0 %842
      %v845 = vsel %vm507, %v491, 0
      %v848 = vsel %vm507, %v843, 0
      %850 = vmatpush.bf16.xpose.msra.mxu0 0
      %851 = vmatpush.bf16.xpose.msra.mxu0 0
      %852 = vmatpush.bf16.xpose.msra.mxu0 0
      %853 = vmatpush.bf16.xpose.msra.mxu0 0
      %854 = vmatpush.bf16.xpose.msra.mxu0 0
      %855 = vmatpush.bf16.xpose.msra.mxu0 0
      %856 = vmatpush.bf16.xpose.msra.mxu0 0
      %857 = vmatpush.bf16.xpose.msra.mxu0 %v848
      %858 = vmatmul.bf16.gmra.mxu0 %v845
      %v859 = vpop.f32.mrf.mxu0
      %v860 = vadd.f32 0.0, %v859
      %v861 = vpop.f32.mrf.mxu0
      %862 = vdwg.mxu0
      %v864 = vunpack.c.l.b16 %v492
      %v865 = vpack.c.b16 %v864, %v864
      %866 = vrot.lane.b32.xlu0 %v865, 96
      %v867 = vpop.permute.xlu0 %866
      %v869 = vsel %vm507, %v492, 0
      %v872 = vsel %vm507, %v867, 0
      %874 = vmatpush.bf16.xpose.msra.mxu0 0
      %875 = vmatpush.bf16.xpose.msra.mxu0 0
      %876 = vmatpush.bf16.xpose.msra.mxu0 0
      %877 = vmatpush.bf16.xpose.msra.mxu0 0
      %878 = vmatpush.bf16.xpose.msra.mxu0 0
      %879 = vmatpush.bf16.xpose.msra.mxu0 0
      %880 = vmatpush.bf16.xpose.msra.mxu0 0
      %881 = vmatpush.bf16.xpose.msra.mxu0 %v872
      %882 = vmatmul.bf16.gmra.mxu0 %v869
      %v883 = vpop.f32.mrf.mxu0
      %v884 = vadd.f32 0.0, %v883
      %v885 = vpop.f32.mrf.mxu0
      %886 = vdwg.mxu0
      %v888 = vunpack.c.l.b16 %v493
      %v889 = vpack.c.b16 %v888, %v888
      %890 = vrot.lane.b32.xlu0 %v889, 96
      %v891 = vpop.permute.xlu0 %890
      %v893 = vsel %vm507, %v493, 0
      %v896 = vsel %vm507, %v891, 0
      %898 = vmatpush.bf16.xpose.msra.mxu0 0
      %899 = vmatpush.bf16.xpose.msra.mxu0 0
      %900 = vmatpush.bf16.xpose.msra.mxu0 0
      %901 = vmatpush.bf16.xpose.msra.mxu0 0
      %902 = vmatpush.bf16.xpose.msra.mxu0 0
      %903 = vmatpush.bf16.xpose.msra.mxu0 0
      %904 = vmatpush.bf16.xpose.msra.mxu0 0
      %905 = vmatpush.bf16.xpose.msra.mxu0 %v896
      %906 = vmatmul.bf16.gmra.mxu0 %v893
      %v907 = vpop.f32.mrf.mxu0
      %v908 = vadd.f32 0.0, %v907
      %v909 = vpop.f32.mrf.mxu0
      %910 = vdwg.mxu0
      %v912 = vunpack.c.l.b16 %v494
      %v913 = vpack.c.b16 %v912, %v912
      %914 = vrot.lane.b32.xlu0 %v913, 96
      %v915 = vpop.permute.xlu0 %914
      %v917 = vsel %vm507, %v494, 0
      %v920 = vsel %vm507, %v915, 0
      %922 = vmatpush.bf16.xpose.msra.mxu0 0
      %923 = vmatpush.bf16.xpose.msra.mxu0 0
      %924 = vmatpush.bf16.xpose.msra.mxu0 0
      %925 = vmatpush.bf16.xpose.msra.mxu0 0
      %926 = vmatpush.bf16.xpose.msra.mxu0 0
      %927 = vmatpush.bf16.xpose.msra.mxu0 0
      %928 = vmatpush.bf16.xpose.msra.mxu0 0
      %929 = vmatpush.bf16.xpose.msra.mxu0 %v920
      %930 = vmatmul.bf16.gmra.mxu0 %v917
      %v931 = vpop.f32.mrf.mxu0
      %v932 = vadd.f32 0.0, %v931
      %v933 = vpop.f32.mrf.mxu0
      %934 = vdwg.mxu0
      %v936 = vunpack.c.l.b16 %v495
      %v937 = vpack.c.b16 %v936, %v936
      %938 = vrot.lane.b32.xlu0 %v937, 96
      %v939 = vpop.permute.xlu0 %938
      %v941 = vsel %vm507, %v495, 0
      %v944 = vsel %vm507, %v939, 0
      %946 = vmatpush.bf16.xpose.msra.mxu0 0
      %947 = vmatpush.bf16.xpose.msra.mxu0 0
      %948 = vmatpush.bf16.xpose.msra.mxu0 0
      %949 = vmatpush.bf16.xpose.msra.mxu0 0
      %950 = vmatpush.bf16.xpose.msra.mxu0 0
      %951 = vmatpush.bf16.xpose.msra.mxu0 0
      %952 = vmatpush.bf16.xpose.msra.mxu0 0
      %953 = vmatpush.bf16.xpose.msra.mxu0 %v944
      %954 = vmatmul.bf16.gmra.mxu0 %v941
      %v955 = vpop.f32.mrf.mxu0
      %v956 = vadd.f32 0.0, %v955
      %v957 = vpop.f32.mrf.mxu0
      %958 = vdwg.mxu0
      %v960 = vunpack.c.l.b16 %v496
      %v961 = vpack.c.b16 %v960, %v960
      %962 = vrot.lane.b32.xlu0 %v961, 96
      %v963 = vpop.permute.xlu0 %962
      %v965 = vsel %vm507, %v496, 0
      %v968 = vsel %vm507, %v963, 0
      %970 = vmatpush.bf16.xpose.msra.mxu0 0
      %971 = vmatpush.bf16.xpose.msra.mxu0 0
      %972 = vmatpush.bf16.xpose.msra.mxu0 0
      %973 = vmatpush.bf16.xpose.msra.mxu0 0
      %974 = vmatpush.bf16.xpose.msra.mxu0 0
      %975 = vmatpush.bf16.xpose.msra.mxu0 0
      %976 = vmatpush.bf16.xpose.msra.mxu0 0
      %977 = vmatpush.bf16.xpose.msra.mxu0 %v968
      %978 = vmatmul.bf16.gmra.mxu0 %v965
      %v979 = vpop.f32.mrf.mxu0
      %v980 = vadd.f32 0.0, %v979
      %v981 = vpop.f32.mrf.mxu0
      %982 = vdwg.mxu0
      %v984 = vunpack.c.l.b16 %v497
      %v985 = vpack.c.b16 %v984, %v984
      %986 = vrot.lane.b32.xlu0 %v985, 96
      %v987 = vpop.permute.xlu0 %986
      %v989 = vsel %vm507, %v497, 0
      %v992 = vsel %vm507, %v987, 0
      %994 = vmatpush.bf16.xpose.msra.mxu0 0
      %995 = vmatpush.bf16.xpose.msra.mxu0 0
      %996 = vmatpush.bf16.xpose.msra.mxu0 0
      %997 = vmatpush.bf16.xpose.msra.mxu0 0
      %998 = vmatpush.bf16.xpose.msra.mxu0 0
      %999 = vmatpush.bf16.xpose.msra.mxu0 0
      %1000 = vmatpush.bf16.xpose.msra.mxu0 0
      %1001 = vmatpush.bf16.xpose.msra.mxu0 %v992
      %1002 = vmatmul.bf16.gmra.mxu0 %v989
      %v1003 = vpop.f32.mrf.mxu0
      %v1004 = vadd.f32 0.0, %v1003
      %v1005 = vpop.f32.mrf.mxu0
      %1006 = vdwg.mxu0
      %v1008 = vunpack.c.l.b16 %v498
      %v1009 = vpack.c.b16 %v1008, %v1008
      %1010 = vrot.lane.b32.xlu0 %v1009, 96
      %v1011 = vpop.permute.xlu0 %1010
      %v1013 = vsel %vm507, %v498, 0
      %v1016 = vsel %vm507, %v1011, 0
      %1018 = vmatpush.bf16.xpose.msra.mxu0 0
      %1019 = vmatpush.bf16.xpose.msra.mxu0 0
      %1020 = vmatpush.bf16.xpose.msra.mxu0 0
      %1021 = vmatpush.bf16.xpose.msra.mxu0 0
      %1022 = vmatpush.bf16.xpose.msra.mxu0 0
      %1023 = vmatpush.bf16.xpose.msra.mxu0 0
      %1024 = vmatpush.bf16.xpose.msra.mxu0 0
      %1025 = vmatpush.bf16.xpose.msra.mxu0 %v1016
      %1026 = vmatmul.bf16.gmra.mxu0 %v1013
      %v1027 = vpop.f32.mrf.mxu0
      %v1028 = vadd.f32 0.0, %v1027
      %v1029 = vpop.f32.mrf.mxu0
      %1030 = vdwg.mxu0
      %v1032 = vunpack.c.l.b16 %v499
      %v1033 = vpack.c.b16 %v1032, %v1032
      %1034 = vrot.lane.b32.xlu0 %v1033, 96
      %v1035 = vpop.permute.xlu0 %1034
      %v1037 = vsel %vm507, %v499, 0
      %v1040 = vsel %vm507, %v1035, 0
      %1042 = vmatpush.bf16.xpose.msra.mxu0 0
      %1043 = vmatpush.bf16.xpose.msra.mxu0 0
      %1044 = vmatpush.bf16.xpose.msra.mxu0 0
      %1045 = vmatpush.bf16.xpose.msra.mxu0 0
      %1046 = vmatpush.bf16.xpose.msra.mxu0 0
      %1047 = vmatpush.bf16.xpose.msra.mxu0 0
      %1048 = vmatpush.bf16.xpose.msra.mxu0 0
      %1049 = vmatpush.bf16.xpose.msra.mxu0 %v1040
      %1050 = vmatmul.bf16.gmra.mxu0 %v1037
      %v1051 = vpop.f32.mrf.mxu0
      %v1052 = vadd.f32 0.0, %v1051
      %v1053 = vpop.f32.mrf.mxu0
      %1054 = vdwg.mxu0
      %v1056 = vunpack.c.l.b16 %v500
      %v1057 = vpack.c.b16 %v1056, %v1056
      %1058 = vrot.lane.b32.xlu0 %v1057, 96
      %v1059 = vpop.permute.xlu0 %1058
      %v1061 = vsel %vm507, %v500, 0
      %v1064 = vsel %vm507, %v1059, 0
      %1066 = vmatpush.bf16.xpose.msra.mxu0 0
      %1067 = vmatpush.bf16.xpose.msra.mxu0 0
      %1068 = vmatpush.bf16.xpose.msra.mxu0 0
      %1069 = vmatpush.bf16.xpose.msra.mxu0 0
      %1070 = vmatpush.bf16.xpose.msra.mxu0 0
      %1071 = vmatpush.bf16.xpose.msra.mxu0 0
      %1072 = vmatpush.bf16.xpose.msra.mxu0 0
      %1073 = vmatpush.bf16.xpose.msra.mxu0 %v1064
      %1074 = vmatmul.bf16.gmra.mxu0 %v1061
      %v1075 = vpop.f32.mrf.mxu0
      %v1076 = vadd.f32 0.0, %v1075
      %v1077 = vpop.f32.mrf.mxu0
      %1078 = vdwg.mxu0
      %v1080 = vunpack.c.l.b16 %v501
      %v1081 = vpack.c.b16 %v1080, %v1080
      %1082 = vrot.lane.b32.xlu0 %v1081, 96
      %v1083 = vpop.permute.xlu0 %1082
      %v1085 = vsel %vm507, %v501, 0
      %v1088 = vsel %vm507, %v1083, 0
      %1090 = vmatpush.bf16.xpose.msra.mxu0 0
      %1091 = vmatpush.bf16.xpose.msra.mxu0 0
      %1092 = vmatpush.bf16.xpose.msra.mxu0 0
      %1093 = vmatpush.bf16.xpose.msra.mxu0 0
      %1094 = vmatpush.bf16.xpose.msra.mxu0 0
      %1095 = vmatpush.bf16.xpose.msra.mxu0 0
      %1096 = vmatpush.bf16.xpose.msra.mxu0 0
      %1097 = vmatpush.bf16.xpose.msra.mxu0 %v1088
      %1098 = vmatmul.bf16.gmra.mxu0 %v1085
      %v1099 = vpop.f32.mrf.mxu0
      %v1100 = vadd.f32 0.0, %v1099
      %v1101 = vpop.f32.mrf.mxu0
      %1102 = vdwg.mxu0
      %v1103 = vmul.f32 %v524, 0.35355338
      %v1104 = vmul.f32 %v548, 0.35355338
      %v1105 = vmul.f32 %v572, 0.35355338
      %v1106 = vmul.f32 %v596, 0.35355338
      %v1107 = vmul.f32 %v620, 0.35355338
      %v1108 = vmul.f32 %v644, 0.35355338
      %v1109 = vmul.f32 %v668, 0.35355338
      %v1110 = vmul.f32 %v692, 0.35355338
      %v1111 = vmul.f32 %v716, 0.35355338
      %v1112 = vmul.f32 %v740, 0.35355338
      %v1113 = vmul.f32 %v764, 0.35355338
      %v1114 = vmul.f32 %v788, 0.35355338
      %v1115 = vmul.f32 %v812, 0.35355338
      %v1116 = vmul.f32 %v836, 0.35355338
      %v1117 = vmul.f32 %v860, 0.35355338
      %v1118 = vmul.f32 %v884, 0.35355338
      %v1119 = vmul.f32 %v908, 0.35355338
      %v1120 = vmul.f32 %v932, 0.35355338
      %v1121 = vmul.f32 %v956, 0.35355338
      %v1122 = vmul.f32 %v980, 0.35355338
      %v1123 = vmul.f32 %v1004, 0.35355338
      %v1124 = vmul.f32 %v1028, 0.35355338
      %v1125 = vmul.f32 %v1052, 0.35355338
      %v1126 = vmul.f32 %v1076, 0.35355338
      %v1127 = vmul.f32 %v1100, 0.35355338
      %v1128 = vsel %vm507, %v1103, -inf
      %1129 = vmax.xlane.f32.xlu0 %v1128
      %v1130 = vpop.xlane.xlu0 %1129
      %v1131 = vsel %vm507, %v1104, -inf
      %1132 = vmax.xlane.f32.xlu0 %v1131
      %v1133 = vpop.xlane.xlu0 %1132
      %v1134 = vsel %vm507, %v1105, -inf
      %1135 = vmax.xlane.f32.xlu0 %v1134
      %v1136 = vpop.xlane.xlu0 %1135
      %v1137 = vsel %vm507, %v1106, -inf
      %1138 = vmax.xlane.f32.xlu0 %v1137
      %v1139 = vpop.xlane.xlu0 %1138
      %v1140 = vsel %vm507, %v1107, -inf
      %1141 = vmax.xlane.f32.xlu0 %v1140
      %v1142 = vpop.xlane.xlu0 %1141
      %v1143 = vsel %vm507, %v1108, -inf
      %1144 = vmax.xlane.f32.xlu0 %v1143
      %v1145 = vpop.xlane.xlu0 %1144
      %v1146 = vsel %vm507, %v1109, -inf
      %1147 = vmax.xlane.f32.xlu0 %v1146
      %v1148 = vpop.xlane.xlu0 %1147
      %v1149 = vsel %vm507, %v1110, -inf
      %1150 = vmax.xlane.f32.xlu0 %v1149
      %v1151 = vpop.xlane.xlu0 %1150
      %v1152 = vsel %vm507, %v1111, -inf
      %1153 = vmax.xlane.f32.xlu0 %v1152
      %v1154 = vpop.xlane.xlu0 %1153
      %v1155 = vsel %vm507, %v1112, -inf
      %1156 = vmax.xlane.f32.xlu0 %v1155
      %v1157 = vpop.xlane.xlu0 %1156
      %v1158 = vsel %vm507, %v1113, -inf
      %1159 = vmax.xlane.f32.xlu0 %v1158
      %v1160 = vpop.xlane.xlu0 %1159
      %v1161 = vsel %vm507, %v1114, -inf
      %1162 = vmax.xlane.f32.xlu0 %v1161
      %v1163 = vpop.xlane.xlu0 %1162
      %v1164 = vsel %vm507, %v1115, -inf
      %1165 = vmax.xlane.f32.xlu0 %v1164
      %v1166 = vpop.xlane.xlu0 %1165
      %v1167 = vsel %vm507, %v1116, -inf
      %1168 = vmax.xlane.f32.xlu0 %v1167
      %v1169 = vpop.xlane.xlu0 %1168
      %v1170 = vsel %vm507, %v1117, -inf
      %1171 = vmax.xlane.f32.xlu0 %v1170
      %v1172 = vpop.xlane.xlu0 %1171
      %v1173 = vsel %vm507, %v1118, -inf
      %1174 = vmax.xlane.f32.xlu0 %v1173
      %v1175 = vpop.xlane.xlu0 %1174
      %v1176 = vsel %vm507, %v1119, -inf
      %1177 = vmax.xlane.f32.xlu0 %v1176
      %v1178 = vpop.xlane.xlu0 %1177
      %v1179 = vsel %vm507, %v1120, -inf
      %1180 = vmax.xlane.f32.xlu0 %v1179
      %v1181 = vpop.xlane.xlu0 %1180
      %v1182 = vsel %vm507, %v1121, -inf
      %1183 = vmax.xlane.f32.xlu0 %v1182
      %v1184 = vpop.xlane.xlu0 %1183
      %v1185 = vsel %vm507, %v1122, -inf
      %1186 = vmax.xlane.f32.xlu0 %v1185
      %v1187 = vpop.xlane.xlu0 %1186
      %v1188 = vsel %vm507, %v1123, -inf
      %1189 = vmax.xlane.f32.xlu0 %v1188
      %v1190 = vpop.xlane.xlu0 %1189
      %v1191 = vsel %vm507, %v1124, -inf
      %1192 = vmax.xlane.f32.xlu0 %v1191
      %v1193 = vpop.xlane.xlu0 %1192
      %v1194 = vsel %vm507, %v1125, -inf
      %1195 = vmax.xlane.f32.xlu0 %v1194
      %v1196 = vpop.xlane.xlu0 %1195
      %v1197 = vsel %vm507, %v1126, -inf
      %1198 = vmax.xlane.f32.xlu0 %v1197
      %v1199 = vpop.xlane.xlu0 %1198
      %v1200 = vsel %vm507, %v1127, -inf
      %1201 = vmax.xlane.f32.xlu0 %v1200
      %v1202 = vpop.xlane.xlu0 %1201
      %v1203 = vsub.f32 %v1103, %v1130
      %v1204 = vsub.f32 %v1104, %v1133
      %v1205 = vsub.f32 %v1105, %v1136
      %v1206 = vsub.f32 %v1106, %v1139
      %v1207 = vsub.f32 %v1107, %v1142
      %v1208 = vsub.f32 %v1108, %v1145
      %v1209 = vsub.f32 %v1109, %v1148
      %v1210 = vsub.f32 %v1110, %v1151
      %v1211 = vsub.f32 %v1111, %v1154
      %v1212 = vsub.f32 %v1112, %v1157
      %v1213 = vsub.f32 %v1113, %v1160
      %v1214 = vsub.f32 %v1114, %v1163
      %v1215 = vsub.f32 %v1115, %v1166
      %v1216 = vsub.f32 %v1116, %v1169
      %v1217 = vsub.f32 %v1117, %v1172
      %v1218 = vsub.f32 %v1118, %v1175
      %v1219 = vsub.f32 %v1119, %v1178
      %v1220 = vsub.f32 %v1120, %v1181
      %v1221 = vsub.f32 %v1121, %v1184
      %v1222 = vsub.f32 %v1122, %v1187
      %v1223 = vsub.f32 %v1123, %v1190
      %v1224 = vsub.f32 %v1124, %v1193
      %v1225 = vsub.f32 %v1125, %v1196
      %v1226 = vsub.f32 %v1126, %v1199
      %v1227 = vsub.f32 %v1127, %v1202
      %v1228 = vmul.f32 %v1203, 1.442695
      %v1229 = vpow.pop %v1228
      %v1230 = vmul.f32 %v1204, 1.442695
      %v1231 = vpow.pop %v1230
      %v1232 = vmul.f32 %v1205, 1.442695
      %v1233 = vpow.pop %v1232
      %v1234 = vmul.f32 %v1206, 1.442695
      %v1235 = vpow.pop %v1234
      %v1236 = vmul.f32 %v1207, 1.442695
      %v1237 = vpow.pop %v1236
      %v1238 = vmul.f32 %v1208, 1.442695
      %v1239 = vpow.pop %v1238
      %v1240 = vmul.f32 %v1209, 1.442695
      %v1241 = vpow.pop %v1240
      %v1242 = vmul.f32 %v1210, 1.442695
      %v1243 = vpow.pop %v1242
      %v1244 = vmul.f32 %v1211, 1.442695
      %v1245 = vpow.pop %v1244
      %v1246 = vmul.f32 %v1212, 1.442695
      %v1247 = vpow.pop %v1246
      %v1248 = vmul.f32 %v1213, 1.442695
      %v1249 = vpow.pop %v1248
      %v1250 = vmul.f32 %v1214, 1.442695
      %v1251 = vpow.pop %v1250
      %v1252 = vmul.f32 %v1215, 1.442695
      %v1253 = vpow.pop %v1252
      %v1254 = vmul.f32 %v1216, 1.442695
      %v1255 = vpow.pop %v1254
      %v1256 = vmul.f32 %v1217, 1.442695
      %v1257 = vpow.pop %v1256
      %v1258 = vmul.f32 %v1218, 1.442695
      %v1259 = vpow.pop %v1258
      %v1260 = vmul.f32 %v1219, 1.442695
      %v1261 = vpow.pop %v1260
      %v1262 = vmul.f32 %v1220, 1.442695
      %v1263 = vpow.pop %v1262
      %v1264 = vmul.f32 %v1221, 1.442695
      %v1265 = vpow.pop %v1264
      %v1266 = vmul.f32 %v1222, 1.442695
      %v1267 = vpow.pop %v1266
      %v1268 = vmul.f32 %v1223, 1.442695
      %v1269 = vpow.pop %v1268
      %v1270 = vmul.f32 %v1224, 1.442695
      %v1271 = vpow.pop %v1270
      %v1272 = vmul.f32 %v1225, 1.442695
      %v1273 = vpow.pop %v1272
      %v1274 = vmul.f32 %v1226, 1.442695
      %v1275 = vpow.pop %v1274
      %v1276 = vmul.f32 %v1227, 1.442695
      %v1277 = vpow.pop %v1276
      %v1278 = vsel %vm507, %v1229, 0.0
      %1279 = vadd.xlane.f32.xlu0 %v1278
      %v1280 = vpop.xlane.xlu0 %1279
      %v1281 = vsel %vm507, %v1231, 0.0
      %1282 = vadd.xlane.f32.xlu0 %v1281
      %v1283 = vpop.xlane.xlu0 %1282
      %v1284 = vsel %vm507, %v1233, 0.0
      %1285 = vadd.xlane.f32.xlu0 %v1284
      %v1286 = vpop.xlane.xlu0 %1285
      %v1287 = vsel %vm507, %v1235, 0.0
      %1288 = vadd.xlane.f32.xlu0 %v1287
      %v1289 = vpop.xlane.xlu0 %1288
      %v1290 = vsel %vm507, %v1237, 0.0
      %1291 = vadd.xlane.f32.xlu0 %v1290
      %v1292 = vpop.xlane.xlu0 %1291
      %v1293 = vsel %vm507, %v1239, 0.0
      %1294 = vadd.xlane.f32.xlu0 %v1293
      %v1295 = vpop.xlane.xlu0 %1294
      %v1296 = vsel %vm507, %v1241, 0.0
      %1297 = vadd.xlane.f32.xlu0 %v1296
      %v1298 = vpop.xlane.xlu0 %1297
      %v1299 = vsel %vm507, %v1243, 0.0
      %1300 = vadd.xlane.f32.xlu0 %v1299
      %v1301 = vpop.xlane.xlu0 %1300
      %v1302 = vsel %vm507, %v1245, 0.0
      %1303 = vadd.xlane.f32.xlu0 %v1302
      %v1304 = vpop.xlane.xlu0 %1303
      %v1305 = vsel %vm507, %v1247, 0.0
      %1306 = vadd.xlane.f32.xlu0 %v1305
      %v1307 = vpop.xlane.xlu0 %1306
      %v1308 = vsel %vm507, %v1249, 0.0
      %1309 = vadd.xlane.f32.xlu0 %v1308
      %v1310 = vpop.xlane.xlu0 %1309
      %v1311 = vsel %vm507, %v1251, 0.0
      %1312 = vadd.xlane.f32.xlu0 %v1311
      %v1313 = vpop.xlane.xlu0 %1312
      %v1314 = vsel %vm507, %v1253, 0.0
      %1315 = vadd.xlane.f32.xlu0 %v1314
      %v1316 = vpop.xlane.xlu0 %1315
      %v1317 = vsel %vm507, %v1255, 0.0
      %1318 = vadd.xlane.f32.xlu0 %v1317
      %v1319 = vpop.xlane.xlu0 %1318
      %v1320 = vsel %vm507, %v1257, 0.0
      %1321 = vadd.xlane.f32.xlu0 %v1320
      %v1322 = vpop.xlane.xlu0 %1321
      %v1323 = vsel %vm507, %v1259, 0.0
      %1324 = vadd.xlane.f32.xlu0 %v1323
      %v1325 = vpop.xlane.xlu0 %1324
      %v1326 = vsel %vm507, %v1261, 0.0
      %1327 = vadd.xlane.f32.xlu0 %v1326
      %v1328 = vpop.xlane.xlu0 %1327
      %v1329 = vsel %vm507, %v1263, 0.0
      %1330 = vadd.xlane.f32.xlu0 %v1329
      %v1331 = vpop.xlane.xlu0 %1330
      %v1332 = vsel %vm507, %v1265, 0.0
      %1333 = vadd.xlane.f32.xlu0 %v1332
      %v1334 = vpop.xlane.xlu0 %1333
      %v1335 = vsel %vm507, %v1267, 0.0
      %1336 = vadd.xlane.f32.xlu0 %v1335
      %v1337 = vpop.xlane.xlu0 %1336
      %v1338 = vsel %vm507, %v1269, 0.0
      %1339 = vadd.xlane.f32.xlu0 %v1338
      %v1340 = vpop.xlane.xlu0 %1339
      %v1341 = vsel %vm507, %v1271, 0.0
      %1342 = vadd.xlane.f32.xlu0 %v1341
      %v1343 = vpop.xlane.xlu0 %1342
      %v1344 = vsel %vm507, %v1273, 0.0
      %1345 = vadd.xlane.f32.xlu0 %v1344
      %v1346 = vpop.xlane.xlu0 %1345
      %v1347 = vsel %vm507, %v1275, 0.0
      %1348 = vadd.xlane.f32.xlu0 %v1347
      %v1349 = vpop.xlane.xlu0 %1348
      %v1350 = vsel %vm507, %v1277, 0.0
      %1351 = vadd.xlane.f32.xlu0 %v1350
      %v1352 = vpop.xlane.xlu0 %1351
      %v1353 = vrcp.pop %v1280
      %v1354 = vrcp.pop %v1283
      %v1355 = vrcp.pop %v1286
      %v1356 = vrcp.pop %v1289
      %v1357 = vrcp.pop %v1292
      %v1358 = vrcp.pop %v1295
      %v1359 = vrcp.pop %v1298
      %v1360 = vrcp.pop %v1301
      %v1361 = vrcp.pop %v1304
      %v1362 = vrcp.pop %v1307
      %v1363 = vrcp.pop %v1310
      %v1364 = vrcp.pop %v1313
      %v1365 = vrcp.pop %v1316
      %v1366 = vrcp.pop %v1319
      %v1367 = vrcp.pop %v1322
      %v1368 = vrcp.pop %v1325
      %v1369 = vrcp.pop %v1328
      %v1370 = vrcp.pop %v1331
      %v1371 = vrcp.pop %v1334
      %v1372 = vrcp.pop %v1337
      %v1373 = vrcp.pop %v1340
      %v1374 = vrcp.pop %v1343
      %v1375 = vrcp.pop %v1346
      %v1376 = vrcp.pop %v1349
      %v1377 = vrcp.pop %v1352
      %v1378 = vmul.f32 %v1229, %v1353
      %v1379 = vmul.f32 %v1231, %v1354
      %v1380 = vmul.f32 %v1233, %v1355
      %v1381 = vmul.f32 %v1235, %v1356
      %v1382 = vmul.f32 %v1237, %v1357
      %v1383 = vmul.f32 %v1239, %v1358
      %v1384 = vmul.f32 %v1241, %v1359
      %v1385 = vmul.f32 %v1243, %v1360
      %v1386 = vmul.f32 %v1245, %v1361
      %v1387 = vmul.f32 %v1247, %v1362
      %v1388 = vmul.f32 %v1249, %v1363
      %v1389 = vmul.f32 %v1251, %v1364
      %v1390 = vmul.f32 %v1253, %v1365
      %v1391 = vmul.f32 %v1255, %v1366
      %v1392 = vmul.f32 %v1257, %v1367
      %v1393 = vmul.f32 %v1259, %v1368
      %v1394 = vmul.f32 %v1261, %v1369
      %v1395 = vmul.f32 %v1263, %v1370
      %v1396 = vmul.f32 %v1265, %v1371
      %v1397 = vmul.f32 %v1267, %v1372
      %v1398 = vmul.f32 %v1269, %v1373
      %v1399 = vmul.f32 %v1271, %v1374
      %v1400 = vmul.f32 %v1273, %v1375
      %v1401 = vmul.f32 %v1275, %v1376
      %v1402 = vmul.f32 %v1277, %v1377
      %v1403 = vpack.c.bf16 %v1378, %v1378
      %v1404 = vpack.c.bf16 %v1379, %v1379
      %v1405 = vpack.c.bf16 %v1380, %v1380
      %v1406 = vpack.c.bf16 %v1381, %v1381
      %v1407 = vpack.c.bf16 %v1382, %v1382
      %v1408 = vpack.c.bf16 %v1383, %v1383
      %v1409 = vpack.c.bf16 %v1384, %v1384
      %v1410 = vpack.c.bf16 %v1385, %v1385
      %v1411 = vpack.c.bf16 %v1386, %v1386
      %v1412 = vpack.c.bf16 %v1387, %v1387
      %v1413 = vpack.c.bf16 %v1388, %v1388
      %v1414 = vpack.c.bf16 %v1389, %v1389
      %v1415 = vpack.c.bf16 %v1390, %v1390
      %v1416 = vpack.c.bf16 %v1391, %v1391
      %v1417 = vpack.c.bf16 %v1392, %v1392
      %v1418 = vpack.c.bf16 %v1393, %v1393
      %v1419 = vpack.c.bf16 %v1394, %v1394
      %v1420 = vpack.c.bf16 %v1395, %v1395
      %v1421 = vpack.c.bf16 %v1396, %v1396
      %v1422 = vpack.c.bf16 %v1397, %v1397
      %v1423 = vpack.c.bf16 %v1398, %v1398
      %v1424 = vpack.c.bf16 %v1399, %v1399
      %v1425 = vpack.c.bf16 %v1400, %v1400
      %v1426 = vpack.c.bf16 %v1401, %v1401
      %v1427 = vpack.c.bf16 %v1402, %v1402
      %1428 = vrot.lane.b32.xlu0 %v504, 64
      %v1429 = vpop.permute.xlu0 %1428
      %v1431 = vsel %vm507, %v1403, 0
      %vm1433 = vcmask 1043456
      %v1435 = vsel %vm1433, %v1429, 0
      %1437 = vmatpush.bf16.msra.mxu0 0
      %1438 = vmatpush.bf16.msra.mxu0 0
      %1439 = vmatpush.bf16.msra.mxu0 0
      %1440 = vmatpush.bf16.msra.mxu0 0
      %1441 = vmatpush.bf16.msra.mxu0 0
      %1442 = vmatpush.bf16.msra.mxu0 0
      %1443 = vmatpush.bf16.msra.mxu0 0
      %1444 = vmatpush.bf16.msra.mxu0 %v1435
      %1445 = vmatmul.bf16.gmra.mxu0 %v1431
      %v1446 = vpop.f32.mrf.mxu0
      %v1447 = vadd.f32 0.0, %v1446
      %v1448 = vpop.f32.mrf.mxu0
      %1449 = vdwg.mxu0
      %1450 = vrot.lane.b32.xlu0 %v529, 64
      %v1451 = vpop.permute.xlu0 %1450
      %v1453 = vsel %vm507, %v1404, 0
      %v1456 = vsel %vm1433, %v1451, 0
      %1458 = vmatpush.bf16.msra.mxu0 0
      %1459 = vmatpush.bf16.msra.mxu0 0
      %1460 = vmatpush.bf16.msra.mxu0 0
      %1461 = vmatpush.bf16.msra.mxu0 0
      %1462 = vmatpush.bf16.msra.mxu0 0
      %1463 = vmatpush.bf16.msra.mxu0 0
      %1464 = vmatpush.bf16.msra.mxu0 0
      %1465 = vmatpush.bf16.msra.mxu0 %v1456
      %1466 = vmatmul.bf16.gmra.mxu0 %v1453
      %v1467 = vpop.f32.mrf.mxu0
      %v1468 = vadd.f32 0.0, %v1467
      %v1469 = vpop.f32.mrf.mxu0
      %1470 = vdwg.mxu0
      %1471 = vrot.lane.b32.xlu0 %v553, 64
      %v1472 = vpop.permute.xlu0 %1471
      %v1474 = vsel %vm507, %v1405, 0
      %v1477 = vsel %vm1433, %v1472, 0
      %1479 = vmatpush.bf16.msra.mxu0 0
      %1480 = vmatpush.bf16.msra.mxu0 0
      %1481 = vmatpush.bf16.msra.mxu0 0
      %1482 = vmatpush.bf16.msra.mxu0 0
      %1483 = vmatpush.bf16.msra.mxu0 0
      %1484 = vmatpush.bf16.msra.mxu0 0
      %1485 = vmatpush.bf16.msra.mxu0 0
      %1486 = vmatpush.bf16.msra.mxu0 %v1477
      %1487 = vmatmul.bf16.gmra.mxu0 %v1474
      %v1488 = vpop.f32.mrf.mxu0
      %v1489 = vadd.f32 0.0, %v1488
      %v1490 = vpop.f32.mrf.mxu0
      %1491 = vdwg.mxu0
      %1492 = vrot.lane.b32.xlu0 %v577, 64
      %v1493 = vpop.permute.xlu0 %1492
      %v1495 = vsel %vm507, %v1406, 0
      %v1498 = vsel %vm1433, %v1493, 0
      %1500 = vmatpush.bf16.msra.mxu0 0
      %1501 = vmatpush.bf16.msra.mxu0 0
      %1502 = vmatpush.bf16.msra.mxu0 0
      %1503 = vmatpush.bf16.msra.mxu0 0
      %1504 = vmatpush.bf16.msra.mxu0 0
      %1505 = vmatpush.bf16.msra.mxu0 0
      %1506 = vmatpush.bf16.msra.mxu0 0
      %1507 = vmatpush.bf16.msra.mxu0 %v1498
      %1508 = vmatmul.bf16.gmra.mxu0 %v1495
      %v1509 = vpop.f32.mrf.mxu0
      %v1510 = vadd.f32 0.0, %v1509
      %v1511 = vpop.f32.mrf.mxu0
      %1512 = vdwg.mxu0
      %1513 = vrot.lane.b32.xlu0 %v601, 64
      %v1514 = vpop.permute.xlu0 %1513
      %v1516 = vsel %vm507, %v1407, 0
      %v1519 = vsel %vm1433, %v1514, 0
      %1521 = vmatpush.bf16.msra.mxu0 0
      %1522 = vmatpush.bf16.msra.mxu0 0
      %1523 = vmatpush.bf16.msra.mxu0 0
      %1524 = vmatpush.bf16.msra.mxu0 0
      %1525 = vmatpush.bf16.msra.mxu0 0
      %1526 = vmatpush.bf16.msra.mxu0 0
      %1527 = vmatpush.bf16.msra.mxu0 0
      %1528 = vmatpush.bf16.msra.mxu0 %v1519
      %1529 = vmatmul.bf16.gmra.mxu0 %v1516
      %v1530 = vpop.f32.mrf.mxu0
      %v1531 = vadd.f32 0.0, %v1530
      %v1532 = vpop.f32.mrf.mxu0
      %1533 = vdwg.mxu0
      %1534 = vrot.lane.b32.xlu0 %v625, 64
      %v1535 = vpop.permute.xlu0 %1534
      %v1537 = vsel %vm507, %v1408, 0
      %v1540 = vsel %vm1433, %v1535, 0
      %1542 = vmatpush.bf16.msra.mxu0 0
      %1543 = vmatpush.bf16.msra.mxu0 0
      %1544 = vmatpush.bf16.msra.mxu0 0
      %1545 = vmatpush.bf16.msra.mxu0 0
      %1546 = vmatpush.bf16.msra.mxu0 0
      %1547 = vmatpush.bf16.msra.mxu0 0
      %1548 = vmatpush.bf16.msra.mxu0 0
      %1549 = vmatpush.bf16.msra.mxu0 %v1540
      %1550 = vmatmul.bf16.gmra.mxu0 %v1537
      %v1551 = vpop.f32.mrf.mxu0
      %v1552 = vadd.f32 0.0, %v1551
      %v1553 = vpop.f32.mrf.mxu0
      %1554 = vdwg.mxu0
      %1555 = vrot.lane.b32.xlu0 %v649, 64
      %v1556 = vpop.permute.xlu0 %1555
      %v1558 = vsel %vm507, %v1409, 0
      %v1561 = vsel %vm1433, %v1556, 0
      %1563 = vmatpush.bf16.msra.mxu0 0
      %1564 = vmatpush.bf16.msra.mxu0 0
      %1565 = vmatpush.bf16.msra.mxu0 0
      %1566 = vmatpush.bf16.msra.mxu0 0
      %1567 = vmatpush.bf16.msra.mxu0 0
      %1568 = vmatpush.bf16.msra.mxu0 0
      %1569 = vmatpush.bf16.msra.mxu0 0
      %1570 = vmatpush.bf16.msra.mxu0 %v1561
      %1571 = vmatmul.bf16.gmra.mxu0 %v1558
      %v1572 = vpop.f32.mrf.mxu0
      %v1573 = vadd.f32 0.0, %v1572
      %v1574 = vpop.f32.mrf.mxu0
      %1575 = vdwg.mxu0
      %1576 = vrot.lane.b32.xlu0 %v673, 64
      %v1577 = vpop.permute.xlu0 %1576
      %v1579 = vsel %vm507, %v1410, 0
      %v1582 = vsel %vm1433, %v1577, 0
      %1584 = vmatpush.bf16.msra.mxu0 0
      %1585 = vmatpush.bf16.msra.mxu0 0
      %1586 = vmatpush.bf16.msra.mxu0 0
      %1587 = vmatpush.bf16.msra.mxu0 0
      %1588 = vmatpush.bf16.msra.mxu0 0
      %1589 = vmatpush.bf16.msra.mxu0 0
      %1590 = vmatpush.bf16.msra.mxu0 0
      %1591 = vmatpush.bf16.msra.mxu0 %v1582
      %1592 = vmatmul.bf16.gmra.mxu0 %v1579
      %v1593 = vpop.f32.mrf.mxu0
      %v1594 = vadd.f32 0.0, %v1593
      %v1595 = vpop.f32.mrf.mxu0
      %1596 = vdwg.mxu0
      %1597 = vrot.lane.b32.xlu0 %v697, 64
      %v1598 = vpop.permute.xlu0 %1597
      %v1600 = vsel %vm507, %v1411, 0
      %v1603 = vsel %vm1433, %v1598, 0
      %1605 = vmatpush.bf16.msra.mxu0 0
      %1606 = vmatpush.bf16.msra.mxu0 0
      %1607 = vmatpush.bf16.msra.mxu0 0
      %1608 = vmatpush.bf16.msra.mxu0 0
      %1609 = vmatpush.bf16.msra.mxu0 0
      %1610 = vmatpush.bf16.msra.mxu0 0
      %1611 = vmatpush.bf16.msra.mxu0 0
      %1612 = vmatpush.bf16.msra.mxu0 %v1603
      %1613 = vmatmul.bf16.gmra.mxu0 %v1600
      %v1614 = vpop.f32.mrf.mxu0
      %v1615 = vadd.f32 0.0, %v1614
      %v1616 = vpop.f32.mrf.mxu0
      %1617 = vdwg.mxu0
      %1618 = vrot.lane.b32.xlu0 %v721, 64
      %v1619 = vpop.permute.xlu0 %1618
      %v1621 = vsel %vm507, %v1412, 0
      %v1624 = vsel %vm1433, %v1619, 0
      %1626 = vmatpush.bf16.msra.mxu0 0
      %1627 = vmatpush.bf16.msra.mxu0 0
      %1628 = vmatpush.bf16.msra.mxu0 0
      %1629 = vmatpush.bf16.msra.mxu0 0
      %1630 = vmatpush.bf16.msra.mxu0 0
      %1631 = vmatpush.bf16.msra.mxu0 0
      %1632 = vmatpush.bf16.msra.mxu0 0
      %1633 = vmatpush.bf16.msra.mxu0 %v1624
      %1634 = vmatmul.bf16.gmra.mxu0 %v1621
      %v1635 = vpop.f32.mrf.mxu0
      %v1636 = vadd.f32 0.0, %v1635
      %v1637 = vpop.f32.mrf.mxu0
      %1638 = vdwg.mxu0
      %1639 = vrot.lane.b32.xlu0 %v745, 64
      %v1640 = vpop.permute.xlu0 %1639
      %v1642 = vsel %vm507, %v1413, 0
      %v1645 = vsel %vm1433, %v1640, 0
      %1647 = vmatpush.bf16.msra.mxu0 0
      %1648 = vmatpush.bf16.msra.mxu0 0
      %1649 = vmatpush.bf16.msra.mxu0 0
      %1650 = vmatpush.bf16.msra.mxu0 0
      %1651 = vmatpush.bf16.msra.mxu0 0
      %1652 = vmatpush.bf16.msra.mxu0 0
      %1653 = vmatpush.bf16.msra.mxu0 0
      %1654 = vmatpush.bf16.msra.mxu0 %v1645
      %1655 = vmatmul.bf16.gmra.mxu0 %v1642
      %v1656 = vpop.f32.mrf.mxu0
      %v1657 = vadd.f32 0.0, %v1656
      %v1658 = vpop.f32.mrf.mxu0
      %1659 = vdwg.mxu0
      %1660 = vrot.lane.b32.xlu0 %v769, 64
      %v1661 = vpop.permute.xlu0 %1660
      %v1663 = vsel %vm507, %v1414, 0
      %v1666 = vsel %vm1433, %v1661, 0
      %1668 = vmatpush.bf16.msra.mxu0 0
      %1669 = vmatpush.bf16.msra.mxu0 0
      %1670 = vmatpush.bf16.msra.mxu0 0
      %1671 = vmatpush.bf16.msra.mxu0 0
      %1672 = vmatpush.bf16.msra.mxu0 0
      %1673 = vmatpush.bf16.msra.mxu0 0
      %1674 = vmatpush.bf16.msra.mxu0 0
      %1675 = vmatpush.bf16.msra.mxu0 %v1666
      %1676 = vmatmul.bf16.gmra.mxu0 %v1663
      %v1677 = vpop.f32.mrf.mxu0
      %v1678 = vadd.f32 0.0, %v1677
      %v1679 = vpop.f32.mrf.mxu0
      %1680 = vdwg.mxu0
      %1681 = vrot.lane.b32.xlu0 %v793, 64
      %v1682 = vpop.permute.xlu0 %1681
      %v1684 = vsel %vm507, %v1415, 0
      %v1687 = vsel %vm1433, %v1682, 0
      %1689 = vmatpush.bf16.msra.mxu0 0
      %1690 = vmatpush.bf16.msra.mxu0 0
      %1691 = vmatpush.bf16.msra.mxu0 0
      %1692 = vmatpush.bf16.msra.mxu0 0
      %1693 = vmatpush.bf16.msra.mxu0 0
      %1694 = vmatpush.bf16.msra.mxu0 0
      %1695 = vmatpush.bf16.msra.mxu0 0
      %1696 = vmatpush.bf16.msra.mxu0 %v1687
      %1697 = vmatmul.bf16.gmra.mxu0 %v1684
      %v1698 = vpop.f32.mrf.mxu0
      %v1699 = vadd.f32 0.0, %v1698
      %v1700 = vpop.f32.mrf.mxu0
      %1701 = vdwg.mxu0
      %1702 = vrot.lane.b32.xlu0 %v817, 64
      %v1703 = vpop.permute.xlu0 %1702
      %v1705 = vsel %vm507, %v1416, 0
      %v1708 = vsel %vm1433, %v1703, 0
      %1710 = vmatpush.bf16.msra.mxu0 0
      %1711 = vmatpush.bf16.msra.mxu0 0
      %1712 = vmatpush.bf16.msra.mxu0 0
      %1713 = vmatpush.bf16.msra.mxu0 0
      %1714 = vmatpush.bf16.msra.mxu0 0
      %1715 = vmatpush.bf16.msra.mxu0 0
      %1716 = vmatpush.bf16.msra.mxu0 0
      %1717 = vmatpush.bf16.msra.mxu0 %v1708
      %1718 = vmatmul.bf16.gmra.mxu0 %v1705
      %v1719 = vpop.f32.mrf.mxu0
      %v1720 = vadd.f32 0.0, %v1719
      %v1721 = vpop.f32.mrf.mxu0
      %1722 = vdwg.mxu0
      %1723 = vrot.lane.b32.xlu0 %v841, 64
      %v1724 = vpop.permute.xlu0 %1723
      %v1726 = vsel %vm507, %v1417, 0
      %v1729 = vsel %vm1433, %v1724, 0
      %1731 = vmatpush.bf16.msra.mxu0 0
      %1732 = vmatpush.bf16.msra.mxu0 0
      %1733 = vmatpush.bf16.msra.mxu0 0
      %1734 = vmatpush.bf16.msra.mxu0 0
      %1735 = vmatpush.bf16.msra.mxu0 0
      %1736 = vmatpush.bf16.msra.mxu0 0
      %1737 = vmatpush.bf16.msra.mxu0 0
      %1738 = vmatpush.bf16.msra.mxu0 %v1729
      %1739 = vmatmul.bf16.gmra.mxu0 %v1726
      %v1740 = vpop.f32.mrf.mxu0
      %v1741 = vadd.f32 0.0, %v1740
      %v1742 = vpop.f32.mrf.mxu0
      %1743 = vdwg.mxu0
      %1744 = vrot.lane.b32.xlu0 %v865, 64
      %v1745 = vpop.permute.xlu0 %1744
      %v1747 = vsel %vm507, %v1418, 0
      %v1750 = vsel %vm1433, %v1745, 0
      %1752 = vmatpush.bf16.msra.mxu0 0
      %1753 = vmatpush.bf16.msra.mxu0 0
      %1754 = vmatpush.bf16.msra.mxu0 0
      %1755 = vmatpush.bf16.msra.mxu0 0
      %1756 = vmatpush.bf16.msra.mxu0 0
      %1757 = vmatpush.bf16.msra.mxu0 0
      %1758 = vmatpush.bf16.msra.mxu0 0
      %1759 = vmatpush.bf16.msra.mxu0 %v1750
      %1760 = vmatmul.bf16.gmra.mxu0 %v1747
      %v1761 = vpop.f32.mrf.mxu0
      %v1762 = vadd.f32 0.0, %v1761
      %v1763 = vpop.f32.mrf.mxu0
      %1764 = vdwg.mxu0
      %1765 = vrot.lane.b32.xlu0 %v889, 64
      %v1766 = vpop.permute.xlu0 %1765
      %v1768 = vsel %vm507, %v1419, 0
      %v1771 = vsel %vm1433, %v1766, 0
      %1773 = vmatpush.bf16.msra.mxu0 0
      %1774 = vmatpush.bf16.msra.mxu0 0
      %1775 = vmatpush.bf16.msra.mxu0 0
      %1776 = vmatpush.bf16.msra.mxu0 0
      %1777 = vmatpush.bf16.msra.mxu0 0
      %1778 = vmatpush.bf16.msra.mxu0 0
      %1779 = vmatpush.bf16.msra.mxu0 0
      %1780 = vmatpush.bf16.msra.mxu0 %v1771
      %1781 = vmatmul.bf16.gmra.mxu0 %v1768
      %v1782 = vpop.f32.mrf.mxu0
      %v1783 = vadd.f32 0.0, %v1782
      %v1784 = vpop.f32.mrf.mxu0
      %1785 = vdwg.mxu0
      %1786 = vrot.lane.b32.xlu0 %v913, 64
      %v1787 = vpop.permute.xlu0 %1786
      %v1789 = vsel %vm507, %v1420, 0
      %v1792 = vsel %vm1433, %v1787, 0
      %1794 = vmatpush.bf16.msra.mxu0 0
      %1795 = vmatpush.bf16.msra.mxu0 0
      %1796 = vmatpush.bf16.msra.mxu0 0
      %1797 = vmatpush.bf16.msra.mxu0 0
      %1798 = vmatpush.bf16.msra.mxu0 0
      %1799 = vmatpush.bf16.msra.mxu0 0
      %1800 = vmatpush.bf16.msra.mxu0 0
      %1801 = vmatpush.bf16.msra.mxu0 %v1792
      %1802 = vmatmul.bf16.gmra.mxu0 %v1789
      %v1803 = vpop.f32.mrf.mxu0
      %v1804 = vadd.f32 0.0, %v1803
      %v1805 = vpop.f32.mrf.mxu0
      %1806 = vdwg.mxu0
      %1807 = vrot.lane.b32.xlu0 %v937, 64
      %v1808 = vpop.permute.xlu0 %1807
      %v1810 = vsel %vm507, %v1421, 0
      %v1813 = vsel %vm1433, %v1808, 0
      %1815 = vmatpush.bf16.msra.mxu0 0
      %1816 = vmatpush.bf16.msra.mxu0 0
      %1817 = vmatpush.bf16.msra.mxu0 0
      %1818 = vmatpush.bf16.msra.mxu0 0
      %1819 = vmatpush.bf16.msra.mxu0 0
      %1820 = vmatpush.bf16.msra.mxu0 0
      %1821 = vmatpush.bf16.msra.mxu0 0
      %1822 = vmatpush.bf16.msra.mxu0 %v1813
      %1823 = vmatmul.bf16.gmra.mxu0 %v1810
      %v1824 = vpop.f32.mrf.mxu0
      %v1825 = vadd.f32 0.0, %v1824
      %v1826 = vpop.f32.mrf.mxu0
      %1827 = vdwg.mxu0
      %1828 = vrot.lane.b32.xlu0 %v961, 64
      %v1829 = vpop.permute.xlu0 %1828
      %v1831 = vsel %vm507, %v1422, 0
      %v1834 = vsel %vm1433, %v1829, 0
      %1836 = vmatpush.bf16.msra.mxu0 0
      %1837 = vmatpush.bf16.msra.mxu0 0
      %1838 = vmatpush.bf16.msra.mxu0 0
      %1839 = vmatpush.bf16.msra.mxu0 0
      %1840 = vmatpush.bf16.msra.mxu0 0
      %1841 = vmatpush.bf16.msra.mxu0 0
      %1842 = vmatpush.bf16.msra.mxu0 0
      %1843 = vmatpush.bf16.msra.mxu0 %v1834
      %1844 = vmatmul.bf16.gmra.mxu0 %v1831
      %v1845 = vpop.f32.mrf.mxu0
      %v1846 = vadd.f32 0.0, %v1845
      %v1847 = vpop.f32.mrf.mxu0
      %1848 = vdwg.mxu0
      %1849 = vrot.lane.b32.xlu0 %v985, 64
      %v1850 = vpop.permute.xlu0 %1849
      %v1852 = vsel %vm507, %v1423, 0
      %v1855 = vsel %vm1433, %v1850, 0
      %1857 = vmatpush.bf16.msra.mxu0 0
      %1858 = vmatpush.bf16.msra.mxu0 0
      %1859 = vmatpush.bf16.msra.mxu0 0
      %1860 = vmatpush.bf16.msra.mxu0 0
      %1861 = vmatpush.bf16.msra.mxu0 0
      %1862 = vmatpush.bf16.msra.mxu0 0
      %1863 = vmatpush.bf16.msra.mxu0 0
      %1864 = vmatpush.bf16.msra.mxu0 %v1855
      %1865 = vmatmul.bf16.gmra.mxu0 %v1852
      %v1866 = vpop.f32.mrf.mxu0
      %v1867 = vadd.f32 0.0, %v1866
      %v1868 = vpop.f32.mrf.mxu0
      %1869 = vdwg.mxu0
      %1870 = vrot.lane.b32.xlu0 %v1009, 64
      %v1871 = vpop.permute.xlu0 %1870
      %v1873 = vsel %vm507, %v1424, 0
      %v1876 = vsel %vm1433, %v1871, 0
      %1878 = vmatpush.bf16.msra.mxu0 0
      %1879 = vmatpush.bf16.msra.mxu0 0
      %1880 = vmatpush.bf16.msra.mxu0 0
      %1881 = vmatpush.bf16.msra.mxu0 0
      %1882 = vmatpush.bf16.msra.mxu0 0
      %1883 = vmatpush.bf16.msra.mxu0 0
      %1884 = vmatpush.bf16.msra.mxu0 0
      %1885 = vmatpush.bf16.msra.mxu0 %v1876
      %1886 = vmatmul.bf16.gmra.mxu0 %v1873
      %v1887 = vpop.f32.mrf.mxu0
      %v1888 = vadd.f32 0.0, %v1887
      %v1889 = vpop.f32.mrf.mxu0
      %1890 = vdwg.mxu0
      %1891 = vrot.lane.b32.xlu0 %v1033, 64
      %v1892 = vpop.permute.xlu0 %1891
      %v1894 = vsel %vm507, %v1425, 0
      %v1897 = vsel %vm1433, %v1892, 0
      %1899 = vmatpush.bf16.msra.mxu0 0
      %1900 = vmatpush.bf16.msra.mxu0 0
      %1901 = vmatpush.bf16.msra.mxu0 0
      %1902 = vmatpush.bf16.msra.mxu0 0
      %1903 = vmatpush.bf16.msra.mxu0 0
      %1904 = vmatpush.bf16.msra.mxu0 0
      %1905 = vmatpush.bf16.msra.mxu0 0
      %1906 = vmatpush.bf16.msra.mxu0 %v1897
      %1907 = vmatmul.bf16.gmra.mxu0 %v1894
      %v1908 = vpop.f32.mrf.mxu0
      %v1909 = vadd.f32 0.0, %v1908
      %v1910 = vpop.f32.mrf.mxu0
      %1911 = vdwg.mxu0
      %1912 = vrot.lane.b32.xlu0 %v1057, 64
      %v1913 = vpop.permute.xlu0 %1912
      %v1915 = vsel %vm507, %v1426, 0
      %v1918 = vsel %vm1433, %v1913, 0
      %1920 = vmatpush.bf16.msra.mxu0 0
      %1921 = vmatpush.bf16.msra.mxu0 0
      %1922 = vmatpush.bf16.msra.mxu0 0
      %1923 = vmatpush.bf16.msra.mxu0 0
      %1924 = vmatpush.bf16.msra.mxu0 0
      %1925 = vmatpush.bf16.msra.mxu0 0
      %1926 = vmatpush.bf16.msra.mxu0 0
      %1927 = vmatpush.bf16.msra.mxu0 %v1918
      %1928 = vmatmul.bf16.gmra.mxu0 %v1915
      %v1929 = vpop.f32.mrf.mxu0
      %v1930 = vadd.f32 0.0, %v1929
      %v1931 = vpop.f32.mrf.mxu0
      %1932 = vdwg.mxu0
      %1933 = vrot.lane.b32.xlu0 %v1081, 64
      %v1934 = vpop.permute.xlu0 %1933
      %v1936 = vsel %vm507, %v1427, 0
      %v1939 = vsel %vm1433, %v1934, 0
      %1941 = vmatpush.bf16.msra.mxu0 0
      %1942 = vmatpush.bf16.msra.mxu0 0
      %1943 = vmatpush.bf16.msra.mxu0 0
      %1944 = vmatpush.bf16.msra.mxu0 0
      %1945 = vmatpush.bf16.msra.mxu0 0
      %1946 = vmatpush.bf16.msra.mxu0 0
      %1947 = vmatpush.bf16.msra.mxu0 0
      %1948 = vmatpush.bf16.msra.mxu0 %v1939
      %1949 = vmatmul.bf16.gmra.mxu0 %v1936
      %v1950 = vpop.f32.mrf.mxu0
      %v1951 = vadd.f32 0.0, %v1950
      %v1952 = vpop.f32.mrf.mxu0
      %1953 = vdwg.mxu0
      %v1954 = vpack.c.bf16 %v1468, %v1447
      %v1955 = vpack.c.bf16 %v1510, %v1489
      %v1956 = vpack.c.bf16 %v1552, %v1531
      %v1957 = vpack.c.bf16 %v1594, %v1573
      %v1958 = vpack.c.bf16 %v1636, %v1615
      %v1959 = vpack.c.bf16 %v1678, %v1657
      %v1960 = vpack.c.bf16 %v1720, %v1699
      %v1961 = vpack.c.bf16 %v1762, %v1741
      %v1962 = vpack.c.bf16 %v1804, %v1783
      %v1963 = vpack.c.bf16 %v1846, %v1825
      %v1964 = vpack.c.bf16 %v1888, %v1867
      %v1965 = vpack.c.bf16 %v1930, %v1909
      %v1966 = vpack.c.bf16 %v1951, %v1951
      %v1967 = vld [vmem:[%s2] sm:$0xf]
      %1968 = vrot.lane.b32.xlu0 %v504, 120
      %v1969 = vpop.permute.xlu0 %1968
      %1970 = vrot.lane.b32.xlu0 %v504, 88
      %v1971 = vpop.permute.xlu0 %1970
      %v1973 = vsel %vm507, %v1969, 0
      %v1976 = vsel %vm507, %v1971, 0
      %1978 = vmatpush.bf16.xpose.msra.mxu0 0
      %1979 = vmatpush.bf16.xpose.msra.mxu0 0
      %1980 = vmatpush.bf16.xpose.msra.mxu0 0
      %1981 = vmatpush.bf16.xpose.msra.mxu0 0
      %1982 = vmatpush.bf16.xpose.msra.mxu0 0
      %1983 = vmatpush.bf16.xpose.msra.mxu0 0
      %1984 = vmatpush.bf16.xpose.msra.mxu0 0
      %1985 = vmatpush.bf16.xpose.msra.mxu0 %v1976
      %1986 = vmatmul.bf16.gmra.mxu0 %v1973
      %v1987 = vpop.f32.mrf.mxu0
      %v1988 = vadd.f32 0.0, %v1987
      %v1989 = vpop.f32.mrf.mxu0
      %1990 = vdwg.mxu0
      %1991 = vrot.lane.b32.xlu0 %v529, 120
      %v1992 = vpop.permute.xlu0 %1991
      %1993 = vrot.lane.b32.xlu0 %v529, 88
      %v1994 = vpop.permute.xlu0 %1993
      %v1996 = vsel %vm507, %v1992, 0
      %v1999 = vsel %vm507, %v1994, 0
      %2001 = vmatpush.bf16.xpose.msra.mxu0 0
      %2002 = vmatpush.bf16.xpose.msra.mxu0 0
      %2003 = vmatpush.bf16.xpose.msra.mxu0 0
      %2004 = vmatpush.bf16.xpose.msra.mxu0 0
      %2005 = vmatpush.bf16.xpose.msra.mxu0 0
      %2006 = vmatpush.bf16.xpose.msra.mxu0 0
      %2007 = vmatpush.bf16.xpose.msra.mxu0 0
      %2008 = vmatpush.bf16.xpose.msra.mxu0 %v1999
      %2009 = vmatmul.bf16.gmra.mxu0 %v1996
      %v2010 = vpop.f32.mrf.mxu0
      %v2011 = vadd.f32 0.0, %v2010
      %v2012 = vpop.f32.mrf.mxu0
      %2013 = vdwg.mxu0
      %2014 = vrot.lane.b32.xlu0 %v553, 120
      %v2015 = vpop.permute.xlu0 %2014
      %2016 = vrot.lane.b32.xlu0 %v553, 88
      %v2017 = vpop.permute.xlu0 %2016
      %v2019 = vsel %vm507, %v2015, 0
      %v2022 = vsel %vm507, %v2017, 0
      %2024 = vmatpush.bf16.xpose.msra.mxu0 0
      %2025 = vmatpush.bf16.xpose.msra.mxu0 0
      %2026 = vmatpush.bf16.xpose.msra.mxu0 0
      %2027 = vmatpush.bf16.xpose.msra.mxu0 0
      %2028 = vmatpush.bf16.xpose.msra.mxu0 0
      %2029 = vmatpush.bf16.xpose.msra.mxu0 0
      %2030 = vmatpush.bf16.xpose.msra.mxu0 0
      %2031 = vmatpush.bf16.xpose.msra.mxu0 %v2022
      %2032 = vmatmul.bf16.gmra.mxu0 %v2019
      %v2033 = vpop.f32.mrf.mxu0
      %v2034 = vadd.f32 0.0, %v2033
      %v2035 = vpop.f32.mrf.mxu0
      %2036 = vdwg.mxu0
      %2037 = vrot.lane.b32.xlu0 %v577, 120
      %v2038 = vpop.permute.xlu0 %2037
      %2039 = vrot.lane.b32.xlu0 %v577, 88
      %v2040 = vpop.permute.xlu0 %2039
      %v2042 = vsel %vm507, %v2038, 0
      %v2045 = vsel %vm507, %v2040, 0
      %2047 = vmatpush.bf16.xpose.msra.mxu0 0
      %2048 = vmatpush.bf16.xpose.msra.mxu0 0
      %2049 = vmatpush.bf16.xpose.msra.mxu0 0
      %2050 = vmatpush.bf16.xpose.msra.mxu0 0
      %2051 = vmatpush.bf16.xpose.msra.mxu0 0
      %2052 = vmatpush.bf16.xpose.msra.mxu0 0
      %2053 = vmatpush.bf16.xpose.msra.mxu0 0
      %2054 = vmatpush.bf16.xpose.msra.mxu0 %v2045
      %2055 = vmatmul.bf16.gmra.mxu0 %v2042
      %v2056 = vpop.f32.mrf.mxu0
      %v2057 = vadd.f32 0.0, %v2056
      %v2058 = vpop.f32.mrf.mxu0
      %2059 = vdwg.mxu0
      %2060 = vrot.lane.b32.xlu0 %v601, 120
      %v2061 = vpop.permute.xlu0 %2060
      %2062 = vrot.lane.b32.xlu0 %v601, 88
      %v2063 = vpop.permute.xlu0 %2062
      %v2065 = vsel %vm507, %v2061, 0
      %v2068 = vsel %vm507, %v2063, 0
      %2070 = vmatpush.bf16.xpose.msra.mxu0 0
      %2071 = vmatpush.bf16.xpose.msra.mxu0 0
      %2072 = vmatpush.bf16.xpose.msra.mxu0 0
      %2073 = vmatpush.bf16.xpose.msra.mxu0 0
      %2074 = vmatpush.bf16.xpose.msra.mxu0 0
      %2075 = vmatpush.bf16.xpose.msra.mxu0 0
      %2076 = vmatpush.bf16.xpose.msra.mxu0 0
      %2077 = vmatpush.bf16.xpose.msra.mxu0 %v2068
      %2078 = vmatmul.bf16.gmra.mxu0 %v2065
      %v2079 = vpop.f32.mrf.mxu0
      %v2080 = vadd.f32 0.0, %v2079
      %v2081 = vpop.f32.mrf.mxu0
      %2082 = vdwg.mxu0
      %2083 = vrot.lane.b32.xlu0 %v625, 120
      %v2084 = vpop.permute.xlu0 %2083
      %2085 = vrot.lane.b32.xlu0 %v625, 88
      %v2086 = vpop.permute.xlu0 %2085
      %v2088 = vsel %vm507, %v2084, 0
      %v2091 = vsel %vm507, %v2086, 0
      %2093 = vmatpush.bf16.xpose.msra.mxu0 0
      %2094 = vmatpush.bf16.xpose.msra.mxu0 0
      %2095 = vmatpush.bf16.xpose.msra.mxu0 0
      %2096 = vmatpush.bf16.xpose.msra.mxu0 0
      %2097 = vmatpush.bf16.xpose.msra.mxu0 0
      %2098 = vmatpush.bf16.xpose.msra.mxu0 0
      %2099 = vmatpush.bf16.xpose.msra.mxu0 0
      %2100 = vmatpush.bf16.xpose.msra.mxu0 %v2091
      %2101 = vmatmul.bf16.gmra.mxu0 %v2088
      %v2102 = vpop.f32.mrf.mxu0
      %v2103 = vadd.f32 0.0, %v2102
      %v2104 = vpop.f32.mrf.mxu0
      %2105 = vdwg.mxu0
      %2106 = vrot.lane.b32.xlu0 %v649, 120
      %v2107 = vpop.permute.xlu0 %2106
      %2108 = vrot.lane.b32.xlu0 %v649, 88
      %v2109 = vpop.permute.xlu0 %2108
      %v2111 = vsel %vm507, %v2107, 0
      %v2114 = vsel %vm507, %v2109, 0
      %2116 = vmatpush.bf16.xpose.msra.mxu0 0
      %2117 = vmatpush.bf16.xpose.msra.mxu0 0
      %2118 = vmatpush.bf16.xpose.msra.mxu0 0
      %2119 = vmatpush.bf16.xpose.msra.mxu0 0
      %2120 = vmatpush.bf16.xpose.msra.mxu0 0
      %2121 = vmatpush.bf16.xpose.msra.mxu0 0
      %2122 = vmatpush.bf16.xpose.msra.mxu0 0
      %2123 = vmatpush.bf16.xpose.msra.mxu0 %v2114
      %2124 = vmatmul.bf16.gmra.mxu0 %v2111
      %v2125 = vpop.f32.mrf.mxu0
      %v2126 = vadd.f32 0.0, %v2125
      %v2127 = vpop.f32.mrf.mxu0
      %2128 = vdwg.mxu0
      %2129 = vrot.lane.b32.xlu0 %v673, 120
      %v2130 = vpop.permute.xlu0 %2129
      %2131 = vrot.lane.b32.xlu0 %v673, 88
      %v2132 = vpop.permute.xlu0 %2131
      %v2134 = vsel %vm507, %v2130, 0
      %v2137 = vsel %vm507, %v2132, 0
      %2139 = vmatpush.bf16.xpose.msra.mxu0 0
      %2140 = vmatpush.bf16.xpose.msra.mxu0 0
      %2141 = vmatpush.bf16.xpose.msra.mxu0 0
      %2142 = vmatpush.bf16.xpose.msra.mxu0 0
      %2143 = vmatpush.bf16.xpose.msra.mxu0 0
      %2144 = vmatpush.bf16.xpose.msra.mxu0 0
      %2145 = vmatpush.bf16.xpose.msra.mxu0 0
      %2146 = vmatpush.bf16.xpose.msra.mxu0 %v2137
      %2147 = vmatmul.bf16.gmra.mxu0 %v2134
      %v2148 = vpop.f32.mrf.mxu0
      %v2149 = vadd.f32 0.0, %v2148
      %v2150 = vpop.f32.mrf.mxu0
      %2151 = vdwg.mxu0
      %2152 = vrot.lane.b32.xlu0 %v697, 120
      %v2153 = vpop.permute.xlu0 %2152
      %2154 = vrot.lane.b32.xlu0 %v697, 88
      %v2155 = vpop.permute.xlu0 %2154
      %v2157 = vsel %vm507, %v2153, 0
      %v2160 = vsel %vm507, %v2155, 0
      %2162 = vmatpush.bf16.xpose.msra.mxu0 0
      %2163 = vmatpush.bf16.xpose.msra.mxu0 0
      %2164 = vmatpush.bf16.xpose.msra.mxu0 0
      %2165 = vmatpush.bf16.xpose.msra.mxu0 0
      %2166 = vmatpush.bf16.xpose.msra.mxu0 0
      %2167 = vmatpush.bf16.xpose.msra.mxu0 0
      %2168 = vmatpush.bf16.xpose.msra.mxu0 0
      %2169 = vmatpush.bf16.xpose.msra.mxu0 %v2160
      %2170 = vmatmul.bf16.gmra.mxu0 %v2157
      %v2171 = vpop.f32.mrf.mxu0
      %v2172 = vadd.f32 0.0, %v2171
      %v2173 = vpop.f32.mrf.mxu0
      %2174 = vdwg.mxu0
      %2175 = vrot.lane.b32.xlu0 %v721, 120
      %v2176 = vpop.permute.xlu0 %2175
      %2177 = vrot.lane.b32.xlu0 %v721, 88
      %v2178 = vpop.permute.xlu0 %2177
      %v2180 = vsel %vm507, %v2176, 0
      %v2183 = vsel %vm507, %v2178, 0
      %2185 = vmatpush.bf16.xpose.msra.mxu0 0
      %2186 = vmatpush.bf16.xpose.msra.mxu0 0
      %2187 = vmatpush.bf16.xpose.msra.mxu0 0
      %2188 = vmatpush.bf16.xpose.msra.mxu0 0
      %2189 = vmatpush.bf16.xpose.msra.mxu0 0
      %2190 = vmatpush.bf16.xpose.msra.mxu0 0
      %2191 = vmatpush.bf16.xpose.msra.mxu0 0
      %2192 = vmatpush.bf16.xpose.msra.mxu0 %v2183
      %2193 = vmatmul.bf16.gmra.mxu0 %v2180
      %v2194 = vpop.f32.mrf.mxu0
      %v2195 = vadd.f32 0.0, %v2194
      %v2196 = vpop.f32.mrf.mxu0
      %2197 = vdwg.mxu0
      %2198 = vrot.lane.b32.xlu0 %v745, 120
      %v2199 = vpop.permute.xlu0 %2198
      %2200 = vrot.lane.b32.xlu0 %v745, 88
      %v2201 = vpop.permute.xlu0 %2200
      %v2203 = vsel %vm507, %v2199, 0
      %v2206 = vsel %vm507, %v2201, 0
      %2208 = vmatpush.bf16.xpose.msra.mxu0 0
      %2209 = vmatpush.bf16.xpose.msra.mxu0 0
      %2210 = vmatpush.bf16.xpose.msra.mxu0 0
      %2211 = vmatpush.bf16.xpose.msra.mxu0 0
      %2212 = vmatpush.bf16.xpose.msra.mxu0 0
      %2213 = vmatpush.bf16.xpose.msra.mxu0 0
      %2214 = vmatpush.bf16.xpose.msra.mxu0 0
      %2215 = vmatpush.bf16.xpose.msra.mxu0 %v2206
      %2216 = vmatmul.bf16.gmra.mxu0 %v2203
      %v2217 = vpop.f32.mrf.mxu0
      %v2218 = vadd.f32 0.0, %v2217
      %v2219 = vpop.f32.mrf.mxu0
      %2220 = vdwg.mxu0
      %2221 = vrot.lane.b32.xlu0 %v769, 120
      %v2222 = vpop.permute.xlu0 %2221
      %2223 = vrot.lane.b32.xlu0 %v769, 88
      %v2224 = vpop.permute.xlu0 %2223
      %v2226 = vsel %vm507, %v2222, 0
      %v2229 = vsel %vm507, %v2224, 0
      %2231 = vmatpush.bf16.xpose.msra.mxu0 0
      %2232 = vmatpush.bf16.xpose.msra.mxu0 0
      %2233 = vmatpush.bf16.xpose.msra.mxu0 0
      %2234 = vmatpush.bf16.xpose.msra.mxu0 0
      %2235 = vmatpush.bf16.xpose.msra.mxu0 0
      %2236 = vmatpush.bf16.xpose.msra.mxu0 0
      %2237 = vmatpush.bf16.xpose.msra.mxu0 0
      %2238 = vmatpush.bf16.xpose.msra.mxu0 %v2229
      %2239 = vmatmul.bf16.gmra.mxu0 %v2226
      %v2240 = vpop.f32.mrf.mxu0
      %v2241 = vadd.f32 0.0, %v2240
      %v2242 = vpop.f32.mrf.mxu0
      %2243 = vdwg.mxu0
      %2244 = vrot.lane.b32.xlu0 %v793, 120
      %v2245 = vpop.permute.xlu0 %2244
      %2246 = vrot.lane.b32.xlu0 %v793, 88
      %v2247 = vpop.permute.xlu0 %2246
      %v2249 = vsel %vm507, %v2245, 0
      %v2252 = vsel %vm507, %v2247, 0
      %2254 = vmatpush.bf16.xpose.msra.mxu0 0
      %2255 = vmatpush.bf16.xpose.msra.mxu0 0
      %2256 = vmatpush.bf16.xpose.msra.mxu0 0
      %2257 = vmatpush.bf16.xpose.msra.mxu0 0
      %2258 = vmatpush.bf16.xpose.msra.mxu0 0
      %2259 = vmatpush.bf16.xpose.msra.mxu0 0
      %2260 = vmatpush.bf16.xpose.msra.mxu0 0
      %2261 = vmatpush.bf16.xpose.msra.mxu0 %v2252
      %2262 = vmatmul.bf16.gmra.mxu0 %v2249
      %v2263 = vpop.f32.mrf.mxu0
      %v2264 = vadd.f32 0.0, %v2263
      %v2265 = vpop.f32.mrf.mxu0
      %2266 = vdwg.mxu0
      %2267 = vrot.lane.b32.xlu0 %v817, 120
      %v2268 = vpop.permute.xlu0 %2267
      %2269 = vrot.lane.b32.xlu0 %v817, 88
      %v2270 = vpop.permute.xlu0 %2269
      %v2272 = vsel %vm507, %v2268, 0
      %v2275 = vsel %vm507, %v2270, 0
      %2277 = vmatpush.bf16.xpose.msra.mxu0 0
      %2278 = vmatpush.bf16.xpose.msra.mxu0 0
      %2279 = vmatpush.bf16.xpose.msra.mxu0 0
      %2280 = vmatpush.bf16.xpose.msra.mxu0 0
      %2281 = vmatpush.bf16.xpose.msra.mxu0 0
      %2282 = vmatpush.bf16.xpose.msra.mxu0 0
      %2283 = vmatpush.bf16.xpose.msra.mxu0 0
      %2284 = vmatpush.bf16.xpose.msra.mxu0 %v2275
      %2285 = vmatmul.bf16.gmra.mxu0 %v2272
      %v2286 = vpop.f32.mrf.mxu0
      %v2287 = vadd.f32 0.0, %v2286
      %v2288 = vpop.f32.mrf.mxu0
      %2289 = vdwg.mxu0
      %2290 = vrot.lane.b32.xlu0 %v841, 120
      %v2291 = vpop.permute.xlu0 %2290
      %2292 = vrot.lane.b32.xlu0 %v841, 88
      %v2293 = vpop.permute.xlu0 %2292
      %v2295 = vsel %vm507, %v2291, 0
      %v2298 = vsel %vm507, %v2293, 0
      %2300 = vmatpush.bf16.xpose.msra.mxu0 0
      %2301 = vmatpush.bf16.xpose.msra.mxu0 0
      %2302 = vmatpush.bf16.xpose.msra.mxu0 0
      %2303 = vmatpush.bf16.xpose.msra.mxu0 0
      %2304 = vmatpush.bf16.xpose.msra.mxu0 0
      %2305 = vmatpush.bf16.xpose.msra.mxu0 0
      %2306 = vmatpush.bf16.xpose.msra.mxu0 0
      %2307 = vmatpush.bf16.xpose.msra.mxu0 %v2298
      %2308 = vmatmul.bf16.gmra.mxu0 %v2295
      %v2309 = vpop.f32.mrf.mxu0
      %v2310 = vadd.f32 0.0, %v2309
      %v2311 = vpop.f32.mrf.mxu0
      %2312 = vdwg.mxu0
      %2313 = vrot.lane.b32.xlu0 %v865, 120
      %v2314 = vpop.permute.xlu0 %2313
      %2315 = vrot.lane.b32.xlu0 %v865, 88
      %v2316 = vpop.permute.xlu0 %2315
      %v2318 = vsel %vm507, %v2314, 0
      %v2321 = vsel %vm507, %v2316, 0
      %2323 = vmatpush.bf16.xpose.msra.mxu0 0
      %2324 = vmatpush.bf16.xpose.msra.mxu0 0
      %2325 = vmatpush.bf16.xpose.msra.mxu0 0
      %2326 = vmatpush.bf16.xpose.msra.mxu0 0
      %2327 = vmatpush.bf16.xpose.msra.mxu0 0
      %2328 = vmatpush.bf16.xpose.msra.mxu0 0
      %2329 = vmatpush.bf16.xpose.msra.mxu0 0
      %2330 = vmatpush.bf16.xpose.msra.mxu0 %v2321
      %2331 = vmatmul.bf16.gmra.mxu0 %v2318
      %v2332 = vpop.f32.mrf.mxu0
      %v2333 = vadd.f32 0.0, %v2332
      %v2334 = vpop.f32.mrf.mxu0
      %2335 = vdwg.mxu0
      %2336 = vrot.lane.b32.xlu0 %v889, 120
      %v2337 = vpop.permute.xlu0 %2336
      %2338 = vrot.lane.b32.xlu0 %v889, 88
      %v2339 = vpop.permute.xlu0 %2338
      %v2341 = vsel %vm507, %v2337, 0
      %v2344 = vsel %vm507, %v2339, 0
      %2346 = vmatpush.bf16.xpose.msra.mxu0 0
      %2347 = vmatpush.bf16.xpose.msra.mxu0 0
      %2348 = vmatpush.bf16.xpose.msra.mxu0 0
      %2349 = vmatpush.bf16.xpose.msra.mxu0 0
      %2350 = vmatpush.bf16.xpose.msra.mxu0 0
      %2351 = vmatpush.bf16.xpose.msra.mxu0 0
      %2352 = vmatpush.bf16.xpose.msra.mxu0 0
      %2353 = vmatpush.bf16.xpose.msra.mxu0 %v2344
      %2354 = vmatmul.bf16.gmra.mxu0 %v2341
      %v2355 = vpop.f32.mrf.mxu0
      %v2356 = vadd.f32 0.0, %v2355
      %v2357 = vpop.f32.mrf.mxu0
      %2358 = vdwg.mxu0
      %2359 = vrot.lane.b32.xlu0 %v913, 120
      %v2360 = vpop.permute.xlu0 %2359
      %2361 = vrot.lane.b32.xlu0 %v913, 88
      %v2362 = vpop.permute.xlu0 %2361
      %v2364 = vsel %vm507, %v2360, 0
      %v2367 = vsel %vm507, %v2362, 0
      %2369 = vmatpush.bf16.xpose.msra.mxu0 0
      %2370 = vmatpush.bf16.xpose.msra.mxu0 0
      %2371 = vmatpush.bf16.xpose.msra.mxu0 0
      %2372 = vmatpush.bf16.xpose.msra.mxu0 0
      %2373 = vmatpush.bf16.xpose.msra.mxu0 0
      %2374 = vmatpush.bf16.xpose.msra.mxu0 0
      %2375 = vmatpush.bf16.xpose.msra.mxu0 0
      %2376 = vmatpush.bf16.xpose.msra.mxu0 %v2367
      %2377 = vmatmul.bf16.gmra.mxu0 %v2364
      %v2378 = vpop.f32.mrf.mxu0
      %v2379 = vadd.f32 0.0, %v2378
      %v2380 = vpop.f32.mrf.mxu0
      %2381 = vdwg.mxu0
      %2382 = vrot.lane.b32.xlu0 %v937, 120
      %v2383 = vpop.permute.xlu0 %2382
      %2384 = vrot.lane.b32.xlu0 %v937, 88
      %v2385 = vpop.permute.xlu0 %2384
      %v2387 = vsel %vm507, %v2383, 0
      %v2390 = vsel %vm507, %v2385, 0
      %2392 = vmatpush.bf16.xpose.msra.mxu0 0
      %2393 = vmatpush.bf16.xpose.msra.mxu0 0
      %2394 = vmatpush.bf16.xpose.msra.mxu0 0
      %2395 = vmatpush.bf16.xpose.msra.mxu0 0
      %2396 = vmatpush.bf16.xpose.msra.mxu0 0
      %2397 = vmatpush.bf16.xpose.msra.mxu0 0
      %2398 = vmatpush.bf16.xpose.msra.mxu0 0
      %2399 = vmatpush.bf16.xpose.msra.mxu0 %v2390
      %2400 = vmatmul.bf16.gmra.mxu0 %v2387
      %v2401 = vpop.f32.mrf.mxu0
      %v2402 = vadd.f32 0.0, %v2401
      %v2403 = vpop.f32.mrf.mxu0
      %2404 = vdwg.mxu0
      %2405 = vrot.lane.b32.xlu0 %v961, 120
      %v2406 = vpop.permute.xlu0 %2405
      %2407 = vrot.lane.b32.xlu0 %v961, 88
      %v2408 = vpop.permute.xlu0 %2407
      %v2410 = vsel %vm507, %v2406, 0
      %v2413 = vsel %vm507, %v2408, 0
      %2415 = vmatpush.bf16.xpose.msra.mxu0 0
      %2416 = vmatpush.bf16.xpose.msra.mxu0 0
      %2417 = vmatpush.bf16.xpose.msra.mxu0 0
      %2418 = vmatpush.bf16.xpose.msra.mxu0 0
      %2419 = vmatpush.bf16.xpose.msra.mxu0 0
      %2420 = vmatpush.bf16.xpose.msra.mxu0 0
      %2421 = vmatpush.bf16.xpose.msra.mxu0 0
      %2422 = vmatpush.bf16.xpose.msra.mxu0 %v2413
      %2423 = vmatmul.bf16.gmra.mxu0 %v2410
      %v2424 = vpop.f32.mrf.mxu0
      %v2425 = vadd.f32 0.0, %v2424
      %v2426 = vpop.f32.mrf.mxu0
      %2427 = vdwg.mxu0
      %2428 = vrot.lane.b32.xlu0 %v985, 120
      %v2429 = vpop.permute.xlu0 %2428
      %2430 = vrot.lane.b32.xlu0 %v985, 88
      %v2431 = vpop.permute.xlu0 %2430
      %v2433 = vsel %vm507, %v2429, 0
      %v2436 = vsel %vm507, %v2431, 0
      %2438 = vmatpush.bf16.xpose.msra.mxu0 0
      %2439 = vmatpush.bf16.xpose.msra.mxu0 0
      %2440 = vmatpush.bf16.xpose.msra.mxu0 0
      %2441 = vmatpush.bf16.xpose.msra.mxu0 0
      %2442 = vmatpush.bf16.xpose.msra.mxu0 0
      %2443 = vmatpush.bf16.xpose.msra.mxu0 0
      %2444 = vmatpush.bf16.xpose.msra.mxu0 0
      %2445 = vmatpush.bf16.xpose.msra.mxu0 %v2436
      %2446 = vmatmul.bf16.gmra.mxu0 %v2433
      %v2447 = vpop.f32.mrf.mxu0
      %v2448 = vadd.f32 0.0, %v2447
      %v2449 = vpop.f32.mrf.mxu0
      %2450 = vdwg.mxu0
      %2451 = vrot.lane.b32.xlu0 %v1009, 120
      %v2452 = vpop.permute.xlu0 %2451
      %2453 = vrot.lane.b32.xlu0 %v1009, 88
      %v2454 = vpop.permute.xlu0 %2453
      %v2456 = vsel %vm507, %v2452, 0
      %v2459 = vsel %vm507, %v2454, 0
      %2461 = vmatpush.bf16.xpose.msra.mxu0 0
      %2462 = vmatpush.bf16.xpose.msra.mxu0 0
      %2463 = vmatpush.bf16.xpose.msra.mxu0 0
      %2464 = vmatpush.bf16.xpose.msra.mxu0 0
      %2465 = vmatpush.bf16.xpose.msra.mxu0 0
      %2466 = vmatpush.bf16.xpose.msra.mxu0 0
      %2467 = vmatpush.bf16.xpose.msra.mxu0 0
      %2468 = vmatpush.bf16.xpose.msra.mxu0 %v2459
      %2469 = vmatmul.bf16.gmra.mxu0 %v2456
      %v2470 = vpop.f32.mrf.mxu0
      %v2471 = vadd.f32 0.0, %v2470
      %v2472 = vpop.f32.mrf.mxu0
      %2473 = vdwg.mxu0
      %2474 = vrot.lane.b32.xlu0 %v1033, 120
      %v2475 = vpop.permute.xlu0 %2474
      %2476 = vrot.lane.b32.xlu0 %v1033, 88
      %v2477 = vpop.permute.xlu0 %2476
      %v2479 = vsel %vm507, %v2475, 0
      %v2482 = vsel %vm507, %v2477, 0
      %2484 = vmatpush.bf16.xpose.msra.mxu0 0
      %2485 = vmatpush.bf16.xpose.msra.mxu0 0
      %2486 = vmatpush.bf16.xpose.msra.mxu0 0
      %2487 = vmatpush.bf16.xpose.msra.mxu0 0
      %2488 = vmatpush.bf16.xpose.msra.mxu0 0
      %2489 = vmatpush.bf16.xpose.msra.mxu0 0
      %2490 = vmatpush.bf16.xpose.msra.mxu0 0
      %2491 = vmatpush.bf16.xpose.msra.mxu0 %v2482
      %2492 = vmatmul.bf16.gmra.mxu0 %v2479
      %v2493 = vpop.f32.mrf.mxu0
      %v2494 = vadd.f32 0.0, %v2493
      %v2495 = vpop.f32.mrf.mxu0
      %2496 = vdwg.mxu0
      %2497 = vrot.lane.b32.xlu0 %v1057, 120
      %v2498 = vpop.permute.xlu0 %2497
      %2499 = vrot.lane.b32.xlu0 %v1057, 88
      %v2500 = vpop.permute.xlu0 %2499
      %v2502 = vsel %vm507, %v2498, 0
      %v2505 = vsel %vm507, %v2500, 0
      %2507 = vmatpush.bf16.xpose.msra.mxu0 0
      %2508 = vmatpush.bf16.xpose.msra.mxu0 0
      %2509 = vmatpush.bf16.xpose.msra.mxu0 0
      %2510 = vmatpush.bf16.xpose.msra.mxu0 0
      %2511 = vmatpush.bf16.xpose.msra.mxu0 0
      %2512 = vmatpush.bf16.xpose.msra.mxu0 0
      %2513 = vmatpush.bf16.xpose.msra.mxu0 0
      %2514 = vmatpush.bf16.xpose.msra.mxu0 %v2505
      %2515 = vmatmul.bf16.gmra.mxu0 %v2502
      %v2516 = vpop.f32.mrf.mxu0
      %v2517 = vadd.f32 0.0, %v2516
      %v2518 = vpop.f32.mrf.mxu0
      %2519 = vdwg.mxu0
      %2520 = vrot.lane.b32.xlu0 %v1081, 120
      %v2521 = vpop.permute.xlu0 %2520
      %2522 = vrot.lane.b32.xlu0 %v1081, 88
      %v2523 = vpop.permute.xlu0 %2522
      %v2525 = vsel %vm507, %v2521, 0
      %v2528 = vsel %vm507, %v2523, 0
      %2530 = vmatpush.bf16.xpose.msra.mxu0 0
      %2531 = vmatpush.bf16.xpose.msra.mxu0 0
      %2532 = vmatpush.bf16.xpose.msra.mxu0 0
      %2533 = vmatpush.bf16.xpose.msra.mxu0 0
      %2534 = vmatpush.bf16.xpose.msra.mxu0 0
      %2535 = vmatpush.bf16.xpose.msra.mxu0 0
      %2536 = vmatpush.bf16.xpose.msra.mxu0 0
      %2537 = vmatpush.bf16.xpose.msra.mxu0 %v2528
      %2538 = vmatmul.bf16.gmra.mxu0 %v2525
      %v2539 = vpop.f32.mrf.mxu0
      %v2540 = vadd.f32 0.0, %v2539
      %v2541 = vpop.f32.mrf.mxu0
      %2542 = vdwg.mxu0
      %v2543 = vmul.f32 %v1988, 0.35355338
      %v2544 = vmul.f32 %v2011, 0.35355338
      %v2545 = vmul.f32 %v2034, 0.35355338
      %v2546 = vmul.f32 %v2057, 0.35355338
      %v2547 = vmul.f32 %v2080, 0.35355338
      %v2548 = vmul.f32 %v2103, 0.35355338
      %v2549 = vmul.f32 %v2126, 0.35355338
      %v2550 = vmul.f32 %v2149, 0.35355338
      %v2551 = vmul.f32 %v2172, 0.35355338
      %v2552 = vmul.f32 %v2195, 0.35355338
      %v2553 = vmul.f32 %v2218, 0.35355338
      %v2554 = vmul.f32 %v2241, 0.35355338
      %v2555 = vmul.f32 %v2264, 0.35355338
      %v2556 = vmul.f32 %v2287, 0.35355338
      %v2557 = vmul.f32 %v2310, 0.35355338
      %v2558 = vmul.f32 %v2333, 0.35355338
      %v2559 = vmul.f32 %v2356, 0.35355338
      %v2560 = vmul.f32 %v2379, 0.35355338
      %v2561 = vmul.f32 %v2402, 0.35355338
      %v2562 = vmul.f32 %v2425, 0.35355338
      %v2563 = vmul.f32 %v2448, 0.35355338
      %v2564 = vmul.f32 %v2471, 0.35355338
      %v2565 = vmul.f32 %v2494, 0.35355338
      %v2566 = vmul.f32 %v2517, 0.35355338
      %v2567 = vmul.f32 %v2540, 0.35355338
      %v2568 = vsel %vm507, %v2543, -inf
      %2569 = vmax.xlane.f32.xlu0 %v2568
      %v2570 = vpop.xlane.xlu0 %2569
      %v2571 = vsel %vm507, %v2544, -inf
      %2572 = vmax.xlane.f32.xlu0 %v2571
      %v2573 = vpop.xlane.xlu0 %2572
      %v2574 = vsel %vm507, %v2545, -inf
      %2575 = vmax.xlane.f32.xlu0 %v2574
      %v2576 = vpop.xlane.xlu0 %2575
      %v2577 = vsel %vm507, %v2546, -inf
      %2578 = vmax.xlane.f32.xlu0 %v2577
      %v2579 = vpop.xlane.xlu0 %2578
      %v2580 = vsel %vm507, %v2547, -inf
      %2581 = vmax.xlane.f32.xlu0 %v2580
      %v2582 = vpop.xlane.xlu0 %2581
      %v2583 = vsel %vm507, %v2548, -inf
      %2584 = vmax.xlane.f32.xlu0 %v2583
      %v2585 = vpop.xlane.xlu0 %2584
      %v2586 = vsel %vm507, %v2549, -inf
      %2587 = vmax.xlane.f32.xlu0 %v2586
      %v2588 = vpop.xlane.xlu0 %2587
      %v2589 = vsel %vm507, %v2550, -inf
      %2590 = vmax.xlane.f32.xlu0 %v2589
      %v2591 = vpop.xlane.xlu0 %2590
      %v2592 = vsel %vm507, %v2551, -inf
      %2593 = vmax.xlane.f32.xlu0 %v2592
      %v2594 = vpop.xlane.xlu0 %2593
      %v2595 = vsel %vm507, %v2552, -inf
      %2596 = vmax.xlane.f32.xlu0 %v2595
      %v2597 = vpop.xlane.xlu0 %2596
      %v2598 = vsel %vm507, %v2553, -inf
      %2599 = vmax.xlane.f32.xlu0 %v2598
      %v2600 = vpop.xlane.xlu0 %2599
      %v2601 = vsel %vm507, %v2554, -inf
      %2602 = vmax.xlane.f32.xlu0 %v2601
      %v2603 = vpop.xlane.xlu0 %2602
      %v2604 = vsel %vm507, %v2555, -inf
      %2605 = vmax.xlane.f32.xlu0 %v2604
      %v2606 = vpop.xlane.xlu0 %2605
      %v2607 = vsel %vm507, %v2556, -inf
      %2608 = vmax.xlane.f32.xlu0 %v2607
      %v2609 = vpop.xlane.xlu0 %2608
      %v2610 = vsel %vm507, %v2557, -inf
      %2611 = vmax.xlane.f32.xlu0 %v2610
      %v2612 = vpop.xlane.xlu0 %2611
      %v2613 = vsel %vm507, %v2558, -inf
      %2614 = vmax.xlane.f32.xlu0 %v2613
      %v2615 = vpop.xlane.xlu0 %2614
      %v2616 = vsel %vm507, %v2559, -inf
      %2617 = vmax.xlane.f32.xlu0 %v2616
      %v2618 = vpop.xlane.xlu0 %2617
      %v2619 = vsel %vm507, %v2560, -inf
      %2620 = vmax.xlane.f32.xlu0 %v2619
      %v2621 = vpop.xlane.xlu0 %2620
      %v2622 = vsel %vm507, %v2561, -inf
      %2623 = vmax.xlane.f32.xlu0 %v2622
      %v2624 = vpop.xlane.xlu0 %2623
      %v2625 = vsel %vm507, %v2562, -inf
      %2626 = vmax.xlane.f32.xlu0 %v2625
      %v2627 = vpop.xlane.xlu0 %2626
      %v2628 = vsel %vm507, %v2563, -inf
      %2629 = vmax.xlane.f32.xlu0 %v2628
      %v2630 = vpop.xlane.xlu0 %2629
      %v2631 = vsel %vm507, %v2564, -inf
      %2632 = vmax.xlane.f32.xlu0 %v2631
      %v2633 = vpop.xlane.xlu0 %2632
      %v2634 = vsel %vm507, %v2565, -inf
      %2635 = vmax.xlane.f32.xlu0 %v2634
      %v2636 = vpop.xlane.xlu0 %2635
      %v2637 = vsel %vm507, %v2566, -inf
      %2638 = vmax.xlane.f32.xlu0 %v2637
      %v2639 = vpop.xlane.xlu0 %2638
      %v2640 = vsel %vm507, %v2567, -inf
      %2641 = vmax.xlane.f32.xlu0 %v2640
      %v2642 = vpop.xlane.xlu0 %2641
      %v2643 = vsub.f32 %v2543, %v2570
      %v2644 = vsub.f32 %v2544, %v2573
      %v2645 = vsub.f32 %v2545, %v2576
      %v2646 = vsub.f32 %v2546, %v2579
      %v2647 = vsub.f32 %v2547, %v2582
      %v2648 = vsub.f32 %v2548, %v2585
      %v2649 = vsub.f32 %v2549, %v2588
      %v2650 = vsub.f32 %v2550, %v2591
      %v2651 = vsub.f32 %v2551, %v2594
      %v2652 = vsub.f32 %v2552, %v2597
      %v2653 = vsub.f32 %v2553, %v2600
      %v2654 = vsub.f32 %v2554, %v2603
      %v2655 = vsub.f32 %v2555, %v2606
      %v2656 = vsub.f32 %v2556, %v2609
      %v2657 = vsub.f32 %v2557, %v2612
      %v2658 = vsub.f32 %v2558, %v2615
      %v2659 = vsub.f32 %v2559, %v2618
      %v2660 = vsub.f32 %v2560, %v2621
      %v2661 = vsub.f32 %v2561, %v2624
      %v2662 = vsub.f32 %v2562, %v2627
      %v2663 = vsub.f32 %v2563, %v2630
      %v2664 = vsub.f32 %v2564, %v2633
      %v2665 = vsub.f32 %v2565, %v2636
      %v2666 = vsub.f32 %v2566, %v2639
      %v2667 = vsub.f32 %v2567, %v2642
      %v2668 = vmul.f32 %v2643, 1.442695
      %v2669 = vpow.pop %v2668
      %v2670 = vmul.f32 %v2644, 1.442695
      %v2671 = vpow.pop %v2670
      %v2672 = vmul.f32 %v2645, 1.442695
      %v2673 = vpow.pop %v2672
      %v2674 = vmul.f32 %v2646, 1.442695
      %v2675 = vpow.pop %v2674
      %v2676 = vmul.f32 %v2647, 1.442695
      %v2677 = vpow.pop %v2676
      %v2678 = vmul.f32 %v2648, 1.442695
      %v2679 = vpow.pop %v2678
      %v2680 = vmul.f32 %v2649, 1.442695
      %v2681 = vpow.pop %v2680
      %v2682 = vmul.f32 %v2650, 1.442695
      %v2683 = vpow.pop %v2682
      %v2684 = vmul.f32 %v2651, 1.442695
      %v2685 = vpow.pop %v2684
      %v2686 = vmul.f32 %v2652, 1.442695
      %v2687 = vpow.pop %v2686
      %v2688 = vmul.f32 %v2653, 1.442695
      %v2689 = vpow.pop %v2688
      %v2690 = vmul.f32 %v2654, 1.442695
      %v2691 = vpow.pop %v2690
      %v2692 = vmul.f32 %v2655, 1.442695
      %v2693 = vpow.pop %v2692
      %v2694 = vmul.f32 %v2656, 1.442695
      %v2695 = vpow.pop %v2694
      %v2696 = vmul.f32 %v2657, 1.442695
      %v2697 = vpow.pop %v2696
      %v2698 = vmul.f32 %v2658, 1.442695
      %v2699 = vpow.pop %v2698
      %v2700 = vmul.f32 %v2659, 1.442695
      %v2701 = vpow.pop %v2700
      %v2702 = vmul.f32 %v2660, 1.442695
      %v2703 = vpow.pop %v2702
      %v2704 = vmul.f32 %v2661, 1.442695
      %v2705 = vpow.pop %v2704
      %v2706 = vmul.f32 %v2662, 1.442695
      %v2707 = vpow.pop %v2706
      %v2708 = vmul.f32 %v2663, 1.442695
      %v2709 = vpow.pop %v2708
      %v2710 = vmul.f32 %v2664, 1.442695
      %v2711 = vpow.pop %v2710
      %v2712 = vmul.f32 %v2665, 1.442695
      %v2713 = vpow.pop %v2712
      %v2714 = vmul.f32 %v2666, 1.442695
      %v2715 = vpow.pop %v2714
      %v2716 = vmul.f32 %v2667, 1.442695
      %v2717 = vpow.pop %v2716
      %v2718 = vsel %vm507, %v2669, 0.0
      %2719 = vadd.xlane.f32.xlu0 %v2718
      %v2720 = vpop.xlane.xlu0 %2719
      %v2721 = vsel %vm507, %v2671, 0.0
      %2722 = vadd.xlane.f32.xlu0 %v2721
      %v2723 = vpop.xlane.xlu0 %2722
      %v2724 = vsel %vm507, %v2673, 0.0
      %2725 = vadd.xlane.f32.xlu0 %v2724
      %v2726 = vpop.xlane.xlu0 %2725
      %v2727 = vsel %vm507, %v2675, 0.0
      %2728 = vadd.xlane.f32.xlu0 %v2727
      %v2729 = vpop.xlane.xlu0 %2728
      %v2730 = vsel %vm507, %v2677, 0.0
      %2731 = vadd.xlane.f32.xlu0 %v2730
      %v2732 = vpop.xlane.xlu0 %2731
      %v2733 = vsel %vm507, %v2679, 0.0
      %2734 = vadd.xlane.f32.xlu0 %v2733
      %v2735 = vpop.xlane.xlu0 %2734
      %v2736 = vsel %vm507, %v2681, 0.0
      %2737 = vadd.xlane.f32.xlu0 %v2736
      %v2738 = vpop.xlane.xlu0 %2737
      %v2739 = vsel %vm507, %v2683, 0.0
      %2740 = vadd.xlane.f32.xlu0 %v2739
      %v2741 = vpop.xlane.xlu0 %2740
      %v2742 = vsel %vm507, %v2685, 0.0
      %2743 = vadd.xlane.f32.xlu0 %v2742
      %v2744 = vpop.xlane.xlu0 %2743
      %v2745 = vsel %vm507, %v2687, 0.0
      %2746 = vadd.xlane.f32.xlu0 %v2745
      %v2747 = vpop.xlane.xlu0 %2746
      %v2748 = vsel %vm507, %v2689, 0.0
      %2749 = vadd.xlane.f32.xlu0 %v2748
      %v2750 = vpop.xlane.xlu0 %2749
      %v2751 = vsel %vm507, %v2691, 0.0
      %2752 = vadd.xlane.f32.xlu0 %v2751
      %v2753 = vpop.xlane.xlu0 %2752
      %v2754 = vsel %vm507, %v2693, 0.0
      %2755 = vadd.xlane.f32.xlu0 %v2754
      %v2756 = vpop.xlane.xlu0 %2755
      %v2757 = vsel %vm507, %v2695, 0.0
      %2758 = vadd.xlane.f32.xlu0 %v2757
      %v2759 = vpop.xlane.xlu0 %2758
      %v2760 = vsel %vm507, %v2697, 0.0
      %2761 = vadd.xlane.f32.xlu0 %v2760
      %v2762 = vpop.xlane.xlu0 %2761
      %v2763 = vsel %vm507, %v2699, 0.0
      %2764 = vadd.xlane.f32.xlu0 %v2763
      %v2765 = vpop.xlane.xlu0 %2764
      %v2766 = vsel %vm507, %v2701, 0.0
      %2767 = vadd.xlane.f32.xlu0 %v2766
      %v2768 = vpop.xlane.xlu0 %2767
      %v2769 = vsel %vm507, %v2703, 0.0
      %2770 = vadd.xlane.f32.xlu0 %v2769
      %v2771 = vpop.xlane.xlu0 %2770
      %v2772 = vsel %vm507, %v2705, 0.0
      %2773 = vadd.xlane.f32.xlu0 %v2772
      %v2774 = vpop.xlane.xlu0 %2773
      %v2775 = vsel %vm507, %v2707, 0.0
      %2776 = vadd.xlane.f32.xlu0 %v2775
      %v2777 = vpop.xlane.xlu0 %2776
      %v2778 = vsel %vm507, %v2709, 0.0
      %2779 = vadd.xlane.f32.xlu0 %v2778
      %v2780 = vpop.xlane.xlu0 %2779
      %v2781 = vsel %vm507, %v2711, 0.0
      %2782 = vadd.xlane.f32.xlu0 %v2781
      %v2783 = vpop.xlane.xlu0 %2782
      %v2784 = vsel %vm507, %v2713, 0.0
      %2785 = vadd.xlane.f32.xlu0 %v2784
      %v2786 = vpop.xlane.xlu0 %2785
      %v2787 = vsel %vm507, %v2715, 0.0
      %2788 = vadd.xlane.f32.xlu0 %v2787
      %v2789 = vpop.xlane.xlu0 %2788
      %v2790 = vsel %vm507, %v2717, 0.0
      %2791 = vadd.xlane.f32.xlu0 %v2790
      %v2792 = vpop.xlane.xlu0 %2791
      %v2793 = vrcp.pop %v2720
      %v2794 = vrcp.pop %v2723
      %v2795 = vrcp.pop %v2726
      %v2796 = vrcp.pop %v2729
      %v2797 = vrcp.pop %v2732
      %v2798 = vrcp.pop %v2735
      %v2799 = vrcp.pop %v2738
      %v2800 = vrcp.pop %v2741
      %v2801 = vrcp.pop %v2744
      %v2802 = vrcp.pop %v2747
      %v2803 = vrcp.pop %v2750
      %v2804 = vrcp.pop %v2753
      %v2805 = vrcp.pop %v2756
      %v2806 = vrcp.pop %v2759
      %v2807 = vrcp.pop %v2762
      %v2808 = vrcp.pop %v2765
      %v2809 = vrcp.pop %v2768
      %v2810 = vrcp.pop %v2771
      %v2811 = vrcp.pop %v2774
      %v2812 = vrcp.pop %v2777
      %v2813 = vrcp.pop %v2780
      %v2814 = vrcp.pop %v2783
      %v2815 = vrcp.pop %v2786
      %v2816 = vrcp.pop %v2789
      %v2817 = vrcp.pop %v2792
      %v2818 = vmul.f32 %v2669, %v2793
      %v2819 = vmul.f32 %v2671, %v2794
      %v2820 = vmul.f32 %v2673, %v2795
      %v2821 = vmul.f32 %v2675, %v2796
      %v2822 = vmul.f32 %v2677, %v2797
      %v2823 = vmul.f32 %v2679, %v2798
      %v2824 = vmul.f32 %v2681, %v2799
      %v2825 = vmul.f32 %v2683, %v2800
      %v2826 = vmul.f32 %v2685, %v2801
      %v2827 = vmul.f32 %v2687, %v2802
      %v2828 = vmul.f32 %v2689, %v2803
      %v2829 = vmul.f32 %v2691, %v2804
      %v2830 = vmul.f32 %v2693, %v2805
      %v2831 = vmul.f32 %v2695, %v2806
      %v2832 = vmul.f32 %v2697, %v2807
      %v2833 = vmul.f32 %v2699, %v2808
      %v2834 = vmul.f32 %v2701, %v2809
      %v2835 = vmul.f32 %v2703, %v2810
      %v2836 = vmul.f32 %v2705, %v2811
      %v2837 = vmul.f32 %v2707, %v2812
      %v2838 = vmul.f32 %v2709, %v2813
      %v2839 = vmul.f32 %v2711, %v2814
      %v2840 = vmul.f32 %v2713, %v2815
      %v2841 = vmul.f32 %v2715, %v2816
      %v2842 = vmul.f32 %v2717, %v2817
      %v2843 = vpack.c.bf16 %v2818, %v2818
      %v2844 = vpack.c.bf16 %v2819, %v2819
      %v2845 = vpack.c.bf16 %v2820, %v2820
      %v2846 = vpack.c.bf16 %v2821, %v2821
      %v2847 = vpack.c.bf16 %v2822, %v2822
      %v2848 = vpack.c.bf16 %v2823, %v2823
      %v2849 = vpack.c.bf16 %v2824, %v2824
      %v2850 = vpack.c.bf16 %v2825, %v2825
      %v2851 = vpack.c.bf16 %v2826, %v2826
      %v2852 = vpack.c.bf16 %v2827, %v2827
      %v2853 = vpack.c.bf16 %v2828, %v2828
      %v2854 = vpack.c.bf16 %v2829, %v2829
      %v2855 = vpack.c.bf16 %v2830, %v2830
      %v2856 = vpack.c.bf16 %v2831, %v2831
      %v2857 = vpack.c.bf16 %v2832, %v2832
      %v2858 = vpack.c.bf16 %v2833, %v2833
      %v2859 = vpack.c.bf16 %v2834, %v2834
      %v2860 = vpack.c.bf16 %v2835, %v2835
      %v2861 = vpack.c.bf16 %v2836, %v2836
      %v2862 = vpack.c.bf16 %v2837, %v2837
      %v2863 = vpack.c.bf16 %v2838, %v2838
      %v2864 = vpack.c.bf16 %v2839, %v2839
      %v2865 = vpack.c.bf16 %v2840, %v2840
      %v2866 = vpack.c.bf16 %v2841, %v2841
      %v2867 = vpack.c.bf16 %v2842, %v2842
      %2868 = vrot.lane.b32.xlu0 %v504, 56
      %v2869 = vpop.permute.xlu0 %2868
      %v2871 = vsel %vm507, %v2843, 0
      %v2874 = vsel %vm1433, %v2869, 0
      %2876 = vmatpush.bf16.msra.mxu0 0
      %2877 = vmatpush.bf16.msra.mxu0 0
      %2878 = vmatpush.bf16.msra.mxu0 0
      %2879 = vmatpush.bf16.msra.mxu0 0
      %2880 = vmatpush.bf16.msra.mxu0 0
      %2881 = vmatpush.bf16.msra.mxu0 0
      %2882 = vmatpush.bf16.msra.mxu0 0
      %2883 = vmatpush.bf16.msra.mxu0 %v2874
      %2884 = vmatmul.bf16.gmra.mxu0 %v2871
      %v2885 = vpop.f32.mrf.mxu0
      %v2886 = vadd.f32 0.0, %v2885
      %v2887 = vpop.f32.mrf.mxu0
      %2888 = vdwg.mxu0
      %2889 = vrot.lane.b32.xlu0 %v529, 56
      %v2890 = vpop.permute.xlu0 %2889
      %v2892 = vsel %vm507, %v2844, 0
      %v2895 = vsel %vm1433, %v2890, 0
      %2897 = vmatpush.bf16.msra.mxu0 0
      %2898 = vmatpush.bf16.msra.mxu0 0
      %2899 = vmatpush.bf16.msra.mxu0 0
      %2900 = vmatpush.bf16.msra.mxu0 0
      %2901 = vmatpush.bf16.msra.mxu0 0
      %2902 = vmatpush.bf16.msra.mxu0 0
      %2903 = vmatpush.bf16.msra.mxu0 0
      %2904 = vmatpush.bf16.msra.mxu0 %v2895
      %2905 = vmatmul.bf16.gmra.mxu0 %v2892
      %v2906 = vpop.f32.mrf.mxu0
      %v2907 = vadd.f32 0.0, %v2906
      %v2908 = vpop.f32.mrf.mxu0
      %2909 = vdwg.mxu0
      %2910 = vrot.lane.b32.xlu0 %v553, 56
      %v2911 = vpop.permute.xlu0 %2910
      %v2913 = vsel %vm507, %v2845, 0
      %v2916 = vsel %vm1433, %v2911, 0
      %2918 = vmatpush.bf16.msra.mxu0 0
      %2919 = vmatpush.bf16.msra.mxu0 0
      %2920 = vmatpush.bf16.msra.mxu0 0
      %2921 = vmatpush.bf16.msra.mxu0 0
      %2922 = vmatpush.bf16.msra.mxu0 0
      %2923 = vmatpush.bf16.msra.mxu0 0
      %2924 = vmatpush.bf16.msra.mxu0 0
      %2925 = vmatpush.bf16.msra.mxu0 %v2916
      %2926 = vmatmul.bf16.gmra.mxu0 %v2913
      %v2927 = vpop.f32.mrf.mxu0
      %v2928 = vadd.f32 0.0, %v2927
      %v2929 = vpop.f32.mrf.mxu0
      %2930 = vdwg.mxu0
      %2931 = vrot.lane.b32.xlu0 %v577, 56
      %v2932 = vpop.permute.xlu0 %2931
      %v2934 = vsel %vm507, %v2846, 0
      %v2937 = vsel %vm1433, %v2932, 0
      %2939 = vmatpush.bf16.msra.mxu0 0
      %2940 = vmatpush.bf16.msra.mxu0 0
      %2941 = vmatpush.bf16.msra.mxu0 0
      %2942 = vmatpush.bf16.msra.mxu0 0
      %2943 = vmatpush.bf16.msra.mxu0 0
      %2944 = vmatpush.bf16.msra.mxu0 0
      %2945 = vmatpush.bf16.msra.mxu0 0
      %2946 = vmatpush.bf16.msra.mxu0 %v2937
      %2947 = vmatmul.bf16.gmra.mxu0 %v2934
      %v2948 = vpop.f32.mrf.mxu0
      %v2949 = vadd.f32 0.0, %v2948
      %v2950 = vpop.f32.mrf.mxu0
      %2951 = vdwg.mxu0
      %2952 = vrot.lane.b32.xlu0 %v601, 56
      %v2953 = vpop.permute.xlu0 %2952
      %v2955 = vsel %vm507, %v2847, 0
      %v2958 = vsel %vm1433, %v2953, 0
      %2960 = vmatpush.bf16.msra.mxu0 0
      %2961 = vmatpush.bf16.msra.mxu0 0
      %2962 = vmatpush.bf16.msra.mxu0 0
      %2963 = vmatpush.bf16.msra.mxu0 0
      %2964 = vmatpush.bf16.msra.mxu0 0
      %2965 = vmatpush.bf16.msra.mxu0 0
      %2966 = vmatpush.bf16.msra.mxu0 0
      %2967 = vmatpush.bf16.msra.mxu0 %v2958
      %2968 = vmatmul.bf16.gmra.mxu0 %v2955
      %v2969 = vpop.f32.mrf.mxu0
      %v2970 = vadd.f32 0.0, %v2969
      %v2971 = vpop.f32.mrf.mxu0
      %2972 = vdwg.mxu0
      %2973 = vrot.lane.b32.xlu0 %v625, 56
      %v2974 = vpop.permute.xlu0 %2973
      %v2976 = vsel %vm507, %v2848, 0
      %v2979 = vsel %vm1433, %v2974, 0
      %2981 = vmatpush.bf16.msra.mxu0 0
      %2982 = vmatpush.bf16.msra.mxu0 0
      %2983 = vmatpush.bf16.msra.mxu0 0
      %2984 = vmatpush.bf16.msra.mxu0 0
      %2985 = vmatpush.bf16.msra.mxu0 0
      %2986 = vmatpush.bf16.msra.mxu0 0
      %2987 = vmatpush.bf16.msra.mxu0 0
      %2988 = vmatpush.bf16.msra.mxu0 %v2979
      %2989 = vmatmul.bf16.gmra.mxu0 %v2976
      %v2990 = vpop.f32.mrf.mxu0
      %v2991 = vadd.f32 0.0, %v2990
      %v2992 = vpop.f32.mrf.mxu0
      %2993 = vdwg.mxu0
      %2994 = vrot.lane.b32.xlu0 %v649, 56
      %v2995 = vpop.permute.xlu0 %2994
      %v2997 = vsel %vm507, %v2849, 0
      %v3000 = vsel %vm1433, %v2995, 0
      %3002 = vmatpush.bf16.msra.mxu0 0
      %3003 = vmatpush.bf16.msra.mxu0 0
      %3004 = vmatpush.bf16.msra.mxu0 0
      %3005 = vmatpush.bf16.msra.mxu0 0
      %3006 = vmatpush.bf16.msra.mxu0 0
      %3007 = vmatpush.bf16.msra.mxu0 0
      %3008 = vmatpush.bf16.msra.mxu0 0
      %3009 = vmatpush.bf16.msra.mxu0 %v3000
      %3010 = vmatmul.bf16.gmra.mxu0 %v2997
      %v3011 = vpop.f32.mrf.mxu0
      %v3012 = vadd.f32 0.0, %v3011
      %v3013 = vpop.f32.mrf.mxu0
      %3014 = vdwg.mxu0
      %3015 = vrot.lane.b32.xlu0 %v673, 56
      %v3016 = vpop.permute.xlu0 %3015
      %v3018 = vsel %vm507, %v2850, 0
      %v3021 = vsel %vm1433, %v3016, 0
      %3023 = vmatpush.bf16.msra.mxu0 0
      %3024 = vmatpush.bf16.msra.mxu0 0
      %3025 = vmatpush.bf16.msra.mxu0 0
      %3026 = vmatpush.bf16.msra.mxu0 0
      %3027 = vmatpush.bf16.msra.mxu0 0
      %3028 = vmatpush.bf16.msra.mxu0 0
      %3029 = vmatpush.bf16.msra.mxu0 0
      %3030 = vmatpush.bf16.msra.mxu0 %v3021
      %3031 = vmatmul.bf16.gmra.mxu0 %v3018
      %v3032 = vpop.f32.mrf.mxu0
      %v3033 = vadd.f32 0.0, %v3032
      %v3034 = vpop.f32.mrf.mxu0
      %3035 = vdwg.mxu0
      %3036 = vrot.lane.b32.xlu0 %v697, 56
      %v3037 = vpop.permute.xlu0 %3036
      %v3039 = vsel %vm507, %v2851, 0
      %v3042 = vsel %vm1433, %v3037, 0
      %3044 = vmatpush.bf16.msra.mxu0 0
      %3045 = vmatpush.bf16.msra.mxu0 0
      %3046 = vmatpush.bf16.msra.mxu0 0
      %3047 = vmatpush.bf16.msra.mxu0 0
      %3048 = vmatpush.bf16.msra.mxu0 0
      %3049 = vmatpush.bf16.msra.mxu0 0
      %3050 = vmatpush.bf16.msra.mxu0 0
      %3051 = vmatpush.bf16.msra.mxu0 %v3042
      %3052 = vmatmul.bf16.gmra.mxu0 %v3039
      %v3053 = vpop.f32.mrf.mxu0
      %v3054 = vadd.f32 0.0, %v3053
      %v3055 = vpop.f32.mrf.mxu0
      %3056 = vdwg.mxu0
      %3057 = vrot.lane.b32.xlu0 %v721, 56
      %v3058 = vpop.permute.xlu0 %3057
      %v3060 = vsel %vm507, %v2852, 0
      %v3063 = vsel %vm1433, %v3058, 0
      %3065 = vmatpush.bf16.msra.mxu0 0
      %3066 = vmatpush.bf16.msra.mxu0 0
      %3067 = vmatpush.bf16.msra.mxu0 0
      %3068 = vmatpush.bf16.msra.mxu0 0
      %3069 = vmatpush.bf16.msra.mxu0 0
      %3070 = vmatpush.bf16.msra.mxu0 0
      %3071 = vmatpush.bf16.msra.mxu0 0
      %3072 = vmatpush.bf16.msra.mxu0 %v3063
      %3073 = vmatmul.bf16.gmra.mxu0 %v3060
      %v3074 = vpop.f32.mrf.mxu0
      %v3075 = vadd.f32 0.0, %v3074
      %v3076 = vpop.f32.mrf.mxu0
      %3077 = vdwg.mxu0
      %3078 = vrot.lane.b32.xlu0 %v745, 56
      %v3079 = vpop.permute.xlu0 %3078
      %v3081 = vsel %vm507, %v2853, 0
      %v3084 = vsel %vm1433, %v3079, 0
      %3086 = vmatpush.bf16.msra.mxu0 0
      %3087 = vmatpush.bf16.msra.mxu0 0
      %3088 = vmatpush.bf16.msra.mxu0 0
      %3089 = vmatpush.bf16.msra.mxu0 0
      %3090 = vmatpush.bf16.msra.mxu0 0
      %3091 = vmatpush.bf16.msra.mxu0 0
      %3092 = vmatpush.bf16.msra.mxu0 0
      %3093 = vmatpush.bf16.msra.mxu0 %v3084
      %3094 = vmatmul.bf16.gmra.mxu0 %v3081
      %v3095 = vpop.f32.mrf.mxu0
      %v3096 = vadd.f32 0.0, %v3095
      %v3097 = vpop.f32.mrf.mxu0
      %3098 = vdwg.mxu0
      %3099 = vrot.lane.b32.xlu0 %v769, 56
      %v3100 = vpop.permute.xlu0 %3099
      %v3102 = vsel %vm507, %v2854, 0
      %v3105 = vsel %vm1433, %v3100, 0
      %3107 = vmatpush.bf16.msra.mxu0 0
      %3108 = vmatpush.bf16.msra.mxu0 0
      %3109 = vmatpush.bf16.msra.mxu0 0
      %3110 = vmatpush.bf16.msra.mxu0 0
      %3111 = vmatpush.bf16.msra.mxu0 0
      %3112 = vmatpush.bf16.msra.mxu0 0
      %3113 = vmatpush.bf16.msra.mxu0 0
      %3114 = vmatpush.bf16.msra.mxu0 %v3105
      %3115 = vmatmul.bf16.gmra.mxu0 %v3102
      %v3116 = vpop.f32.mrf.mxu0
      %v3117 = vadd.f32 0.0, %v3116
      %v3118 = vpop.f32.mrf.mxu0
      %3119 = vdwg.mxu0
      %3120 = vrot.lane.b32.xlu0 %v793, 56
      %v3121 = vpop.permute.xlu0 %3120
      %v3123 = vsel %vm507, %v2855, 0
      %v3126 = vsel %vm1433, %v3121, 0
      %3128 = vmatpush.bf16.msra.mxu0 0
      %3129 = vmatpush.bf16.msra.mxu0 0
      %3130 = vmatpush.bf16.msra.mxu0 0
      %3131 = vmatpush.bf16.msra.mxu0 0
      %3132 = vmatpush.bf16.msra.mxu0 0
      %3133 = vmatpush.bf16.msra.mxu0 0
      %3134 = vmatpush.bf16.msra.mxu0 0
      %3135 = vmatpush.bf16.msra.mxu0 %v3126
      %3136 = vmatmul.bf16.gmra.mxu0 %v3123
      %v3137 = vpop.f32.mrf.mxu0
      %v3138 = vadd.f32 0.0, %v3137
      %v3139 = vpop.f32.mrf.mxu0
      %3140 = vdwg.mxu0
      %3141 = vrot.lane.b32.xlu0 %v817, 56
      %v3142 = vpop.permute.xlu0 %3141
      %v3144 = vsel %vm507, %v2856, 0
      %v3147 = vsel %vm1433, %v3142, 0
      %3149 = vmatpush.bf16.msra.mxu0 0
      %3150 = vmatpush.bf16.msra.mxu0 0
      %3151 = vmatpush.bf16.msra.mxu0 0
      %3152 = vmatpush.bf16.msra.mxu0 0
      %3153 = vmatpush.bf16.msra.mxu0 0
      %3154 = vmatpush.bf16.msra.mxu0 0
      %3155 = vmatpush.bf16.msra.mxu0 0
      %3156 = vmatpush.bf16.msra.mxu0 %v3147
      %3157 = vmatmul.bf16.gmra.mxu0 %v3144
      %v3158 = vpop.f32.mrf.mxu0
      %v3159 = vadd.f32 0.0, %v3158
      %v3160 = vpop.f32.mrf.mxu0
      %3161 = vdwg.mxu0
      %3162 = vrot.lane.b32.xlu0 %v841, 56
      %v3163 = vpop.permute.xlu0 %3162
      %v3165 = vsel %vm507, %v2857, 0
      %v3168 = vsel %vm1433, %v3163, 0
      %3170 = vmatpush.bf16.msra.mxu0 0
      %3171 = vmatpush.bf16.msra.mxu0 0
      %3172 = vmatpush.bf16.msra.mxu0 0
      %3173 = vmatpush.bf16.msra.mxu0 0
      %3174 = vmatpush.bf16.msra.mxu0 0
      %3175 = vmatpush.bf16.msra.mxu0 0
      %3176 = vmatpush.bf16.msra.mxu0 0
      %3177 = vmatpush.bf16.msra.mxu0 %v3168
      %3178 = vmatmul.bf16.gmra.mxu0 %v3165
      %v3179 = vpop.f32.mrf.mxu0
      %v3180 = vadd.f32 0.0, %v3179
      %v3181 = vpop.f32.mrf.mxu0
      %3182 = vdwg.mxu0
      %3183 = vrot.lane.b32.xlu0 %v865, 56
      %v3184 = vpop.permute.xlu0 %3183
      %v3186 = vsel %vm507, %v2858, 0
      %v3189 = vsel %vm1433, %v3184, 0
      %3191 = vmatpush.bf16.msra.mxu0 0
      %3192 = vmatpush.bf16.msra.mxu0 0
      %3193 = vmatpush.bf16.msra.mxu0 0
      %3194 = vmatpush.bf16.msra.mxu0 0
      %3195 = vmatpush.bf16.msra.mxu0 0
      %3196 = vmatpush.bf16.msra.mxu0 0
      %3197 = vmatpush.bf16.msra.mxu0 0
      %3198 = vmatpush.bf16.msra.mxu0 %v3189
      %3199 = vmatmul.bf16.gmra.mxu0 %v3186
      %v3200 = vpop.f32.mrf.mxu0
      %v3201 = vadd.f32 0.0, %v3200
      %v3202 = vpop.f32.mrf.mxu0
      %3203 = vdwg.mxu0
      %3204 = vrot.lane.b32.xlu0 %v889, 56
      %v3205 = vpop.permute.xlu0 %3204
      %v3207 = vsel %vm507, %v2859, 0
      %v3210 = vsel %vm1433, %v3205, 0
      %3212 = vmatpush.bf16.msra.mxu0 0
      %3213 = vmatpush.bf16.msra.mxu0 0
      %3214 = vmatpush.bf16.msra.mxu0 0
      %3215 = vmatpush.bf16.msra.mxu0 0
      %3216 = vmatpush.bf16.msra.mxu0 0
      %3217 = vmatpush.bf16.msra.mxu0 0
      %3218 = vmatpush.bf16.msra.mxu0 0
      %3219 = vmatpush.bf16.msra.mxu0 %v3210
      %3220 = vmatmul.bf16.gmra.mxu0 %v3207
      %v3221 = vpop.f32.mrf.mxu0
      %v3222 = vadd.f32 0.0, %v3221
      %v3223 = vpop.f32.mrf.mxu0
      %3224 = vdwg.mxu0
      %3225 = vrot.lane.b32.xlu0 %v913, 56
      %v3226 = vpop.permute.xlu0 %3225
      %v3228 = vsel %vm507, %v2860, 0
      %v3231 = vsel %vm1433, %v3226, 0
      %3233 = vmatpush.bf16.msra.mxu0 0
      %3234 = vmatpush.bf16.msra.mxu0 0
      %3235 = vmatpush.bf16.msra.mxu0 0
      %3236 = vmatpush.bf16.msra.mxu0 0
      %3237 = vmatpush.bf16.msra.mxu0 0
      %3238 = vmatpush.bf16.msra.mxu0 0
      %3239 = vmatpush.bf16.msra.mxu0 0
      %3240 = vmatpush.bf16.msra.mxu0 %v3231
      %3241 = vmatmul.bf16.gmra.mxu0 %v3228
      %v3242 = vpop.f32.mrf.mxu0
      %v3243 = vadd.f32 0.0, %v3242
      %v3244 = vpop.f32.mrf.mxu0
      %3245 = vdwg.mxu0
      %3246 = vrot.lane.b32.xlu0 %v937, 56
      %v3247 = vpop.permute.xlu0 %3246
      %v3249 = vsel %vm507, %v2861, 0
      %v3252 = vsel %vm1433, %v3247, 0
      %3254 = vmatpush.bf16.msra.mxu0 0
      %3255 = vmatpush.bf16.msra.mxu0 0
      %3256 = vmatpush.bf16.msra.mxu0 0
      %3257 = vmatpush.bf16.msra.mxu0 0
      %3258 = vmatpush.bf16.msra.mxu0 0
      %3259 = vmatpush.bf16.msra.mxu0 0
      %3260 = vmatpush.bf16.msra.mxu0 0
      %3261 = vmatpush.bf16.msra.mxu0 %v3252
      %3262 = vmatmul.bf16.gmra.mxu0 %v3249
      %v3263 = vpop.f32.mrf.mxu0
      %v3264 = vadd.f32 0.0, %v3263
      %v3265 = vpop.f32.mrf.mxu0
      %3266 = vdwg.mxu0
      %3267 = vrot.lane.b32.xlu0 %v961, 56
      %v3268 = vpop.permute.xlu0 %3267
      %v3270 = vsel %vm507, %v2862, 0
      %v3273 = vsel %vm1433, %v3268, 0
      %3275 = vmatpush.bf16.msra.mxu0 0
      %3276 = vmatpush.bf16.msra.mxu0 0
      %3277 = vmatpush.bf16.msra.mxu0 0
      %3278 = vmatpush.bf16.msra.mxu0 0
      %3279 = vmatpush.bf16.msra.mxu0 0
      %3280 = vmatpush.bf16.msra.mxu0 0
      %3281 = vmatpush.bf16.msra.mxu0 0
      %3282 = vmatpush.bf16.msra.mxu0 %v3273
      %3283 = vmatmul.bf16.gmra.mxu0 %v3270
      %v3284 = vpop.f32.mrf.mxu0
      %v3285 = vadd.f32 0.0, %v3284
      %v3286 = vpop.f32.mrf.mxu0
      %3287 = vdwg.mxu0
      %3288 = vrot.lane.b32.xlu0 %v985, 56
      %v3289 = vpop.permute.xlu0 %3288
      %v3291 = vsel %vm507, %v2863, 0
      %v3294 = vsel %vm1433, %v3289, 0
      %3296 = vmatpush.bf16.msra.mxu0 0
      %3297 = vmatpush.bf16.msra.mxu0 0
      %3298 = vmatpush.bf16.msra.mxu0 0
      %3299 = vmatpush.bf16.msra.mxu0 0
      %3300 = vmatpush.bf16.msra.mxu0 0
      %3301 = vmatpush.bf16.msra.mxu0 0
      %3302 = vmatpush.bf16.msra.mxu0 0
      %3303 = vmatpush.bf16.msra.mxu0 %v3294
      %3304 = vmatmul.bf16.gmra.mxu0 %v3291
      %v3305 = vpop.f32.mrf.mxu0
      %v3306 = vadd.f32 0.0, %v3305
      %v3307 = vpop.f32.mrf.mxu0
      %3308 = vdwg.mxu0
      %3309 = vrot.lane.b32.xlu0 %v1009, 56
      %v3310 = vpop.permute.xlu0 %3309
      %v3312 = vsel %vm507, %v2864, 0
      %v3315 = vsel %vm1433, %v3310, 0
      %3317 = vmatpush.bf16.msra.mxu0 0
      %3318 = vmatpush.bf16.msra.mxu0 0
      %3319 = vmatpush.bf16.msra.mxu0 0
      %3320 = vmatpush.bf16.msra.mxu0 0
      %3321 = vmatpush.bf16.msra.mxu0 0
      %3322 = vmatpush.bf16.msra.mxu0 0
      %3323 = vmatpush.bf16.msra.mxu0 0
      %3324 = vmatpush.bf16.msra.mxu0 %v3315
      %3325 = vmatmul.bf16.gmra.mxu0 %v3312
      %v3326 = vpop.f32.mrf.mxu0
      %v3327 = vadd.f32 0.0, %v3326
      %v3328 = vpop.f32.mrf.mxu0
      %3329 = vdwg.mxu0
      %3330 = vrot.lane.b32.xlu0 %v1033, 56
      %v3331 = vpop.permute.xlu0 %3330
      %v3333 = vsel %vm507, %v2865, 0
      %v3336 = vsel %vm1433, %v3331, 0
      %3338 = vmatpush.bf16.msra.mxu0 0
      %3339 = vmatpush.bf16.msra.mxu0 0
      %3340 = vmatpush.bf16.msra.mxu0 0
      %3341 = vmatpush.bf16.msra.mxu0 0
      %3342 = vmatpush.bf16.msra.mxu0 0
      %3343 = vmatpush.bf16.msra.mxu0 0
      %3344 = vmatpush.bf16.msra.mxu0 0
      %3345 = vmatpush.bf16.msra.mxu0 %v3336
      %3346 = vmatmul.bf16.gmra.mxu0 %v3333
      %v3347 = vpop.f32.mrf.mxu0
      %v3348 = vadd.f32 0.0, %v3347
      %v3349 = vpop.f32.mrf.mxu0
      %3350 = vdwg.mxu0
      %3351 = vrot.lane.b32.xlu0 %v1057, 56
      %v3352 = vpop.permute.xlu0 %3351
      %v3354 = vsel %vm507, %v2866, 0
      %v3357 = vsel %vm1433, %v3352, 0
      %3359 = vmatpush.bf16.msra.mxu0 0
      %3360 = vmatpush.bf16.msra.mxu0 0
      %3361 = vmatpush.bf16.msra.mxu0 0
      %3362 = vmatpush.bf16.msra.mxu0 0
      %3363 = vmatpush.bf16.msra.mxu0 0
      %3364 = vmatpush.bf16.msra.mxu0 0
      %3365 = vmatpush.bf16.msra.mxu0 0
      %3366 = vmatpush.bf16.msra.mxu0 %v3357
      %3367 = vmatmul.bf16.gmra.mxu0 %v3354
      %v3368 = vpop.f32.mrf.mxu0
      %v3369 = vadd.f32 0.0, %v3368
      %v3370 = vpop.f32.mrf.mxu0
      %3371 = vdwg.mxu0
      %3372 = vrot.lane.b32.xlu0 %v1081, 56
      %v3373 = vpop.permute.xlu0 %3372
      %v3375 = vsel %vm507, %v2867, 0
      %v3378 = vsel %vm1433, %v3373, 0
      %3380 = vmatpush.bf16.msra.mxu0 0
      %3381 = vmatpush.bf16.msra.mxu0 0
      %3382 = vmatpush.bf16.msra.mxu0 0
      %3383 = vmatpush.bf16.msra.mxu0 0
      %3384 = vmatpush.bf16.msra.mxu0 0
      %3385 = vmatpush.bf16.msra.mxu0 0
      %3386 = vmatpush.bf16.msra.mxu0 0
      %3387 = vmatpush.bf16.msra.mxu0 %v3378
      %3388 = vmatmul.bf16.gmra.mxu0 %v3375
      %v3389 = vpop.f32.mrf.mxu0
      %v3390 = vadd.f32 0.0, %v3389
      %v3391 = vpop.f32.mrf.mxu0
      %3392 = vdwg.mxu0
      %v3393 = vpack.c.bf16 %v2907, %v2886
      %v3394 = vpack.c.bf16 %v2949, %v2928
      %v3395 = vpack.c.bf16 %v2991, %v2970
      %v3396 = vpack.c.bf16 %v3033, %v3012
      %v3397 = vpack.c.bf16 %v3075, %v3054
      %v3398 = vpack.c.bf16 %v3117, %v3096
      %v3399 = vpack.c.bf16 %v3159, %v3138
      %v3400 = vpack.c.bf16 %v3201, %v3180
      %v3401 = vpack.c.bf16 %v3243, %v3222
      %v3402 = vpack.c.bf16 %v3285, %v3264
      %v3403 = vpack.c.bf16 %v3327, %v3306
      %v3404 = vpack.c.bf16 %v3369, %v3348
      %v3405 = vpack.c.bf16 %v3390, %v3390
      %v3406 = vld [vmem:[%s2 + $0x4] sm:$0xf]
      %v3408 = vsel %vm507, %v3393, 0
      %v3411 = vsel %vm507, %v3394, 0
      %v3414 = vsel %vm507, %v3395, 0
      %v3417 = vsel %vm507, %v3396, 0
      %v3420 = vsel %vm507, %v3397, 0
      %v3423 = vsel %vm507, %v3398, 0
      %v3426 = vsel %vm507, %v3399, 0
      %v3429 = vsel %vm507, %v3400, 0
      %v3432 = vsel %vm507, %v3401, 0
      %v3435 = vsel %vm507, %v3402, 0
      %v3438 = vsel %vm507, %v3403, 0
      %v3441 = vsel %vm507, %v3404, 0
      %v3444 = vsel %vm507, %v3405, 0
      %v3447 = vsel %vm1433, %v3406, 0
      %3449 = vmatpush.bf16.msra.mxu0 0
      %3450 = vmatpush.bf16.msra.mxu0 0
      %3451 = vmatpush.bf16.msra.mxu0 0
      %3452 = vmatpush.bf16.msra.mxu0 0
      %3453 = vmatpush.bf16.msra.mxu0 0
      %3454 = vmatpush.bf16.msra.mxu0 0
      %3455 = vmatpush.bf16.msra.mxu0 0
      %3456 = vmatpush.bf16.msra.mxu0 %v3447
      %3457 = vmatmul.bf16.gmra.mxu0 %v3408
      %v3458 = vpop.f32.mrf.mxu0
      %v3459 = vadd.f32 0.0, %v3458
      %v3460 = vpop.f32.mrf.mxu0
      %v3461 = vadd.f32 0.0, %v3460
      %3462 = vmatmul.bf16.gmra.mxu0 %v3411
      %v3463 = vpop.f32.mrf.mxu0
      %v3464 = vadd.f32 0.0, %v3463
      %v3465 = vpop.f32.mrf.mxu0
      %v3466 = vadd.f32 0.0, %v3465
      %3467 = vmatmul.bf16.gmra.mxu0 %v3414
      %v3468 = vpop.f32.mrf.mxu0
      %v3469 = vadd.f32 0.0, %v3468
      %v3470 = vpop.f32.mrf.mxu0
      %v3471 = vadd.f32 0.0, %v3470
      %3472 = vmatmul.bf16.gmra.mxu0 %v3417
      %v3473 = vpop.f32.mrf.mxu0
      %v3474 = vadd.f32 0.0, %v3473
      %v3475 = vpop.f32.mrf.mxu0
      %v3476 = vadd.f32 0.0, %v3475
      %3477 = vmatmul.bf16.gmra.mxu0 %v3420
      %v3478 = vpop.f32.mrf.mxu0
      %v3479 = vadd.f32 0.0, %v3478
      %v3480 = vpop.f32.mrf.mxu0
      %v3481 = vadd.f32 0.0, %v3480
      %3482 = vmatmul.bf16.gmra.mxu0 %v3423
      %v3483 = vpop.f32.mrf.mxu0
      %v3484 = vadd.f32 0.0, %v3483
      %v3485 = vpop.f32.mrf.mxu0
      %v3486 = vadd.f32 0.0, %v3485
      %3487 = vmatmul.bf16.gmra.mxu0 %v3426
      %v3488 = vpop.f32.mrf.mxu0
      %v3489 = vadd.f32 0.0, %v3488
      %v3490 = vpop.f32.mrf.mxu0
      %v3491 = vadd.f32 0.0, %v3490
      %3492 = vmatmul.bf16.gmra.mxu0 %v3429
      %v3493 = vpop.f32.mrf.mxu0
      %v3494 = vadd.f32 0.0, %v3493
      %v3495 = vpop.f32.mrf.mxu0
      %v3496 = vadd.f32 0.0, %v3495
      %3497 = vmatmul.bf16.gmra.mxu0 %v3432
      %v3498 = vpop.f32.mrf.mxu0
      %v3499 = vadd.f32 0.0, %v3498
      %v3500 = vpop.f32.mrf.mxu0
      %v3501 = vadd.f32 0.0, %v3500
      %3502 = vmatmul.bf16.gmra.mxu0 %v3435
      %v3503 = vpop.f32.mrf.mxu0
      %v3504 = vadd.f32 0.0, %v3503
      %v3505 = vpop.f32.mrf.mxu0
      %v3506 = vadd.f32 0.0, %v3505
      %3507 = vmatmul.bf16.gmra.mxu0 %v3438
      %v3508 = vpop.f32.mrf.mxu0
      %v3509 = vadd.f32 0.0, %v3508
      %v3510 = vpop.f32.mrf.mxu0
      %v3511 = vadd.f32 0.0, %v3510
      %3512 = vmatmul.bf16.gmra.mxu0 %v3441
      %v3513 = vpop.f32.mrf.mxu0
      %v3514 = vadd.f32 0.0, %v3513
      %v3515 = vpop.f32.mrf.mxu0
      %v3516 = vadd.f32 0.0, %v3515
      %3517 = vmatmul.bf16.gmra.mxu0 %v3444
      %v3518 = vpop.f32.mrf.mxu0
      %v3519 = vadd.f32 0.0, %v3518
      %v3520 = vpop.f32.mrf.mxu0
      %3521 = vdwg.mxu0
      %v3523 = vsel %vm507, %v1954, 0
      %v3526 = vsel %vm507, %v1955, 0
      %v3529 = vsel %vm507, %v1956, 0
      %v3532 = vsel %vm507, %v1957, 0
      %v3535 = vsel %vm507, %v1958, 0
      %v3538 = vsel %vm507, %v1959, 0
      %v3541 = vsel %vm507, %v1960, 0
      %v3544 = vsel %vm507, %v1961, 0
      %v3547 = vsel %vm507, %v1962, 0
      %v3550 = vsel %vm507, %v1963, 0
      %v3553 = vsel %vm507, %v1964, 0
      %v3556 = vsel %vm507, %v1965, 0
      %v3559 = vsel %vm507, %v1966, 0
      %v3562 = vsel %vm1433, %v1967, 0
      %3564 = vmatpush.bf16.msra.mxu0 0
      %3565 = vmatpush.bf16.msra.mxu0 0
      %3566 = vmatpush.bf16.msra.mxu0 0
      %3567 = vmatpush.bf16.msra.mxu0 0
      %3568 = vmatpush.bf16.msra.mxu0 0
      %3569 = vmatpush.bf16.msra.mxu0 0
      %3570 = vmatpush.bf16.msra.mxu0 0
      %3571 = vmatpush.bf16.msra.mxu0 %v3562
      %3572 = vmatmul.bf16.gmra.mxu0 %v3523
      %v3573 = vpop.f32.mrf.mxu0
      %v3574 = vadd.f32 %v3459, %v3573
      %v3575 = vpop.f32.mrf.mxu0
      %v3576 = vadd.f32 %v3461, %v3575
      %3577 = vmatmul.bf16.gmra.mxu0 %v3526
      %v3578 = vpop.f32.mrf.mxu0
      %v3579 = vadd.f32 %v3464, %v3578
      %v3580 = vpop.f32.mrf.mxu0
      %v3581 = vadd.f32 %v3466, %v3580
      %3582 = vmatmul.bf16.gmra.mxu0 %v3529
      %v3583 = vpop.f32.mrf.mxu0
      %v3584 = vadd.f32 %v3469, %v3583
      %v3585 = vpop.f32.mrf.mxu0
      %v3586 = vadd.f32 %v3471, %v3585
      %3587 = vmatmul.bf16.gmra.mxu0 %v3532
      %v3588 = vpop.f32.mrf.mxu0
      %v3589 = vadd.f32 %v3474, %v3588
      %v3590 = vpop.f32.mrf.mxu0
      %v3591 = vadd.f32 %v3476, %v3590
      %3592 = vmatmul.bf16.gmra.mxu0 %v3535
      %v3593 = vpop.f32.mrf.mxu0
      %v3594 = vadd.f32 %v3479, %v3593
      %v3595 = vpop.f32.mrf.mxu0
      %v3596 = vadd.f32 %v3481, %v3595
      %3597 = vmatmul.bf16.gmra.mxu0 %v3538
      %v3598 = vpop.f32.mrf.mxu0
      %v3599 = vadd.f32 %v3484, %v3598
      %v3600 = vpop.f32.mrf.mxu0
      %v3601 = vadd.f32 %v3486, %v3600
      %3602 = vmatmul.bf16.gmra.mxu0 %v3541
      %v3603 = vpop.f32.mrf.mxu0
      %v3604 = vadd.f32 %v3489, %v3603
      %v3605 = vpop.f32.mrf.mxu0
      %v3606 = vadd.f32 %v3491, %v3605
      %3607 = vmatmul.bf16.gmra.mxu0 %v3544
      %v3608 = vpop.f32.mrf.mxu0
      %v3609 = vadd.f32 %v3494, %v3608
      %v3610 = vpop.f32.mrf.mxu0
      %v3611 = vadd.f32 %v3496, %v3610
      %3612 = vmatmul.bf16.gmra.mxu0 %v3547
      %v3613 = vpop.f32.mrf.mxu0
      %v3614 = vadd.f32 %v3499, %v3613
      %v3615 = vpop.f32.mrf.mxu0
      %v3616 = vadd.f32 %v3501, %v3615
      %3617 = vmatmul.bf16.gmra.mxu0 %v3550
      %v3618 = vpop.f32.mrf.mxu0
      %v3619 = vadd.f32 %v3504, %v3618
      %v3620 = vpop.f32.mrf.mxu0
      %v3621 = vadd.f32 %v3506, %v3620
      %3622 = vmatmul.bf16.gmra.mxu0 %v3553
      %v3623 = vpop.f32.mrf.mxu0
      %v3624 = vadd.f32 %v3509, %v3623
      %v3625 = vpop.f32.mrf.mxu0
      %v3626 = vadd.f32 %v3511, %v3625
      %3627 = vmatmul.bf16.gmra.mxu0 %v3556
      %v3628 = vpop.f32.mrf.mxu0
      %v3629 = vadd.f32 %v3514, %v3628
      %v3630 = vpop.f32.mrf.mxu0
      %v3631 = vadd.f32 %v3516, %v3630
      %3632 = vmatmul.bf16.gmra.mxu0 %v3559
      %v3633 = vpop.f32.mrf.mxu0
      %v3634 = vadd.f32 %v3519, %v3633
      %v3635 = vpop.f32.mrf.mxu0
      %3636 = vdwg.mxu0
      %3637 = vrot.lane.b32.xlu0 %v504, 112
      %v3638 = vpop.permute.xlu0 %3637
      %3639 = vrot.lane.b32.xlu0 %v504, 80
      %v3640 = vpop.permute.xlu0 %3639
      %v3642 = vsel %vm507, %v3638, 0
      %v3645 = vsel %vm507, %v3640, 0
      %3647 = vmatpush.bf16.xpose.msra.mxu0 0
      %3648 = vmatpush.bf16.xpose.msra.mxu0 0
      %3649 = vmatpush.bf16.xpose.msra.mxu0 0
      %3650 = vmatpush.bf16.xpose.msra.mxu0 0
      %3651 = vmatpush.bf16.xpose.msra.mxu0 0
      %3652 = vmatpush.bf16.xpose.msra.mxu0 0
      %3653 = vmatpush.bf16.xpose.msra.mxu0 0
      %3654 = vmatpush.bf16.xpose.msra.mxu0 %v3645
      %3655 = vmatmul.bf16.gmra.mxu0 %v3642
      %v3656 = vpop.f32.mrf.mxu0
      %v3657 = vadd.f32 0.0, %v3656
      %v3658 = vpop.f32.mrf.mxu0
      %3659 = vdwg.mxu0
      %3660 = vrot.lane.b32.xlu0 %v529, 112
      %v3661 = vpop.permute.xlu0 %3660
      %3662 = vrot.lane.b32.xlu0 %v529, 80
      %v3663 = vpop.permute.xlu0 %3662
      %v3665 = vsel %vm507, %v3661, 0
      %v3668 = vsel %vm507, %v3663, 0
      %3670 = vmatpush.bf16.xpose.msra.mxu0 0
      %3671 = vmatpush.bf16.xpose.msra.mxu0 0
      %3672 = vmatpush.bf16.xpose.msra.mxu0 0
      %3673 = vmatpush.bf16.xpose.msra.mxu0 0
      %3674 = vmatpush.bf16.xpose.msra.mxu0 0
      %3675 = vmatpush.bf16.xpose.msra.mxu0 0
      %3676 = vmatpush.bf16.xpose.msra.mxu0 0
      %3677 = vmatpush.bf16.xpose.msra.mxu0 %v3668
      %3678 = vmatmul.bf16.gmra.mxu0 %v3665
      %v3679 = vpop.f32.mrf.mxu0
      %v3680 = vadd.f32 0.0, %v3679
      %v3681 = vpop.f32.mrf.mxu0
      %3682 = vdwg.mxu0
      %3683 = vrot.lane.b32.xlu0 %v553, 112
      %v3684 = vpop.permute.xlu0 %3683
      %3685 = vrot.lane.b32.xlu0 %v553, 80
      %v3686 = vpop.permute.xlu0 %3685
      %v3688 = vsel %vm507, %v3684, 0
      %v3691 = vsel %vm507, %v3686, 0
      %3693 = vmatpush.bf16.xpose.msra.mxu0 0
      %3694 = vmatpush.bf16.xpose.msra.mxu0 0
      %3695 = vmatpush.bf16.xpose.msra.mxu0 0
      %3696 = vmatpush.bf16.xpose.msra.mxu0 0
      %3697 = vmatpush.bf16.xpose.msra.mxu0 0
      %3698 = vmatpush.bf16.xpose.msra.mxu0 0
      %3699 = vmatpush.bf16.xpose.msra.mxu0 0
      %3700 = vmatpush.bf16.xpose.msra.mxu0 %v3691
      %3701 = vmatmul.bf16.gmra.mxu0 %v3688
      %v3702 = vpop.f32.mrf.mxu0
      %v3703 = vadd.f32 0.0, %v3702
      %v3704 = vpop.f32.mrf.mxu0
      %3705 = vdwg.mxu0
      %3706 = vrot.lane.b32.xlu0 %v577, 112
      %v3707 = vpop.permute.xlu0 %3706
      %3708 = vrot.lane.b32.xlu0 %v577, 80
      %v3709 = vpop.permute.xlu0 %3708
      %v3711 = vsel %vm507, %v3707, 0
      %v3714 = vsel %vm507, %v3709, 0
      %3716 = vmatpush.bf16.xpose.msra.mxu0 0
      %3717 = vmatpush.bf16.xpose.msra.mxu0 0
      %3718 = vmatpush.bf16.xpose.msra.mxu0 0
      %3719 = vmatpush.bf16.xpose.msra.mxu0 0
      %3720 = vmatpush.bf16.xpose.msra.mxu0 0
      %3721 = vmatpush.bf16.xpose.msra.mxu0 0
      %3722 = vmatpush.bf16.xpose.msra.mxu0 0
      %3723 = vmatpush.bf16.xpose.msra.mxu0 %v3714
      %3724 = vmatmul.bf16.gmra.mxu0 %v3711
      %v3725 = vpop.f32.mrf.mxu0
      %v3726 = vadd.f32 0.0, %v3725
      %v3727 = vpop.f32.mrf.mxu0
      %3728 = vdwg.mxu0
      %3729 = vrot.lane.b32.xlu0 %v601, 112
      %v3730 = vpop.permute.xlu0 %3729
      %3731 = vrot.lane.b32.xlu0 %v601, 80
      %v3732 = vpop.permute.xlu0 %3731
      %v3734 = vsel %vm507, %v3730, 0
      %v3737 = vsel %vm507, %v3732, 0
      %3739 = vmatpush.bf16.xpose.msra.mxu0 0
      %3740 = vmatpush.bf16.xpose.msra.mxu0 0
      %3741 = vmatpush.bf16.xpose.msra.mxu0 0
      %3742 = vmatpush.bf16.xpose.msra.mxu0 0
      %3743 = vmatpush.bf16.xpose.msra.mxu0 0
      %3744 = vmatpush.bf16.xpose.msra.mxu0 0
      %3745 = vmatpush.bf16.xpose.msra.mxu0 0
      %3746 = vmatpush.bf16.xpose.msra.mxu0 %v3737
      %3747 = vmatmul.bf16.gmra.mxu0 %v3734
      %v3748 = vpop.f32.mrf.mxu0
      %v3749 = vadd.f32 0.0, %v3748
      %v3750 = vpop.f32.mrf.mxu0
      %3751 = vdwg.mxu0
      %3752 = vrot.lane.b32.xlu0 %v625, 112
      %v3753 = vpop.permute.xlu0 %3752
      %3754 = vrot.lane.b32.xlu0 %v625, 80
      %v3755 = vpop.permute.xlu0 %3754
      %v3757 = vsel %vm507, %v3753, 0
      %v3760 = vsel %vm507, %v3755, 0
      %3762 = vmatpush.bf16.xpose.msra.mxu0 0
      %3763 = vmatpush.bf16.xpose.msra.mxu0 0
      %3764 = vmatpush.bf16.xpose.msra.mxu0 0
      %3765 = vmatpush.bf16.xpose.msra.mxu0 0
      %3766 = vmatpush.bf16.xpose.msra.mxu0 0
      %3767 = vmatpush.bf16.xpose.msra.mxu0 0
      %3768 = vmatpush.bf16.xpose.msra.mxu0 0
      %3769 = vmatpush.bf16.xpose.msra.mxu0 %v3760
      %3770 = vmatmul.bf16.gmra.mxu0 %v3757
      %v3771 = vpop.f32.mrf.mxu0
      %v3772 = vadd.f32 0.0, %v3771
      %v3773 = vpop.f32.mrf.mxu0
      %3774 = vdwg.mxu0
      %3775 = vrot.lane.b32.xlu0 %v649, 112
      %v3776 = vpop.permute.xlu0 %3775
      %3777 = vrot.lane.b32.xlu0 %v649, 80
      %v3778 = vpop.permute.xlu0 %3777
      %v3780 = vsel %vm507, %v3776, 0
      %v3783 = vsel %vm507, %v3778, 0
      %3785 = vmatpush.bf16.xpose.msra.mxu0 0
      %3786 = vmatpush.bf16.xpose.msra.mxu0 0
      %3787 = vmatpush.bf16.xpose.msra.mxu0 0
      %3788 = vmatpush.bf16.xpose.msra.mxu0 0
      %3789 = vmatpush.bf16.xpose.msra.mxu0 0
      %3790 = vmatpush.bf16.xpose.msra.mxu0 0
      %3791 = vmatpush.bf16.xpose.msra.mxu0 0
      %3792 = vmatpush.bf16.xpose.msra.mxu0 %v3783
      %3793 = vmatmul.bf16.gmra.mxu0 %v3780
      %v3794 = vpop.f32.mrf.mxu0
      %v3795 = vadd.f32 0.0, %v3794
      %v3796 = vpop.f32.mrf.mxu0
      %3797 = vdwg.mxu0
      %3798 = vrot.lane.b32.xlu0 %v673, 112
      %v3799 = vpop.permute.xlu0 %3798
      %3800 = vrot.lane.b32.xlu0 %v673, 80
      %v3801 = vpop.permute.xlu0 %3800
      %v3803 = vsel %vm507, %v3799, 0
      %v3806 = vsel %vm507, %v3801, 0
      %3808 = vmatpush.bf16.xpose.msra.mxu0 0
      %3809 = vmatpush.bf16.xpose.msra.mxu0 0
      %3810 = vmatpush.bf16.xpose.msra.mxu0 0
      %3811 = vmatpush.bf16.xpose.msra.mxu0 0
      %3812 = vmatpush.bf16.xpose.msra.mxu0 0
      %3813 = vmatpush.bf16.xpose.msra.mxu0 0
      %3814 = vmatpush.bf16.xpose.msra.mxu0 0
      %3815 = vmatpush.bf16.xpose.msra.mxu0 %v3806
      %3816 = vmatmul.bf16.gmra.mxu0 %v3803
      %v3817 = vpop.f32.mrf.mxu0
      %v3818 = vadd.f32 0.0, %v3817
      %v3819 = vpop.f32.mrf.mxu0
      %3820 = vdwg.mxu0
      %3821 = vrot.lane.b32.xlu0 %v697, 112
      %v3822 = vpop.permute.xlu0 %3821
      %3823 = vrot.lane.b32.xlu0 %v697, 80
      %v3824 = vpop.permute.xlu0 %3823
      %v3826 = vsel %vm507, %v3822, 0
      %v3829 = vsel %vm507, %v3824, 0
      %3831 = vmatpush.bf16.xpose.msra.mxu0 0
      %3832 = vmatpush.bf16.xpose.msra.mxu0 0
      %3833 = vmatpush.bf16.xpose.msra.mxu0 0
      %3834 = vmatpush.bf16.xpose.msra.mxu0 0
      %3835 = vmatpush.bf16.xpose.msra.mxu0 0
      %3836 = vmatpush.bf16.xpose.msra.mxu0 0
      %3837 = vmatpush.bf16.xpose.msra.mxu0 0
      %3838 = vmatpush.bf16.xpose.msra.mxu0 %v3829
      %3839 = vmatmul.bf16.gmra.mxu0 %v3826
      %v3840 = vpop.f32.mrf.mxu0
      %v3841 = vadd.f32 0.0, %v3840
      %v3842 = vpop.f32.mrf.mxu0
      %3843 = vdwg.mxu0
      %3844 = vrot.lane.b32.xlu0 %v721, 112
      %v3845 = vpop.permute.xlu0 %3844
      %3846 = vrot.lane.b32.xlu0 %v721, 80
      %v3847 = vpop.permute.xlu0 %3846
      %v3849 = vsel %vm507, %v3845, 0
      %v3852 = vsel %vm507, %v3847, 0
      %3854 = vmatpush.bf16.xpose.msra.mxu0 0
      %3855 = vmatpush.bf16.xpose.msra.mxu0 0
      %3856 = vmatpush.bf16.xpose.msra.mxu0 0
      %3857 = vmatpush.bf16.xpose.msra.mxu0 0
      %3858 = vmatpush.bf16.xpose.msra.mxu0 0
      %3859 = vmatpush.bf16.xpose.msra.mxu0 0
      %3860 = vmatpush.bf16.xpose.msra.mxu0 0
      %3861 = vmatpush.bf16.xpose.msra.mxu0 %v3852
      %3862 = vmatmul.bf16.gmra.mxu0 %v3849
      %v3863 = vpop.f32.mrf.mxu0
      %v3864 = vadd.f32 0.0, %v3863
      %v3865 = vpop.f32.mrf.mxu0
      %3866 = vdwg.mxu0
      %3867 = vrot.lane.b32.xlu0 %v745, 112
      %v3868 = vpop.permute.xlu0 %3867
      %3869 = vrot.lane.b32.xlu0 %v745, 80
      %v3870 = vpop.permute.xlu0 %3869
      %v3872 = vsel %vm507, %v3868, 0
      %v3875 = vsel %vm507, %v3870, 0
      %3877 = vmatpush.bf16.xpose.msra.mxu0 0
      %3878 = vmatpush.bf16.xpose.msra.mxu0 0
      %3879 = vmatpush.bf16.xpose.msra.mxu0 0
      %3880 = vmatpush.bf16.xpose.msra.mxu0 0
      %3881 = vmatpush.bf16.xpose.msra.mxu0 0
      %3882 = vmatpush.bf16.xpose.msra.mxu0 0
      %3883 = vmatpush.bf16.xpose.msra.mxu0 0
      %3884 = vmatpush.bf16.xpose.msra.mxu0 %v3875
      %3885 = vmatmul.bf16.gmra.mxu0 %v3872
      %v3886 = vpop.f32.mrf.mxu0
      %v3887 = vadd.f32 0.0, %v3886
      %v3888 = vpop.f32.mrf.mxu0
      %3889 = vdwg.mxu0
      %3890 = vrot.lane.b32.xlu0 %v769, 112
      %v3891 = vpop.permute.xlu0 %3890
      %3892 = vrot.lane.b32.xlu0 %v769, 80
      %v3893 = vpop.permute.xlu0 %3892
      %v3895 = vsel %vm507, %v3891, 0
      %v3898 = vsel %vm507, %v3893, 0
      %3900 = vmatpush.bf16.xpose.msra.mxu0 0
      %3901 = vmatpush.bf16.xpose.msra.mxu0 0
      %3902 = vmatpush.bf16.xpose.msra.mxu0 0
      %3903 = vmatpush.bf16.xpose.msra.mxu0 0
      %3904 = vmatpush.bf16.xpose.msra.mxu0 0
      %3905 = vmatpush.bf16.xpose.msra.mxu0 0
      %3906 = vmatpush.bf16.xpose.msra.mxu0 0
      %3907 = vmatpush.bf16.xpose.msra.mxu0 %v3898
      %3908 = vmatmul.bf16.gmra.mxu0 %v3895
      %v3909 = vpop.f32.mrf.mxu0
      %v3910 = vadd.f32 0.0, %v3909
      %v3911 = vpop.f32.mrf.mxu0
      %3912 = vdwg.mxu0
      %3913 = vrot.lane.b32.xlu0 %v793, 112
      %v3914 = vpop.permute.xlu0 %3913
      %3915 = vrot.lane.b32.xlu0 %v793, 80
      %v3916 = vpop.permute.xlu0 %3915
      %v3918 = vsel %vm507, %v3914, 0
      %v3921 = vsel %vm507, %v3916, 0
      %3923 = vmatpush.bf16.xpose.msra.mxu0 0
      %3924 = vmatpush.bf16.xpose.msra.mxu0 0
      %3925 = vmatpush.bf16.xpose.msra.mxu0 0
      %3926 = vmatpush.bf16.xpose.msra.mxu0 0
      %3927 = vmatpush.bf16.xpose.msra.mxu0 0
      %3928 = vmatpush.bf16.xpose.msra.mxu0 0
      %3929 = vmatpush.bf16.xpose.msra.mxu0 0
      %3930 = vmatpush.bf16.xpose.msra.mxu0 %v3921
      %3931 = vmatmul.bf16.gmra.mxu0 %v3918
      %v3932 = vpop.f32.mrf.mxu0
      %v3933 = vadd.f32 0.0, %v3932
      %v3934 = vpop.f32.mrf.mxu0
      %3935 = vdwg.mxu0
      %3936 = vrot.lane.b32.xlu0 %v817, 112
      %v3937 = vpop.permute.xlu0 %3936
      %3938 = vrot.lane.b32.xlu0 %v817, 80
      %v3939 = vpop.permute.xlu0 %3938
      %v3941 = vsel %vm507, %v3937, 0
      %v3944 = vsel %vm507, %v3939, 0
      %3946 = vmatpush.bf16.xpose.msra.mxu0 0
      %3947 = vmatpush.bf16.xpose.msra.mxu0 0
      %3948 = vmatpush.bf16.xpose.msra.mxu0 0
      %3949 = vmatpush.bf16.xpose.msra.mxu0 0
      %3950 = vmatpush.bf16.xpose.msra.mxu0 0
      %3951 = vmatpush.bf16.xpose.msra.mxu0 0
      %3952 = vmatpush.bf16.xpose.msra.mxu0 0
      %3953 = vmatpush.bf16.xpose.msra.mxu0 %v3944
      %3954 = vmatmul.bf16.gmra.mxu0 %v3941
      %v3955 = vpop.f32.mrf.mxu0
      %v3956 = vadd.f32 0.0, %v3955
      %v3957 = vpop.f32.mrf.mxu0
      %3958 = vdwg.mxu0
      %3959 = vrot.lane.b32.xlu0 %v841, 112
      %v3960 = vpop.permute.xlu0 %3959
      %3961 = vrot.lane.b32.xlu0 %v841, 80
      %v3962 = vpop.permute.xlu0 %3961
      %v3964 = vsel %vm507, %v3960, 0
      %v3967 = vsel %vm507, %v3962, 0
      %3969 = vmatpush.bf16.xpose.msra.mxu0 0
      %3970 = vmatpush.bf16.xpose.msra.mxu0 0
      %3971 = vmatpush.bf16.xpose.msra.mxu0 0
      %3972 = vmatpush.bf16.xpose.msra.mxu0 0
      %3973 = vmatpush.bf16.xpose.msra.mxu0 0
      %3974 = vmatpush.bf16.xpose.msra.mxu0 0
      %3975 = vmatpush.bf16.xpose.msra.mxu0 0
      %3976 = vmatpush.bf16.xpose.msra.mxu0 %v3967
      %3977 = vmatmul.bf16.gmra.mxu0 %v3964
      %v3978 = vpop.f32.mrf.mxu0
      %v3979 = vadd.f32 0.0, %v3978
      %v3980 = vpop.f32.mrf.mxu0
      %3981 = vdwg.mxu0
      %3982 = vrot.lane.b32.xlu0 %v865, 112
      %v3983 = vpop.permute.xlu0 %3982
      %3984 = vrot.lane.b32.xlu0 %v865, 80
      %v3985 = vpop.permute.xlu0 %3984
      %v3987 = vsel %vm507, %v3983, 0
      %v3990 = vsel %vm507, %v3985, 0
      %3992 = vmatpush.bf16.xpose.msra.mxu0 0
      %3993 = vmatpush.bf16.xpose.msra.mxu0 0
      %3994 = vmatpush.bf16.xpose.msra.mxu0 0
      %3995 = vmatpush.bf16.xpose.msra.mxu0 0
      %3996 = vmatpush.bf16.xpose.msra.mxu0 0
      %3997 = vmatpush.bf16.xpose.msra.mxu0 0
      %3998 = vmatpush.bf16.xpose.msra.mxu0 0
      %3999 = vmatpush.bf16.xpose.msra.mxu0 %v3990
      %4000 = vmatmul.bf16.gmra.mxu0 %v3987
      %v4001 = vpop.f32.mrf.mxu0
      %v4002 = vadd.f32 0.0, %v4001
      %v4003 = vpop.f32.mrf.mxu0
      %4004 = vdwg.mxu0
      %4005 = vrot.lane.b32.xlu0 %v889, 112
      %v4006 = vpop.permute.xlu0 %4005
      %4007 = vrot.lane.b32.xlu0 %v889, 80
      %v4008 = vpop.permute.xlu0 %4007
      %v4010 = vsel %vm507, %v4006, 0
      %v4013 = vsel %vm507, %v4008, 0
      %4015 = vmatpush.bf16.xpose.msra.mxu0 0
      %4016 = vmatpush.bf16.xpose.msra.mxu0 0
      %4017 = vmatpush.bf16.xpose.msra.mxu0 0
      %4018 = vmatpush.bf16.xpose.msra.mxu0 0
      %4019 = vmatpush.bf16.xpose.msra.mxu0 0
      %4020 = vmatpush.bf16.xpose.msra.mxu0 0
      %4021 = vmatpush.bf16.xpose.msra.mxu0 0
      %4022 = vmatpush.bf16.xpose.msra.mxu0 %v4013
      %4023 = vmatmul.bf16.gmra.mxu0 %v4010
      %v4024 = vpop.f32.mrf.mxu0
      %v4025 = vadd.f32 0.0, %v4024
      %v4026 = vpop.f32.mrf.mxu0
      %4027 = vdwg.mxu0
      %4028 = vrot.lane.b32.xlu0 %v913, 112
      %v4029 = vpop.permute.xlu0 %4028
      %4030 = vrot.lane.b32.xlu0 %v913, 80
      %v4031 = vpop.permute.xlu0 %4030
      %v4033 = vsel %vm507, %v4029, 0
      %v4036 = vsel %vm507, %v4031, 0
      %4038 = vmatpush.bf16.xpose.msra.mxu0 0
      %4039 = vmatpush.bf16.xpose.msra.mxu0 0
      %4040 = vmatpush.bf16.xpose.msra.mxu0 0
      %4041 = vmatpush.bf16.xpose.msra.mxu0 0
      %4042 = vmatpush.bf16.xpose.msra.mxu0 0
      %4043 = vmatpush.bf16.xpose.msra.mxu0 0
      %4044 = vmatpush.bf16.xpose.msra.mxu0 0
      %4045 = vmatpush.bf16.xpose.msra.mxu0 %v4036
      %4046 = vmatmul.bf16.gmra.mxu0 %v4033
      %v4047 = vpop.f32.mrf.mxu0
      %v4048 = vadd.f32 0.0, %v4047
      %v4049 = vpop.f32.mrf.mxu0
      %4050 = vdwg.mxu0
      %4051 = vrot.lane.b32.xlu0 %v937, 112
      %v4052 = vpop.permute.xlu0 %4051
      %4053 = vrot.lane.b32.xlu0 %v937, 80
      %v4054 = vpop.permute.xlu0 %4053
      %v4056 = vsel %vm507, %v4052, 0
      %v4059 = vsel %vm507, %v4054, 0
      %4061 = vmatpush.bf16.xpose.msra.mxu0 0
      %4062 = vmatpush.bf16.xpose.msra.mxu0 0
      %4063 = vmatpush.bf16.xpose.msra.mxu0 0
      %4064 = vmatpush.bf16.xpose.msra.mxu0 0
      %4065 = vmatpush.bf16.xpose.msra.mxu0 0
      %4066 = vmatpush.bf16.xpose.msra.mxu0 0
      %4067 = vmatpush.bf16.xpose.msra.mxu0 0
      %4068 = vmatpush.bf16.xpose.msra.mxu0 %v4059
      %4069 = vmatmul.bf16.gmra.mxu0 %v4056
      %v4070 = vpop.f32.mrf.mxu0
      %v4071 = vadd.f32 0.0, %v4070
      %v4072 = vpop.f32.mrf.mxu0
      %4073 = vdwg.mxu0
      %4074 = vrot.lane.b32.xlu0 %v961, 112
      %v4075 = vpop.permute.xlu0 %4074
      %4076 = vrot.lane.b32.xlu0 %v961, 80
      %v4077 = vpop.permute.xlu0 %4076
      %v4079 = vsel %vm507, %v4075, 0
      %v4082 = vsel %vm507, %v4077, 0
      %4084 = vmatpush.bf16.xpose.msra.mxu0 0
      %4085 = vmatpush.bf16.xpose.msra.mxu0 0
      %4086 = vmatpush.bf16.xpose.msra.mxu0 0
      %4087 = vmatpush.bf16.xpose.msra.mxu0 0
      %4088 = vmatpush.bf16.xpose.msra.mxu0 0
      %4089 = vmatpush.bf16.xpose.msra.mxu0 0
      %4090 = vmatpush.bf16.xpose.msra.mxu0 0
      %4091 = vmatpush.bf16.xpose.msra.mxu0 %v4082
      %4092 = vmatmul.bf16.gmra.mxu0 %v4079
      %v4093 = vpop.f32.mrf.mxu0
      %v4094 = vadd.f32 0.0, %v4093
      %v4095 = vpop.f32.mrf.mxu0
      %4096 = vdwg.mxu0
      %4097 = vrot.lane.b32.xlu0 %v985, 112
      %v4098 = vpop.permute.xlu0 %4097
      %4099 = vrot.lane.b32.xlu0 %v985, 80
      %v4100 = vpop.permute.xlu0 %4099
      %v4102 = vsel %vm507, %v4098, 0
      %v4105 = vsel %vm507, %v4100, 0
      %4107 = vmatpush.bf16.xpose.msra.mxu0 0
      %4108 = vmatpush.bf16.xpose.msra.mxu0 0
      %4109 = vmatpush.bf16.xpose.msra.mxu0 0
      %4110 = vmatpush.bf16.xpose.msra.mxu0 0
      %4111 = vmatpush.bf16.xpose.msra.mxu0 0
      %4112 = vmatpush.bf16.xpose.msra.mxu0 0
      %4113 = vmatpush.bf16.xpose.msra.mxu0 0
      %4114 = vmatpush.bf16.xpose.msra.mxu0 %v4105
      %4115 = vmatmul.bf16.gmra.mxu0 %v4102
      %v4116 = vpop.f32.mrf.mxu0
      %v4117 = vadd.f32 0.0, %v4116
      %v4118 = vpop.f32.mrf.mxu0
      %4119 = vdwg.mxu0
      %4120 = vrot.lane.b32.xlu0 %v1009, 112
      %v4121 = vpop.permute.xlu0 %4120
      %4122 = vrot.lane.b32.xlu0 %v1009, 80
      %v4123 = vpop.permute.xlu0 %4122
      %v4125 = vsel %vm507, %v4121, 0
      %v4128 = vsel %vm507, %v4123, 0
      %4130 = vmatpush.bf16.xpose.msra.mxu0 0
      %4131 = vmatpush.bf16.xpose.msra.mxu0 0
      %4132 = vmatpush.bf16.xpose.msra.mxu0 0
      %4133 = vmatpush.bf16.xpose.msra.mxu0 0
      %4134 = vmatpush.bf16.xpose.msra.mxu0 0
      %4135 = vmatpush.bf16.xpose.msra.mxu0 0
      %4136 = vmatpush.bf16.xpose.msra.mxu0 0
      %4137 = vmatpush.bf16.xpose.msra.mxu0 %v4128
      %4138 = vmatmul.bf16.gmra.mxu0 %v4125
      %v4139 = vpop.f32.mrf.mxu0
      %v4140 = vadd.f32 0.0, %v4139
      %v4141 = vpop.f32.mrf.mxu0
      %4142 = vdwg.mxu0
      %4143 = vrot.lane.b32.xlu0 %v1033, 112
      %v4144 = vpop.permute.xlu0 %4143
      %4145 = vrot.lane.b32.xlu0 %v1033, 80
      %v4146 = vpop.permute.xlu0 %4145
      %v4148 = vsel %vm507, %v4144, 0
      %v4151 = vsel %vm507, %v4146, 0
      %4153 = vmatpush.bf16.xpose.msra.mxu0 0
      %4154 = vmatpush.bf16.xpose.msra.mxu0 0
      %4155 = vmatpush.bf16.xpose.msra.mxu0 0
      %4156 = vmatpush.bf16.xpose.msra.mxu0 0
      %4157 = vmatpush.bf16.xpose.msra.mxu0 0
      %4158 = vmatpush.bf16.xpose.msra.mxu0 0
      %4159 = vmatpush.bf16.xpose.msra.mxu0 0
      %4160 = vmatpush.bf16.xpose.msra.mxu0 %v4151
      %4161 = vmatmul.bf16.gmra.mxu0 %v4148
      %v4162 = vpop.f32.mrf.mxu0
      %v4163 = vadd.f32 0.0, %v4162
      %v4164 = vpop.f32.mrf.mxu0
      %4165 = vdwg.mxu0
      %4166 = vrot.lane.b32.xlu0 %v1057, 112
      %v4167 = vpop.permute.xlu0 %4166
      %4168 = vrot.lane.b32.xlu0 %v1057, 80
      %v4169 = vpop.permute.xlu0 %4168
      %v4171 = vsel %vm507, %v4167, 0
      %v4174 = vsel %vm507, %v4169, 0
      %4176 = vmatpush.bf16.xpose.msra.mxu0 0
      %4177 = vmatpush.bf16.xpose.msra.mxu0 0
      %4178 = vmatpush.bf16.xpose.msra.mxu0 0
      %4179 = vmatpush.bf16.xpose.msra.mxu0 0
      %4180 = vmatpush.bf16.xpose.msra.mxu0 0
      %4181 = vmatpush.bf16.xpose.msra.mxu0 0
      %4182 = vmatpush.bf16.xpose.msra.mxu0 0
      %4183 = vmatpush.bf16.xpose.msra.mxu0 %v4174
      %4184 = vmatmul.bf16.gmra.mxu0 %v4171
      %v4185 = vpop.f32.mrf.mxu0
      %v4186 = vadd.f32 0.0, %v4185
      %v4187 = vpop.f32.mrf.mxu0
      %4188 = vdwg.mxu0
      %4189 = vrot.lane.b32.xlu0 %v1081, 112
      %v4190 = vpop.permute.xlu0 %4189
      %4191 = vrot.lane.b32.xlu0 %v1081, 80
      %v4192 = vpop.permute.xlu0 %4191
      %v4194 = vsel %vm507, %v4190, 0
      %v4197 = vsel %vm507, %v4192, 0
      %4199 = vmatpush.bf16.xpose.msra.mxu0 0
      %4200 = vmatpush.bf16.xpose.msra.mxu0 0
      %4201 = vmatpush.bf16.xpose.msra.mxu0 0
      %4202 = vmatpush.bf16.xpose.msra.mxu0 0
      %4203 = vmatpush.bf16.xpose.msra.mxu0 0
      %4204 = vmatpush.bf16.xpose.msra.mxu0 0
      %4205 = vmatpush.bf16.xpose.msra.mxu0 0
      %4206 = vmatpush.bf16.xpose.msra.mxu0 %v4197
      %4207 = vmatmul.bf16.gmra.mxu0 %v4194
      %v4208 = vpop.f32.mrf.mxu0
      %v4209 = vadd.f32 0.0, %v4208
      %v4210 = vpop.f32.mrf.mxu0
      %4211 = vdwg.mxu0
      %v4212 = vmul.f32 %v3657, 0.35355338
      %v4213 = vmul.f32 %v3680, 0.35355338
      %v4214 = vmul.f32 %v3703, 0.35355338
      %v4215 = vmul.f32 %v3726, 0.35355338
      %v4216 = vmul.f32 %v3749, 0.35355338
      %v4217 = vmul.f32 %v3772, 0.35355338
      %v4218 = vmul.f32 %v3795, 0.35355338
      %v4219 = vmul.f32 %v3818, 0.35355338
      %v4220 = vmul.f32 %v3841, 0.35355338
      %v4221 = vmul.f32 %v3864, 0.35355338
      %v4222 = vmul.f32 %v3887, 0.35355338
      %v4223 = vmul.f32 %v3910, 0.35355338
      %v4224 = vmul.f32 %v3933, 0.35355338
      %v4225 = vmul.f32 %v3956, 0.35355338
      %v4226 = vmul.f32 %v3979, 0.35355338
      %v4227 = vmul.f32 %v4002, 0.35355338
      %v4228 = vmul.f32 %v4025, 0.35355338
      %v4229 = vmul.f32 %v4048, 0.35355338
      %v4230 = vmul.f32 %v4071, 0.35355338
      %v4231 = vmul.f32 %v4094, 0.35355338
      %v4232 = vmul.f32 %v4117, 0.35355338
      %v4233 = vmul.f32 %v4140, 0.35355338
      %v4234 = vmul.f32 %v4163, 0.35355338
      %v4235 = vmul.f32 %v4186, 0.35355338
      %v4236 = vmul.f32 %v4209, 0.35355338
      %v4237 = vsel %vm507, %v4212, -inf
      %4238 = vmax.xlane.f32.xlu0 %v4237
      %v4239 = vpop.xlane.xlu0 %4238
      %v4240 = vsel %vm507, %v4213, -inf
      %4241 = vmax.xlane.f32.xlu0 %v4240
      %v4242 = vpop.xlane.xlu0 %4241
      %v4243 = vsel %vm507, %v4214, -inf
      %4244 = vmax.xlane.f32.xlu0 %v4243
      %v4245 = vpop.xlane.xlu0 %4244
      %v4246 = vsel %vm507, %v4215, -inf
      %4247 = vmax.xlane.f32.xlu0 %v4246
      %v4248 = vpop.xlane.xlu0 %4247
      %v4249 = vsel %vm507, %v4216, -inf
      %4250 = vmax.xlane.f32.xlu0 %v4249
      %v4251 = vpop.xlane.xlu0 %4250
      %v4252 = vsel %vm507, %v4217, -inf
      %4253 = vmax.xlane.f32.xlu0 %v4252
      %v4254 = vpop.xlane.xlu0 %4253
      %v4255 = vsel %vm507, %v4218, -inf
      %4256 = vmax.xlane.f32.xlu0 %v4255
      %v4257 = vpop.xlane.xlu0 %4256
      %v4258 = vsel %vm507, %v4219, -inf
      %4259 = vmax.xlane.f32.xlu0 %v4258
      %v4260 = vpop.xlane.xlu0 %4259
      %v4261 = vsel %vm507, %v4220, -inf
      %4262 = vmax.xlane.f32.xlu0 %v4261
      %v4263 = vpop.xlane.xlu0 %4262
      %v4264 = vsel %vm507, %v4221, -inf
      %4265 = vmax.xlane.f32.xlu0 %v4264
      %v4266 = vpop.xlane.xlu0 %4265
      %v4267 = vsel %vm507, %v4222, -inf
      %4268 = vmax.xlane.f32.xlu0 %v4267
      %v4269 = vpop.xlane.xlu0 %4268
      %v4270 = vsel %vm507, %v4223, -inf
      %4271 = vmax.xlane.f32.xlu0 %v4270
      %v4272 = vpop.xlane.xlu0 %4271
      %v4273 = vsel %vm507, %v4224, -inf
      %4274 = vmax.xlane.f32.xlu0 %v4273
      %v4275 = vpop.xlane.xlu0 %4274
      %v4276 = vsel %vm507, %v4225, -inf
      %4277 = vmax.xlane.f32.xlu0 %v4276
      %v4278 = vpop.xlane.xlu0 %4277
      %v4279 = vsel %vm507, %v4226, -inf
      %4280 = vmax.xlane.f32.xlu0 %v4279
      %v4281 = vpop.xlane.xlu0 %4280
      %v4282 = vsel %vm507, %v4227, -inf
      %4283 = vmax.xlane.f32.xlu0 %v4282
      %v4284 = vpop.xlane.xlu0 %4283
      %v4285 = vsel %vm507, %v4228, -inf
      %4286 = vmax.xlane.f32.xlu0 %v4285
      %v4287 = vpop.xlane.xlu0 %4286
      %v4288 = vsel %vm507, %v4229, -inf
      %4289 = vmax.xlane.f32.xlu0 %v4288
      %v4290 = vpop.xlane.xlu0 %4289
      %v4291 = vsel %vm507, %v4230, -inf
      %4292 = vmax.xlane.f32.xlu0 %v4291
      %v4293 = vpop.xlane.xlu0 %4292
      %v4294 = vsel %vm507, %v4231, -inf
      %4295 = vmax.xlane.f32.xlu0 %v4294
      %v4296 = vpop.xlane.xlu0 %4295
      %v4297 = vsel %vm507, %v4232, -inf
      %4298 = vmax.xlane.f32.xlu0 %v4297
      %v4299 = vpop.xlane.xlu0 %4298
      %v4300 = vsel %vm507, %v4233, -inf
      %4301 = vmax.xlane.f32.xlu0 %v4300
      %v4302 = vpop.xlane.xlu0 %4301
      %v4303 = vsel %vm507, %v4234, -inf
      %4304 = vmax.xlane.f32.xlu0 %v4303
      %v4305 = vpop.xlane.xlu0 %4304
      %v4306 = vsel %vm507, %v4235, -inf
      %4307 = vmax.xlane.f32.xlu0 %v4306
      %v4308 = vpop.xlane.xlu0 %4307
      %v4309 = vsel %vm507, %v4236, -inf
      %4310 = vmax.xlane.f32.xlu0 %v4309
      %v4311 = vpop.xlane.xlu0 %4310
      %v4312 = vsub.f32 %v4212, %v4239
      %v4313 = vsub.f32 %v4213, %v4242
      %v4314 = vsub.f32 %v4214, %v4245
      %v4315 = vsub.f32 %v4215, %v4248
      %v4316 = vsub.f32 %v4216, %v4251
      %v4317 = vsub.f32 %v4217, %v4254
      %v4318 = vsub.f32 %v4218, %v4257
      %v4319 = vsub.f32 %v4219, %v4260
      %v4320 = vsub.f32 %v4220, %v4263
      %v4321 = vsub.f32 %v4221, %v4266
      %v4322 = vsub.f32 %v4222, %v4269
      %v4323 = vsub.f32 %v4223, %v4272
      %v4324 = vsub.f32 %v4224, %v4275
      %v4325 = vsub.f32 %v4225, %v4278
      %v4326 = vsub.f32 %v4226, %v4281
      %v4327 = vsub.f32 %v4227, %v4284
      %v4328 = vsub.f32 %v4228, %v4287
      %v4329 = vsub.f32 %v4229, %v4290
      %v4330 = vsub.f32 %v4230, %v4293
      %v4331 = vsub.f32 %v4231, %v4296
      %v4332 = vsub.f32 %v4232, %v4299
      %v4333 = vsub.f32 %v4233, %v4302
      %v4334 = vsub.f32 %v4234, %v4305
      %v4335 = vsub.f32 %v4235, %v4308
      %v4336 = vsub.f32 %v4236, %v4311
      %v4337 = vmul.f32 %v4312, 1.442695
      %v4338 = vpow.pop %v4337
      %v4339 = vmul.f32 %v4313, 1.442695
      %v4340 = vpow.pop %v4339
      %v4341 = vmul.f32 %v4314, 1.442695
      %v4342 = vpow.pop %v4341
      %v4343 = vmul.f32 %v4315, 1.442695
      %v4344 = vpow.pop %v4343
      %v4345 = vmul.f32 %v4316, 1.442695
      %v4346 = vpow.pop %v4345
      %v4347 = vmul.f32 %v4317, 1.442695
      %v4348 = vpow.pop %v4347
      %v4349 = vmul.f32 %v4318, 1.442695
      %v4350 = vpow.pop %v4349
      %v4351 = vmul.f32 %v4319, 1.442695
      %v4352 = vpow.pop %v4351
      %v4353 = vmul.f32 %v4320, 1.442695
      %v4354 = vpow.pop %v4353
      %v4355 = vmul.f32 %v4321, 1.442695
      %v4356 = vpow.pop %v4355
      %v4357 = vmul.f32 %v4322, 1.442695
      %v4358 = vpow.pop %v4357
      %v4359 = vmul.f32 %v4323, 1.442695
      %v4360 = vpow.pop %v4359
      %v4361 = vmul.f32 %v4324, 1.442695
      %v4362 = vpow.pop %v4361
      %v4363 = vmul.f32 %v4325, 1.442695
      %v4364 = vpow.pop %v4363
      %v4365 = vmul.f32 %v4326, 1.442695
      %v4366 = vpow.pop %v4365
      %v4367 = vmul.f32 %v4327, 1.442695
      %v4368 = vpow.pop %v4367
      %v4369 = vmul.f32 %v4328, 1.442695
      %v4370 = vpow.pop %v4369
      %v4371 = vmul.f32 %v4329, 1.442695
      %v4372 = vpow.pop %v4371
      %v4373 = vmul.f32 %v4330, 1.442695
      %v4374 = vpow.pop %v4373
      %v4375 = vmul.f32 %v4331, 1.442695
      %v4376 = vpow.pop %v4375
      %v4377 = vmul.f32 %v4332, 1.442695
      %v4378 = vpow.pop %v4377
      %v4379 = vmul.f32 %v4333, 1.442695
      %v4380 = vpow.pop %v4379
      %v4381 = vmul.f32 %v4334, 1.442695
      %v4382 = vpow.pop %v4381
      %v4383 = vmul.f32 %v4335, 1.442695
      %v4384 = vpow.pop %v4383
      %v4385 = vmul.f32 %v4336, 1.442695
      %v4386 = vpow.pop %v4385
      %v4387 = vsel %vm507, %v4338, 0.0
      %4388 = vadd.xlane.f32.xlu0 %v4387
      %v4389 = vpop.xlane.xlu0 %4388
      %v4390 = vsel %vm507, %v4340, 0.0
      %4391 = vadd.xlane.f32.xlu0 %v4390
      %v4392 = vpop.xlane.xlu0 %4391
      %v4393 = vsel %vm507, %v4342, 0.0
      %4394 = vadd.xlane.f32.xlu0 %v4393
      %v4395 = vpop.xlane.xlu0 %4394
      %v4396 = vsel %vm507, %v4344, 0.0
      %4397 = vadd.xlane.f32.xlu0 %v4396
      %v4398 = vpop.xlane.xlu0 %4397
      %v4399 = vsel %vm507, %v4346, 0.0
      %4400 = vadd.xlane.f32.xlu0 %v4399
      %v4401 = vpop.xlane.xlu0 %4400
      %v4402 = vsel %vm507, %v4348, 0.0
      %4403 = vadd.xlane.f32.xlu0 %v4402
      %v4404 = vpop.xlane.xlu0 %4403
      %v4405 = vsel %vm507, %v4350, 0.0
      %4406 = vadd.xlane.f32.xlu0 %v4405
      %v4407 = vpop.xlane.xlu0 %4406
      %v4408 = vsel %vm507, %v4352, 0.0
      %4409 = vadd.xlane.f32.xlu0 %v4408
      %v4410 = vpop.xlane.xlu0 %4409
      %v4411 = vsel %vm507, %v4354, 0.0
      %4412 = vadd.xlane.f32.xlu0 %v4411
      %v4413 = vpop.xlane.xlu0 %4412
      %v4414 = vsel %vm507, %v4356, 0.0
      %4415 = vadd.xlane.f32.xlu0 %v4414
      %v4416 = vpop.xlane.xlu0 %4415
      %v4417 = vsel %vm507, %v4358, 0.0
      %4418 = vadd.xlane.f32.xlu0 %v4417
      %v4419 = vpop.xlane.xlu0 %4418
      %v4420 = vsel %vm507, %v4360, 0.0
      %4421 = vadd.xlane.f32.xlu0 %v4420
      %v4422 = vpop.xlane.xlu0 %4421
      %v4423 = vsel %vm507, %v4362, 0.0
      %4424 = vadd.xlane.f32.xlu0 %v4423
      %v4425 = vpop.xlane.xlu0 %4424
      %v4426 = vsel %vm507, %v4364, 0.0
      %4427 = vadd.xlane.f32.xlu0 %v4426
      %v4428 = vpop.xlane.xlu0 %4427
      %v4429 = vsel %vm507, %v4366, 0.0
      %4430 = vadd.xlane.f32.xlu0 %v4429
      %v4431 = vpop.xlane.xlu0 %4430
      %v4432 = vsel %vm507, %v4368, 0.0
      %4433 = vadd.xlane.f32.xlu0 %v4432
      %v4434 = vpop.xlane.xlu0 %4433
      %v4435 = vsel %vm507, %v4370, 0.0
      %4436 = vadd.xlane.f32.xlu0 %v4435
      %v4437 = vpop.xlane.xlu0 %4436
      %v4438 = vsel %vm507, %v4372, 0.0
      %4439 = vadd.xlane.f32.xlu0 %v4438
      %v4440 = vpop.xlane.xlu0 %4439
      %v4441 = vsel %vm507, %v4374, 0.0
      %4442 = vadd.xlane.f32.xlu0 %v4441
      %v4443 = vpop.xlane.xlu0 %4442
      %v4444 = vsel %vm507, %v4376, 0.0
      %4445 = vadd.xlane.f32.xlu0 %v4444
      %v4446 = vpop.xlane.xlu0 %4445
      %v4447 = vsel %vm507, %v4378, 0.0
      %4448 = vadd.xlane.f32.xlu0 %v4447
      %v4449 = vpop.xlane.xlu0 %4448
      %v4450 = vsel %vm507, %v4380, 0.0
      %4451 = vadd.xlane.f32.xlu0 %v4450
      %v4452 = vpop.xlane.xlu0 %4451
      %v4453 = vsel %vm507, %v4382, 0.0
      %4454 = vadd.xlane.f32.xlu0 %v4453
      %v4455 = vpop.xlane.xlu0 %4454
      %v4456 = vsel %vm507, %v4384, 0.0
      %4457 = vadd.xlane.f32.xlu0 %v4456
      %v4458 = vpop.xlane.xlu0 %4457
      %v4459 = vsel %vm507, %v4386, 0.0
      %4460 = vadd.xlane.f32.xlu0 %v4459
      %v4461 = vpop.xlane.xlu0 %4460
      %v4462 = vrcp.pop %v4389
      %v4463 = vrcp.pop %v4392
      %v4464 = vrcp.pop %v4395
      %v4465 = vrcp.pop %v4398
      %v4466 = vrcp.pop %v4401
      %v4467 = vrcp.pop %v4404
      %v4468 = vrcp.pop %v4407
      %v4469 = vrcp.pop %v4410
      %v4470 = vrcp.pop %v4413
      %v4471 = vrcp.pop %v4416
      %v4472 = vrcp.pop %v4419
      %v4473 = vrcp.pop %v4422
      %v4474 = vrcp.pop %v4425
      %v4475 = vrcp.pop %v4428
      %v4476 = vrcp.pop %v4431
      %v4477 = vrcp.pop %v4434
      %v4478 = vrcp.pop %v4437
      %v4479 = vrcp.pop %v4440
      %v4480 = vrcp.pop %v4443
      %v4481 = vrcp.pop %v4446
      %v4482 = vrcp.pop %v4449
      %v4483 = vrcp.pop %v4452
      %v4484 = vrcp.pop %v4455
      %v4485 = vrcp.pop %v4458
      %v4486 = vrcp.pop %v4461
      %v4487 = vmul.f32 %v4338, %v4462
      %v4488 = vmul.f32 %v4340, %v4463
      %v4489 = vmul.f32 %v4342, %v4464
      %v4490 = vmul.f32 %v4344, %v4465
      %v4491 = vmul.f32 %v4346, %v4466
      %v4492 = vmul.f32 %v4348, %v4467
      %v4493 = vmul.f32 %v4350, %v4468
      %v4494 = vmul.f32 %v4352, %v4469
      %v4495 = vmul.f32 %v4354, %v4470
      %v4496 = vmul.f32 %v4356, %v4471
      %v4497 = vmul.f32 %v4358, %v4472
      %v4498 = vmul.f32 %v4360, %v4473
      %v4499 = vmul.f32 %v4362, %v4474
      %v4500 = vmul.f32 %v4364, %v4475
      %v4501 = vmul.f32 %v4366, %v4476
      %v4502 = vmul.f32 %v4368, %v4477
      %v4503 = vmul.f32 %v4370, %v4478
      %v4504 = vmul.f32 %v4372, %v4479
      %v4505 = vmul.f32 %v4374, %v4480
      %v4506 = vmul.f32 %v4376, %v4481
      %v4507 = vmul.f32 %v4378, %v4482
      %v4508 = vmul.f32 %v4380, %v4483
      %v4509 = vmul.f32 %v4382, %v4484
      %v4510 = vmul.f32 %v4384, %v4485
      %v4511 = vmul.f32 %v4386, %v4486
      %v4512 = vpack.c.bf16 %v4487, %v4487
      %v4513 = vpack.c.bf16 %v4488, %v4488
      %v4514 = vpack.c.bf16 %v4489, %v4489
      %v4515 = vpack.c.bf16 %v4490, %v4490
      %v4516 = vpack.c.bf16 %v4491, %v4491
      %v4517 = vpack.c.bf16 %v4492, %v4492
      %v4518 = vpack.c.bf16 %v4493, %v4493
      %v4519 = vpack.c.bf16 %v4494, %v4494
      %v4520 = vpack.c.bf16 %v4495, %v4495
      %v4521 = vpack.c.bf16 %v4496, %v4496
      %v4522 = vpack.c.bf16 %v4497, %v4497
      %v4523 = vpack.c.bf16 %v4498, %v4498
      %v4524 = vpack.c.bf16 %v4499, %v4499
      %v4525 = vpack.c.bf16 %v4500, %v4500
      %v4526 = vpack.c.bf16 %v4501, %v4501
      %v4527 = vpack.c.bf16 %v4502, %v4502
      %v4528 = vpack.c.bf16 %v4503, %v4503
      %v4529 = vpack.c.bf16 %v4504, %v4504
      %v4530 = vpack.c.bf16 %v4505, %v4505
      %v4531 = vpack.c.bf16 %v4506, %v4506
      %v4532 = vpack.c.bf16 %v4507, %v4507
      %v4533 = vpack.c.bf16 %v4508, %v4508
      %v4534 = vpack.c.bf16 %v4509, %v4509
      %v4535 = vpack.c.bf16 %v4510, %v4510
      %v4536 = vpack.c.bf16 %v4511, %v4511
      %4537 = vrot.lane.b32.xlu0 %v504, 48
      %v4538 = vpop.permute.xlu0 %4537
      %v4540 = vsel %vm507, %v4512, 0
      %v4543 = vsel %vm1433, %v4538, 0
      %4545 = vmatpush.bf16.msra.mxu0 0
      %4546 = vmatpush.bf16.msra.mxu0 0
      %4547 = vmatpush.bf16.msra.mxu0 0
      %4548 = vmatpush.bf16.msra.mxu0 0
      %4549 = vmatpush.bf16.msra.mxu0 0
      %4550 = vmatpush.bf16.msra.mxu0 0
      %4551 = vmatpush.bf16.msra.mxu0 0
      %4552 = vmatpush.bf16.msra.mxu0 %v4543
      %4553 = vmatmul.bf16.gmra.mxu0 %v4540
      %v4554 = vpop.f32.mrf.mxu0
      %v4555 = vadd.f32 0.0, %v4554
      %v4556 = vpop.f32.mrf.mxu0
      %4557 = vdwg.mxu0
      %4558 = vrot.lane.b32.xlu0 %v529, 48
      %v4559 = vpop.permute.xlu0 %4558
      %v4561 = vsel %vm507, %v4513, 0
      %v4564 = vsel %vm1433, %v4559, 0
      %4566 = vmatpush.bf16.msra.mxu0 0
      %4567 = vmatpush.bf16.msra.mxu0 0
      %4568 = vmatpush.bf16.msra.mxu0 0
      %4569 = vmatpush.bf16.msra.mxu0 0
      %4570 = vmatpush.bf16.msra.mxu0 0
      %4571 = vmatpush.bf16.msra.mxu0 0
      %4572 = vmatpush.bf16.msra.mxu0 0
      %4573 = vmatpush.bf16.msra.mxu0 %v4564
      %4574 = vmatmul.bf16.gmra.mxu0 %v4561
      %v4575 = vpop.f32.mrf.mxu0
      %v4576 = vadd.f32 0.0, %v4575
      %v4577 = vpop.f32.mrf.mxu0
      %4578 = vdwg.mxu0
      %4579 = vrot.lane.b32.xlu0 %v553, 48
      %v4580 = vpop.permute.xlu0 %4579
      %v4582 = vsel %vm507, %v4514, 0
      %v4585 = vsel %vm1433, %v4580, 0
      %4587 = vmatpush.bf16.msra.mxu0 0
      %4588 = vmatpush.bf16.msra.mxu0 0
      %4589 = vmatpush.bf16.msra.mxu0 0
      %4590 = vmatpush.bf16.msra.mxu0 0
      %4591 = vmatpush.bf16.msra.mxu0 0
      %4592 = vmatpush.bf16.msra.mxu0 0
      %4593 = vmatpush.bf16.msra.mxu0 0
      %4594 = vmatpush.bf16.msra.mxu0 %v4585
      %4595 = vmatmul.bf16.gmra.mxu0 %v4582
      %v4596 = vpop.f32.mrf.mxu0
      %v4597 = vadd.f32 0.0, %v4596
      %v4598 = vpop.f32.mrf.mxu0
      %4599 = vdwg.mxu0
      %4600 = vrot.lane.b32.xlu0 %v577, 48
      %v4601 = vpop.permute.xlu0 %4600
      %v4603 = vsel %vm507, %v4515, 0
      %v4606 = vsel %vm1433, %v4601, 0
      %4608 = vmatpush.bf16.msra.mxu0 0
      %4609 = vmatpush.bf16.msra.mxu0 0
      %4610 = vmatpush.bf16.msra.mxu0 0
      %4611 = vmatpush.bf16.msra.mxu0 0
      %4612 = vmatpush.bf16.msra.mxu0 0
      %4613 = vmatpush.bf16.msra.mxu0 0
      %4614 = vmatpush.bf16.msra.mxu0 0
      %4615 = vmatpush.bf16.msra.mxu0 %v4606
      %4616 = vmatmul.bf16.gmra.mxu0 %v4603
      %v4617 = vpop.f32.mrf.mxu0
      %v4618 = vadd.f32 0.0, %v4617
      %v4619 = vpop.f32.mrf.mxu0
      %4620 = vdwg.mxu0
      %4621 = vrot.lane.b32.xlu0 %v601, 48
      %v4622 = vpop.permute.xlu0 %4621
      %v4624 = vsel %vm507, %v4516, 0
      %v4627 = vsel %vm1433, %v4622, 0
      %4629 = vmatpush.bf16.msra.mxu0 0
      %4630 = vmatpush.bf16.msra.mxu0 0
      %4631 = vmatpush.bf16.msra.mxu0 0
      %4632 = vmatpush.bf16.msra.mxu0 0
      %4633 = vmatpush.bf16.msra.mxu0 0
      %4634 = vmatpush.bf16.msra.mxu0 0
      %4635 = vmatpush.bf16.msra.mxu0 0
      %4636 = vmatpush.bf16.msra.mxu0 %v4627
      %4637 = vmatmul.bf16.gmra.mxu0 %v4624
      %v4638 = vpop.f32.mrf.mxu0
      %v4639 = vadd.f32 0.0, %v4638
      %v4640 = vpop.f32.mrf.mxu0
      %4641 = vdwg.mxu0
      %4642 = vrot.lane.b32.xlu0 %v625, 48
      %v4643 = vpop.permute.xlu0 %4642
      %v4645 = vsel %vm507, %v4517, 0
      %v4648 = vsel %vm1433, %v4643, 0
      %4650 = vmatpush.bf16.msra.mxu0 0
      %4651 = vmatpush.bf16.msra.mxu0 0
      %4652 = vmatpush.bf16.msra.mxu0 0
      %4653 = vmatpush.bf16.msra.mxu0 0
      %4654 = vmatpush.bf16.msra.mxu0 0
      %4655 = vmatpush.bf16.msra.mxu0 0
      %4656 = vmatpush.bf16.msra.mxu0 0
      %4657 = vmatpush.bf16.msra.mxu0 %v4648
      %4658 = vmatmul.bf16.gmra.mxu0 %v4645
      %v4659 = vpop.f32.mrf.mxu0
      %v4660 = vadd.f32 0.0, %v4659
      %v4661 = vpop.f32.mrf.mxu0
      %4662 = vdwg.mxu0
      %4663 = vrot.lane.b32.xlu0 %v649, 48
      %v4664 = vpop.permute.xlu0 %4663
      %v4666 = vsel %vm507, %v4518, 0
      %v4669 = vsel %vm1433, %v4664, 0
      %4671 = vmatpush.bf16.msra.mxu0 0
      %4672 = vmatpush.bf16.msra.mxu0 0
      %4673 = vmatpush.bf16.msra.mxu0 0
      %4674 = vmatpush.bf16.msra.mxu0 0
      %4675 = vmatpush.bf16.msra.mxu0 0
      %4676 = vmatpush.bf16.msra.mxu0 0
      %4677 = vmatpush.bf16.msra.mxu0 0
      %4678 = vmatpush.bf16.msra.mxu0 %v4669
      %4679 = vmatmul.bf16.gmra.mxu0 %v4666
      %v4680 = vpop.f32.mrf.mxu0
      %v4681 = vadd.f32 0.0, %v4680
      %v4682 = vpop.f32.mrf.mxu0
      %4683 = vdwg.mxu0
      %4684 = vrot.lane.b32.xlu0 %v673, 48
      %v4685 = vpop.permute.xlu0 %4684
      %v4687 = vsel %vm507, %v4519, 0
      %v4690 = vsel %vm1433, %v4685, 0
      %4692 = vmatpush.bf16.msra.mxu0 0
      %4693 = vmatpush.bf16.msra.mxu0 0
      %4694 = vmatpush.bf16.msra.mxu0 0
      %4695 = vmatpush.bf16.msra.mxu0 0
      %4696 = vmatpush.bf16.msra.mxu0 0
      %4697 = vmatpush.bf16.msra.mxu0 0
      %4698 = vmatpush.bf16.msra.mxu0 0
      %4699 = vmatpush.bf16.msra.mxu0 %v4690
      %4700 = vmatmul.bf16.gmra.mxu0 %v4687
      %v4701 = vpop.f32.mrf.mxu0
      %v4702 = vadd.f32 0.0, %v4701
      %v4703 = vpop.f32.mrf.mxu0
      %4704 = vdwg.mxu0
      %4705 = vrot.lane.b32.xlu0 %v697, 48
      %v4706 = vpop.permute.xlu0 %4705
      %v4708 = vsel %vm507, %v4520, 0
      %v4711 = vsel %vm1433, %v4706, 0
      %4713 = vmatpush.bf16.msra.mxu0 0
      %4714 = vmatpush.bf16.msra.mxu0 0
      %4715 = vmatpush.bf16.msra.mxu0 0
      %4716 = vmatpush.bf16.msra.mxu0 0
      %4717 = vmatpush.bf16.msra.mxu0 0
      %4718 = vmatpush.bf16.msra.mxu0 0
      %4719 = vmatpush.bf16.msra.mxu0 0
      %4720 = vmatpush.bf16.msra.mxu0 %v4711
      %4721 = vmatmul.bf16.gmra.mxu0 %v4708
      %v4722 = vpop.f32.mrf.mxu0
      %v4723 = vadd.f32 0.0, %v4722
      %v4724 = vpop.f32.mrf.mxu0
      %4725 = vdwg.mxu0
      %4726 = vrot.lane.b32.xlu0 %v721, 48
      %v4727 = vpop.permute.xlu0 %4726
      %v4729 = vsel %vm507, %v4521, 0
      %v4732 = vsel %vm1433, %v4727, 0
      %4734 = vmatpush.bf16.msra.mxu0 0
      %4735 = vmatpush.bf16.msra.mxu0 0
      %4736 = vmatpush.bf16.msra.mxu0 0
      %4737 = vmatpush.bf16.msra.mxu0 0
      %4738 = vmatpush.bf16.msra.mxu0 0
      %4739 = vmatpush.bf16.msra.mxu0 0
      %4740 = vmatpush.bf16.msra.mxu0 0
      %4741 = vmatpush.bf16.msra.mxu0 %v4732
      %4742 = vmatmul.bf16.gmra.mxu0 %v4729
      %v4743 = vpop.f32.mrf.mxu0
      %v4744 = vadd.f32 0.0, %v4743
      %v4745 = vpop.f32.mrf.mxu0
      %4746 = vdwg.mxu0
      %4747 = vrot.lane.b32.xlu0 %v745, 48
      %v4748 = vpop.permute.xlu0 %4747
      %v4750 = vsel %vm507, %v4522, 0
      %v4753 = vsel %vm1433, %v4748, 0
      %4755 = vmatpush.bf16.msra.mxu0 0
      %4756 = vmatpush.bf16.msra.mxu0 0
      %4757 = vmatpush.bf16.msra.mxu0 0
      %4758 = vmatpush.bf16.msra.mxu0 0
      %4759 = vmatpush.bf16.msra.mxu0 0
      %4760 = vmatpush.bf16.msra.mxu0 0
      %4761 = vmatpush.bf16.msra.mxu0 0
      %4762 = vmatpush.bf16.msra.mxu0 %v4753
      %4763 = vmatmul.bf16.gmra.mxu0 %v4750
      %v4764 = vpop.f32.mrf.mxu0
      %v4765 = vadd.f32 0.0, %v4764
      %v4766 = vpop.f32.mrf.mxu0
      %4767 = vdwg.mxu0
      %4768 = vrot.lane.b32.xlu0 %v769, 48
      %v4769 = vpop.permute.xlu0 %4768
      %v4771 = vsel %vm507, %v4523, 0
      %v4774 = vsel %vm1433, %v4769, 0
      %4776 = vmatpush.bf16.msra.mxu0 0
      %4777 = vmatpush.bf16.msra.mxu0 0
      %4778 = vmatpush.bf16.msra.mxu0 0
      %4779 = vmatpush.bf16.msra.mxu0 0
      %4780 = vmatpush.bf16.msra.mxu0 0
      %4781 = vmatpush.bf16.msra.mxu0 0
      %4782 = vmatpush.bf16.msra.mxu0 0
      %4783 = vmatpush.bf16.msra.mxu0 %v4774
      %4784 = vmatmul.bf16.gmra.mxu0 %v4771
      %v4785 = vpop.f32.mrf.mxu0
      %v4786 = vadd.f32 0.0, %v4785
      %v4787 = vpop.f32.mrf.mxu0
      %4788 = vdwg.mxu0
      %4789 = vrot.lane.b32.xlu0 %v793, 48
      %v4790 = vpop.permute.xlu0 %4789
      %v4792 = vsel %vm507, %v4524, 0
      %v4795 = vsel %vm1433, %v4790, 0
      %4797 = vmatpush.bf16.msra.mxu0 0
      %4798 = vmatpush.bf16.msra.mxu0 0
      %4799 = vmatpush.bf16.msra.mxu0 0
      %4800 = vmatpush.bf16.msra.mxu0 0
      %4801 = vmatpush.bf16.msra.mxu0 0
      %4802 = vmatpush.bf16.msra.mxu0 0
      %4803 = vmatpush.bf16.msra.mxu0 0
      %4804 = vmatpush.bf16.msra.mxu0 %v4795
      %4805 = vmatmul.bf16.gmra.mxu0 %v4792
      %v4806 = vpop.f32.mrf.mxu0
      %v4807 = vadd.f32 0.0, %v4806
      %v4808 = vpop.f32.mrf.mxu0
      %4809 = vdwg.mxu0
      %4810 = vrot.lane.b32.xlu0 %v817, 48
      %v4811 = vpop.permute.xlu0 %4810
      %v4813 = vsel %vm507, %v4525, 0
      %v4816 = vsel %vm1433, %v4811, 0
      %4818 = vmatpush.bf16.msra.mxu0 0
      %4819 = vmatpush.bf16.msra.mxu0 0
      %4820 = vmatpush.bf16.msra.mxu0 0
      %4821 = vmatpush.bf16.msra.mxu0 0
      %4822 = vmatpush.bf16.msra.mxu0 0
      %4823 = vmatpush.bf16.msra.mxu0 0
      %4824 = vmatpush.bf16.msra.mxu0 0
      %4825 = vmatpush.bf16.msra.mxu0 %v4816
      %4826 = vmatmul.bf16.gmra.mxu0 %v4813
      %v4827 = vpop.f32.mrf.mxu0
      %v4828 = vadd.f32 0.0, %v4827
      %v4829 = vpop.f32.mrf.mxu0
      %4830 = vdwg.mxu0
      %4831 = vrot.lane.b32.xlu0 %v841, 48
      %v4832 = vpop.permute.xlu0 %4831
      %v4834 = vsel %vm507, %v4526, 0
      %v4837 = vsel %vm1433, %v4832, 0
      %4839 = vmatpush.bf16.msra.mxu0 0
      %4840 = vmatpush.bf16.msra.mxu0 0
      %4841 = vmatpush.bf16.msra.mxu0 0
      %4842 = vmatpush.bf16.msra.mxu0 0
      %4843 = vmatpush.bf16.msra.mxu0 0
      %4844 = vmatpush.bf16.msra.mxu0 0
      %4845 = vmatpush.bf16.msra.mxu0 0
      %4846 = vmatpush.bf16.msra.mxu0 %v4837
      %4847 = vmatmul.bf16.gmra.mxu0 %v4834
      %v4848 = vpop.f32.mrf.mxu0
      %v4849 = vadd.f32 0.0, %v4848
      %v4850 = vpop.f32.mrf.mxu0
      %4851 = vdwg.mxu0
      %4852 = vrot.lane.b32.xlu0 %v865, 48
      %v4853 = vpop.permute.xlu0 %4852
      %v4855 = vsel %vm507, %v4527, 0
      %v4858 = vsel %vm1433, %v4853, 0
      %4860 = vmatpush.bf16.msra.mxu0 0
      %4861 = vmatpush.bf16.msra.mxu0 0
      %4862 = vmatpush.bf16.msra.mxu0 0
      %4863 = vmatpush.bf16.msra.mxu0 0
      %4864 = vmatpush.bf16.msra.mxu0 0
      %4865 = vmatpush.bf16.msra.mxu0 0
      %4866 = vmatpush.bf16.msra.mxu0 0
      %4867 = vmatpush.bf16.msra.mxu0 %v4858
      %4868 = vmatmul.bf16.gmra.mxu0 %v4855
      %v4869 = vpop.f32.mrf.mxu0
      %v4870 = vadd.f32 0.0, %v4869
      %v4871 = vpop.f32.mrf.mxu0
      %4872 = vdwg.mxu0
      %4873 = vrot.lane.b32.xlu0 %v889, 48
      %v4874 = vpop.permute.xlu0 %4873
      %v4876 = vsel %vm507, %v4528, 0
      %v4879 = vsel %vm1433, %v4874, 0
      %4881 = vmatpush.bf16.msra.mxu0 0
      %4882 = vmatpush.bf16.msra.mxu0 0
      %4883 = vmatpush.bf16.msra.mxu0 0
      %4884 = vmatpush.bf16.msra.mxu0 0
      %4885 = vmatpush.bf16.msra.mxu0 0
      %4886 = vmatpush.bf16.msra.mxu0 0
      %4887 = vmatpush.bf16.msra.mxu0 0
      %4888 = vmatpush.bf16.msra.mxu0 %v4879
      %4889 = vmatmul.bf16.gmra.mxu0 %v4876
      %v4890 = vpop.f32.mrf.mxu0
      %v4891 = vadd.f32 0.0, %v4890
      %v4892 = vpop.f32.mrf.mxu0
      %4893 = vdwg.mxu0
      %4894 = vrot.lane.b32.xlu0 %v913, 48
      %v4895 = vpop.permute.xlu0 %4894
      %v4897 = vsel %vm507, %v4529, 0
      %v4900 = vsel %vm1433, %v4895, 0
      %4902 = vmatpush.bf16.msra.mxu0 0
      %4903 = vmatpush.bf16.msra.mxu0 0
      %4904 = vmatpush.bf16.msra.mxu0 0
      %4905 = vmatpush.bf16.msra.mxu0 0
      %4906 = vmatpush.bf16.msra.mxu0 0
      %4907 = vmatpush.bf16.msra.mxu0 0
      %4908 = vmatpush.bf16.msra.mxu0 0
      %4909 = vmatpush.bf16.msra.mxu0 %v4900
      %4910 = vmatmul.bf16.gmra.mxu0 %v4897
      %v4911 = vpop.f32.mrf.mxu0
      %v4912 = vadd.f32 0.0, %v4911
      %v4913 = vpop.f32.mrf.mxu0
      %4914 = vdwg.mxu0
      %4915 = vrot.lane.b32.xlu0 %v937, 48
      %v4916 = vpop.permute.xlu0 %4915
      %v4918 = vsel %vm507, %v4530, 0
      %v4921 = vsel %vm1433, %v4916, 0
      %4923 = vmatpush.bf16.msra.mxu0 0
      %4924 = vmatpush.bf16.msra.mxu0 0
      %4925 = vmatpush.bf16.msra.mxu0 0
      %4926 = vmatpush.bf16.msra.mxu0 0
      %4927 = vmatpush.bf16.msra.mxu0 0
      %4928 = vmatpush.bf16.msra.mxu0 0
      %4929 = vmatpush.bf16.msra.mxu0 0
      %4930 = vmatpush.bf16.msra.mxu0 %v4921
      %4931 = vmatmul.bf16.gmra.mxu0 %v4918
      %v4932 = vpop.f32.mrf.mxu0
      %v4933 = vadd.f32 0.0, %v4932
      %v4934 = vpop.f32.mrf.mxu0
      %4935 = vdwg.mxu0
      %4936 = vrot.lane.b32.xlu0 %v961, 48
      %v4937 = vpop.permute.xlu0 %4936
      %v4939 = vsel %vm507, %v4531, 0
      %v4942 = vsel %vm1433, %v4937, 0
      %4944 = vmatpush.bf16.msra.mxu0 0
      %4945 = vmatpush.bf16.msra.mxu0 0
      %4946 = vmatpush.bf16.msra.mxu0 0
      %4947 = vmatpush.bf16.msra.mxu0 0
      %4948 = vmatpush.bf16.msra.mxu0 0
      %4949 = vmatpush.bf16.msra.mxu0 0
      %4950 = vmatpush.bf16.msra.mxu0 0
      %4951 = vmatpush.bf16.msra.mxu0 %v4942
      %4952 = vmatmul.bf16.gmra.mxu0 %v4939
      %v4953 = vpop.f32.mrf.mxu0
      %v4954 = vadd.f32 0.0, %v4953
      %v4955 = vpop.f32.mrf.mxu0
      %4956 = vdwg.mxu0
      %4957 = vrot.lane.b32.xlu0 %v985, 48
      %v4958 = vpop.permute.xlu0 %4957
      %v4960 = vsel %vm507, %v4532, 0
      %v4963 = vsel %vm1433, %v4958, 0
      %4965 = vmatpush.bf16.msra.mxu0 0
      %4966 = vmatpush.bf16.msra.mxu0 0
      %4967 = vmatpush.bf16.msra.mxu0 0
      %4968 = vmatpush.bf16.msra.mxu0 0
      %4969 = vmatpush.bf16.msra.mxu0 0
      %4970 = vmatpush.bf16.msra.mxu0 0
      %4971 = vmatpush.bf16.msra.mxu0 0
      %4972 = vmatpush.bf16.msra.mxu0 %v4963
      %4973 = vmatmul.bf16.gmra.mxu0 %v4960
      %v4974 = vpop.f32.mrf.mxu0
      %v4975 = vadd.f32 0.0, %v4974
      %v4976 = vpop.f32.mrf.mxu0
      %4977 = vdwg.mxu0
      %4978 = vrot.lane.b32.xlu0 %v1009, 48
      %v4979 = vpop.permute.xlu0 %4978
      %v4981 = vsel %vm507, %v4533, 0
      %v4984 = vsel %vm1433, %v4979, 0
      %4986 = vmatpush.bf16.msra.mxu0 0
      %4987 = vmatpush.bf16.msra.mxu0 0
      %4988 = vmatpush.bf16.msra.mxu0 0
      %4989 = vmatpush.bf16.msra.mxu0 0
      %4990 = vmatpush.bf16.msra.mxu0 0
      %4991 = vmatpush.bf16.msra.mxu0 0
      %4992 = vmatpush.bf16.msra.mxu0 0
      %4993 = vmatpush.bf16.msra.mxu0 %v4984
      %4994 = vmatmul.bf16.gmra.mxu0 %v4981
      %v4995 = vpop.f32.mrf.mxu0
      %v4996 = vadd.f32 0.0, %v4995
      %v4997 = vpop.f32.mrf.mxu0
      %4998 = vdwg.mxu0
      %4999 = vrot.lane.b32.xlu0 %v1033, 48
      %v5000 = vpop.permute.xlu0 %4999
      %v5002 = vsel %vm507, %v4534, 0
      %v5005 = vsel %vm1433, %v5000, 0
      %5007 = vmatpush.bf16.msra.mxu0 0
      %5008 = vmatpush.bf16.msra.mxu0 0
      %5009 = vmatpush.bf16.msra.mxu0 0
      %5010 = vmatpush.bf16.msra.mxu0 0
      %5011 = vmatpush.bf16.msra.mxu0 0
      %5012 = vmatpush.bf16.msra.mxu0 0
      %5013 = vmatpush.bf16.msra.mxu0 0
      %5014 = vmatpush.bf16.msra.mxu0 %v5005
      %5015 = vmatmul.bf16.gmra.mxu0 %v5002
      %v5016 = vpop.f32.mrf.mxu0
      %v5017 = vadd.f32 0.0, %v5016
      %v5018 = vpop.f32.mrf.mxu0
      %5019 = vdwg.mxu0
      %5020 = vrot.lane.b32.xlu0 %v1057, 48
      %v5021 = vpop.permute.xlu0 %5020
      %v5023 = vsel %vm507, %v4535, 0
      %v5026 = vsel %vm1433, %v5021, 0
      %5028 = vmatpush.bf16.msra.mxu0 0
      %5029 = vmatpush.bf16.msra.mxu0 0
      %5030 = vmatpush.bf16.msra.mxu0 0
      %5031 = vmatpush.bf16.msra.mxu0 0
      %5032 = vmatpush.bf16.msra.mxu0 0
      %5033 = vmatpush.bf16.msra.mxu0 0
      %5034 = vmatpush.bf16.msra.mxu0 0
      %5035 = vmatpush.bf16.msra.mxu0 %v5026
      %5036 = vmatmul.bf16.gmra.mxu0 %v5023
      %v5037 = vpop.f32.mrf.mxu0
      %v5038 = vadd.f32 0.0, %v5037
      %v5039 = vpop.f32.mrf.mxu0
      %5040 = vdwg.mxu0
      %5041 = vrot.lane.b32.xlu0 %v1081, 48
      %v5042 = vpop.permute.xlu0 %5041
      %v5044 = vsel %vm507, %v4536, 0
      %v5047 = vsel %vm1433, %v5042, 0
      %5049 = vmatpush.bf16.msra.mxu0 0
      %5050 = vmatpush.bf16.msra.mxu0 0
      %5051 = vmatpush.bf16.msra.mxu0 0
      %5052 = vmatpush.bf16.msra.mxu0 0
      %5053 = vmatpush.bf16.msra.mxu0 0
      %5054 = vmatpush.bf16.msra.mxu0 0
      %5055 = vmatpush.bf16.msra.mxu0 0
      %5056 = vmatpush.bf16.msra.mxu0 %v5047
      %5057 = vmatmul.bf16.gmra.mxu0 %v5044
      %v5058 = vpop.f32.mrf.mxu0
      %v5059 = vadd.f32 0.0, %v5058
      %v5060 = vpop.f32.mrf.mxu0
      %5061 = vdwg.mxu0
      %v5062 = vpack.c.bf16 %v4576, %v4555
      %v5063 = vpack.c.bf16 %v4618, %v4597
      %v5064 = vpack.c.bf16 %v4660, %v4639
      %v5065 = vpack.c.bf16 %v4702, %v4681
      %v5066 = vpack.c.bf16 %v4744, %v4723
      %v5067 = vpack.c.bf16 %v4786, %v4765
      %v5068 = vpack.c.bf16 %v4828, %v4807
      %v5069 = vpack.c.bf16 %v4870, %v4849
      %v5070 = vpack.c.bf16 %v4912, %v4891
      %v5071 = vpack.c.bf16 %v4954, %v4933
      %v5072 = vpack.c.bf16 %v4996, %v4975
      %v5073 = vpack.c.bf16 %v5038, %v5017
      %v5074 = vpack.c.bf16 %v5059, %v5059
      %v5075 = vld [vmem:[%s2 + $0x8] sm:$0xf]
      %v5077 = vsel %vm507, %v5062, 0
      %v5080 = vsel %vm507, %v5063, 0
      %v5083 = vsel %vm507, %v5064, 0
      %v5086 = vsel %vm507, %v5065, 0
      %v5089 = vsel %vm507, %v5066, 0
      %v5092 = vsel %vm507, %v5067, 0
      %v5095 = vsel %vm507, %v5068, 0
      %v5098 = vsel %vm507, %v5069, 0
      %v5101 = vsel %vm507, %v5070, 0
      %v5104 = vsel %vm507, %v5071, 0
      %v5107 = vsel %vm507, %v5072, 0
      %v5110 = vsel %vm507, %v5073, 0
      %v5113 = vsel %vm507, %v5074, 0
      %v5116 = vsel %vm1433, %v5075, 0
      %5118 = vmatpush.bf16.msra.mxu0 0
      %5119 = vmatpush.bf16.msra.mxu0 0
      %5120 = vmatpush.bf16.msra.mxu0 0
      %5121 = vmatpush.bf16.msra.mxu0 0
      %5122 = vmatpush.bf16.msra.mxu0 0
      %5123 = vmatpush.bf16.msra.mxu0 0
      %5124 = vmatpush.bf16.msra.mxu0 0
      %5125 = vmatpush.bf16.msra.mxu0 %v5116
      %5126 = vmatmul.bf16.gmra.mxu0 %v5077
      %v5127 = vpop.f32.mrf.mxu0
      %v5128 = vadd.f32 0.0, %v5127
      %v5129 = vpop.f32.mrf.mxu0
      %v5130 = vadd.f32 0.0, %v5129
      %5131 = vmatmul.bf16.gmra.mxu0 %v5080
      %v5132 = vpop.f32.mrf.mxu0
      %v5133 = vadd.f32 0.0, %v5132
      %v5134 = vpop.f32.mrf.mxu0
      %v5135 = vadd.f32 0.0, %v5134
      %5136 = vmatmul.bf16.gmra.mxu0 %v5083
      %v5137 = vpop.f32.mrf.mxu0
      %v5138 = vadd.f32 0.0, %v5137
      %v5139 = vpop.f32.mrf.mxu0
      %v5140 = vadd.f32 0.0, %v5139
      %5141 = vmatmul.bf16.gmra.mxu0 %v5086
      %v5142 = vpop.f32.mrf.mxu0
      %v5143 = vadd.f32 0.0, %v5142
      %v5144 = vpop.f32.mrf.mxu0
      %v5145 = vadd.f32 0.0, %v5144
      %5146 = vmatmul.bf16.gmra.mxu0 %v5089
      %v5147 = vpop.f32.mrf.mxu0
      %v5148 = vadd.f32 0.0, %v5147
      %v5149 = vpop.f32.mrf.mxu0
      %v5150 = vadd.f32 0.0, %v5149
      %5151 = vmatmul.bf16.gmra.mxu0 %v5092
      %v5152 = vpop.f32.mrf.mxu0
      %v5153 = vadd.f32 0.0, %v5152
      %v5154 = vpop.f32.mrf.mxu0
      %v5155 = vadd.f32 0.0, %v5154
      %5156 = vmatmul.bf16.gmra.mxu0 %v5095
      %v5157 = vpop.f32.mrf.mxu0
      %v5158 = vadd.f32 0.0, %v5157
      %v5159 = vpop.f32.mrf.mxu0
      %v5160 = vadd.f32 0.0, %v5159
      %5161 = vmatmul.bf16.gmra.mxu0 %v5098
      %v5162 = vpop.f32.mrf.mxu0
      %v5163 = vadd.f32 0.0, %v5162
      %v5164 = vpop.f32.mrf.mxu0
      %v5165 = vadd.f32 0.0, %v5164
      %5166 = vmatmul.bf16.gmra.mxu0 %v5101
      %v5167 = vpop.f32.mrf.mxu0
      %v5168 = vadd.f32 0.0, %v5167
      %v5169 = vpop.f32.mrf.mxu0
      %v5170 = vadd.f32 0.0, %v5169
      %5171 = vmatmul.bf16.gmra.mxu0 %v5104
      %v5172 = vpop.f32.mrf.mxu0
      %v5173 = vadd.f32 0.0, %v5172
      %v5174 = vpop.f32.mrf.mxu0
      %v5175 = vadd.f32 0.0, %v5174
      %5176 = vmatmul.bf16.gmra.mxu0 %v5107
      %v5177 = vpop.f32.mrf.mxu0
      %v5178 = vadd.f32 0.0, %v5177
      %v5179 = vpop.f32.mrf.mxu0
      %v5180 = vadd.f32 0.0, %v5179
      %5181 = vmatmul.bf16.gmra.mxu0 %v5110
      %v5182 = vpop.f32.mrf.mxu0
      %v5183 = vadd.f32 0.0, %v5182
      %v5184 = vpop.f32.mrf.mxu0
      %v5185 = vadd.f32 0.0, %v5184
      %5186 = vmatmul.bf16.gmra.mxu0 %v5113
      %v5187 = vpop.f32.mrf.mxu0
      %v5188 = vadd.f32 0.0, %v5187
      %v5189 = vpop.f32.mrf.mxu0
      %5190 = vdwg.mxu0
      %v5191 = vadd.f32 %v3574, %v5128
      %v5192 = vadd.f32 %v3576, %v5130
      %v5193 = vadd.f32 %v3579, %v5133
      %v5194 = vadd.f32 %v3581, %v5135
      %v5195 = vadd.f32 %v3584, %v5138
      %v5196 = vadd.f32 %v3586, %v5140
      %v5197 = vadd.f32 %v3589, %v5143
      %v5198 = vadd.f32 %v3591, %v5145
      %v5199 = vadd.f32 %v3594, %v5148
      %v5200 = vadd.f32 %v3596, %v5150
      %v5201 = vadd.f32 %v3599, %v5153
      %v5202 = vadd.f32 %v3601, %v5155
      %v5203 = vadd.f32 %v3604, %v5158
      %v5204 = vadd.f32 %v3606, %v5160
      %v5205 = vadd.f32 %v3609, %v5163
      %v5206 = vadd.f32 %v3611, %v5165
      %v5207 = vadd.f32 %v3614, %v5168
      %v5208 = vadd.f32 %v3616, %v5170
      %v5209 = vadd.f32 %v3619, %v5173
      %v5210 = vadd.f32 %v3621, %v5175
      %v5211 = vadd.f32 %v3624, %v5178
      %v5212 = vadd.f32 %v3626, %v5180
      %v5213 = vadd.f32 %v3629, %v5183
      %v5214 = vadd.f32 %v3631, %v5185
      %v5215 = vadd.f32 %v3634, %v5188
      %5216 = vrot.lane.b32.xlu0 %v504, 104
      %v5217 = vpop.permute.xlu0 %5216
      %5218 = vrot.lane.b32.xlu0 %v504, 72
      %v5219 = vpop.permute.xlu0 %5218
      %v5221 = vsel %vm507, %v5217, 0
      %v5224 = vsel %vm507, %v5219, 0
      %5226 = vmatpush.bf16.xpose.msra.mxu0 0
      %5227 = vmatpush.bf16.xpose.msra.mxu0 0
      %5228 = vmatpush.bf16.xpose.msra.mxu0 0
      %5229 = vmatpush.bf16.xpose.msra.mxu0 0
      %5230 = vmatpush.bf16.xpose.msra.mxu0 0
      %5231 = vmatpush.bf16.xpose.msra.mxu0 0
      %5232 = vmatpush.bf16.xpose.msra.mxu0 0
      %5233 = vmatpush.bf16.xpose.msra.mxu0 %v5224
      %5234 = vmatmul.bf16.gmra.mxu0 %v5221
      %v5235 = vpop.f32.mrf.mxu0
      %v5236 = vadd.f32 0.0, %v5235
      %v5237 = vpop.f32.mrf.mxu0
      %5238 = vdwg.mxu0
      %5239 = vrot.lane.b32.xlu0 %v529, 104
      %v5240 = vpop.permute.xlu0 %5239
      %5241 = vrot.lane.b32.xlu0 %v529, 72
      %v5242 = vpop.permute.xlu0 %5241
      %v5244 = vsel %vm507, %v5240, 0
      %v5247 = vsel %vm507, %v5242, 0
      %5249 = vmatpush.bf16.xpose.msra.mxu0 0
      %5250 = vmatpush.bf16.xpose.msra.mxu0 0
      %5251 = vmatpush.bf16.xpose.msra.mxu0 0
      %5252 = vmatpush.bf16.xpose.msra.mxu0 0
      %5253 = vmatpush.bf16.xpose.msra.mxu0 0
      %5254 = vmatpush.bf16.xpose.msra.mxu0 0
      %5255 = vmatpush.bf16.xpose.msra.mxu0 0
      %5256 = vmatpush.bf16.xpose.msra.mxu0 %v5247
      %5257 = vmatmul.bf16.gmra.mxu0 %v5244
      %v5258 = vpop.f32.mrf.mxu0
      %v5259 = vadd.f32 0.0, %v5258
      %v5260 = vpop.f32.mrf.mxu0
      %5261 = vdwg.mxu0
      %5262 = vrot.lane.b32.xlu0 %v553, 104
      %v5263 = vpop.permute.xlu0 %5262
      %5264 = vrot.lane.b32.xlu0 %v553, 72
      %v5265 = vpop.permute.xlu0 %5264
      %v5267 = vsel %vm507, %v5263, 0
      %v5270 = vsel %vm507, %v5265, 0
      %5272 = vmatpush.bf16.xpose.msra.mxu0 0
      %5273 = vmatpush.bf16.xpose.msra.mxu0 0
      %5274 = vmatpush.bf16.xpose.msra.mxu0 0
      %5275 = vmatpush.bf16.xpose.msra.mxu0 0
      %5276 = vmatpush.bf16.xpose.msra.mxu0 0
      %5277 = vmatpush.bf16.xpose.msra.mxu0 0
      %5278 = vmatpush.bf16.xpose.msra.mxu0 0
      %5279 = vmatpush.bf16.xpose.msra.mxu0 %v5270
      %5280 = vmatmul.bf16.gmra.mxu0 %v5267
      %v5281 = vpop.f32.mrf.mxu0
      %v5282 = vadd.f32 0.0, %v5281
      %v5283 = vpop.f32.mrf.mxu0
      %5284 = vdwg.mxu0
      %5285 = vrot.lane.b32.xlu0 %v577, 104
      %v5286 = vpop.permute.xlu0 %5285
      %5287 = vrot.lane.b32.xlu0 %v577, 72
      %v5288 = vpop.permute.xlu0 %5287
      %v5290 = vsel %vm507, %v5286, 0
      %v5293 = vsel %vm507, %v5288, 0
      %5295 = vmatpush.bf16.xpose.msra.mxu0 0
      %5296 = vmatpush.bf16.xpose.msra.mxu0 0
      %5297 = vmatpush.bf16.xpose.msra.mxu0 0
      %5298 = vmatpush.bf16.xpose.msra.mxu0 0
      %5299 = vmatpush.bf16.xpose.msra.mxu0 0
      %5300 = vmatpush.bf16.xpose.msra.mxu0 0
      %5301 = vmatpush.bf16.xpose.msra.mxu0 0
      %5302 = vmatpush.bf16.xpose.msra.mxu0 %v5293
      %5303 = vmatmul.bf16.gmra.mxu0 %v5290
      %v5304 = vpop.f32.mrf.mxu0
      %v5305 = vadd.f32 0.0, %v5304
      %v5306 = vpop.f32.mrf.mxu0
      %5307 = vdwg.mxu0
      %5308 = vrot.lane.b32.xlu0 %v601, 104
      %v5309 = vpop.permute.xlu0 %5308
      %5310 = vrot.lane.b32.xlu0 %v601, 72
      %v5311 = vpop.permute.xlu0 %5310
      %v5313 = vsel %vm507, %v5309, 0
      %v5316 = vsel %vm507, %v5311, 0
      %5318 = vmatpush.bf16.xpose.msra.mxu0 0
      %5319 = vmatpush.bf16.xpose.msra.mxu0 0
      %5320 = vmatpush.bf16.xpose.msra.mxu0 0
      %5321 = vmatpush.bf16.xpose.msra.mxu0 0
      %5322 = vmatpush.bf16.xpose.msra.mxu0 0
      %5323 = vmatpush.bf16.xpose.msra.mxu0 0
      %5324 = vmatpush.bf16.xpose.msra.mxu0 0
      %5325 = vmatpush.bf16.xpose.msra.mxu0 %v5316
      %5326 = vmatmul.bf16.gmra.mxu0 %v5313
      %v5327 = vpop.f32.mrf.mxu0
      %v5328 = vadd.f32 0.0, %v5327
      %v5329 = vpop.f32.mrf.mxu0
      %5330 = vdwg.mxu0
      %5331 = vrot.lane.b32.xlu0 %v625, 104
      %v5332 = vpop.permute.xlu0 %5331
      %5333 = vrot.lane.b32.xlu0 %v625, 72
      %v5334 = vpop.permute.xlu0 %5333
      %v5336 = vsel %vm507, %v5332, 0
      %v5339 = vsel %vm507, %v5334, 0
      %5341 = vmatpush.bf16.xpose.msra.mxu0 0
      %5342 = vmatpush.bf16.xpose.msra.mxu0 0
      %5343 = vmatpush.bf16.xpose.msra.mxu0 0
      %5344 = vmatpush.bf16.xpose.msra.mxu0 0
      %5345 = vmatpush.bf16.xpose.msra.mxu0 0
      %5346 = vmatpush.bf16.xpose.msra.mxu0 0
      %5347 = vmatpush.bf16.xpose.msra.mxu0 0
      %5348 = vmatpush.bf16.xpose.msra.mxu0 %v5339
      %5349 = vmatmul.bf16.gmra.mxu0 %v5336
      %v5350 = vpop.f32.mrf.mxu0
      %v5351 = vadd.f32 0.0, %v5350
      %v5352 = vpop.f32.mrf.mxu0
      %5353 = vdwg.mxu0
      %5354 = vrot.lane.b32.xlu0 %v649, 104
      %v5355 = vpop.permute.xlu0 %5354
      %5356 = vrot.lane.b32.xlu0 %v649, 72
      %v5357 = vpop.permute.xlu0 %5356
      %v5359 = vsel %vm507, %v5355, 0
      %v5362 = vsel %vm507, %v5357, 0
      %5364 = vmatpush.bf16.xpose.msra.mxu0 0
      %5365 = vmatpush.bf16.xpose.msra.mxu0 0
      %5366 = vmatpush.bf16.xpose.msra.mxu0 0
      %5367 = vmatpush.bf16.xpose.msra.mxu0 0
      %5368 = vmatpush.bf16.xpose.msra.mxu0 0
      %5369 = vmatpush.bf16.xpose.msra.mxu0 0
      %5370 = vmatpush.bf16.xpose.msra.mxu0 0
      %5371 = vmatpush.bf16.xpose.msra.mxu0 %v5362
      %5372 = vmatmul.bf16.gmra.mxu0 %v5359
      %v5373 = vpop.f32.mrf.mxu0
      %v5374 = vadd.f32 0.0, %v5373
      %v5375 = vpop.f32.mrf.mxu0
      %5376 = vdwg.mxu0
      %5377 = vrot.lane.b32.xlu0 %v673, 104
      %v5378 = vpop.permute.xlu0 %5377
      %5379 = vrot.lane.b32.xlu0 %v673, 72
      %v5380 = vpop.permute.xlu0 %5379
      %v5382 = vsel %vm507, %v5378, 0
      %v5385 = vsel %vm507, %v5380, 0
      %5387 = vmatpush.bf16.xpose.msra.mxu0 0
      %5388 = vmatpush.bf16.xpose.msra.mxu0 0
      %5389 = vmatpush.bf16.xpose.msra.mxu0 0
      %5390 = vmatpush.bf16.xpose.msra.mxu0 0
      %5391 = vmatpush.bf16.xpose.msra.mxu0 0
      %5392 = vmatpush.bf16.xpose.msra.mxu0 0
      %5393 = vmatpush.bf16.xpose.msra.mxu0 0
      %5394 = vmatpush.bf16.xpose.msra.mxu0 %v5385
      %5395 = vmatmul.bf16.gmra.mxu0 %v5382
      %v5396 = vpop.f32.mrf.mxu0
      %v5397 = vadd.f32 0.0, %v5396
      %v5398 = vpop.f32.mrf.mxu0
      %5399 = vdwg.mxu0
      %5400 = vrot.lane.b32.xlu0 %v697, 104
      %v5401 = vpop.permute.xlu0 %5400
      %5402 = vrot.lane.b32.xlu0 %v697, 72
      %v5403 = vpop.permute.xlu0 %5402
      %v5405 = vsel %vm507, %v5401, 0
      %v5408 = vsel %vm507, %v5403, 0
      %5410 = vmatpush.bf16.xpose.msra.mxu0 0
      %5411 = vmatpush.bf16.xpose.msra.mxu0 0
      %5412 = vmatpush.bf16.xpose.msra.mxu0 0
      %5413 = vmatpush.bf16.xpose.msra.mxu0 0
      %5414 = vmatpush.bf16.xpose.msra.mxu0 0
      %5415 = vmatpush.bf16.xpose.msra.mxu0 0
      %5416 = vmatpush.bf16.xpose.msra.mxu0 0
      %5417 = vmatpush.bf16.xpose.msra.mxu0 %v5408
      %5418 = vmatmul.bf16.gmra.mxu0 %v5405
      %v5419 = vpop.f32.mrf.mxu0
      %v5420 = vadd.f32 0.0, %v5419
      %v5421 = vpop.f32.mrf.mxu0
      %5422 = vdwg.mxu0
      %5423 = vrot.lane.b32.xlu0 %v721, 104
      %v5424 = vpop.permute.xlu0 %5423
      %5425 = vrot.lane.b32.xlu0 %v721, 72
      %v5426 = vpop.permute.xlu0 %5425
      %v5428 = vsel %vm507, %v5424, 0
      %v5431 = vsel %vm507, %v5426, 0
      %5433 = vmatpush.bf16.xpose.msra.mxu0 0
      %5434 = vmatpush.bf16.xpose.msra.mxu0 0
      %5435 = vmatpush.bf16.xpose.msra.mxu0 0
      %5436 = vmatpush.bf16.xpose.msra.mxu0 0
      %5437 = vmatpush.bf16.xpose.msra.mxu0 0
      %5438 = vmatpush.bf16.xpose.msra.mxu0 0
      %5439 = vmatpush.bf16.xpose.msra.mxu0 0
      %5440 = vmatpush.bf16.xpose.msra.mxu0 %v5431
      %5441 = vmatmul.bf16.gmra.mxu0 %v5428
      %v5442 = vpop.f32.mrf.mxu0
      %v5443 = vadd.f32 0.0, %v5442
      %v5444 = vpop.f32.mrf.mxu0
      %5445 = vdwg.mxu0
      %5446 = vrot.lane.b32.xlu0 %v745, 104
      %v5447 = vpop.permute.xlu0 %5446
      %5448 = vrot.lane.b32.xlu0 %v745, 72
      %v5449 = vpop.permute.xlu0 %5448
      %v5451 = vsel %vm507, %v5447, 0
      %v5454 = vsel %vm507, %v5449, 0
      %5456 = vmatpush.bf16.xpose.msra.mxu0 0
      %5457 = vmatpush.bf16.xpose.msra.mxu0 0
      %5458 = vmatpush.bf16.xpose.msra.mxu0 0
      %5459 = vmatpush.bf16.xpose.msra.mxu0 0
      %5460 = vmatpush.bf16.xpose.msra.mxu0 0
      %5461 = vmatpush.bf16.xpose.msra.mxu0 0
      %5462 = vmatpush.bf16.xpose.msra.mxu0 0
      %5463 = vmatpush.bf16.xpose.msra.mxu0 %v5454
      %5464 = vmatmul.bf16.gmra.mxu0 %v5451
      %v5465 = vpop.f32.mrf.mxu0
      %v5466 = vadd.f32 0.0, %v5465
      %v5467 = vpop.f32.mrf.mxu0
      %5468 = vdwg.mxu0
      %5469 = vrot.lane.b32.xlu0 %v769, 104
      %v5470 = vpop.permute.xlu0 %5469
      %5471 = vrot.lane.b32.xlu0 %v769, 72
      %v5472 = vpop.permute.xlu0 %5471
      %v5474 = vsel %vm507, %v5470, 0
      %v5477 = vsel %vm507, %v5472, 0
      %5479 = vmatpush.bf16.xpose.msra.mxu0 0
      %5480 = vmatpush.bf16.xpose.msra.mxu0 0
      %5481 = vmatpush.bf16.xpose.msra.mxu0 0
      %5482 = vmatpush.bf16.xpose.msra.mxu0 0
      %5483 = vmatpush.bf16.xpose.msra.mxu0 0
      %5484 = vmatpush.bf16.xpose.msra.mxu0 0
      %5485 = vmatpush.bf16.xpose.msra.mxu0 0
      %5486 = vmatpush.bf16.xpose.msra.mxu0 %v5477
      %5487 = vmatmul.bf16.gmra.mxu0 %v5474
      %v5488 = vpop.f32.mrf.mxu0
      %v5489 = vadd.f32 0.0, %v5488
      %v5490 = vpop.f32.mrf.mxu0
      %5491 = vdwg.mxu0
      %5492 = vrot.lane.b32.xlu0 %v793, 104
      %v5493 = vpop.permute.xlu0 %5492
      %5494 = vrot.lane.b32.xlu0 %v793, 72
      %v5495 = vpop.permute.xlu0 %5494
      %v5497 = vsel %vm507, %v5493, 0
      %v5500 = vsel %vm507, %v5495, 0
      %5502 = vmatpush.bf16.xpose.msra.mxu0 0
      %5503 = vmatpush.bf16.xpose.msra.mxu0 0
      %5504 = vmatpush.bf16.xpose.msra.mxu0 0
      %5505 = vmatpush.bf16.xpose.msra.mxu0 0
      %5506 = vmatpush.bf16.xpose.msra.mxu0 0
      %5507 = vmatpush.bf16.xpose.msra.mxu0 0
      %5508 = vmatpush.bf16.xpose.msra.mxu0 0
      %5509 = vmatpush.bf16.xpose.msra.mxu0 %v5500
      %5510 = vmatmul.bf16.gmra.mxu0 %v5497
      %v5511 = vpop.f32.mrf.mxu0
      %v5512 = vadd.f32 0.0, %v5511
      %v5513 = vpop.f32.mrf.mxu0
      %5514 = vdwg.mxu0
      %5515 = vrot.lane.b32.xlu0 %v817, 104
      %v5516 = vpop.permute.xlu0 %5515
      %5517 = vrot.lane.b32.xlu0 %v817, 72
      %v5518 = vpop.permute.xlu0 %5517
      %v5520 = vsel %vm507, %v5516, 0
      %v5523 = vsel %vm507, %v5518, 0
      %5525 = vmatpush.bf16.xpose.msra.mxu0 0
      %5526 = vmatpush.bf16.xpose.msra.mxu0 0
      %5527 = vmatpush.bf16.xpose.msra.mxu0 0
      %5528 = vmatpush.bf16.xpose.msra.mxu0 0
      %5529 = vmatpush.bf16.xpose.msra.mxu0 0
      %5530 = vmatpush.bf16.xpose.msra.mxu0 0
      %5531 = vmatpush.bf16.xpose.msra.mxu0 0
      %5532 = vmatpush.bf16.xpose.msra.mxu0 %v5523
      %5533 = vmatmul.bf16.gmra.mxu0 %v5520
      %v5534 = vpop.f32.mrf.mxu0
      %v5535 = vadd.f32 0.0, %v5534
      %v5536 = vpop.f32.mrf.mxu0
      %5537 = vdwg.mxu0
      %5538 = vrot.lane.b32.xlu0 %v841, 104
      %v5539 = vpop.permute.xlu0 %5538
      %5540 = vrot.lane.b32.xlu0 %v841, 72
      %v5541 = vpop.permute.xlu0 %5540
      %v5543 = vsel %vm507, %v5539, 0
      %v5546 = vsel %vm507, %v5541, 0
      %5548 = vmatpush.bf16.xpose.msra.mxu0 0
      %5549 = vmatpush.bf16.xpose.msra.mxu0 0
      %5550 = vmatpush.bf16.xpose.msra.mxu0 0
      %5551 = vmatpush.bf16.xpose.msra.mxu0 0
      %5552 = vmatpush.bf16.xpose.msra.mxu0 0
      %5553 = vmatpush.bf16.xpose.msra.mxu0 0
      %5554 = vmatpush.bf16.xpose.msra.mxu0 0
      %5555 = vmatpush.bf16.xpose.msra.mxu0 %v5546
      %5556 = vmatmul.bf16.gmra.mxu0 %v5543
      %v5557 = vpop.f32.mrf.mxu0
      %v5558 = vadd.f32 0.0, %v5557
      %v5559 = vpop.f32.mrf.mxu0
      %5560 = vdwg.mxu0
      %5561 = vrot.lane.b32.xlu0 %v865, 104
      %v5562 = vpop.permute.xlu0 %5561
      %5563 = vrot.lane.b32.xlu0 %v865, 72
      %v5564 = vpop.permute.xlu0 %5563
      %v5566 = vsel %vm507, %v5562, 0
      %v5569 = vsel %vm507, %v5564, 0
      %5571 = vmatpush.bf16.xpose.msra.mxu0 0
      %5572 = vmatpush.bf16.xpose.msra.mxu0 0
      %5573 = vmatpush.bf16.xpose.msra.mxu0 0
      %5574 = vmatpush.bf16.xpose.msra.mxu0 0
      %5575 = vmatpush.bf16.xpose.msra.mxu0 0
      %5576 = vmatpush.bf16.xpose.msra.mxu0 0
      %5577 = vmatpush.bf16.xpose.msra.mxu0 0
      %5578 = vmatpush.bf16.xpose.msra.mxu0 %v5569
      %5579 = vmatmul.bf16.gmra.mxu0 %v5566
      %v5580 = vpop.f32.mrf.mxu0
      %v5581 = vadd.f32 0.0, %v5580
      %v5582 = vpop.f32.mrf.mxu0
      %5583 = vdwg.mxu0
      %5584 = vrot.lane.b32.xlu0 %v889, 104
      %v5585 = vpop.permute.xlu0 %5584
      %5586 = vrot.lane.b32.xlu0 %v889, 72
      %v5587 = vpop.permute.xlu0 %5586
      %v5589 = vsel %vm507, %v5585, 0
      %v5592 = vsel %vm507, %v5587, 0
      %5594 = vmatpush.bf16.xpose.msra.mxu0 0
      %5595 = vmatpush.bf16.xpose.msra.mxu0 0
      %5596 = vmatpush.bf16.xpose.msra.mxu0 0
      %5597 = vmatpush.bf16.xpose.msra.mxu0 0
      %5598 = vmatpush.bf16.xpose.msra.mxu0 0
      %5599 = vmatpush.bf16.xpose.msra.mxu0 0
      %5600 = vmatpush.bf16.xpose.msra.mxu0 0
      %5601 = vmatpush.bf16.xpose.msra.mxu0 %v5592
      %5602 = vmatmul.bf16.gmra.mxu0 %v5589
      %v5603 = vpop.f32.mrf.mxu0
      %v5604 = vadd.f32 0.0, %v5603
      %v5605 = vpop.f32.mrf.mxu0
      %5606 = vdwg.mxu0
      %5607 = vrot.lane.b32.xlu0 %v913, 104
      %v5608 = vpop.permute.xlu0 %5607
      %5609 = vrot.lane.b32.xlu0 %v913, 72
      %v5610 = vpop.permute.xlu0 %5609
      %v5612 = vsel %vm507, %v5608, 0
      %v5615 = vsel %vm507, %v5610, 0
      %5617 = vmatpush.bf16.xpose.msra.mxu0 0
      %5618 = vmatpush.bf16.xpose.msra.mxu0 0
      %5619 = vmatpush.bf16.xpose.msra.mxu0 0
      %5620 = vmatpush.bf16.xpose.msra.mxu0 0
      %5621 = vmatpush.bf16.xpose.msra.mxu0 0
      %5622 = vmatpush.bf16.xpose.msra.mxu0 0
      %5623 = vmatpush.bf16.xpose.msra.mxu0 0
      %5624 = vmatpush.bf16.xpose.msra.mxu0 %v5615
      %5625 = vmatmul.bf16.gmra.mxu0 %v5612
      %v5626 = vpop.f32.mrf.mxu0
      %v5627 = vadd.f32 0.0, %v5626
      %v5628 = vpop.f32.mrf.mxu0
      %5629 = vdwg.mxu0
      %5630 = vrot.lane.b32.xlu0 %v937, 104
      %v5631 = vpop.permute.xlu0 %5630
      %5632 = vrot.lane.b32.xlu0 %v937, 72
      %v5633 = vpop.permute.xlu0 %5632
      %v5635 = vsel %vm507, %v5631, 0
      %v5638 = vsel %vm507, %v5633, 0
      %5640 = vmatpush.bf16.xpose.msra.mxu0 0
      %5641 = vmatpush.bf16.xpose.msra.mxu0 0
      %5642 = vmatpush.bf16.xpose.msra.mxu0 0
      %5643 = vmatpush.bf16.xpose.msra.mxu0 0
      %5644 = vmatpush.bf16.xpose.msra.mxu0 0
      %5645 = vmatpush.bf16.xpose.msra.mxu0 0
      %5646 = vmatpush.bf16.xpose.msra.mxu0 0
      %5647 = vmatpush.bf16.xpose.msra.mxu0 %v5638
      %5648 = vmatmul.bf16.gmra.mxu0 %v5635
      %v5649 = vpop.f32.mrf.mxu0
      %v5650 = vadd.f32 0.0, %v5649
      %v5651 = vpop.f32.mrf.mxu0
      %5652 = vdwg.mxu0
      %5653 = vrot.lane.b32.xlu0 %v961, 104
      %v5654 = vpop.permute.xlu0 %5653
      %5655 = vrot.lane.b32.xlu0 %v961, 72
      %v5656 = vpop.permute.xlu0 %5655
      %v5658 = vsel %vm507, %v5654, 0
      %v5661 = vsel %vm507, %v5656, 0
      %5663 = vmatpush.bf16.xpose.msra.mxu0 0
      %5664 = vmatpush.bf16.xpose.msra.mxu0 0
      %5665 = vmatpush.bf16.xpose.msra.mxu0 0
      %5666 = vmatpush.bf16.xpose.msra.mxu0 0
      %5667 = vmatpush.bf16.xpose.msra.mxu0 0
      %5668 = vmatpush.bf16.xpose.msra.mxu0 0
      %5669 = vmatpush.bf16.xpose.msra.mxu0 0
      %5670 = vmatpush.bf16.xpose.msra.mxu0 %v5661
      %5671 = vmatmul.bf16.gmra.mxu0 %v5658
      %v5672 = vpop.f32.mrf.mxu0
      %v5673 = vadd.f32 0.0, %v5672
      %v5674 = vpop.f32.mrf.mxu0
      %5675 = vdwg.mxu0
      %5676 = vrot.lane.b32.xlu0 %v985, 104
      %v5677 = vpop.permute.xlu0 %5676
      %5678 = vrot.lane.b32.xlu0 %v985, 72
      %v5679 = vpop.permute.xlu0 %5678
      %v5681 = vsel %vm507, %v5677, 0
      %v5684 = vsel %vm507, %v5679, 0
      %5686 = vmatpush.bf16.xpose.msra.mxu0 0
      %5687 = vmatpush.bf16.xpose.msra.mxu0 0
      %5688 = vmatpush.bf16.xpose.msra.mxu0 0
      %5689 = vmatpush.bf16.xpose.msra.mxu0 0
      %5690 = vmatpush.bf16.xpose.msra.mxu0 0
      %5691 = vmatpush.bf16.xpose.msra.mxu0 0
      %5692 = vmatpush.bf16.xpose.msra.mxu0 0
      %5693 = vmatpush.bf16.xpose.msra.mxu0 %v5684
      %5694 = vmatmul.bf16.gmra.mxu0 %v5681
      %v5695 = vpop.f32.mrf.mxu0
      %v5696 = vadd.f32 0.0, %v5695
      %v5697 = vpop.f32.mrf.mxu0
      %5698 = vdwg.mxu0
      %5699 = vrot.lane.b32.xlu0 %v1009, 104
      %v5700 = vpop.permute.xlu0 %5699
      %5701 = vrot.lane.b32.xlu0 %v1009, 72
      %v5702 = vpop.permute.xlu0 %5701
      %v5704 = vsel %vm507, %v5700, 0
      %v5707 = vsel %vm507, %v5702, 0
      %5709 = vmatpush.bf16.xpose.msra.mxu0 0
      %5710 = vmatpush.bf16.xpose.msra.mxu0 0
      %5711 = vmatpush.bf16.xpose.msra.mxu0 0
      %5712 = vmatpush.bf16.xpose.msra.mxu0 0
      %5713 = vmatpush.bf16.xpose.msra.mxu0 0
      %5714 = vmatpush.bf16.xpose.msra.mxu0 0
      %5715 = vmatpush.bf16.xpose.msra.mxu0 0
      %5716 = vmatpush.bf16.xpose.msra.mxu0 %v5707
      %5717 = vmatmul.bf16.gmra.mxu0 %v5704
      %v5718 = vpop.f32.mrf.mxu0
      %v5719 = vadd.f32 0.0, %v5718
      %v5720 = vpop.f32.mrf.mxu0
      %5721 = vdwg.mxu0
      %5722 = vrot.lane.b32.xlu0 %v1033, 104
      %v5723 = vpop.permute.xlu0 %5722
      %5724 = vrot.lane.b32.xlu0 %v1033, 72
      %v5725 = vpop.permute.xlu0 %5724
      %v5727 = vsel %vm507, %v5723, 0
      %v5730 = vsel %vm507, %v5725, 0
      %5732 = vmatpush.bf16.xpose.msra.mxu0 0
      %5733 = vmatpush.bf16.xpose.msra.mxu0 0
      %5734 = vmatpush.bf16.xpose.msra.mxu0 0
      %5735 = vmatpush.bf16.xpose.msra.mxu0 0
      %5736 = vmatpush.bf16.xpose.msra.mxu0 0
      %5737 = vmatpush.bf16.xpose.msra.mxu0 0
      %5738 = vmatpush.bf16.xpose.msra.mxu0 0
      %5739 = vmatpush.bf16.xpose.msra.mxu0 %v5730
      %5740 = vmatmul.bf16.gmra.mxu0 %v5727
      %v5741 = vpop.f32.mrf.mxu0
      %v5742 = vadd.f32 0.0, %v5741
      %v5743 = vpop.f32.mrf.mxu0
      %5744 = vdwg.mxu0
      %5745 = vrot.lane.b32.xlu0 %v1057, 104
      %v5746 = vpop.permute.xlu0 %5745
      %5747 = vrot.lane.b32.xlu0 %v1057, 72
      %v5748 = vpop.permute.xlu0 %5747
      %v5750 = vsel %vm507, %v5746, 0
      %v5753 = vsel %vm507, %v5748, 0
      %5755 = vmatpush.bf16.xpose.msra.mxu0 0
      %5756 = vmatpush.bf16.xpose.msra.mxu0 0
      %5757 = vmatpush.bf16.xpose.msra.mxu0 0
      %5758 = vmatpush.bf16.xpose.msra.mxu0 0
      %5759 = vmatpush.bf16.xpose.msra.mxu0 0
      %5760 = vmatpush.bf16.xpose.msra.mxu0 0
      %5761 = vmatpush.bf16.xpose.msra.mxu0 0
      %5762 = vmatpush.bf16.xpose.msra.mxu0 %v5753
      %5763 = vmatmul.bf16.gmra.mxu0 %v5750
      %v5764 = vpop.f32.mrf.mxu0
      %v5765 = vadd.f32 0.0, %v5764
      %v5766 = vpop.f32.mrf.mxu0
      %5767 = vdwg.mxu0
      %5768 = vrot.lane.b32.xlu0 %v1081, 104
      %v5769 = vpop.permute.xlu0 %5768
      %5770 = vrot.lane.b32.xlu0 %v1081, 72
      %v5771 = vpop.permute.xlu0 %5770
      %v5773 = vsel %vm507, %v5769, 0
      %v5776 = vsel %vm507, %v5771, 0
      %5778 = vmatpush.bf16.xpose.msra.mxu0 0
      %5779 = vmatpush.bf16.xpose.msra.mxu0 0
      %5780 = vmatpush.bf16.xpose.msra.mxu0 0
      %5781 = vmatpush.bf16.xpose.msra.mxu0 0
      %5782 = vmatpush.bf16.xpose.msra.mxu0 0
      %5783 = vmatpush.bf16.xpose.msra.mxu0 0
      %5784 = vmatpush.bf16.xpose.msra.mxu0 0
      %5785 = vmatpush.bf16.xpose.msra.mxu0 %v5776
      %5786 = vmatmul.bf16.gmra.mxu0 %v5773
      %v5787 = vpop.f32.mrf.mxu0
      %v5788 = vadd.f32 0.0, %v5787
      %v5789 = vpop.f32.mrf.mxu0
      %5790 = vdwg.mxu0
      %v5791 = vmul.f32 %v5236, 0.35355338
      %v5792 = vmul.f32 %v5259, 0.35355338
      %v5793 = vmul.f32 %v5282, 0.35355338
      %v5794 = vmul.f32 %v5305, 0.35355338
      %v5795 = vmul.f32 %v5328, 0.35355338
      %v5796 = vmul.f32 %v5351, 0.35355338
      %v5797 = vmul.f32 %v5374, 0.35355338
      %v5798 = vmul.f32 %v5397, 0.35355338
      %v5799 = vmul.f32 %v5420, 0.35355338
      %v5800 = vmul.f32 %v5443, 0.35355338
      %v5801 = vmul.f32 %v5466, 0.35355338
      %v5802 = vmul.f32 %v5489, 0.35355338
      %v5803 = vmul.f32 %v5512, 0.35355338
      %v5804 = vmul.f32 %v5535, 0.35355338
      %v5805 = vmul.f32 %v5558, 0.35355338
      %v5806 = vmul.f32 %v5581, 0.35355338
      %v5807 = vmul.f32 %v5604, 0.35355338
      %v5808 = vmul.f32 %v5627, 0.35355338
      %v5809 = vmul.f32 %v5650, 0.35355338
      %v5810 = vmul.f32 %v5673, 0.35355338
      %v5811 = vmul.f32 %v5696, 0.35355338
      %v5812 = vmul.f32 %v5719, 0.35355338
      %v5813 = vmul.f32 %v5742, 0.35355338
      %v5814 = vmul.f32 %v5765, 0.35355338
      %v5815 = vmul.f32 %v5788, 0.35355338
      %v5816 = vsel %vm507, %v5791, -inf
      %5817 = vmax.xlane.f32.xlu0 %v5816
      %v5818 = vpop.xlane.xlu0 %5817
      %v5819 = vsel %vm507, %v5792, -inf
      %5820 = vmax.xlane.f32.xlu0 %v5819
      %v5821 = vpop.xlane.xlu0 %5820
      %v5822 = vsel %vm507, %v5793, -inf
      %5823 = vmax.xlane.f32.xlu0 %v5822
      %v5824 = vpop.xlane.xlu0 %5823
      %v5825 = vsel %vm507, %v5794, -inf
      %5826 = vmax.xlane.f32.xlu0 %v5825
      %v5827 = vpop.xlane.xlu0 %5826
      %v5828 = vsel %vm507, %v5795, -inf
      %5829 = vmax.xlane.f32.xlu0 %v5828
      %v5830 = vpop.xlane.xlu0 %5829
      %v5831 = vsel %vm507, %v5796, -inf
      %5832 = vmax.xlane.f32.xlu0 %v5831
      %v5833 = vpop.xlane.xlu0 %5832
      %v5834 = vsel %vm507, %v5797, -inf
      %5835 = vmax.xlane.f32.xlu0 %v5834
      %v5836 = vpop.xlane.xlu0 %5835
      %v5837 = vsel %vm507, %v5798, -inf
      %5838 = vmax.xlane.f32.xlu0 %v5837
      %v5839 = vpop.xlane.xlu0 %5838
      %v5840 = vsel %vm507, %v5799, -inf
      %5841 = vmax.xlane.f32.xlu0 %v5840
      %v5842 = vpop.xlane.xlu0 %5841
      %v5843 = vsel %vm507, %v5800, -inf
      %5844 = vmax.xlane.f32.xlu0 %v5843
      %v5845 = vpop.xlane.xlu0 %5844
      %v5846 = vsel %vm507, %v5801, -inf
      %5847 = vmax.xlane.f32.xlu0 %v5846
      %v5848 = vpop.xlane.xlu0 %5847
      %v5849 = vsel %vm507, %v5802, -inf
      %5850 = vmax.xlane.f32.xlu0 %v5849
      %v5851 = vpop.xlane.xlu0 %5850
      %v5852 = vsel %vm507, %v5803, -inf
      %5853 = vmax.xlane.f32.xlu0 %v5852
      %v5854 = vpop.xlane.xlu0 %5853
      %v5855 = vsel %vm507, %v5804, -inf
      %5856 = vmax.xlane.f32.xlu0 %v5855
      %v5857 = vpop.xlane.xlu0 %5856
      %v5858 = vsel %vm507, %v5805, -inf
      %5859 = vmax.xlane.f32.xlu0 %v5858
      %v5860 = vpop.xlane.xlu0 %5859
      %v5861 = vsel %vm507, %v5806, -inf
      %5862 = vmax.xlane.f32.xlu0 %v5861
      %v5863 = vpop.xlane.xlu0 %5862
      %v5864 = vsel %vm507, %v5807, -inf
      %5865 = vmax.xlane.f32.xlu0 %v5864
      %v5866 = vpop.xlane.xlu0 %5865
      %v5867 = vsel %vm507, %v5808, -inf
      %5868 = vmax.xlane.f32.xlu0 %v5867
      %v5869 = vpop.xlane.xlu0 %5868
      %v5870 = vsel %vm507, %v5809, -inf
      %5871 = vmax.xlane.f32.xlu0 %v5870
      %v5872 = vpop.xlane.xlu0 %5871
      %v5873 = vsel %vm507, %v5810, -inf
      %5874 = vmax.xlane.f32.xlu0 %v5873
      %v5875 = vpop.xlane.xlu0 %5874
      %v5876 = vsel %vm507, %v5811, -inf
      %5877 = vmax.xlane.f32.xlu0 %v5876
      %v5878 = vpop.xlane.xlu0 %5877
      %v5879 = vsel %vm507, %v5812, -inf
      %5880 = vmax.xlane.f32.xlu0 %v5879
      %v5881 = vpop.xlane.xlu0 %5880
      %v5882 = vsel %vm507, %v5813, -inf
      %5883 = vmax.xlane.f32.xlu0 %v5882
      %v5884 = vpop.xlane.xlu0 %5883
      %v5885 = vsel %vm507, %v5814, -inf
      %5886 = vmax.xlane.f32.xlu0 %v5885
      %v5887 = vpop.xlane.xlu0 %5886
      %v5888 = vsel %vm507, %v5815, -inf
      %5889 = vmax.xlane.f32.xlu0 %v5888
      %v5890 = vpop.xlane.xlu0 %5889
      %v5891 = vsub.f32 %v5791, %v5818
      %v5892 = vsub.f32 %v5792, %v5821
      %v5893 = vsub.f32 %v5793, %v5824
      %v5894 = vsub.f32 %v5794, %v5827
      %v5895 = vsub.f32 %v5795, %v5830
      %v5896 = vsub.f32 %v5796, %v5833
      %v5897 = vsub.f32 %v5797, %v5836
      %v5898 = vsub.f32 %v5798, %v5839
      %v5899 = vsub.f32 %v5799, %v5842
      %v5900 = vsub.f32 %v5800, %v5845
      %v5901 = vsub.f32 %v5801, %v5848
      %v5902 = vsub.f32 %v5802, %v5851
      %v5903 = vsub.f32 %v5803, %v5854
      %v5904 = vsub.f32 %v5804, %v5857
      %v5905 = vsub.f32 %v5805, %v5860
      %v5906 = vsub.f32 %v5806, %v5863
      %v5907 = vsub.f32 %v5807, %v5866
      %v5908 = vsub.f32 %v5808, %v5869
      %v5909 = vsub.f32 %v5809, %v5872
      %v5910 = vsub.f32 %v5810, %v5875
      %v5911 = vsub.f32 %v5811, %v5878
      %v5912 = vsub.f32 %v5812, %v5881
      %v5913 = vsub.f32 %v5813, %v5884
      %v5914 = vsub.f32 %v5814, %v5887
      %v5915 = vsub.f32 %v5815, %v5890
      %v5916 = vmul.f32 %v5891, 1.442695
      %v5917 = vpow.pop %v5916
      %v5918 = vmul.f32 %v5892, 1.442695
      %v5919 = vpow.pop %v5918
      %v5920 = vmul.f32 %v5893, 1.442695
      %v5921 = vpow.pop %v5920
      %v5922 = vmul.f32 %v5894, 1.442695
      %v5923 = vpow.pop %v5922
      %v5924 = vmul.f32 %v5895, 1.442695
      %v5925 = vpow.pop %v5924
      %v5926 = vmul.f32 %v5896, 1.442695
      %v5927 = vpow.pop %v5926
      %v5928 = vmul.f32 %v5897, 1.442695
      %v5929 = vpow.pop %v5928
      %v5930 = vmul.f32 %v5898, 1.442695
      %v5931 = vpow.pop %v5930
      %v5932 = vmul.f32 %v5899, 1.442695
      %v5933 = vpow.pop %v5932
      %v5934 = vmul.f32 %v5900, 1.442695
      %v5935 = vpow.pop %v5934
      %v5936 = vmul.f32 %v5901, 1.442695
      %v5937 = vpow.pop %v5936
      %v5938 = vmul.f32 %v5902, 1.442695
      %v5939 = vpow.pop %v5938
      %v5940 = vmul.f32 %v5903, 1.442695
      %v5941 = vpow.pop %v5940
      %v5942 = vmul.f32 %v5904, 1.442695
      %v5943 = vpow.pop %v5942
      %v5944 = vmul.f32 %v5905, 1.442695
      %v5945 = vpow.pop %v5944
      %v5946 = vmul.f32 %v5906, 1.442695
      %v5947 = vpow.pop %v5946
      %v5948 = vmul.f32 %v5907, 1.442695
      %v5949 = vpow.pop %v5948
      %v5950 = vmul.f32 %v5908, 1.442695
      %v5951 = vpow.pop %v5950
      %v5952 = vmul.f32 %v5909, 1.442695
      %v5953 = vpow.pop %v5952
      %v5954 = vmul.f32 %v5910, 1.442695
      %v5955 = vpow.pop %v5954
      %v5956 = vmul.f32 %v5911, 1.442695
      %v5957 = vpow.pop %v5956
      %v5958 = vmul.f32 %v5912, 1.442695
      %v5959 = vpow.pop %v5958
      %v5960 = vmul.f32 %v5913, 1.442695
      %v5961 = vpow.pop %v5960
      %v5962 = vmul.f32 %v5914, 1.442695
      %v5963 = vpow.pop %v5962
      %v5964 = vmul.f32 %v5915, 1.442695
      %v5965 = vpow.pop %v5964
      %v5966 = vsel %vm507, %v5917, 0.0
      %5967 = vadd.xlane.f32.xlu0 %v5966
      %v5968 = vpop.xlane.xlu0 %5967
      %v5969 = vsel %vm507, %v5919, 0.0
      %5970 = vadd.xlane.f32.xlu0 %v5969
      %v5971 = vpop.xlane.xlu0 %5970
      %v5972 = vsel %vm507, %v5921, 0.0
      %5973 = vadd.xlane.f32.xlu0 %v5972
      %v5974 = vpop.xlane.xlu0 %5973
      %v5975 = vsel %vm507, %v5923, 0.0
      %5976 = vadd.xlane.f32.xlu0 %v5975
      %v5977 = vpop.xlane.xlu0 %5976
      %v5978 = vsel %vm507, %v5925, 0.0
      %5979 = vadd.xlane.f32.xlu0 %v5978
      %v5980 = vpop.xlane.xlu0 %5979
      %v5981 = vsel %vm507, %v5927, 0.0
      %5982 = vadd.xlane.f32.xlu0 %v5981
      %v5983 = vpop.xlane.xlu0 %5982
      %v5984 = vsel %vm507, %v5929, 0.0
      %5985 = vadd.xlane.f32.xlu0 %v5984
      %v5986 = vpop.xlane.xlu0 %5985
      %v5987 = vsel %vm507, %v5931, 0.0
      %5988 = vadd.xlane.f32.xlu0 %v5987
      %v5989 = vpop.xlane.xlu0 %5988
      %v5990 = vsel %vm507, %v5933, 0.0
      %5991 = vadd.xlane.f32.xlu0 %v5990
      %v5992 = vpop.xlane.xlu0 %5991
      %v5993 = vsel %vm507, %v5935, 0.0
      %5994 = vadd.xlane.f32.xlu0 %v5993
      %v5995 = vpop.xlane.xlu0 %5994
      %v5996 = vsel %vm507, %v5937, 0.0
      %5997 = vadd.xlane.f32.xlu0 %v5996
      %v5998 = vpop.xlane.xlu0 %5997
      %v5999 = vsel %vm507, %v5939, 0.0
      %6000 = vadd.xlane.f32.xlu0 %v5999
      %v6001 = vpop.xlane.xlu0 %6000
      %v6002 = vsel %vm507, %v5941, 0.0
      %6003 = vadd.xlane.f32.xlu0 %v6002
      %v6004 = vpop.xlane.xlu0 %6003
      %v6005 = vsel %vm507, %v5943, 0.0
      %6006 = vadd.xlane.f32.xlu0 %v6005
      %v6007 = vpop.xlane.xlu0 %6006
      %v6008 = vsel %vm507, %v5945, 0.0
      %6009 = vadd.xlane.f32.xlu0 %v6008
      %v6010 = vpop.xlane.xlu0 %6009
      %v6011 = vsel %vm507, %v5947, 0.0
      %6012 = vadd.xlane.f32.xlu0 %v6011
      %v6013 = vpop.xlane.xlu0 %6012
      %v6014 = vsel %vm507, %v5949, 0.0
      %6015 = vadd.xlane.f32.xlu0 %v6014
      %v6016 = vpop.xlane.xlu0 %6015
      %v6017 = vsel %vm507, %v5951, 0.0
      %6018 = vadd.xlane.f32.xlu0 %v6017
      %v6019 = vpop.xlane.xlu0 %6018
      %v6020 = vsel %vm507, %v5953, 0.0
      %6021 = vadd.xlane.f32.xlu0 %v6020
      %v6022 = vpop.xlane.xlu0 %6021
      %v6023 = vsel %vm507, %v5955, 0.0
      %6024 = vadd.xlane.f32.xlu0 %v6023
      %v6025 = vpop.xlane.xlu0 %6024
      %v6026 = vsel %vm507, %v5957, 0.0
      %6027 = vadd.xlane.f32.xlu0 %v6026
      %v6028 = vpop.xlane.xlu0 %6027
      %v6029 = vsel %vm507, %v5959, 0.0
      %6030 = vadd.xlane.f32.xlu0 %v6029
      %v6031 = vpop.xlane.xlu0 %6030
      %v6032 = vsel %vm507, %v5961, 0.0
      %6033 = vadd.xlane.f32.xlu0 %v6032
      %v6034 = vpop.xlane.xlu0 %6033
      %v6035 = vsel %vm507, %v5963, 0.0
      %6036 = vadd.xlane.f32.xlu0 %v6035
      %v6037 = vpop.xlane.xlu0 %6036
      %v6038 = vsel %vm507, %v5965, 0.0
      %6039 = vadd.xlane.f32.xlu0 %v6038
      %v6040 = vpop.xlane.xlu0 %6039
      %v6041 = vrcp.pop %v5968
      %v6042 = vrcp.pop %v5971
      %v6043 = vrcp.pop %v5974
      %v6044 = vrcp.pop %v5977
      %v6045 = vrcp.pop %v5980
      %v6046 = vrcp.pop %v5983
      %v6047 = vrcp.pop %v5986
      %v6048 = vrcp.pop %v5989
      %v6049 = vrcp.pop %v5992
      %v6050 = vrcp.pop %v5995
      %v6051 = vrcp.pop %v5998
      %v6052 = vrcp.pop %v6001
      %v6053 = vrcp.pop %v6004
      %v6054 = vrcp.pop %v6007
      %v6055 = vrcp.pop %v6010
      %v6056 = vrcp.pop %v6013
      %v6057 = vrcp.pop %v6016
      %v6058 = vrcp.pop %v6019
      %v6059 = vrcp.pop %v6022
      %v6060 = vrcp.pop %v6025
      %v6061 = vrcp.pop %v6028
      %v6062 = vrcp.pop %v6031
      %v6063 = vrcp.pop %v6034
      %v6064 = vrcp.pop %v6037
      %v6065 = vrcp.pop %v6040
      %v6066 = vmul.f32 %v5917, %v6041
      %v6067 = vmul.f32 %v5919, %v6042
      %v6068 = vmul.f32 %v5921, %v6043
      %v6069 = vmul.f32 %v5923, %v6044
      %v6070 = vmul.f32 %v5925, %v6045
      %v6071 = vmul.f32 %v5927, %v6046
      %v6072 = vmul.f32 %v5929, %v6047
      %v6073 = vmul.f32 %v5931, %v6048
      %v6074 = vmul.f32 %v5933, %v6049
      %v6075 = vmul.f32 %v5935, %v6050
      %v6076 = vmul.f32 %v5937, %v6051
      %v6077 = vmul.f32 %v5939, %v6052
      %v6078 = vmul.f32 %v5941, %v6053
      %v6079 = vmul.f32 %v5943, %v6054
      %v6080 = vmul.f32 %v5945, %v6055
      %v6081 = vmul.f32 %v5947, %v6056
      %v6082 = vmul.f32 %v5949, %v6057
      %v6083 = vmul.f32 %v5951, %v6058
      %v6084 = vmul.f32 %v5953, %v6059
      %v6085 = vmul.f32 %v5955, %v6060
      %v6086 = vmul.f32 %v5957, %v6061
      %v6087 = vmul.f32 %v5959, %v6062
      %v6088 = vmul.f32 %v5961, %v6063
      %v6089 = vmul.f32 %v5963, %v6064
      %v6090 = vmul.f32 %v5965, %v6065
      %v6091 = vpack.c.bf16 %v6066, %v6066
      %v6092 = vpack.c.bf16 %v6067, %v6067
      %v6093 = vpack.c.bf16 %v6068, %v6068
      %v6094 = vpack.c.bf16 %v6069, %v6069
      %v6095 = vpack.c.bf16 %v6070, %v6070
      %v6096 = vpack.c.bf16 %v6071, %v6071
      %v6097 = vpack.c.bf16 %v6072, %v6072
      %v6098 = vpack.c.bf16 %v6073, %v6073
      %v6099 = vpack.c.bf16 %v6074, %v6074
      %v6100 = vpack.c.bf16 %v6075, %v6075
      %v6101 = vpack.c.bf16 %v6076, %v6076
      %v6102 = vpack.c.bf16 %v6077, %v6077
      %v6103 = vpack.c.bf16 %v6078, %v6078
      %v6104 = vpack.c.bf16 %v6079, %v6079
      %v6105 = vpack.c.bf16 %v6080, %v6080
      %v6106 = vpack.c.bf16 %v6081, %v6081
      %v6107 = vpack.c.bf16 %v6082, %v6082
      %v6108 = vpack.c.bf16 %v6083, %v6083
      %v6109 = vpack.c.bf16 %v6084, %v6084
      %v6110 = vpack.c.bf16 %v6085, %v6085
      %v6111 = vpack.c.bf16 %v6086, %v6086
      %v6112 = vpack.c.bf16 %v6087, %v6087
      %v6113 = vpack.c.bf16 %v6088, %v6088
      %v6114 = vpack.c.bf16 %v6089, %v6089
      %v6115 = vpack.c.bf16 %v6090, %v6090
      %6116 = vrot.lane.b32.xlu0 %v504, 40
      %v6117 = vpop.permute.xlu0 %6116
      %v6119 = vsel %vm507, %v6091, 0
      %v6122 = vsel %vm1433, %v6117, 0
      %6124 = vmatpush.bf16.msra.mxu0 0
      %6125 = vmatpush.bf16.msra.mxu0 0
      %6126 = vmatpush.bf16.msra.mxu0 0
      %6127 = vmatpush.bf16.msra.mxu0 0
      %6128 = vmatpush.bf16.msra.mxu0 0
      %6129 = vmatpush.bf16.msra.mxu0 0
      %6130 = vmatpush.bf16.msra.mxu0 0
      %6131 = vmatpush.bf16.msra.mxu0 %v6122
      %6132 = vmatmul.bf16.gmra.mxu0 %v6119
      %v6133 = vpop.f32.mrf.mxu0
      %v6134 = vadd.f32 0.0, %v6133
      %v6135 = vpop.f32.mrf.mxu0
      %6136 = vdwg.mxu0
      %6137 = vrot.lane.b32.xlu0 %v529, 40
      %v6138 = vpop.permute.xlu0 %6137
      %v6140 = vsel %vm507, %v6092, 0
      %v6143 = vsel %vm1433, %v6138, 0
      %6145 = vmatpush.bf16.msra.mxu0 0
      %6146 = vmatpush.bf16.msra.mxu0 0
      %6147 = vmatpush.bf16.msra.mxu0 0
      %6148 = vmatpush.bf16.msra.mxu0 0
      %6149 = vmatpush.bf16.msra.mxu0 0
      %6150 = vmatpush.bf16.msra.mxu0 0
      %6151 = vmatpush.bf16.msra.mxu0 0
      %6152 = vmatpush.bf16.msra.mxu0 %v6143
      %6153 = vmatmul.bf16.gmra.mxu0 %v6140
      %v6154 = vpop.f32.mrf.mxu0
      %v6155 = vadd.f32 0.0, %v6154
      %v6156 = vpop.f32.mrf.mxu0
      %6157 = vdwg.mxu0
      %6158 = vrot.lane.b32.xlu0 %v553, 40
      %v6159 = vpop.permute.xlu0 %6158
      %v6161 = vsel %vm507, %v6093, 0
      %v6164 = vsel %vm1433, %v6159, 0
      %6166 = vmatpush.bf16.msra.mxu0 0
      %6167 = vmatpush.bf16.msra.mxu0 0
      %6168 = vmatpush.bf16.msra.mxu0 0
      %6169 = vmatpush.bf16.msra.mxu0 0
      %6170 = vmatpush.bf16.msra.mxu0 0
      %6171 = vmatpush.bf16.msra.mxu0 0
      %6172 = vmatpush.bf16.msra.mxu0 0
      %6173 = vmatpush.bf16.msra.mxu0 %v6164
      %6174 = vmatmul.bf16.gmra.mxu0 %v6161
      %v6175 = vpop.f32.mrf.mxu0
      %v6176 = vadd.f32 0.0, %v6175
      %v6177 = vpop.f32.mrf.mxu0
      %6178 = vdwg.mxu0
      %6179 = vrot.lane.b32.xlu0 %v577, 40
      %v6180 = vpop.permute.xlu0 %6179
      %v6182 = vsel %vm507, %v6094, 0
      %v6185 = vsel %vm1433, %v6180, 0
      %6187 = vmatpush.bf16.msra.mxu0 0
      %6188 = vmatpush.bf16.msra.mxu0 0
      %6189 = vmatpush.bf16.msra.mxu0 0
      %6190 = vmatpush.bf16.msra.mxu0 0
      %6191 = vmatpush.bf16.msra.mxu0 0
      %6192 = vmatpush.bf16.msra.mxu0 0
      %6193 = vmatpush.bf16.msra.mxu0 0
      %6194 = vmatpush.bf16.msra.mxu0 %v6185
      %6195 = vmatmul.bf16.gmra.mxu0 %v6182
      %v6196 = vpop.f32.mrf.mxu0
      %v6197 = vadd.f32 0.0, %v6196
      %v6198 = vpop.f32.mrf.mxu0
      %6199 = vdwg.mxu0
      %6200 = vrot.lane.b32.xlu0 %v601, 40
      %v6201 = vpop.permute.xlu0 %6200
      %v6203 = vsel %vm507, %v6095, 0
      %v6206 = vsel %vm1433, %v6201, 0
      %6208 = vmatpush.bf16.msra.mxu0 0
      %6209 = vmatpush.bf16.msra.mxu0 0
      %6210 = vmatpush.bf16.msra.mxu0 0
      %6211 = vmatpush.bf16.msra.mxu0 0
      %6212 = vmatpush.bf16.msra.mxu0 0
      %6213 = vmatpush.bf16.msra.mxu0 0
      %6214 = vmatpush.bf16.msra.mxu0 0
      %6215 = vmatpush.bf16.msra.mxu0 %v6206
      %6216 = vmatmul.bf16.gmra.mxu0 %v6203
      %v6217 = vpop.f32.mrf.mxu0
      %v6218 = vadd.f32 0.0, %v6217
      %v6219 = vpop.f32.mrf.mxu0
      %6220 = vdwg.mxu0
      %6221 = vrot.lane.b32.xlu0 %v625, 40
      %v6222 = vpop.permute.xlu0 %6221
      %v6224 = vsel %vm507, %v6096, 0
      %v6227 = vsel %vm1433, %v6222, 0
      %6229 = vmatpush.bf16.msra.mxu0 0
      %6230 = vmatpush.bf16.msra.mxu0 0
      %6231 = vmatpush.bf16.msra.mxu0 0
      %6232 = vmatpush.bf16.msra.mxu0 0
      %6233 = vmatpush.bf16.msra.mxu0 0
      %6234 = vmatpush.bf16.msra.mxu0 0
      %6235 = vmatpush.bf16.msra.mxu0 0
      %6236 = vmatpush.bf16.msra.mxu0 %v6227
      %6237 = vmatmul.bf16.gmra.mxu0 %v6224
      %v6238 = vpop.f32.mrf.mxu0
      %v6239 = vadd.f32 0.0, %v6238
      %v6240 = vpop.f32.mrf.mxu0
      %6241 = vdwg.mxu0
      %6242 = vrot.lane.b32.xlu0 %v649, 40
      %v6243 = vpop.permute.xlu0 %6242
      %v6245 = vsel %vm507, %v6097, 0
      %v6248 = vsel %vm1433, %v6243, 0
      %6250 = vmatpush.bf16.msra.mxu0 0
      %6251 = vmatpush.bf16.msra.mxu0 0
      %6252 = vmatpush.bf16.msra.mxu0 0
      %6253 = vmatpush.bf16.msra.mxu0 0
      %6254 = vmatpush.bf16.msra.mxu0 0
      %6255 = vmatpush.bf16.msra.mxu0 0
      %6256 = vmatpush.bf16.msra.mxu0 0
      %6257 = vmatpush.bf16.msra.mxu0 %v6248
      %6258 = vmatmul.bf16.gmra.mxu0 %v6245
      %v6259 = vpop.f32.mrf.mxu0
      %v6260 = vadd.f32 0.0, %v6259
      %v6261 = vpop.f32.mrf.mxu0
      %6262 = vdwg.mxu0
      %6263 = vrot.lane.b32.xlu0 %v673, 40
      %v6264 = vpop.permute.xlu0 %6263
      %v6266 = vsel %vm507, %v6098, 0
      %v6269 = vsel %vm1433, %v6264, 0
      %6271 = vmatpush.bf16.msra.mxu0 0
      %6272 = vmatpush.bf16.msra.mxu0 0
      %6273 = vmatpush.bf16.msra.mxu0 0
      %6274 = vmatpush.bf16.msra.mxu0 0
      %6275 = vmatpush.bf16.msra.mxu0 0
      %6276 = vmatpush.bf16.msra.mxu0 0
      %6277 = vmatpush.bf16.msra.mxu0 0
      %6278 = vmatpush.bf16.msra.mxu0 %v6269
      %6279 = vmatmul.bf16.gmra.mxu0 %v6266
      %v6280 = vpop.f32.mrf.mxu0
      %v6281 = vadd.f32 0.0, %v6280
      %v6282 = vpop.f32.mrf.mxu0
      %6283 = vdwg.mxu0
      %6284 = vrot.lane.b32.xlu0 %v697, 40
      %v6285 = vpop.permute.xlu0 %6284
      %v6287 = vsel %vm507, %v6099, 0
      %v6290 = vsel %vm1433, %v6285, 0
      %6292 = vmatpush.bf16.msra.mxu0 0
      %6293 = vmatpush.bf16.msra.mxu0 0
      %6294 = vmatpush.bf16.msra.mxu0 0
      %6295 = vmatpush.bf16.msra.mxu0 0
      %6296 = vmatpush.bf16.msra.mxu0 0
      %6297 = vmatpush.bf16.msra.mxu0 0
      %6298 = vmatpush.bf16.msra.mxu0 0
      %6299 = vmatpush.bf16.msra.mxu0 %v6290
      %6300 = vmatmul.bf16.gmra.mxu0 %v6287
      %v6301 = vpop.f32.mrf.mxu0
      %v6302 = vadd.f32 0.0, %v6301
      %v6303 = vpop.f32.mrf.mxu0
      %6304 = vdwg.mxu0
      %6305 = vrot.lane.b32.xlu0 %v721, 40
      %v6306 = vpop.permute.xlu0 %6305
      %v6308 = vsel %vm507, %v6100, 0
      %v6311 = vsel %vm1433, %v6306, 0
      %6313 = vmatpush.bf16.msra.mxu0 0
      %6314 = vmatpush.bf16.msra.mxu0 0
      %6315 = vmatpush.bf16.msra.mxu0 0
      %6316 = vmatpush.bf16.msra.mxu0 0
      %6317 = vmatpush.bf16.msra.mxu0 0
      %6318 = vmatpush.bf16.msra.mxu0 0
      %6319 = vmatpush.bf16.msra.mxu0 0
      %6320 = vmatpush.bf16.msra.mxu0 %v6311
      %6321 = vmatmul.bf16.gmra.mxu0 %v6308
      %v6322 = vpop.f32.mrf.mxu0
      %v6323 = vadd.f32 0.0, %v6322
      %v6324 = vpop.f32.mrf.mxu0
      %6325 = vdwg.mxu0
      %6326 = vrot.lane.b32.xlu0 %v745, 40
      %v6327 = vpop.permute.xlu0 %6326
      %v6329 = vsel %vm507, %v6101, 0
      %v6332 = vsel %vm1433, %v6327, 0
      %6334 = vmatpush.bf16.msra.mxu0 0
      %6335 = vmatpush.bf16.msra.mxu0 0
      %6336 = vmatpush.bf16.msra.mxu0 0
      %6337 = vmatpush.bf16.msra.mxu0 0
      %6338 = vmatpush.bf16.msra.mxu0 0
      %6339 = vmatpush.bf16.msra.mxu0 0
      %6340 = vmatpush.bf16.msra.mxu0 0
      %6341 = vmatpush.bf16.msra.mxu0 %v6332
      %6342 = vmatmul.bf16.gmra.mxu0 %v6329
      %v6343 = vpop.f32.mrf.mxu0
      %v6344 = vadd.f32 0.0, %v6343
      %v6345 = vpop.f32.mrf.mxu0
      %6346 = vdwg.mxu0
      %6347 = vrot.lane.b32.xlu0 %v769, 40
      %v6348 = vpop.permute.xlu0 %6347
      %v6350 = vsel %vm507, %v6102, 0
      %v6353 = vsel %vm1433, %v6348, 0
      %6355 = vmatpush.bf16.msra.mxu0 0
      %6356 = vmatpush.bf16.msra.mxu0 0
      %6357 = vmatpush.bf16.msra.mxu0 0
      %6358 = vmatpush.bf16.msra.mxu0 0
      %6359 = vmatpush.bf16.msra.mxu0 0
      %6360 = vmatpush.bf16.msra.mxu0 0
      %6361 = vmatpush.bf16.msra.mxu0 0
      %6362 = vmatpush.bf16.msra.mxu0 %v6353
      %6363 = vmatmul.bf16.gmra.mxu0 %v6350
      %v6364 = vpop.f32.mrf.mxu0
      %v6365 = vadd.f32 0.0, %v6364
      %v6366 = vpop.f32.mrf.mxu0
      %6367 = vdwg.mxu0
      %6368 = vrot.lane.b32.xlu0 %v793, 40
      %v6369 = vpop.permute.xlu0 %6368
      %v6371 = vsel %vm507, %v6103, 0
      %v6374 = vsel %vm1433, %v6369, 0
      %6376 = vmatpush.bf16.msra.mxu0 0
      %6377 = vmatpush.bf16.msra.mxu0 0
      %6378 = vmatpush.bf16.msra.mxu0 0
      %6379 = vmatpush.bf16.msra.mxu0 0
      %6380 = vmatpush.bf16.msra.mxu0 0
      %6381 = vmatpush.bf16.msra.mxu0 0
      %6382 = vmatpush.bf16.msra.mxu0 0
      %6383 = vmatpush.bf16.msra.mxu0 %v6374
      %6384 = vmatmul.bf16.gmra.mxu0 %v6371
      %v6385 = vpop.f32.mrf.mxu0
      %v6386 = vadd.f32 0.0, %v6385
      %v6387 = vpop.f32.mrf.mxu0
      %6388 = vdwg.mxu0
      %6389 = vrot.lane.b32.xlu0 %v817, 40
      %v6390 = vpop.permute.xlu0 %6389
      %v6392 = vsel %vm507, %v6104, 0
      %v6395 = vsel %vm1433, %v6390, 0
      %6397 = vmatpush.bf16.msra.mxu0 0
      %6398 = vmatpush.bf16.msra.mxu0 0
      %6399 = vmatpush.bf16.msra.mxu0 0
      %6400 = vmatpush.bf16.msra.mxu0 0
      %6401 = vmatpush.bf16.msra.mxu0 0
      %6402 = vmatpush.bf16.msra.mxu0 0
      %6403 = vmatpush.bf16.msra.mxu0 0
      %6404 = vmatpush.bf16.msra.mxu0 %v6395
      %6405 = vmatmul.bf16.gmra.mxu0 %v6392
      %v6406 = vpop.f32.mrf.mxu0
      %v6407 = vadd.f32 0.0, %v6406
      %v6408 = vpop.f32.mrf.mxu0
      %6409 = vdwg.mxu0
      %6410 = vrot.lane.b32.xlu0 %v841, 40
      %v6411 = vpop.permute.xlu0 %6410
      %v6413 = vsel %vm507, %v6105, 0
      %v6416 = vsel %vm1433, %v6411, 0
      %6418 = vmatpush.bf16.msra.mxu0 0
      %6419 = vmatpush.bf16.msra.mxu0 0
      %6420 = vmatpush.bf16.msra.mxu0 0
      %6421 = vmatpush.bf16.msra.mxu0 0
      %6422 = vmatpush.bf16.msra.mxu0 0
      %6423 = vmatpush.bf16.msra.mxu0 0
      %6424 = vmatpush.bf16.msra.mxu0 0
      %6425 = vmatpush.bf16.msra.mxu0 %v6416
      %6426 = vmatmul.bf16.gmra.mxu0 %v6413
      %v6427 = vpop.f32.mrf.mxu0
      %v6428 = vadd.f32 0.0, %v6427
      %v6429 = vpop.f32.mrf.mxu0
      %6430 = vdwg.mxu0
      %6431 = vrot.lane.b32.xlu0 %v865, 40
      %v6432 = vpop.permute.xlu0 %6431
      %v6434 = vsel %vm507, %v6106, 0
      %v6437 = vsel %vm1433, %v6432, 0
      %6439 = vmatpush.bf16.msra.mxu0 0
      %6440 = vmatpush.bf16.msra.mxu0 0
      %6441 = vmatpush.bf16.msra.mxu0 0
      %6442 = vmatpush.bf16.msra.mxu0 0
      %6443 = vmatpush.bf16.msra.mxu0 0
      %6444 = vmatpush.bf16.msra.mxu0 0
      %6445 = vmatpush.bf16.msra.mxu0 0
      %6446 = vmatpush.bf16.msra.mxu0 %v6437
      %6447 = vmatmul.bf16.gmra.mxu0 %v6434
      %v6448 = vpop.f32.mrf.mxu0
      %v6449 = vadd.f32 0.0, %v6448
      %v6450 = vpop.f32.mrf.mxu0
      %6451 = vdwg.mxu0
      %6452 = vrot.lane.b32.xlu0 %v889, 40
      %v6453 = vpop.permute.xlu0 %6452
      %v6455 = vsel %vm507, %v6107, 0
      %v6458 = vsel %vm1433, %v6453, 0
      %6460 = vmatpush.bf16.msra.mxu0 0
      %6461 = vmatpush.bf16.msra.mxu0 0
      %6462 = vmatpush.bf16.msra.mxu0 0
      %6463 = vmatpush.bf16.msra.mxu0 0
      %6464 = vmatpush.bf16.msra.mxu0 0
      %6465 = vmatpush.bf16.msra.mxu0 0
      %6466 = vmatpush.bf16.msra.mxu0 0
      %6467 = vmatpush.bf16.msra.mxu0 %v6458
      %6468 = vmatmul.bf16.gmra.mxu0 %v6455
      %v6469 = vpop.f32.mrf.mxu0
      %v6470 = vadd.f32 0.0, %v6469
      %v6471 = vpop.f32.mrf.mxu0
      %6472 = vdwg.mxu0
      %6473 = vrot.lane.b32.xlu0 %v913, 40
      %v6474 = vpop.permute.xlu0 %6473
      %v6476 = vsel %vm507, %v6108, 0
      %v6479 = vsel %vm1433, %v6474, 0
      %6481 = vmatpush.bf16.msra.mxu0 0
      %6482 = vmatpush.bf16.msra.mxu0 0
      %6483 = vmatpush.bf16.msra.mxu0 0
      %6484 = vmatpush.bf16.msra.mxu0 0
      %6485 = vmatpush.bf16.msra.mxu0 0
      %6486 = vmatpush.bf16.msra.mxu0 0
      %6487 = vmatpush.bf16.msra.mxu0 0
      %6488 = vmatpush.bf16.msra.mxu0 %v6479
      %6489 = vmatmul.bf16.gmra.mxu0 %v6476
      %v6490 = vpop.f32.mrf.mxu0
      %v6491 = vadd.f32 0.0, %v6490
      %v6492 = vpop.f32.mrf.mxu0
      %6493 = vdwg.mxu0
      %6494 = vrot.lane.b32.xlu0 %v937, 40
      %v6495 = vpop.permute.xlu0 %6494
      %v6497 = vsel %vm507, %v6109, 0
      %v6500 = vsel %vm1433, %v6495, 0
      %6502 = vmatpush.bf16.msra.mxu0 0
      %6503 = vmatpush.bf16.msra.mxu0 0
      %6504 = vmatpush.bf16.msra.mxu0 0
      %6505 = vmatpush.bf16.msra.mxu0 0
      %6506 = vmatpush.bf16.msra.mxu0 0
      %6507 = vmatpush.bf16.msra.mxu0 0
      %6508 = vmatpush.bf16.msra.mxu0 0
      %6509 = vmatpush.bf16.msra.mxu0 %v6500
      %6510 = vmatmul.bf16.gmra.mxu0 %v6497
      %v6511 = vpop.f32.mrf.mxu0
      %v6512 = vadd.f32 0.0, %v6511
      %v6513 = vpop.f32.mrf.mxu0
      %6514 = vdwg.mxu0
      %6515 = vrot.lane.b32.xlu0 %v961, 40
      %v6516 = vpop.permute.xlu0 %6515
      %v6518 = vsel %vm507, %v6110, 0
      %v6521 = vsel %vm1433, %v6516, 0
      %6523 = vmatpush.bf16.msra.mxu0 0
      %6524 = vmatpush.bf16.msra.mxu0 0
      %6525 = vmatpush.bf16.msra.mxu0 0
      %6526 = vmatpush.bf16.msra.mxu0 0
      %6527 = vmatpush.bf16.msra.mxu0 0
      %6528 = vmatpush.bf16.msra.mxu0 0
      %6529 = vmatpush.bf16.msra.mxu0 0
      %6530 = vmatpush.bf16.msra.mxu0 %v6521
      %6531 = vmatmul.bf16.gmra.mxu0 %v6518
      %v6532 = vpop.f32.mrf.mxu0
      %v6533 = vadd.f32 0.0, %v6532
      %v6534 = vpop.f32.mrf.mxu0
      %6535 = vdwg.mxu0
      %6536 = vrot.lane.b32.xlu0 %v985, 40
      %v6537 = vpop.permute.xlu0 %6536
      %v6539 = vsel %vm507, %v6111, 0
      %v6542 = vsel %vm1433, %v6537, 0
      %6544 = vmatpush.bf16.msra.mxu0 0
      %6545 = vmatpush.bf16.msra.mxu0 0
      %6546 = vmatpush.bf16.msra.mxu0 0
      %6547 = vmatpush.bf16.msra.mxu0 0
      %6548 = vmatpush.bf16.msra.mxu0 0
      %6549 = vmatpush.bf16.msra.mxu0 0
      %6550 = vmatpush.bf16.msra.mxu0 0
      %6551 = vmatpush.bf16.msra.mxu0 %v6542
      %6552 = vmatmul.bf16.gmra.mxu0 %v6539
      %v6553 = vpop.f32.mrf.mxu0
      %v6554 = vadd.f32 0.0, %v6553
      %v6555 = vpop.f32.mrf.mxu0
      %6556 = vdwg.mxu0
      %6557 = vrot.lane.b32.xlu0 %v1009, 40
      %v6558 = vpop.permute.xlu0 %6557
      %v6560 = vsel %vm507, %v6112, 0
      %v6563 = vsel %vm1433, %v6558, 0
      %6565 = vmatpush.bf16.msra.mxu0 0
      %6566 = vmatpush.bf16.msra.mxu0 0
      %6567 = vmatpush.bf16.msra.mxu0 0
      %6568 = vmatpush.bf16.msra.mxu0 0
      %6569 = vmatpush.bf16.msra.mxu0 0
      %6570 = vmatpush.bf16.msra.mxu0 0
      %6571 = vmatpush.bf16.msra.mxu0 0
      %6572 = vmatpush.bf16.msra.mxu0 %v6563
      %6573 = vmatmul.bf16.gmra.mxu0 %v6560
      %v6574 = vpop.f32.mrf.mxu0
      %v6575 = vadd.f32 0.0, %v6574
      %v6576 = vpop.f32.mrf.mxu0
      %6577 = vdwg.mxu0
      %6578 = vrot.lane.b32.xlu0 %v1033, 40
      %v6579 = vpop.permute.xlu0 %6578
      %v6581 = vsel %vm507, %v6113, 0
      %v6584 = vsel %vm1433, %v6579, 0
      %6586 = vmatpush.bf16.msra.mxu0 0
      %6587 = vmatpush.bf16.msra.mxu0 0
      %6588 = vmatpush.bf16.msra.mxu0 0
      %6589 = vmatpush.bf16.msra.mxu0 0
      %6590 = vmatpush.bf16.msra.mxu0 0
      %6591 = vmatpush.bf16.msra.mxu0 0
      %6592 = vmatpush.bf16.msra.mxu0 0
      %6593 = vmatpush.bf16.msra.mxu0 %v6584
      %6594 = vmatmul.bf16.gmra.mxu0 %v6581
      %v6595 = vpop.f32.mrf.mxu0
      %v6596 = vadd.f32 0.0, %v6595
      %v6597 = vpop.f32.mrf.mxu0
      %6598 = vdwg.mxu0
      %6599 = vrot.lane.b32.xlu0 %v1057, 40
      %v6600 = vpop.permute.xlu0 %6599
      %v6602 = vsel %vm507, %v6114, 0
      %v6605 = vsel %vm1433, %v6600, 0
      %6607 = vmatpush.bf16.msra.mxu0 0
      %6608 = vmatpush.bf16.msra.mxu0 0
      %6609 = vmatpush.bf16.msra.mxu0 0
      %6610 = vmatpush.bf16.msra.mxu0 0
      %6611 = vmatpush.bf16.msra.mxu0 0
      %6612 = vmatpush.bf16.msra.mxu0 0
      %6613 = vmatpush.bf16.msra.mxu0 0
      %6614 = vmatpush.bf16.msra.mxu0 %v6605
      %6615 = vmatmul.bf16.gmra.mxu0 %v6602
      %v6616 = vpop.f32.mrf.mxu0
      %v6617 = vadd.f32 0.0, %v6616
      %v6618 = vpop.f32.mrf.mxu0
      %6619 = vdwg.mxu0
      %6620 = vrot.lane.b32.xlu0 %v1081, 40
      %v6621 = vpop.permute.xlu0 %6620
      %v6623 = vsel %vm507, %v6115, 0
      %v6626 = vsel %vm1433, %v6621, 0
      %6628 = vmatpush.bf16.msra.mxu0 0
      %6629 = vmatpush.bf16.msra.mxu0 0
      %6630 = vmatpush.bf16.msra.mxu0 0
      %6631 = vmatpush.bf16.msra.mxu0 0
      %6632 = vmatpush.bf16.msra.mxu0 0
      %6633 = vmatpush.bf16.msra.mxu0 0
      %6634 = vmatpush.bf16.msra.mxu0 0
      %6635 = vmatpush.bf16.msra.mxu0 %v6626
      %6636 = vmatmul.bf16.gmra.mxu0 %v6623
      %v6637 = vpop.f32.mrf.mxu0
      %v6638 = vadd.f32 0.0, %v6637
      %v6639 = vpop.f32.mrf.mxu0
      %6640 = vdwg.mxu0
      %v6641 = vpack.c.bf16 %v6155, %v6134
      %v6642 = vpack.c.bf16 %v6197, %v6176
      %v6643 = vpack.c.bf16 %v6239, %v6218
      %v6644 = vpack.c.bf16 %v6281, %v6260
      %v6645 = vpack.c.bf16 %v6323, %v6302
      %v6646 = vpack.c.bf16 %v6365, %v6344
      %v6647 = vpack.c.bf16 %v6407, %v6386
      %v6648 = vpack.c.bf16 %v6449, %v6428
      %v6649 = vpack.c.bf16 %v6491, %v6470
      %v6650 = vpack.c.bf16 %v6533, %v6512
      %v6651 = vpack.c.bf16 %v6575, %v6554
      %v6652 = vpack.c.bf16 %v6617, %v6596
      %v6653 = vpack.c.bf16 %v6638, %v6638
      %v6654 = vld [vmem:[%s2 + $0xc] sm:$0xf]
      %v6656 = vsel %vm507, %v6641, 0
      %v6659 = vsel %vm507, %v6642, 0
      %v6662 = vsel %vm507, %v6643, 0
      %v6665 = vsel %vm507, %v6644, 0
      %v6668 = vsel %vm507, %v6645, 0
      %v6671 = vsel %vm507, %v6646, 0
      %v6674 = vsel %vm507, %v6647, 0
      %v6677 = vsel %vm507, %v6648, 0
      %v6680 = vsel %vm507, %v6649, 0
      %v6683 = vsel %vm507, %v6650, 0
      %v6686 = vsel %vm507, %v6651, 0
      %v6689 = vsel %vm507, %v6652, 0
      %v6692 = vsel %vm507, %v6653, 0
      %v6695 = vsel %vm1433, %v6654, 0
      %6697 = vmatpush.bf16.msra.mxu0 0
      %6698 = vmatpush.bf16.msra.mxu0 0
      %6699 = vmatpush.bf16.msra.mxu0 0
      %6700 = vmatpush.bf16.msra.mxu0 0
      %6701 = vmatpush.bf16.msra.mxu0 0
      %6702 = vmatpush.bf16.msra.mxu0 0
      %6703 = vmatpush.bf16.msra.mxu0 0
      %6704 = vmatpush.bf16.msra.mxu0 %v6695
      %6705 = vmatmul.bf16.gmra.mxu0 %v6656
      %v6706 = vpop.f32.mrf.mxu0
      %v6707 = vadd.f32 0.0, %v6706
      %v6708 = vpop.f32.mrf.mxu0
      %v6709 = vadd.f32 0.0, %v6708
      %6710 = vmatmul.bf16.gmra.mxu0 %v6659
      %v6711 = vpop.f32.mrf.mxu0
      %v6712 = vadd.f32 0.0, %v6711
      %v6713 = vpop.f32.mrf.mxu0
      %v6714 = vadd.f32 0.0, %v6713
      %6715 = vmatmul.bf16.gmra.mxu0 %v6662
      %v6716 = vpop.f32.mrf.mxu0
      %v6717 = vadd.f32 0.0, %v6716
      %v6718 = vpop.f32.mrf.mxu0
      %v6719 = vadd.f32 0.0, %v6718
      %6720 = vmatmul.bf16.gmra.mxu0 %v6665
      %v6721 = vpop.f32.mrf.mxu0
      %v6722 = vadd.f32 0.0, %v6721
      %v6723 = vpop.f32.mrf.mxu0
      %v6724 = vadd.f32 0.0, %v6723
      %6725 = vmatmul.bf16.gmra.mxu0 %v6668
      %v6726 = vpop.f32.mrf.mxu0
      %v6727 = vadd.f32 0.0, %v6726
      %v6728 = vpop.f32.mrf.mxu0
      %v6729 = vadd.f32 0.0, %v6728
      %6730 = vmatmul.bf16.gmra.mxu0 %v6671
      %v6731 = vpop.f32.mrf.mxu0
      %v6732 = vadd.f32 0.0, %v6731
      %v6733 = vpop.f32.mrf.mxu0
      %v6734 = vadd.f32 0.0, %v6733
      %6735 = vmatmul.bf16.gmra.mxu0 %v6674
      %v6736 = vpop.f32.mrf.mxu0
      %v6737 = vadd.f32 0.0, %v6736
      %v6738 = vpop.f32.mrf.mxu0
      %v6739 = vadd.f32 0.0, %v6738
      %6740 = vmatmul.bf16.gmra.mxu0 %v6677
      %v6741 = vpop.f32.mrf.mxu0
      %v6742 = vadd.f32 0.0, %v6741
      %v6743 = vpop.f32.mrf.mxu0
      %v6744 = vadd.f32 0.0, %v6743
      %6745 = vmatmul.bf16.gmra.mxu0 %v6680
      %v6746 = vpop.f32.mrf.mxu0
      %v6747 = vadd.f32 0.0, %v6746
      %v6748 = vpop.f32.mrf.mxu0
      %v6749 = vadd.f32 0.0, %v6748
      %6750 = vmatmul.bf16.gmra.mxu0 %v6683
      %v6751 = vpop.f32.mrf.mxu0
      %v6752 = vadd.f32 0.0, %v6751
      %v6753 = vpop.f32.mrf.mxu0
      %v6754 = vadd.f32 0.0, %v6753
      %6755 = vmatmul.bf16.gmra.mxu0 %v6686
      %v6756 = vpop.f32.mrf.mxu0
      %v6757 = vadd.f32 0.0, %v6756
      %v6758 = vpop.f32.mrf.mxu0
      %v6759 = vadd.f32 0.0, %v6758
      %6760 = vmatmul.bf16.gmra.mxu0 %v6689
      %v6761 = vpop.f32.mrf.mxu0
      %v6762 = vadd.f32 0.0, %v6761
      %v6763 = vpop.f32.mrf.mxu0
      %v6764 = vadd.f32 0.0, %v6763
      %6765 = vmatmul.bf16.gmra.mxu0 %v6692
      %v6766 = vpop.f32.mrf.mxu0
      %v6767 = vadd.f32 0.0, %v6766
      %v6768 = vpop.f32.mrf.mxu0
      %6769 = vdwg.mxu0
      %v6770 = vadd.f32 %v5191, %v6707
      %v6771 = vadd.f32 %v5192, %v6709
      %v6772 = vadd.f32 %v5193, %v6712
      %v6773 = vadd.f32 %v5194, %v6714
      %v6774 = vadd.f32 %v5195, %v6717
      %v6775 = vadd.f32 %v5196, %v6719
      %v6776 = vadd.f32 %v5197, %v6722
      %v6777 = vadd.f32 %v5198, %v6724
      %v6778 = vadd.f32 %v5199, %v6727
      %v6779 = vadd.f32 %v5200, %v6729
      %v6780 = vadd.f32 %v5201, %v6732
      %v6781 = vadd.f32 %v5202, %v6734
      %v6782 = vadd.f32 %v5203, %v6737
      %v6783 = vadd.f32 %v5204, %v6739
      %v6784 = vadd.f32 %v5205, %v6742
      %v6785 = vadd.f32 %v5206, %v6744
      %v6786 = vadd.f32 %v5207, %v6747
      %v6787 = vadd.f32 %v5208, %v6749
      %v6788 = vadd.f32 %v5209, %v6752
      %v6789 = vadd.f32 %v5210, %v6754
      %v6790 = vadd.f32 %v5211, %v6757
      %v6791 = vadd.f32 %v5212, %v6759
      %v6792 = vadd.f32 %v5213, %v6762
      %v6793 = vadd.f32 %v5214, %v6764
      %v6794 = vadd.f32 %v5215, %v6767
      %v6795 = vadd.f32 %v310, %v6770
      %v6796 = vadd.f32 %v311, %v6771
      %v6797 = vadd.f32 %v312, %v6772
      %v6798 = vadd.f32 %v313, %v6773
      %v6799 = vadd.f32 %v314, %v6774
      %v6800 = vadd.f32 %v315, %v6775
      %v6801 = vadd.f32 %v316, %v6776
      %v6802 = vadd.f32 %v317, %v6777
      %v6803 = vadd.f32 %v318, %v6778
      %v6804 = vadd.f32 %v319, %v6779
      %v6805 = vadd.f32 %v320, %v6780
      %v6806 = vadd.f32 %v321, %v6781
      %v6807 = vadd.f32 %v322, %v6782
      %v6808 = vadd.f32 %v323, %v6783
      %v6809 = vadd.f32 %v324, %v6784
      %v6810 = vadd.f32 %v325, %v6785
      %v6811 = vadd.f32 %v326, %v6786
      %v6812 = vadd.f32 %v327, %v6787
      %v6813 = vadd.f32 %v328, %v6788
      %v6814 = vadd.f32 %v329, %v6789
      %v6815 = vadd.f32 %v330, %v6790
      %v6816 = vadd.f32 %v331, %v6791
      %v6817 = vadd.f32 %v332, %v6792
      %v6818 = vadd.f32 %v333, %v6793
      %v6819 = vadd.f32 %v334, %v6794
      %v6820 = vld [vmem:[%s3] sm:$0x1]
      %v6822 = vperm.slane %v6820, 0
      %v6824 = vadd.f32 %v6795, %v6822
      %v6825 = vadd.f32 %v6796, %v6822
      %v6826 = vadd.f32 %v6797, %v6822
      %v6827 = vadd.f32 %v6798, %v6822
      %v6828 = vadd.f32 %v6799, %v6822
      %v6829 = vadd.f32 %v6800, %v6822
      %v6830 = vadd.f32 %v6801, %v6822
      %v6831 = vadd.f32 %v6802, %v6822
      %v6832 = vadd.f32 %v6803, %v6822
      %v6833 = vadd.f32 %v6804, %v6822
      %v6834 = vadd.f32 %v6805, %v6822
      %v6835 = vadd.f32 %v6806, %v6822
      %v6836 = vadd.f32 %v6807, %v6822
      %v6837 = vadd.f32 %v6808, %v6822
      %v6838 = vadd.f32 %v6809, %v6822
      %v6839 = vadd.f32 %v6810, %v6822
      %v6840 = vadd.f32 %v6811, %v6822
      %v6841 = vadd.f32 %v6812, %v6822
      %v6842 = vadd.f32 %v6813, %v6822
      %v6843 = vadd.f32 %v6814, %v6822
      %v6844 = vadd.f32 %v6815, %v6822
      %v6845 = vadd.f32 %v6816, %v6822
      %v6846 = vadd.f32 %v6817, %v6822
      %v6847 = vadd.f32 %v6818, %v6822
      %v6848 = vadd.f32 %v6819, %v6822
      %v6849 = vpack.c.bf16 %v6825, %v6824
      %v6850 = vpack.c.bf16 %v6827, %v6826
      %v6851 = vpack.c.bf16 %v6829, %v6828
      %v6852 = vpack.c.bf16 %v6831, %v6830
      %v6853 = vpack.c.bf16 %v6833, %v6832
      %v6854 = vpack.c.bf16 %v6835, %v6834
      %v6855 = vpack.c.bf16 %v6837, %v6836
      %v6856 = vpack.c.bf16 %v6839, %v6838
      %v6857 = vpack.c.bf16 %v6841, %v6840
      %v6858 = vpack.c.bf16 %v6843, %v6842
      %v6859 = vpack.c.bf16 %v6845, %v6844
      %v6860 = vpack.c.bf16 %v6847, %v6846
      %v6861 = vpack.c.bf16 %v6848, %v6848
      %v6862 = vld [vmem:[%s4] sm:$0xf]
      %v6863 = vld [vmem:[%s4 + $0x4] sm:$0xf]
      %v6864 = vld [vmem:[%s4 + $0x8] sm:$0xf]
      %v6865 = vld [vmem:[%s4 + $0xc] sm:$0xf]
      %v6866 = vld [vmem:[%s5] sm:$0x1]
      %v6868 = vperm.slane %v6866, 0
      %v6874 = vunpack.c.l.b16 %v6862
      %v6875 = vunpack.c.l.b16 %v6863
      %v6876 = vunpack.c.l.b16 %v6864
      %v6877 = vunpack.c.l.b16 %v6865
      %v6878 = vpack.c.b16 %v6875, %v6874
      %v6879 = vpack.c.b16 %v6877, %v6876
      %v6883 = vsel %vm364, %v6849, 0
      %v6886 = vsel %vm364, %v6850, 0
      %v6889 = vsel %vm364, %v6851, 0
      %v6892 = vsel %vm364, %v6852, 0
      %v6895 = vsel %vm364, %v6853, 0
      %v6898 = vsel %vm364, %v6854, 0
      %v6901 = vsel %vm364, %v6855, 0
      %v6904 = vsel %vm364, %v6856, 0
      %v6907 = vsel %vm364, %v6857, 0
      %v6910 = vsel %vm364, %v6858, 0
      %v6913 = vsel %vm364, %v6859, 0
      %v6916 = vsel %vm364, %v6860, 0
      %v6919 = vsel %vm364, %v6861, 0
      %6921 = vmatpush.bf16.msra.mxu0 0
      %6922 = vmatpush.bf16.msra.mxu0 0
      %6923 = vmatpush.bf16.msra.mxu0 0
      %6924 = vmatpush.bf16.msra.mxu0 0
      %6925 = vmatpush.bf16.msra.mxu0 0
      %6926 = vmatpush.bf16.msra.mxu0 0
      %6927 = vmatpush.bf16.msra.mxu0 %v6879
      %6928 = vmatpush.bf16.msra.mxu0 %v6878
      %6929 = vmatmul.bf16.gmra.mxu0 %v6883
      %v6930 = vpop.f32.mrf.mxu0
      %v6931 = vadd.f32 %v6868, %v6930
      %v6932 = vpop.f32.mrf.mxu0
      %v6933 = vadd.f32 %v6868, %v6932
      %6934 = vmatmul.bf16.gmra.mxu0 %v6886
      %v6935 = vpop.f32.mrf.mxu0
      %v6936 = vadd.f32 %v6868, %v6935
      %v6937 = vpop.f32.mrf.mxu0
      %v6938 = vadd.f32 %v6868, %v6937
      %6939 = vmatmul.bf16.gmra.mxu0 %v6889
      %v6940 = vpop.f32.mrf.mxu0
      %v6941 = vadd.f32 %v6868, %v6940
      %v6942 = vpop.f32.mrf.mxu0
      %v6943 = vadd.f32 %v6868, %v6942
      %6944 = vmatmul.bf16.gmra.mxu0 %v6892
      %v6945 = vpop.f32.mrf.mxu0
      %v6946 = vadd.f32 %v6868, %v6945
      %v6947 = vpop.f32.mrf.mxu0
      %v6948 = vadd.f32 %v6868, %v6947
      %6949 = vmatmul.bf16.gmra.mxu0 %v6895
      %v6950 = vpop.f32.mrf.mxu0
      %v6951 = vadd.f32 %v6868, %v6950
      %v6952 = vpop.f32.mrf.mxu0
      %v6953 = vadd.f32 %v6868, %v6952
      %6954 = vmatmul.bf16.gmra.mxu0 %v6898
      %v6955 = vpop.f32.mrf.mxu0
      %v6956 = vadd.f32 %v6868, %v6955
      %v6957 = vpop.f32.mrf.mxu0
      %v6958 = vadd.f32 %v6868, %v6957
      %6959 = vmatmul.bf16.gmra.mxu0 %v6901
      %v6960 = vpop.f32.mrf.mxu0
      %v6961 = vadd.f32 %v6868, %v6960
      %v6962 = vpop.f32.mrf.mxu0
      %v6963 = vadd.f32 %v6868, %v6962
      %6964 = vmatmul.bf16.gmra.mxu0 %v6904
      %v6965 = vpop.f32.mrf.mxu0
      %v6966 = vadd.f32 %v6868, %v6965
      %v6967 = vpop.f32.mrf.mxu0
      %v6968 = vadd.f32 %v6868, %v6967
      %6969 = vmatmul.bf16.gmra.mxu0 %v6907
      %v6970 = vpop.f32.mrf.mxu0
      %v6971 = vadd.f32 %v6868, %v6970
      %v6972 = vpop.f32.mrf.mxu0
      %v6973 = vadd.f32 %v6868, %v6972
      %6974 = vmatmul.bf16.gmra.mxu0 %v6910
      %v6975 = vpop.f32.mrf.mxu0
      %v6976 = vadd.f32 %v6868, %v6975
      %v6977 = vpop.f32.mrf.mxu0
      %v6978 = vadd.f32 %v6868, %v6977
      %6979 = vmatmul.bf16.gmra.mxu0 %v6913
      %v6980 = vpop.f32.mrf.mxu0
      %v6981 = vadd.f32 %v6868, %v6980
      %v6982 = vpop.f32.mrf.mxu0
      %v6983 = vadd.f32 %v6868, %v6982
      %6984 = vmatmul.bf16.gmra.mxu0 %v6916
      %v6985 = vpop.f32.mrf.mxu0
      %v6986 = vadd.f32 %v6868, %v6985
      %v6987 = vpop.f32.mrf.mxu0
      %v6988 = vadd.f32 %v6868, %v6987
      %6989 = vmatmul.bf16.gmra.mxu0 %v6919
      %v6990 = vpop.f32.mrf.mxu0
      %v6991 = vadd.f32 %v6868, %v6990
      %v6992 = vpop.f32.mrf.mxu0
      %6993 = vdwg.mxu0
      %v6994 = vmax.f32 %v6931, 0.0
      %v6995 = vmax.f32 %v6933, 0.0
      %v6996 = vmax.f32 %v6936, 0.0
      %v6997 = vmax.f32 %v6938, 0.0
      %v6998 = vmax.f32 %v6941, 0.0
      %v6999 = vmax.f32 %v6943, 0.0
      %v7000 = vmax.f32 %v6946, 0.0
      %v7001 = vmax.f32 %v6948, 0.0
      %v7002 = vmax.f32 %v6951, 0.0
      %v7003 = vmax.f32 %v6953, 0.0
      %v7004 = vmax.f32 %v6956, 0.0
      %v7005 = vmax.f32 %v6958, 0.0
      %v7006 = vmax.f32 %v6961, 0.0
      %v7007 = vmax.f32 %v6963, 0.0
      %v7008 = vmax.f32 %v6966, 0.0
      %v7009 = vmax.f32 %v6968, 0.0
      %v7010 = vmax.f32 %v6971, 0.0
      %v7011 = vmax.f32 %v6973, 0.0
      %v7012 = vmax.f32 %v6976, 0.0
      %v7013 = vmax.f32 %v6978, 0.0
      %v7014 = vmax.f32 %v6981, 0.0
      %v7015 = vmax.f32 %v6983, 0.0
      %v7016 = vmax.f32 %v6986, 0.0
      %v7017 = vmax.f32 %v6988, 0.0
      %v7018 = vmax.f32 %v6991, 0.0
      %v7019 = vpack.c.bf16 %v6995, %v6994
      %v7020 = vpack.c.bf16 %v6997, %v6996
      %v7021 = vpack.c.bf16 %v6999, %v6998
      %v7022 = vpack.c.bf16 %v7001, %v7000
      %v7023 = vpack.c.bf16 %v7003, %v7002
      %v7024 = vpack.c.bf16 %v7005, %v7004
      %v7025 = vpack.c.bf16 %v7007, %v7006
      %v7026 = vpack.c.bf16 %v7009, %v7008
      %v7027 = vpack.c.bf16 %v7011, %v7010
      %v7028 = vpack.c.bf16 %v7013, %v7012
      %v7029 = vpack.c.bf16 %v7015, %v7014
      %v7030 = vpack.c.bf16 %v7017, %v7016
      %v7031 = vpack.c.bf16 %v7018, %v7018
      %v7032 = vld [vmem:[%s6] sm:$0xf]
      %v7033 = vld [vmem:[%s6 + $0x4] sm:$0xf]
      %v7034 = vld [vmem:[%s6 + $0x8] sm:$0xf]
      %v7035 = vld [vmem:[%s6 + $0xc] sm:$0xf]
      %v7036 = vld [vmem:[%s6 + $0x10] sm:$0xf]
      %v7037 = vld [vmem:[%s6 + $0x14] sm:$0xf]
      %v7038 = vld [vmem:[%s6 + $0x18] sm:$0xf]
      %v7039 = vld [vmem:[%s6 + $0x1c] sm:$0xf]
      %v7040 = vld [vmem:[%s7] sm:$0x1]
      %v7042 = vperm.slane %v7040, 0
      %v7052 = vunpack.c.l.b16 %v7032
      %v7053 = vunpack.c.l.b16 %v7033
      %v7054 = vunpack.c.l.b16 %v7034
      %v7055 = vunpack.c.l.b16 %v7035
      %v7056 = vunpack.c.l.b16 %v7036
      %v7057 = vunpack.c.l.b16 %v7037
      %v7058 = vunpack.c.l.b16 %v7038
      %v7059 = vunpack.c.l.b16 %v7039
      %v7060 = vpack.c.b16 %v7053, %v7052
      %v7061 = vpack.c.b16 %v7055, %v7054
      %v7062 = vpack.c.b16 %v7057, %v7056
      %v7063 = vpack.c.b16 %v7059, %v7058
      %vm7068 = vcmask 523264
      %v7070 = vsel %vm7068, %v7019, 0
      %v7073 = vsel %vm7068, %v7020, 0
      %v7076 = vsel %vm7068, %v7021, 0
      %v7079 = vsel %vm7068, %v7022, 0
      %v7082 = vsel %vm7068, %v7023, 0
      %v7085 = vsel %vm7068, %v7024, 0
      %v7088 = vsel %vm7068, %v7025, 0
      %v7091 = vsel %vm7068, %v7026, 0
      %v7094 = vsel %vm7068, %v7027, 0
      %v7097 = vsel %vm7068, %v7028, 0
      %v7100 = vsel %vm7068, %v7029, 0
      %v7103 = vsel %vm7068, %v7030, 0
      %v7106 = vsel %vm7068, %v7031, 0
      %7108 = vmatpush.bf16.msra.mxu0 0
      %7109 = vmatpush.bf16.msra.mxu0 0
      %7110 = vmatpush.bf16.msra.mxu0 0
      %7111 = vmatpush.bf16.msra.mxu0 0
      %7112 = vmatpush.bf16.msra.mxu0 %v7063
      %7113 = vmatpush.bf16.msra.mxu0 %v7062
      %7114 = vmatpush.bf16.msra.mxu0 %v7061
      %7115 = vmatpush.bf16.msra.mxu0 %v7060
      %7116 = vmatmul.bf16.gmra.mxu0 %v7070
      %v7117 = vpop.f32.mrf.mxu0
      %v7118 = vadd.f32 %v7042, %v7117
      %v7119 = vpop.f32.mrf.mxu0
      %v7120 = vadd.f32 %v7042, %v7119
      %7121 = vmatmul.bf16.gmra.mxu0 %v7073
      %v7122 = vpop.f32.mrf.mxu0
      %v7123 = vadd.f32 %v7042, %v7122
      %v7124 = vpop.f32.mrf.mxu0
      %v7125 = vadd.f32 %v7042, %v7124
      %7126 = vmatmul.bf16.gmra.mxu0 %v7076
      %v7127 = vpop.f32.mrf.mxu0
      %v7128 = vadd.f32 %v7042, %v7127
      %v7129 = vpop.f32.mrf.mxu0
      %v7130 = vadd.f32 %v7042, %v7129
      %7131 = vmatmul.bf16.gmra.mxu0 %v7079
      %v7132 = vpop.f32.mrf.mxu0
      %v7133 = vadd.f32 %v7042, %v7132
      %v7134 = vpop.f32.mrf.mxu0
      %v7135 = vadd.f32 %v7042, %v7134
      %7136 = vmatmul.bf16.gmra.mxu0 %v7082
      %v7137 = vpop.f32.mrf.mxu0
      %v7138 = vadd.f32 %v7042, %v7137
      %v7139 = vpop.f32.mrf.mxu0
      %v7140 = vadd.f32 %v7042, %v7139
      %7141 = vmatmul.bf16.gmra.mxu0 %v7085
      %v7142 = vpop.f32.mrf.mxu0
      %v7143 = vadd.f32 %v7042, %v7142
      %v7144 = vpop.f32.mrf.mxu0
      %v7145 = vadd.f32 %v7042, %v7144
      %7146 = vmatmul.bf16.gmra.mxu0 %v7088
      %v7147 = vpop.f32.mrf.mxu0
      %v7148 = vadd.f32 %v7042, %v7147
      %v7149 = vpop.f32.mrf.mxu0
      %v7150 = vadd.f32 %v7042, %v7149
      %7151 = vmatmul.bf16.gmra.mxu0 %v7091
      %v7152 = vpop.f32.mrf.mxu0
      %v7153 = vadd.f32 %v7042, %v7152
      %v7154 = vpop.f32.mrf.mxu0
      %v7155 = vadd.f32 %v7042, %v7154
      %7156 = vmatmul.bf16.gmra.mxu0 %v7094
      %v7157 = vpop.f32.mrf.mxu0
      %v7158 = vadd.f32 %v7042, %v7157
      %v7159 = vpop.f32.mrf.mxu0
      %v7160 = vadd.f32 %v7042, %v7159
      %7161 = vmatmul.bf16.gmra.mxu0 %v7097
      %v7162 = vpop.f32.mrf.mxu0
      %v7163 = vadd.f32 %v7042, %v7162
      %v7164 = vpop.f32.mrf.mxu0
      %v7165 = vadd.f32 %v7042, %v7164
      %7166 = vmatmul.bf16.gmra.mxu0 %v7100
      %v7167 = vpop.f32.mrf.mxu0
      %v7168 = vadd.f32 %v7042, %v7167
      %v7169 = vpop.f32.mrf.mxu0
      %v7170 = vadd.f32 %v7042, %v7169
      %7171 = vmatmul.bf16.gmra.mxu0 %v7103
      %v7172 = vpop.f32.mrf.mxu0
      %v7173 = vadd.f32 %v7042, %v7172
      %v7174 = vpop.f32.mrf.mxu0
      %v7175 = vadd.f32 %v7042, %v7174
      %7176 = vmatmul.bf16.gmra.mxu0 %v7106
      %v7177 = vpop.f32.mrf.mxu0
      %v7178 = vadd.f32 %v7042, %v7177
      %v7179 = vpop.f32.mrf.mxu0
      %7180 = vdwg.mxu0
      %v7181 = vadd.f32 %v6824, %v7118
      %v7182 = vadd.f32 %v6825, %v7120
      %v7183 = vadd.f32 %v6826, %v7123
      %v7184 = vadd.f32 %v6827, %v7125
      %v7185 = vadd.f32 %v6828, %v7128
      %v7186 = vadd.f32 %v6829, %v7130
      %v7187 = vadd.f32 %v6830, %v7133
      %v7188 = vadd.f32 %v6831, %v7135
      %v7189 = vadd.f32 %v6832, %v7138
      %v7190 = vadd.f32 %v6833, %v7140
      %v7191 = vadd.f32 %v6834, %v7143
      %v7192 = vadd.f32 %v6835, %v7145
      %v7193 = vadd.f32 %v6836, %v7148
      %v7194 = vadd.f32 %v6837, %v7150
      %v7195 = vadd.f32 %v6838, %v7153
      %v7196 = vadd.f32 %v6839, %v7155
      %v7197 = vadd.f32 %v6840, %v7158
      %v7198 = vadd.f32 %v6841, %v7160
      %v7199 = vadd.f32 %v6842, %v7163
      %v7200 = vadd.f32 %v6843, %v7165
      %v7201 = vadd.f32 %v6844, %v7168
      %v7202 = vadd.f32 %v6845, %v7170
      %v7203 = vadd.f32 %v6846, %v7173
      %v7204 = vadd.f32 %v6847, %v7175
      %v7205 = vadd.f32 %v6848, %v7178
      %7206 = vst.msk [vmem:[%s307] sm:$0xff] %vm364, %v7181
      %7207 = vst.msk [vmem:[%s307 + $0x8] sm:$0xff] %vm364, %v7182
      %7208 = vst.msk [vmem:[%s307 + $0x10] sm:$0xff] %vm364, %v7183
      %7209 = vst.msk [vmem:[%s307 + $0x18] sm:$0xff] %vm364, %v7184
      %7210 = vst.msk [vmem:[%s307 + $0x20] sm:$0xff] %vm364, %v7185
      %7211 = vst.msk [vmem:[%s307 + $0x28] sm:$0xff] %vm364, %v7186
      %7212 = vst.msk [vmem:[%s307 + $0x30] sm:$0xff] %vm364, %v7187
      %7213 = vst.msk [vmem:[%s307 + $0x38] sm:$0xff] %vm364, %v7188
      %7214 = vst.msk [vmem:[%s307 + $0x40] sm:$0xff] %vm364, %v7189
      %7215 = vst.msk [vmem:[%s307 + $0x48] sm:$0xff] %vm364, %v7190
      %7216 = vst.msk [vmem:[%s307 + $0x50] sm:$0xff] %vm364, %v7191
      %7217 = vst.msk [vmem:[%s307 + $0x58] sm:$0xff] %vm364, %v7192
      %7218 = vst.msk [vmem:[%s307 + $0x60] sm:$0xff] %vm364, %v7193
      %7219 = vst.msk [vmem:[%s307 + $0x68] sm:$0xff] %vm364, %v7194
      %7220 = vst.msk [vmem:[%s307 + $0x70] sm:$0xff] %vm364, %v7195
      %7221 = vst.msk [vmem:[%s307 + $0x78] sm:$0xff] %vm364, %v7196
      %7222 = vst.msk [vmem:[%s307 + $0x80] sm:$0xff] %vm364, %v7197
      %7223 = vst.msk [vmem:[%s307 + $0x88] sm:$0xff] %vm364, %v7198
      %7224 = vst.msk [vmem:[%s307 + $0x90] sm:$0xff] %vm364, %v7199
      %7225 = vst.msk [vmem:[%s307 + $0x98] sm:$0xff] %vm364, %v7200
      %7226 = vst.msk [vmem:[%s307 + $0xa0] sm:$0xff] %vm364, %v7201
      %7227 = vst.msk [vmem:[%s307 + $0xa8] sm:$0xff] %vm364, %v7202
      %7228 = vst.msk [vmem:[%s307 + $0xb0] sm:$0xff] %vm364, %v7203
      %7229 = vst.msk [vmem:[%s307 + $0xb8] sm:$0xff] %vm364, %v7204
      %7230 = vst.msk [vmem:[%s307 + $0xc0] sm:$0xff] %vm364, %v7205
      %s7231 = smul.u32 25, %s19
      %p7232 = scmp.lt.s32.totalorder %s7231, 49
      %s7233 = scalar_select %p7232, %s7231, 49
      %s7234 = smul.addr %s7233, 8
      %s7235 = scalar_lea.vmem %s8, %s7234
      // Predicated region
      $region53: #{tpu_custom_call.1} parent=51 // pred_check
        %p7236 = pneg %p210
      $region54: #{tpu_custom_call.1} parent=51 // pred_check_branch
        %7238 = sbr.rel (%p7236) target = $region56
      $region55: #{tpu_custom_call.1} parent=51 // pred_region
        %s7239 = smul.u32 25, %s19
      $region56: #{tpu_custom_call.1} parent=51 // pred_fallthru
        _
    $region52: #{tpu_custom_call.1} parent=5 // pred_fallthru
      _
    %p7240 = scmp.le.s32.totalorder 2, %s14
    // Predicated region
    $region57: #{tpu_custom_call.1} parent=5 // pred_check
      %p7241 = pneg %p7240
    $region58: #{tpu_custom_call.1} parent=5 // pred_check_branch
      %7243 = sbr.rel (%p7241) target = $region60
    $region59: #{tpu_custom_call.1} parent=5 // pred_region
      %s7244 = ssub.s32 %s14, 2
      // Predicated region
      $region61: #{tpu_custom_call.1} parent=59 // pred_check
        %p7245 = pneg %p216
      $region62: #{tpu_custom_call.1} parent=59 // pred_check_branch
        %7247 = sbr.rel (%p7245) target = $region64
      $region63: #{tpu_custom_call.1} parent=59 // pred_region
        %s7248 = smul.u32 25, %s20
        %p7249 = scmp.lt.s32.totalorder %s7248, 49
        %s7250 = scalar_select %p7249, %s7248, 49
        %s7251 = smul.addr %s7250, 8
        %s7252 = scalar_lea.vmem %s8, %s7251
      $region64: #{tpu_custom_call.1} parent=59 // pred_fallthru
        _
    $region60: #{tpu_custom_call.1} parent=5 // pred_fallthru
      _
  $region6: #{tpu_custom_call.1} parent=0 // loop_footer
    %s18 = sadd.s32 1, %s14
  $region7: #{tpu_custom_call.1} parent=0 // loop_footer_branch
    %13 = sbr.rel target = $region3
  $region8: #{tpu_custom_call.1} parent=0 // loop_exit
    _

</llo_original>
